<compile_context>
chip_gen: v7x
topology: tpu7x:2x2x1
jax: 0.10.0
libtpu: 0.0.40
codegen_flags: <defaults>
</compile_context>

<pallas_src>
import math
from functools import partial

import jax
import jax.numpy as jnp
from jax.experimental import pallas as pl
from jax.experimental.pallas import tpu as pltpu


# ----------------------------------------------------------------------------
# Fused DecoderBlock kernel (per batch element):
#   masked self-attention -> residual+LN -> cross-attention -> residual+LN ->
#   FFN (Linear/ReLU/Linear) -> residual+LN.
# ----------------------------------------------------------------------------
def _decoder_block_kernel(
    x_ref, enc_ref, tmask_ref, smask_ref,
    sa_wqT, sa_wkT, sa_wvT, sa_wfcT, sa_bfc, n_g, n_b,
    ca_wqT, ca_wkT, ca_wvT, ca_wfcT, ca_bfc, n1_g, n1_b,
    ff_w1T, ff_b1, ff_w2T, ff_b2, n2_g, n2_b,
    o_ref, *, H, hd, scale):

    x = x_ref[0]        # (T, E)
    enc = enc_ref[0]    # (S, E)

    def layer_norm(y, g_ref, b_ref):
        mu = jnp.mean(y, axis=-1, keepdims=True)
        var = jnp.mean((y - mu) ** 2, axis=-1, keepdims=True)
        return (y - mu) * jax.lax.rsqrt(var + 1e-5) * g_ref[...] + b_ref[...]

    def attention(q, kv, bias, wqT, wkT, wvT, wfcT, bfc):
        # Block-diagonal (E,E) weights == the per-head (hd,hd) nn.Linear applied per head,
        # done as one MXU matmul instead of H tiny ones.
        qp = jnp.dot(q, wqT[...], preferred_element_type=jnp.float32)    # (Tq, E)
        kp = jnp.dot(kv, wkT[...], preferred_element_type=jnp.float32)   # (Tk, E)
        vp = jnp.dot(kv, wvT[...], preferred_element_type=jnp.float32)   # (Tk, E)
        outs = []
        for h in range(H):                      # static head loop (energy/softmax only)
            sl = slice(h * hd, (h + 1) * hd)
            e = jax.lax.dot_general(qp[:, sl], kp[:, sl], (((1,), (1,)), ((), ())),
                                    preferred_element_type=jnp.float32)  # (Tq, Tk)
            a = jax.nn.softmax(e * scale + bias, axis=-1)
            # torch.einsum('nhqk,nvhd->nqhd', attention, values): k and v are summed
            # independently -> outer product of the two sums (faithful to the source).
            a_sum = jnp.sum(a, axis=-1, keepdims=True)          # (Tq, 1)
            v_sum = jnp.sum(vp[:, sl], axis=0, keepdims=True)   # (1, hd)
            outs.append(a_sum * v_sum)
        concat = jnp.concatenate(outs, axis=-1)                 # (Tq, E)
        return jnp.dot(concat, wfcT[...], preferred_element_type=jnp.float32) + bfc[...]

    # Additive mask bias, computed once per grid step (not per head).  Finite -1e30
    # instead of -inf so fully-masked rows yield a uniform softmax instead of NaN.
    t_bias = jnp.where(tmask_ref[0] == 0.0, jnp.float32(-1e30), jnp.float32(0.0))  # (T, T)
    s_bias = jnp.where(smask_ref[0] == 0.0, jnp.float32(-1e30), jnp.float32(0.0))  # (T, S)

    # DecoderBlock: masked self-attention + add & norm.
    attn = attention(x, x, t_bias, sa_wqT, sa_wkT, sa_wvT, sa_wfcT, sa_bfc)
    query = layer_norm(attn + x, n_g, n_b)
    # TransformerBlock: cross-attention (k = v = encoder output) + add & norm.
    attn2 = attention(query, enc, s_bias, ca_wqT, ca_wkT, ca_wvT, ca_wfcT, ca_bfc)
    xb = layer_norm(attn2 + query, n1_g, n1_b)
    # FFN + add & norm.
    hid = jnp.dot(xb, ff_w1T[...], preferred_element_type=jnp.float32) + ff_b1[...]
    hid = jnp.maximum(hid, 0.0)
    ff = jnp.dot(hid, ff_w2T[...], preferred_element_type=jnp.float32) + ff_b2[...]
    o_ref[0] = layer_norm(ff + xb, n2_g, n2_b)


def decoder_block(x, enc, trg_c, src_c, lp, *, H):
    """x: (N,T,E), enc: (N,S,E), trg_c: (N,T,T), src_c: (N,T,S) float32."""
    N, T, E = x.shape
    S = enc.shape[1]
    hd = E // H
    kernel = partial(_decoder_block_kernel, H=H, hd=hd, scale=1.0 / math.sqrt(E))

    weights = [
        lp["sa"]["wqT_bd"], lp["sa"]["wkT_bd"], lp["sa"]["wvT_bd"],
        lp["sa"]["wfcT"], lp["sa"]["bfc"], lp["norm_g"], lp["norm_b"],
        lp["ca"]["wqT_bd"], lp["ca"]["wkT_bd"], lp["ca"]["wvT_bd"],
        lp["ca"]["wfcT"], lp["ca"]["bfc"], lp["norm1_g"], lp["norm1_b"],
        lp["ff_w1T"], lp["ff_b1"], lp["ff_w2T"], lp["ff_b2"],
        lp["norm2_g"], lp["norm2_b"],
    ]
    rep2 = lambda b: (0, 0)
    w_specs = [pl.BlockSpec(wt.shape, rep2) for wt in weights]

    return pl.pallas_call(
        kernel,
        out_shape=jax.ShapeDtypeStruct((N, T, E), jnp.float32),
        grid=(N,),
        in_specs=[
            pl.BlockSpec((1, T, E), lambda b: (b, 0, 0)),
            pl.BlockSpec((1, S, E), lambda b: (b, 0, 0)),
            pl.BlockSpec((1, T, T), lambda b: (b, 0, 0)),
            pl.BlockSpec((1, T, S), lambda b: (b, 0, 0)),
        ] + w_specs,
        out_specs=pl.BlockSpec((1, T, E), lambda b: (b, 0, 0)),
        compiler_params=pltpu.CompilerParams(dimension_semantics=("parallel",)),
    )(x, enc, trg_c, src_c, *weights)


# ----------------------------------------------------------------------------
# Row-tiled final vocab projection (lane-dense, pre-padded output width).
# ----------------------------------------------------------------------------
def _linear_kernel(x_ref, wT_ref, b_ref, o_ref):
    o_ref[...] = jnp.dot(x_ref[...], wT_ref[...],
                         preferred_element_type=jnp.float32) + b_ref[...]


def _row_block(rows, target=512):
    if rows <= target:
        return rows
    for tm in range(target - target % 8, 7, -8):
        if rows % tm == 0:
            return tm
    return rows


def linear_rows(x2d, wT, b):
    R, E = x2d.shape
    Vp = wT.shape[1]
    tm = _row_block(R)
    return pl.pallas_call(
        _linear_kernel,
        out_shape=jax.ShapeDtypeStruct((R, Vp), jnp.float32),
        grid=(R // tm,),
        in_specs=[pl.BlockSpec((tm, E), lambda i: (i, 0)),
                  pl.BlockSpec((E, Vp), lambda i: (0, 0)),
                  pl.BlockSpec((1, Vp), lambda i: (0, 0))],
        out_specs=pl.BlockSpec((tm, Vp), lambda i: (i, 0)),
        compiler_params=pltpu.CompilerParams(dimension_semantics=("parallel",)),
    )(x2d, wT, b)


# ----------------------------------------------------------------------------
# Parameter init (deterministic, synthetic) producing the kernel-ready layout:
# block-diagonal / pre-transposed / lane-padded weights built ONCE here.
# ----------------------------------------------------------------------------
def init_params(key, vocab, E, L, H, fe, max_len):
    hd = E // H
    F = fe * E
    state = {"key": key}

    def nxt():
        state["key"], sub = jax.random.split(state["key"])
        return sub

    def w(shape, scale=0.02):
        return (scale * jax.random.normal(nxt(), shape)).astype(jnp.float32)

    eyeH = jnp.eye(H, dtype=jnp.float32)

    def attn_params():
        wq, wk, wv = w((hd, hd)), w((hd, hd)), w((hd, hd))
        wfc, bfc = w((E, E)), w((1, E))
        # x @ kron(I_H, W.T) applies the per-head (hd,hd) Linear to each head's columns.
        return dict(wqT_bd=jnp.kron(eyeH, wq.T),
                    wkT_bd=jnp.kron(eyeH, wk.T),
                    wvT_bd=jnp.kron(eyeH, wv.T),
                    wfcT=wfc.T, bfc=bfc)

    layers = []
    for _ in range(L):
        layers.append(dict(
            sa=attn_params(),
            norm_g=jnp.ones((1, E), jnp.float32), norm_b=jnp.zeros((1, E), jnp.float32),
            ca=attn_params(),
            norm1_g=jnp.ones((1, E), jnp.float32), norm1_b=jnp.zeros((1, E), jnp.float32),
            ff_w1T=w((F, E)).T, ff_b1=w((1, F)),
            ff_w2T=w((E, F)).T, ff_b2=w((1, E)),
            norm2_g=jnp.ones((1, E), jnp.float32), norm2_b=jnp.zeros((1, E), jnp.float32),
        ))

    fc_w, fc_b = w((vocab, E)), w((1, vocab))
    Vp = ((vocab + 127) // 128) * 128           # lane-dense padded output width
    fc_wT = jnp.zeros((E, Vp), jnp.float32).at[:, :vocab].set(fc_w.T)
    fc_bp = jnp.zeros((1, Vp), jnp.float32).at[:, :vocab].set(fc_b)

    return dict(word_emb=w((vocab, E), 1.0), pos_emb=w((max_len, E), 1.0),
                layers=layers, fc_wT=fc_wT, fc_bp=fc_bp,
                H=H, E=E, V=vocab)


# ----------------------------------------------------------------------------
# Full Decoder forward (embedding gather + mask prep in XLA glue, hot paths fused
# in Pallas: one kernel per decoder layer + one vocab-projection kernel).
# ----------------------------------------------------------------------------
def decoder_forward(params, x_ids, enc_out, src_mask, trg_mask):
    N, T = x_ids.shape
    S = enc_out.shape[1]
    E, H, V = params["E"], params["H"], params["V"]

    positions = jnp.arange(T)[None, :]
    x = params["word_emb"][x_ids] + params["pos_emb"][positions]   # (N, T, E); dropout = id

    # Compact, head-shared masks: (N, Tq, Tk) float32 (no H-fold broadcast DMA).
    trg_c = jnp.broadcast_to(trg_mask.astype(jnp.float32), (N, 1, T, T))[:, 0]
    src_c = jnp.broadcast_to(src_mask.astype(jnp.float32), (N, 1, T, S))[:, 0]

    for lp in params["layers"]:
        x = decoder_block(x, enc_out, trg_c, src_c, lp, H=H)

    logits = linear_rows(x.reshape(N * T, E), params["fc_wT"], params["fc_bp"])
    return logits[:, :V].reshape(N, T, V)


if __name__ == "__main__":
    N, T, S = 2, 8, 8
    vocab, E, L, H, fe, max_len = 50, 32, 2, 4, 2, 16

    params = init_params(jax.random.PRNGKey(0), vocab, E, L, H, fe, max_len)

    k1, k2 = jax.random.split(jax.random.PRNGKey(1))
    x_ids = jax.random.randint(k1, (N, T), 0, vocab)
    enc_out = jax.random.normal(k2, (N, S, E), dtype=jnp.float32)

    # source mask: no padding; target mask: causal
    src_mask = jnp.ones((N, 1, 1, S), dtype=jnp.float32)
    trg_mask = jnp.broadcast_to(
        jnp.tril(jnp.ones((T, T), dtype=jnp.float32))[None, None], (N, 1, T, T))

    fwd = jax.jit(partial(decoder_forward, params))
    out = jax.block_until_ready(fwd(x_ids, enc_out, src_mask, trg_mask))

    assert out.shape == (N, T, vocab)
    assert bool(jnp.all(jnp.isfinite(out)))
    print("KERNEL_OK")
</pallas_src>

<mosaic_0001>
module attributes {stable_mosaic.version = 11 : i64} {
  func.func @_linear_kernel(%arg0: i32, %arg1: memref<16x32xf32, #tpu.memory_space<vmem>>, %arg2: memref<32x128xf32, #tpu.memory_space<vmem>>, %arg3: memref<1x128xf32, #tpu.memory_space<vmem>>, %arg4: memref<16x128xf32, #tpu.memory_space<vmem>>) attributes {dimension_semantics = [#tpu.dimension_semantics<parallel>], iteration_bounds = array<i64: 1>, scalar_prefetch = 0 : i64, scratch_operands = 0 : i64, tpu.core_type = #tpu.core_type<tc>, window_params = [{transform_indices = @transform_0, window_bounds = array<i64: 16, 32>}, {pipeline_mode = #tpu.pipeline_mode<synchronous>, transform_indices = @transform_1, window_bounds = array<i64: 32, 128>}, {pipeline_mode = #tpu.pipeline_mode<synchronous>, transform_indices = @transform_2, window_bounds = array<i64: 1, 128>}, {transform_indices = @transform_3, window_bounds = array<i64: 16, 128>}]} {
    %c0 = arith.constant 0 : index
    %c0_0 = arith.constant 0 : index
    %0 = vector.load %arg1[%c0, %c0_0] : memref<16x32xf32, #tpu.memory_space<vmem>>, vector<16x32xf32>
    %c0_1 = arith.constant 0 : index
    %c0_2 = arith.constant 0 : index
    %1 = vector.load %arg2[%c0_1, %c0_2] : memref<32x128xf32, #tpu.memory_space<vmem>>, vector<32x128xf32>
    %cst = arith.constant dense<0.000000e+00> : vector<16x128xf32>
    %2 = tpu.matmul %0, %1, %cst {dimension_numbers = #tpu.dot_dimension_numbers<[1], [0], [0], [1], [0, 0, 1, 1], [], []>} : vector<16x32xf32>, vector<32x128xf32>, vector<16x128xf32> -> vector<16x128xf32>
    %c0_3 = arith.constant 0 : index
    %c0_4 = arith.constant 0 : index
    %3 = vector.load %arg3[%c0_3, %c0_4] : memref<1x128xf32, #tpu.memory_space<vmem>>, vector<1x128xf32>
    %4 = vector.broadcast %3 : vector<1x128xf32> to vector<16x128xf32>
    %5 = arith.addf %2, %4 : vector<16x128xf32>
    %c0_5 = arith.constant 0 : index
    %c0_6 = arith.constant 0 : index
    %6 = vector.load %arg4[%c0_5, %c0_6] : memref<16x128xf32, #tpu.memory_space<vmem>>, vector<16x128xf32>
    tpu.vector_store %arg4[%c0_5, %c0_6], %5 {strides = array<i32>} : memref<16x128xf32, #tpu.memory_space<vmem>>, vector<16x128xf32>,
    return
  }
  func.func @transform_0(%arg0: i32) -> (i32, i32) {
    %c0_i32 = arith.constant 0 : i32
    %c0_i32_0 = arith.constant 0 : i32
    return %arg0, %c0_i32 : i32, i32
  }
  func.func @transform_1(%arg0: i32) -> (i32, i32) {
    %c0_i32 = arith.constant 0 : i32
    %c0_i32_0 = arith.constant 0 : i32
    %c0_i32_1 = arith.constant 0 : i32
    return %c0_i32, %c0_i32_0 : i32, i32
  }
  func.func @transform_2(%arg0: i32) -> (i32, i32) {
    %c0_i32 = arith.constant 0 : i32
    %c0_i32_0 = arith.constant 0 : i32
    %c0_i32_1 = arith.constant 0 : i32
    return %c0_i32, %c0_i32_0 : i32, i32
  }
  func.func @transform_3(%arg0: i32) -> (i32, i32) {
    %c0_i32 = arith.constant 0 : i32
    %c0_i32_0 = arith.constant 0 : i32
    return %arg0, %c0_i32 : i32, i32
  }
}

module attributes {stable_mosaic.version = 11 : i64} {
  func.func @_decoder_block_kernel(%arg0: i32, %arg1: memref<1x8x32xf32, #tpu.memory_space<vmem>>, %arg2: memref<1x8x32xf32, #tpu.memory_space<vmem>>, %arg3: memref<1x8x8xf32, #tpu.memory_space<vmem>>, %arg4: memref<1x8x8xf32, #tpu.memory_space<vmem>>, %arg5: memref<32x32xf32, #tpu.memory_space<vmem>>, %arg6: memref<32x32xf32, #tpu.memory_space<vmem>>, %arg7: memref<32x32xf32, #tpu.memory_space<vmem>>, %arg8: memref<32x32xf32, #tpu.memory_space<vmem>>, %arg9: memref<1x32xf32, #tpu.memory_space<vmem>>, %arg10: memref<1x32xf32, #tpu.memory_space<vmem>>, %arg11: memref<1x32xf32, #tpu.memory_space<vmem>>, %arg12: memref<32x32xf32, #tpu.memory_space<vmem>>, %arg13: memref<32x32xf32, #tpu.memory_space<vmem>>, %arg14: memref<32x32xf32, #tpu.memory_space<vmem>>, %arg15: memref<32x32xf32, #tpu.memory_space<vmem>>, %arg16: memref<1x32xf32, #tpu.memory_space<vmem>>, %arg17: memref<1x32xf32, #tpu.memory_space<vmem>>, %arg18: memref<1x32xf32, #tpu.memory_space<vmem>>, %arg19: memref<32x64xf32, #tpu.memory_space<vmem>>, %arg20: memref<1x64xf32, #tpu.memory_space<vmem>>, %arg21: memref<64x32xf32, #tpu.memory_space<vmem>>, %arg22: memref<1x32xf32, #tpu.memory_space<vmem>>, %arg23: memref<1x32xf32, #tpu.memory_space<vmem>>, %arg24: memref<1x32xf32, #tpu.memory_space<vmem>>, %arg25: memref<1x8x32xf32, #tpu.memory_space<vmem>>) attributes {dimension_semantics = [#tpu.dimension_semantics<parallel>], iteration_bounds = array<i64: 2>, scalar_prefetch = 0 : i64, scratch_operands = 0 : i64, tpu.core_type = #tpu.core_type<tc>, window_params = [{transform_indices = @transform_0, window_bounds = array<i64: 1, 8, 32>}, {transform_indices = @transform_1, window_bounds = array<i64: 1, 8, 32>}, {transform_indices = @transform_2, window_bounds = array<i64: 1, 8, 8>}, {transform_indices = @transform_3, window_bounds = array<i64: 1, 8, 8>}, {pipeline_mode = #tpu.pipeline_mode<synchronous>, transform_indices = @transform_4, window_bounds = array<i64: 32, 32>}, {pipeline_mode = #tpu.pipeline_mode<synchronous>, transform_indices = @transform_5, window_bounds = array<i64: 32, 32>}, {pipeline_mode = #tpu.pipeline_mode<synchronous>, transform_indices = @transform_6, window_bounds = array<i64: 32, 32>}, {pipeline_mode = #tpu.pipeline_mode<synchronous>, transform_indices = @transform_7, window_bounds = array<i64: 32, 32>}, {pipeline_mode = #tpu.pipeline_mode<synchronous>, transform_indices = @transform_8, window_bounds = array<i64: 1, 32>}, {pipeline_mode = #tpu.pipeline_mode<synchronous>, transform_indices = @transform_9, window_bounds = array<i64: 1, 32>}, {pipeline_mode = #tpu.pipeline_mode<synchronous>, transform_indices = @transform_10, window_bounds = array<i64: 1, 32>}, {pipeline_mode = #tpu.pipeline_mode<synchronous>, transform_indices = @transform_11, window_bounds = array<i64: 32, 32>}, {pipeline_mode = #tpu.pipeline_mode<synchronous>, transform_indices = @transform_12, window_bounds = array<i64: 32, 32>}, {pipeline_mode = #tpu.pipeline_mode<synchronous>, transform_indices = @transform_13, window_bounds = array<i64: 32, 32>}, {pipeline_mode = #tpu.pipeline_mode<synchronous>, transform_indices = @transform_14, window_bounds = array<i64: 32, 32>}, {pipeline_mode = #tpu.pipeline_mode<synchronous>, transform_indices = @transform_15, window_bounds = array<i64: 1, 32>}, {pipeline_mode = #tpu.pipeline_mode<synchronous>, transform_indices = @transform_16, window_bounds = array<i64: 1, 32>}, {pipeline_mode = #tpu.pipeline_mode<synchronous>, transform_indices = @transform_17, window_bounds = array<i64: 1, 32>}, {pipeline_mode = #tpu.pipeline_mode<synchronous>, transform_indices = @transform_18, window_bounds = array<i64: 32, 64>}, {pipeline_mode = #tpu.pipeline_mode<synchronous>, transform_indices = @transform_19, window_bounds = array<i64: 1, 64>}, {pipeline_mode = #tpu.pipeline_mode<synchronous>, transform_indices = @transform_20, window_bounds = array<i64: 64, 32>}, {pipeline_mode = #tpu.pipeline_mode<synchronous>, transform_indices = @transform_21, window_bounds = array<i64: 1, 32>}, {pipeline_mode = #tpu.pipeline_mode<synchronous>, transform_indices = @transform_22, window_bounds = array<i64: 1, 32>}, {pipeline_mode = #tpu.pipeline_mode<synchronous>, transform_indices = @transform_23, window_bounds = array<i64: 1, 32>}, {transform_indices = @transform_24, window_bounds = array<i64: 1, 8, 32>}]} {
    %c0 = arith.constant 0 : index
    %c0_0 = arith.constant 0 : index
    %c0_1 = arith.constant 0 : index
    %0 = vector.load %arg1[%c0, %c0_0, %c0_1] : memref<1x8x32xf32, #tpu.memory_space<vmem>>, vector<1x8x32xf32>
    %1 = vector.shape_cast %0 : vector<1x8x32xf32> to vector<8x32xf32>
    %c0_2 = arith.constant 0 : index
    %c0_3 = arith.constant 0 : index
    %c0_4 = arith.constant 0 : index
    %2 = vector.load %arg2[%c0_2, %c0_3, %c0_4] : memref<1x8x32xf32, #tpu.memory_space<vmem>>, vector<1x8x32xf32>
    %3 = vector.shape_cast %2 : vector<1x8x32xf32> to vector<8x32xf32>
    %c0_5 = arith.constant 0 : index
    %c0_6 = arith.constant 0 : index
    %c0_7 = arith.constant 0 : index
    %4 = vector.load %arg3[%c0_5, %c0_6, %c0_7] : memref<1x8x8xf32, #tpu.memory_space<vmem>>, vector<1x8x8xf32>
    %5 = vector.shape_cast %4 : vector<1x8x8xf32> to vector<8x8xf32>
    %cst = arith.constant 0.000000e+00 : f32
    %6 = vector.broadcast %cst : f32 to vector<8x8xf32>
    %7 = arith.cmpf oeq, %5, %6 : vector<8x8xf32>
    %cst_8 = arith.constant -1.000000e+30 : f32
    %cst_9 = arith.constant 0.000000e+00 : f32
    %8 = vector.broadcast %cst_8 : f32 to vector<8x8xf32>
    %9 = vector.broadcast %cst_9 : f32 to vector<8x8xf32>
    %10 = arith.select %7, %8, %9 : vector<8x8xi1>, vector<8x8xf32>
    %c0_10 = arith.constant 0 : index
    %c0_11 = arith.constant 0 : index
    %c0_12 = arith.constant 0 : index
    %11 = vector.load %arg4[%c0_10, %c0_11, %c0_12] : memref<1x8x8xf32, #tpu.memory_space<vmem>>, vector<1x8x8xf32>
    %12 = vector.shape_cast %11 : vector<1x8x8xf32> to vector<8x8xf32>
    %cst_13 = arith.constant 0.000000e+00 : f32
    %13 = vector.broadcast %cst_13 : f32 to vector<8x8xf32>
    %14 = arith.cmpf oeq, %12, %13 : vector<8x8xf32>
    %cst_14 = arith.constant -1.000000e+30 : f32
    %cst_15 = arith.constant 0.000000e+00 : f32
    %15 = vector.broadcast %cst_14 : f32 to vector<8x8xf32>
    %16 = vector.broadcast %cst_15 : f32 to vector<8x8xf32>
    %17 = arith.select %14, %15, %16 : vector<8x8xi1>, vector<8x8xf32>
    %c0_16 = arith.constant 0 : index
    %c0_17 = arith.constant 0 : index
    %18 = vector.load %arg5[%c0_16, %c0_17] : memref<32x32xf32, #tpu.memory_space<vmem>>, vector<32x32xf32>
    %cst_18 = arith.constant dense<0.000000e+00> : vector<8x32xf32>
    %19 = tpu.matmul %1, %18, %cst_18 {dimension_numbers = #tpu.dot_dimension_numbers<[1], [0], [0], [1], [0, 0, 1, 1], [], []>} : vector<8x32xf32>, vector<32x32xf32>, vector<8x32xf32> -> vector<8x32xf32>
    %c0_19 = arith.constant 0 : index
    %c0_20 = arith.constant 0 : index
    %20 = vector.load %arg6[%c0_19, %c0_20] : memref<32x32xf32, #tpu.memory_space<vmem>>, vector<32x32xf32>
    %cst_21 = arith.constant dense<0.000000e+00> : vector<8x32xf32>
    %21 = tpu.matmul %1, %20, %cst_21 {dimension_numbers = #tpu.dot_dimension_numbers<[1], [0], [0], [1], [0, 0, 1, 1], [], []>} : vector<8x32xf32>, vector<32x32xf32>, vector<8x32xf32> -> vector<8x32xf32>
    %c0_22 = arith.constant 0 : index
    %c0_23 = arith.constant 0 : index
    %22 = vector.load %arg7[%c0_22, %c0_23] : memref<32x32xf32, #tpu.memory_space<vmem>>, vector<32x32xf32>
    %cst_24 = arith.constant dense<0.000000e+00> : vector<8x32xf32>
    %23 = tpu.matmul %1, %22, %cst_24 {dimension_numbers = #tpu.dot_dimension_numbers<[1], [0], [0], [1], [0, 0, 1, 1], [], []>} : vector<8x32xf32>, vector<32x32xf32>, vector<8x32xf32> -> vector<8x32xf32>
    %24 = vector.extract_strided_slice %19 {offsets = [0, 0], sizes = [8, 8], strides = [1, 1]} : vector<8x32xf32> to vector<8x8xf32>
    %25 = vector.extract_strided_slice %21 {offsets = [0, 0], sizes = [8, 8], strides = [1, 1]} : vector<8x32xf32> to vector<8x8xf32>
    %cst_25 = arith.constant dense<0.000000e+00> : vector<8x8xf32>
    %26 = tpu.matmul %24, %25, %cst_25 {dimension_numbers = #tpu.dot_dimension_numbers<[1], [1], [0], [0], [0, 0, 1, 0], [], []>} : vector<8x8xf32>, vector<8x8xf32>, vector<8x8xf32> -> vector<8x8xf32>
    %cst_26 = arith.constant 0.176776692 : f32
    %27 = vector.broadcast %cst_26 : f32 to vector<8x8xf32>
    %28 = arith.mulf %26, %27 : vector<8x8xf32>
    %29 = arith.addf %28, %10 : vector<8x8xf32>
    %cst_27 = arith.constant dense<0xFF800000> : vector<8xf32>
    %30 = vector.multi_reduction <maximumf>, %29, %cst_27 [1] : vector<8x8xf32> to vector<8xf32>
    %cst_28 = arith.constant 0xFF800000 : f32
    %31 = vector.broadcast %cst_28 : f32 to vector<8xf32>
    %32 = arith.maximumf %31, %30 : vector<8xf32>
    %33 = vector.shape_cast %32 : vector<8xf32> to vector<8x1xf32>
    %34 = vector.broadcast %33 : vector<8x1xf32> to vector<8x8xf32>
    %35 = arith.subf %29, %34 : vector<8x8xf32>
    %36 = math.exp %35 : vector<8x8xf32>
    %cst_29 = arith.constant dense<0.000000e+00> : vector<8xf32>
    %37 = vector.multi_reduction <add>, %36, %cst_29 [1] : vector<8x8xf32> to vector<8xf32>
    %38 = vector.shape_cast %37 : vector<8xf32> to vector<8x1xf32>
    %39 = vector.broadcast %38 : vector<8x1xf32> to vector<8x8xf32>
    %40 = arith.divf %36, %39 : vector<8x8xf32>
    %cst_30 = arith.constant dense<0.000000e+00> : vector<8xf32>
    %41 = vector.multi_reduction <add>, %40, %cst_30 [1] : vector<8x8xf32> to vector<8xf32>
    %42 = vector.shape_cast %41 : vector<8xf32> to vector<8x1xf32>
    %43 = vector.extract_strided_slice %23 {offsets = [0, 0], sizes = [8, 8], strides = [1, 1]} : vector<8x32xf32> to vector<8x8xf32>
    %cst_31 = arith.constant dense<0.000000e+00> : vector<8xf32>
    %44 = vector.multi_reduction <add>, %43, %cst_31 [0] : vector<8x8xf32> to vector<8xf32>
    %45 = vector.shape_cast %44 : vector<8xf32> to vector<1x8xf32>
    %46 = vector.broadcast %42 : vector<8x1xf32> to vector<8x8xf32>
    %47 = vector.broadcast %45 : vector<1x8xf32> to vector<8x8xf32>
    %48 = arith.mulf %46, %47 : vector<8x8xf32>
    %49 = vector.extract_strided_slice %19 {offsets = [0, 8], sizes = [8, 8], strides = [1, 1]} : vector<8x32xf32> to vector<8x8xf32>
    %50 = vector.extract_strided_slice %21 {offsets = [0, 8], sizes = [8, 8], strides = [1, 1]} : vector<8x32xf32> to vector<8x8xf32>
    %cst_32 = arith.constant dense<0.000000e+00> : vector<8x8xf32>
    %51 = tpu.matmul %49, %50, %cst_32 {dimension_numbers = #tpu.dot_dimension_numbers<[1], [1], [0], [0], [0, 0, 1, 0], [], []>} : vector<8x8xf32>, vector<8x8xf32>, vector<8x8xf32> -> vector<8x8xf32>
    %cst_33 = arith.constant 0.176776692 : f32
    %52 = vector.broadcast %cst_33 : f32 to vector<8x8xf32>
    %53 = arith.mulf %51, %52 : vector<8x8xf32>
    %54 = arith.addf %53, %10 : vector<8x8xf32>
    %cst_34 = arith.constant dense<0xFF800000> : vector<8xf32>
    %55 = vector.multi_reduction <maximumf>, %54, %cst_34 [1] : vector<8x8xf32> to vector<8xf32>
    %cst_35 = arith.constant 0xFF800000 : f32
    %56 = vector.broadcast %cst_35 : f32 to vector<8xf32>
    %57 = arith.maximumf %56, %55 : vector<8xf32>
    %58 = vector.shape_cast %57 : vector<8xf32> to vector<8x1xf32>
    %59 = vector.broadcast %58 : vector<8x1xf32> to vector<8x8xf32>
    %60 = arith.subf %54, %59 : vector<8x8xf32>
    %61 = math.exp %60 : vector<8x8xf32>
    %cst_36 = arith.constant dense<0.000000e+00> : vector<8xf32>
    %62 = vector.multi_reduction <add>, %61, %cst_36 [1] : vector<8x8xf32> to vector<8xf32>
    %63 = vector.shape_cast %62 : vector<8xf32> to vector<8x1xf32>
    %64 = vector.broadcast %63 : vector<8x1xf32> to vector<8x8xf32>
    %65 = arith.divf %61, %64 : vector<8x8xf32>
    %cst_37 = arith.constant dense<0.000000e+00> : vector<8xf32>
    %66 = vector.multi_reduction <add>, %65, %cst_37 [1] : vector<8x8xf32> to vector<8xf32>
    %67 = vector.shape_cast %66 : vector<8xf32> to vector<8x1xf32>
    %68 = vector.extract_strided_slice %23 {offsets = [0, 8], sizes = [8, 8], strides = [1, 1]} : vector<8x32xf32> to vector<8x8xf32>
    %cst_38 = arith.constant dense<0.000000e+00> : vector<8xf32>
    %69 = vector.multi_reduction <add>, %68, %cst_38 [0] : vector<8x8xf32> to vector<8xf32>
    %70 = vector.shape_cast %69 : vector<8xf32> to vector<1x8xf32>
    %71 = vector.broadcast %67 : vector<8x1xf32> to vector<8x8xf32>
    %72 = vector.broadcast %70 : vector<1x8xf32> to vector<8x8xf32>
    %73 = arith.mulf %71, %72 : vector<8x8xf32>
    %74 = vector.extract_strided_slice %19 {offsets = [0, 16], sizes = [8, 8], strides = [1, 1]} : vector<8x32xf32> to vector<8x8xf32>
    %75 = vector.extract_strided_slice %21 {offsets = [0, 16], sizes = [8, 8], strides = [1, 1]} : vector<8x32xf32> to vector<8x8xf32>
    %cst_39 = arith.constant dense<0.000000e+00> : vector<8x8xf32>
    %76 = tpu.matmul %74, %75, %cst_39 {dimension_numbers = #tpu.dot_dimension_numbers<[1], [1], [0], [0], [0, 0, 1, 0], [], []>} : vector<8x8xf32>, vector<8x8xf32>, vector<8x8xf32> -> vector<8x8xf32>
    %cst_40 = arith.constant 0.176776692 : f32
    %77 = vector.broadcast %cst_40 : f32 to vector<8x8xf32>
    %78 = arith.mulf %76, %77 : vector<8x8xf32>
    %79 = arith.addf %78, %10 : vector<8x8xf32>
    %cst_41 = arith.constant dense<0xFF800000> : vector<8xf32>
    %80 = vector.multi_reduction <maximumf>, %79, %cst_41 [1] : vector<8x8xf32> to vector<8xf32>
    %cst_42 = arith.constant 0xFF800000 : f32
    %81 = vector.broadcast %cst_42 : f32 to vector<8xf32>
    %82 = arith.maximumf %81, %80 : vector<8xf32>
    %83 = vector.shape_cast %82 : vector<8xf32> to vector<8x1xf32>
    %84 = vector.broadcast %83 : vector<8x1xf32> to vector<8x8xf32>
    %85 = arith.subf %79, %84 : vector<8x8xf32>
    %86 = math.exp %85 : vector<8x8xf32>
    %cst_43 = arith.constant dense<0.000000e+00> : vector<8xf32>
    %87 = vector.multi_reduction <add>, %86, %cst_43 [1] : vector<8x8xf32> to vector<8xf32>
    %88 = vector.shape_cast %87 : vector<8xf32> to vector<8x1xf32>
    %89 = vector.broadcast %88 : vector<8x1xf32> to vector<8x8xf32>
    %90 = arith.divf %86, %89 : vector<8x8xf32>
    %cst_44 = arith.constant dense<0.000000e+00> : vector<8xf32>
    %91 = vector.multi_reduction <add>, %90, %cst_44 [1] : vector<8x8xf32> to vector<8xf32>
    %92 = vector.shape_cast %91 : vector<8xf32> to vector<8x1xf32>
    %93 = vector.extract_strided_slice %23 {offsets = [0, 16], sizes = [8, 8], strides = [1, 1]} : vector<8x32xf32> to vector<8x8xf32>
    %cst_45 = arith.constant dense<0.000000e+00> : vector<8xf32>
    %94 = vector.multi_reduction <add>, %93, %cst_45 [0] : vector<8x8xf32> to vector<8xf32>
    %95 = vector.shape_cast %94 : vector<8xf32> to vector<1x8xf32>
    %96 = vector.broadcast %92 : vector<8x1xf32> to vector<8x8xf32>
    %97 = vector.broadcast %95 : vector<1x8xf32> to vector<8x8xf32>
    %98 = arith.mulf %96, %97 : vector<8x8xf32>
    %99 = vector.extract_strided_slice %19 {offsets = [0, 24], sizes = [8, 8], strides = [1, 1]} : vector<8x32xf32> to vector<8x8xf32>
    %100 = vector.extract_strided_slice %21 {offsets = [0, 24], sizes = [8, 8], strides = [1, 1]} : vector<8x32xf32> to vector<8x8xf32>
    %cst_46 = arith.constant dense<0.000000e+00> : vector<8x8xf32>
    %101 = tpu.matmul %99, %100, %cst_46 {dimension_numbers = #tpu.dot_dimension_numbers<[1], [1], [0], [0], [0, 0, 1, 0], [], []>} : vector<8x8xf32>, vector<8x8xf32>, vector<8x8xf32> -> vector<8x8xf32>
    %cst_47 = arith.constant 0.176776692 : f32
    %102 = vector.broadcast %cst_47 : f32 to vector<8x8xf32>
    %103 = arith.mulf %101, %102 : vector<8x8xf32>
    %104 = arith.addf %103, %10 : vector<8x8xf32>
    %cst_48 = arith.constant dense<0xFF800000> : vector<8xf32>
    %105 = vector.multi_reduction <maximumf>, %104, %cst_48 [1] : vector<8x8xf32> to vector<8xf32>
    %cst_49 = arith.constant 0xFF800000 : f32
    %106 = vector.broadcast %cst_49 : f32 to vector<8xf32>
    %107 = arith.maximumf %106, %105 : vector<8xf32>
    %108 = vector.shape_cast %107 : vector<8xf32> to vector<8x1xf32>
    %109 = vector.broadcast %108 : vector<8x1xf32> to vector<8x8xf32>
    %110 = arith.subf %104, %109 : vector<8x8xf32>
    %111 = math.exp %110 : vector<8x8xf32>
    %cst_50 = arith.constant dense<0.000000e+00> : vector<8xf32>
    %112 = vector.multi_reduction <add>, %111, %cst_50 [1] : vector<8x8xf32> to vector<8xf32>
    %113 = vector.shape_cast %112 : vector<8xf32> to vector<8x1xf32>
    %114 = vector.broadcast %113 : vector<8x1xf32> to vector<8x8xf32>
    %115 = arith.divf %111, %114 : vector<8x8xf32>
    %cst_51 = arith.constant dense<0.000000e+00> : vector<8xf32>
    %116 = vector.multi_reduction <add>, %115, %cst_51 [1] : vector<8x8xf32> to vector<8xf32>
    %117 = vector.shape_cast %116 : vector<8xf32> to vector<8x1xf32>
    %118 = vector.extract_strided_slice %23 {offsets = [0, 24], sizes = [8, 8], strides = [1, 1]} : vector<8x32xf32> to vector<8x8xf32>
    %cst_52 = arith.constant dense<0.000000e+00> : vector<8xf32>
    %119 = vector.multi_reduction <add>, %118, %cst_52 [0] : vector<8x8xf32> to vector<8xf32>
    %120 = vector.shape_cast %119 : vector<8xf32> to vector<1x8xf32>
    %121 = vector.broadcast %117 : vector<8x1xf32> to vector<8x8xf32>
    %122 = vector.broadcast %120 : vector<1x8xf32> to vector<8x8xf32>
    %123 = arith.mulf %121, %122 : vector<8x8xf32>
    %124 = tpu.concatenate %48, %73, %98, %123 in 1 : vector<8x8xf32>, vector<8x8xf32>, vector<8x8xf32>, vector<8x8xf32> -> vector<8x32xf32>
    %c0_53 = arith.constant 0 : index
    %c0_54 = arith.constant 0 : index
    %125 = vector.load %arg8[%c0_53, %c0_54] : memref<32x32xf32, #tpu.memory_space<vmem>>, vector<32x32xf32>
    %cst_55 = arith.constant dense<0.000000e+00> : vector<8x32xf32>
    %126 = tpu.matmul %124, %125, %cst_55 {dimension_numbers = #tpu.dot_dimension_numbers<[1], [0], [0], [1], [0, 0, 1, 1], [], []>} : vector<8x32xf32>, vector<32x32xf32>, vector<8x32xf32> -> vector<8x32xf32>
    %c0_56 = arith.constant 0 : index
    %c0_57 = arith.constant 0 : index
    %127 = vector.load %arg9[%c0_56, %c0_57] : memref<1x32xf32, #tpu.memory_space<vmem>>, vector<1x32xf32>
    %128 = vector.broadcast %127 : vector<1x32xf32> to vector<8x32xf32>
    %129 = arith.addf %126, %128 : vector<8x32xf32>
    %130 = arith.addf %129, %1 : vector<8x32xf32>
    %cst_58 = arith.constant dense<0.000000e+00> : vector<8xf32>
    %131 = vector.multi_reduction <add>, %130, %cst_58 [1] : vector<8x32xf32> to vector<8xf32>
    %132 = vector.shape_cast %131 : vector<8xf32> to vector<8x1xf32>
    %cst_59 = arith.constant 3.200000e+01 : f32
    %133 = vector.broadcast %cst_59 : f32 to vector<8x1xf32>
    %134 = arith.divf %132, %133 : vector<8x1xf32>
    %135 = vector.broadcast %134 : vector<8x1xf32> to vector<8x32xf32>
    %136 = arith.subf %130, %135 : vector<8x32xf32>
    %137 = arith.mulf %136, %136 : vector<8x32xf32>
    %cst_60 = arith.constant dense<0.000000e+00> : vector<8xf32>
    %138 = vector.multi_reduction <add>, %137, %cst_60 [1] : vector<8x32xf32> to vector<8xf32>
    %139 = vector.shape_cast %138 : vector<8xf32> to vector<8x1xf32>
    %cst_61 = arith.constant 3.200000e+01 : f32
    %140 = vector.broadcast %cst_61 : f32 to vector<8x1xf32>
    %141 = arith.divf %139, %140 : vector<8x1xf32>
    %142 = vector.broadcast %134 : vector<8x1xf32> to vector<8x32xf32>
    %143 = arith.subf %130, %142 : vector<8x32xf32>
    %cst_62 = arith.constant 9.99999974E-6 : f32
    %144 = vector.broadcast %cst_62 : f32 to vector<8x1xf32>
    %145 = arith.addf %141, %144 : vector<8x1xf32>
    %146 = math.rsqrt %145 : vector<8x1xf32>
    %147 = vector.broadcast %146 : vector<8x1xf32> to vector<8x32xf32>
    %148 = arith.mulf %143, %147 : vector<8x32xf32>
    %c0_63 = arith.constant 0 : index
    %c0_64 = arith.constant 0 : index
    %149 = vector.load %arg10[%c0_63, %c0_64] : memref<1x32xf32, #tpu.memory_space<vmem>>, vector<1x32xf32>
    %150 = vector.broadcast %149 : vector<1x32xf32> to vector<8x32xf32>
    %151 = arith.mulf %148, %150 : vector<8x32xf32>
    %c0_65 = arith.constant 0 : index
    %c0_66 = arith.constant 0 : index
    %152 = vector.load %arg11[%c0_65, %c0_66] : memref<1x32xf32, #tpu.memory_space<vmem>>, vector<1x32xf32>
    %153 = vector.broadcast %152 : vector<1x32xf32> to vector<8x32xf32>
    %154 = arith.addf %151, %153 : vector<8x32xf32>
    %c0_67 = arith.constant 0 : index
    %c0_68 = arith.constant 0 : index
    %155 = vector.load %arg12[%c0_67, %c0_68] : memref<32x32xf32, #tpu.memory_space<vmem>>, vector<32x32xf32>
    %cst_69 = arith.constant dense<0.000000e+00> : vector<8x32xf32>
    %156 = tpu.matmul %154, %155, %cst_69 {dimension_numbers = #tpu.dot_dimension_numbers<[1], [0], [0], [1], [0, 0, 1, 1], [], []>} : vector<8x32xf32>, vector<32x32xf32>, vector<8x32xf32> -> vector<8x32xf32>
    %c0_70 = arith.constant 0 : index
    %c0_71 = arith.constant 0 : index
    %157 = vector.load %arg13[%c0_70, %c0_71] : memref<32x32xf32, #tpu.memory_space<vmem>>, vector<32x32xf32>
    %cst_72 = arith.constant dense<0.000000e+00> : vector<8x32xf32>
    %158 = tpu.matmul %3, %157, %cst_72 {dimension_numbers = #tpu.dot_dimension_numbers<[1], [0], [0], [1], [0, 0, 1, 1], [], []>} : vector<8x32xf32>, vector<32x32xf32>, vector<8x32xf32> -> vector<8x32xf32>
    %c0_73 = arith.constant 0 : index
    %c0_74 = arith.constant 0 : index
    %159 = vector.load %arg14[%c0_73, %c0_74] : memref<32x32xf32, #tpu.memory_space<vmem>>, vector<32x32xf32>
    %cst_75 = arith.constant dense<0.000000e+00> : vector<8x32xf32>
    %160 = tpu.matmul %3, %159, %cst_75 {dimension_numbers = #tpu.dot_dimension_numbers<[1], [0], [0], [1], [0, 0, 1, 1], [], []>} : vector<8x32xf32>, vector<32x32xf32>, vector<8x32xf32> -> vector<8x32xf32>
    %161 = vector.extract_strided_slice %156 {offsets = [0, 0], sizes = [8, 8], strides = [1, 1]} : vector<8x32xf32> to vector<8x8xf32>
    %162 = vector.extract_strided_slice %158 {offsets = [0, 0], sizes = [8, 8], strides = [1, 1]} : vector<8x32xf32> to vector<8x8xf32>
    %cst_76 = arith.constant dense<0.000000e+00> : vector<8x8xf32>
    %163 = tpu.matmul %161, %162, %cst_76 {dimension_numbers = #tpu.dot_dimension_numbers<[1], [1], [0], [0], [0, 0, 1, 0], [], []>} : vector<8x8xf32>, vector<8x8xf32>, vector<8x8xf32> -> vector<8x8xf32>
    %cst_77 = arith.constant 0.176776692 : f32
    %164 = vector.broadcast %cst_77 : f32 to vector<8x8xf32>
    %165 = arith.mulf %163, %164 : vector<8x8xf32>
    %166 = arith.addf %165, %17 : vector<8x8xf32>
    %cst_78 = arith.constant dense<0xFF800000> : vector<8xf32>
    %167 = vector.multi_reduction <maximumf>, %166, %cst_78 [1] : vector<8x8xf32> to vector<8xf32>
    %cst_79 = arith.constant 0xFF800000 : f32
    %168 = vector.broadcast %cst_79 : f32 to vector<8xf32>
    %169 = arith.maximumf %168, %167 : vector<8xf32>
    %170 = vector.shape_cast %169 : vector<8xf32> to vector<8x1xf32>
    %171 = vector.broadcast %170 : vector<8x1xf32> to vector<8x8xf32>
    %172 = arith.subf %166, %171 : vector<8x8xf32>
    %173 = math.exp %172 : vector<8x8xf32>
    %cst_80 = arith.constant dense<0.000000e+00> : vector<8xf32>
    %174 = vector.multi_reduction <add>, %173, %cst_80 [1] : vector<8x8xf32> to vector<8xf32>
    %175 = vector.shape_cast %174 : vector<8xf32> to vector<8x1xf32>
    %176 = vector.broadcast %175 : vector<8x1xf32> to vector<8x8xf32>
    %177 = arith.divf %173, %176 : vector<8x8xf32>
    %cst_81 = arith.constant dense<0.000000e+00> : vector<8xf32>
    %178 = vector.multi_reduction <add>, %177, %cst_81 [1] : vector<8x8xf32> to vector<8xf32>
    %179 = vector.shape_cast %178 : vector<8xf32> to vector<8x1xf32>
    %180 = vector.extract_strided_slice %160 {offsets = [0, 0], sizes = [8, 8], strides = [1, 1]} : vector<8x32xf32> to vector<8x8xf32>
    %cst_82 = arith.constant dense<0.000000e+00> : vector<8xf32>
    %181 = vector.multi_reduction <add>, %180, %cst_82 [0] : vector<8x8xf32> to vector<8xf32>
    %182 = vector.shape_cast %181 : vector<8xf32> to vector<1x8xf32>
    %183 = vector.broadcast %179 : vector<8x1xf32> to vector<8x8xf32>
    %184 = vector.broadcast %182 : vector<1x8xf32> to vector<8x8xf32>
    %185 = arith.mulf %183, %184 : vector<8x8xf32>
    %186 = vector.extract_strided_slice %156 {offsets = [0, 8], sizes = [8, 8], strides = [1, 1]} : vector<8x32xf32> to vector<8x8xf32>
    %187 = vector.extract_strided_slice %158 {offsets = [0, 8], sizes = [8, 8], strides = [1, 1]} : vector<8x32xf32> to vector<8x8xf32>
    %cst_83 = arith.constant dense<0.000000e+00> : vector<8x8xf32>
    %188 = tpu.matmul %186, %187, %cst_83 {dimension_numbers = #tpu.dot_dimension_numbers<[1], [1], [0], [0], [0, 0, 1, 0], [], []>} : vector<8x8xf32>, vector<8x8xf32>, vector<8x8xf32> -> vector<8x8xf32>
    %cst_84 = arith.constant 0.176776692 : f32
    %189 = vector.broadcast %cst_84 : f32 to vector<8x8xf32>
    %190 = arith.mulf %188, %189 : vector<8x8xf32>
    %191 = arith.addf %190, %17 : vector<8x8xf32>
    %cst_85 = arith.constant dense<0xFF800000> : vector<8xf32>
    %192 = vector.multi_reduction <maximumf>, %191, %cst_85 [1] : vector<8x8xf32> to vector<8xf32>
    %cst_86 = arith.constant 0xFF800000 : f32
    %193 = vector.broadcast %cst_86 : f32 to vector<8xf32>
    %194 = arith.maximumf %193, %192 : vector<8xf32>
    %195 = vector.shape_cast %194 : vector<8xf32> to vector<8x1xf32>
    %196 = vector.broadcast %195 : vector<8x1xf32> to vector<8x8xf32>
    %197 = arith.subf %191, %196 : vector<8x8xf32>
    %198 = math.exp %197 : vector<8x8xf32>
    %cst_87 = arith.constant dense<0.000000e+00> : vector<8xf32>
    %199 = vector.multi_reduction <add>, %198, %cst_87 [1] : vector<8x8xf32> to vector<8xf32>
    %200 = vector.shape_cast %199 : vector<8xf32> to vector<8x1xf32>
    %201 = vector.broadcast %200 : vector<8x1xf32> to vector<8x8xf32>
    %202 = arith.divf %198, %201 : vector<8x8xf32>
    %cst_88 = arith.constant dense<0.000000e+00> : vector<8xf32>
    %203 = vector.multi_reduction <add>, %202, %cst_88 [1] : vector<8x8xf32> to vector<8xf32>
    %204 = vector.shape_cast %203 : vector<8xf32> to vector<8x1xf32>
    %205 = vector.extract_strided_slice %160 {offsets = [0, 8], sizes = [8, 8], strides = [1, 1]} : vector<8x32xf32> to vector<8x8xf32>
    %cst_89 = arith.constant dense<0.000000e+00> : vector<8xf32>
    %206 = vector.multi_reduction <add>, %205, %cst_89 [0] : vector<8x8xf32> to vector<8xf32>
    %207 = vector.shape_cast %206 : vector<8xf32> to vector<1x8xf32>
    %208 = vector.broadcast %204 : vector<8x1xf32> to vector<8x8xf32>
    %209 = vector.broadcast %207 : vector<1x8xf32> to vector<8x8xf32>
    %210 = arith.mulf %208, %209 : vector<8x8xf32>
    %211 = vector.extract_strided_slice %156 {offsets = [0, 16], sizes = [8, 8], strides = [1, 1]} : vector<8x32xf32> to vector<8x8xf32>
    %212 = vector.extract_strided_slice %158 {offsets = [0, 16], sizes = [8, 8], strides = [1, 1]} : vector<8x32xf32> to vector<8x8xf32>
    %cst_90 = arith.constant dense<0.000000e+00> : vector<8x8xf32>
    %213 = tpu.matmul %211, %212, %cst_90 {dimension_numbers = #tpu.dot_dimension_numbers<[1], [1], [0], [0], [0, 0, 1, 0], [], []>} : vector<8x8xf32>, vector<8x8xf32>, vector<8x8xf32> -> vector<8x8xf32>
    %cst_91 = arith.constant 0.176776692 : f32
    %214 = vector.broadcast %cst_91 : f32 to vector<8x8xf32>
    %215 = arith.mulf %213, %214 : vector<8x8xf32>
    %216 = arith.addf %215, %17 : vector<8x8xf32>
    %cst_92 = arith.constant dense<0xFF800000> : vector<8xf32>
    %217 = vector.multi_reduction <maximumf>, %216, %cst_92 [1] : vector<8x8xf32> to vector<8xf32>
    %cst_93 = arith.constant 0xFF800000 : f32
    %218 = vector.broadcast %cst_93 : f32 to vector<8xf32>
    %219 = arith.maximumf %218, %217 : vector<8xf32>
    %220 = vector.shape_cast %219 : vector<8xf32> to vector<8x1xf32>
    %221 = vector.broadcast %220 : vector<8x1xf32> to vector<8x8xf32>
    %222 = arith.subf %216, %221 : vector<8x8xf32>
    %223 = math.exp %222 : vector<8x8xf32>
    %cst_94 = arith.constant dense<0.000000e+00> : vector<8xf32>
    %224 = vector.multi_reduction <add>, %223, %cst_94 [1] : vector<8x8xf32> to vector<8xf32>
    %225 = vector.shape_cast %224 : vector<8xf32> to vector<8x1xf32>
    %226 = vector.broadcast %225 : vector<8x1xf32> to vector<8x8xf32>
    %227 = arith.divf %223, %226 : vector<8x8xf32>
    %cst_95 = arith.constant dense<0.000000e+00> : vector<8xf32>
    %228 = vector.multi_reduction <add>, %227, %cst_95 [1] : vector<8x8xf32> to vector<8xf32>
    %229 = vector.shape_cast %228 : vector<8xf32> to vector<8x1xf32>
    %230 = vector.extract_strided_slice %160 {offsets = [0, 16], sizes = [8, 8], strides = [1, 1]} : vector<8x32xf32> to vector<8x8xf32>
    %cst_96 = arith.constant dense<0.000000e+00> : vector<8xf32>
    %231 = vector.multi_reduction <add>, %230, %cst_96 [0] : vector<8x8xf32> to vector<8xf32>
    %232 = vector.shape_cast %231 : vector<8xf32> to vector<1x8xf32>
    %233 = vector.broadcast %229 : vector<8x1xf32> to vector<8x8xf32>
    %234 = vector.broadcast %232 : vector<1x8xf32> to vector<8x8xf32>
    %235 = arith.mulf %233, %234 : vector<8x8xf32>
    %236 = vector.extract_strided_slice %156 {offsets = [0, 24], sizes = [8, 8], strides = [1, 1]} : vector<8x32xf32> to vector<8x8xf32>
    %237 = vector.extract_strided_slice %158 {offsets = [0, 24], sizes = [8, 8], strides = [1, 1]} : vector<8x32xf32> to vector<8x8xf32>
    %cst_97 = arith.constant dense<0.000000e+00> : vector<8x8xf32>
    %238 = tpu.matmul %236, %237, %cst_97 {dimension_numbers = #tpu.dot_dimension_numbers<[1], [1], [0], [0], [0, 0, 1, 0], [], []>} : vector<8x8xf32>, vector<8x8xf32>, vector<8x8xf32> -> vector<8x8xf32>
    %cst_98 = arith.constant 0.176776692 : f32
    %239 = vector.broadcast %cst_98 : f32 to vector<8x8xf32>
    %240 = arith.mulf %238, %239 : vector<8x8xf32>
    %241 = arith.addf %240, %17 : vector<8x8xf32>
    %cst_99 = arith.constant dense<0xFF800000> : vector<8xf32>
    %242 = vector.multi_reduction <maximumf>, %241, %cst_99 [1] : vector<8x8xf32> to vector<8xf32>
    %cst_100 = arith.constant 0xFF800000 : f32
    %243 = vector.broadcast %cst_100 : f32 to vector<8xf32>
    %244 = arith.maximumf %243, %242 : vector<8xf32>
    %245 = vector.shape_cast %244 : vector<8xf32> to vector<8x1xf32>
    %246 = vector.broadcast %245 : vector<8x1xf32> to vector<8x8xf32>
    %247 = arith.subf %241, %246 : vector<8x8xf32>
    %248 = math.exp %247 : vector<8x8xf32>
    %cst_101 = arith.constant dense<0.000000e+00> : vector<8xf32>
    %249 = vector.multi_reduction <add>, %248, %cst_101 [1] : vector<8x8xf32> to vector<8xf32>
    %250 = vector.shape_cast %249 : vector<8xf32> to vector<8x1xf32>
    %251 = vector.broadcast %250 : vector<8x1xf32> to vector<8x8xf32>
    %252 = arith.divf %248, %251 : vector<8x8xf32>
    %cst_102 = arith.constant dense<0.000000e+00> : vector<8xf32>
    %253 = vector.multi_reduction <add>, %252, %cst_102 [1] : vector<8x8xf32> to vector<8xf32>
    %254 = vector.shape_cast %253 : vector<8xf32> to vector<8x1xf32>
    %255 = vector.extract_strided_slice %160 {offsets = [0, 24], sizes = [8, 8], strides = [1, 1]} : vector<8x32xf32> to vector<8x8xf32>
    %cst_103 = arith.constant dense<0.000000e+00> : vector<8xf32>
    %256 = vector.multi_reduction <add>, %255, %cst_103 [0] : vector<8x8xf32> to vector<8xf32>
    %257 = vector.shape_cast %256 : vector<8xf32> to vector<1x8xf32>
    %258 = vector.broadcast %254 : vector<8x1xf32> to vector<8x8xf32>
    %259 = vector.broadcast %257 : vector<1x8xf32> to vector<8x8xf32>
    %260 = arith.mulf %258, %259 : vector<8x8xf32>
    %261 = tpu.concatenate %185, %210, %235, %260 in 1 : vector<8x8xf32>, vector<8x8xf32>, vector<8x8xf32>, vector<8x8xf32> -> vector<8x32xf32>
    %c0_104 = arith.constant 0 : index
    %c0_105 = arith.constant 0 : index
    %262 = vector.load %arg15[%c0_104, %c0_105] : memref<32x32xf32, #tpu.memory_space<vmem>>, vector<32x32xf32>
    %cst_106 = arith.constant dense<0.000000e+00> : vector<8x32xf32>
    %263 = tpu.matmul %261, %262, %cst_106 {dimension_numbers = #tpu.dot_dimension_numbers<[1], [0], [0], [1], [0, 0, 1, 1], [], []>} : vector<8x32xf32>, vector<32x32xf32>, vector<8x32xf32> -> vector<8x32xf32>
    %c0_107 = arith.constant 0 : index
    %c0_108 = arith.constant 0 : index
    %264 = vector.load %arg16[%c0_107, %c0_108] : memref<1x32xf32, #tpu.memory_space<vmem>>, vector<1x32xf32>
    %265 = vector.broadcast %264 : vector<1x32xf32> to vector<8x32xf32>
    %266 = arith.addf %263, %265 : vector<8x32xf32>
    %267 = arith.addf %266, %154 : vector<8x32xf32>
    %cst_109 = arith.constant dense<0.000000e+00> : vector<8xf32>
    %268 = vector.multi_reduction <add>, %267, %cst_109 [1] : vector<8x32xf32> to vector<8xf32>
    %269 = vector.shape_cast %268 : vector<8xf32> to vector<8x1xf32>
    %cst_110 = arith.constant 3.200000e+01 : f32
    %270 = vector.broadcast %cst_110 : f32 to vector<8x1xf32>
    %271 = arith.divf %269, %270 : vector<8x1xf32>
    %272 = vector.broadcast %271 : vector<8x1xf32> to vector<8x32xf32>
    %273 = arith.subf %267, %272 : vector<8x32xf32>
    %274 = arith.mulf %273, %273 : vector<8x32xf32>
    %cst_111 = arith.constant dense<0.000000e+00> : vector<8xf32>
    %275 = vector.multi_reduction <add>, %274, %cst_111 [1] : vector<8x32xf32> to vector<8xf32>
    %276 = vector.shape_cast %275 : vector<8xf32> to vector<8x1xf32>
    %cst_112 = arith.constant 3.200000e+01 : f32
    %277 = vector.broadcast %cst_112 : f32 to vector<8x1xf32>
    %278 = arith.divf %276, %277 : vector<8x1xf32>
    %279 = vector.broadcast %271 : vector<8x1xf32> to vector<8x32xf32>
    %280 = arith.subf %267, %279 : vector<8x32xf32>
    %cst_113 = arith.constant 9.99999974E-6 : f32
    %281 = vector.broadcast %cst_113 : f32 to vector<8x1xf32>
    %282 = arith.addf %278, %281 : vector<8x1xf32>
    %283 = math.rsqrt %282 : vector<8x1xf32>
    %284 = vector.broadcast %283 : vector<8x1xf32> to vector<8x32xf32>
    %285 = arith.mulf %280, %284 : vector<8x32xf32>
    %c0_114 = arith.constant 0 : index
    %c0_115 = arith.constant 0 : index
    %286 = vector.load %arg17[%c0_114, %c0_115] : memref<1x32xf32, #tpu.memory_space<vmem>>, vector<1x32xf32>
    %287 = vector.broadcast %286 : vector<1x32xf32> to vector<8x32xf32>
    %288 = arith.mulf %285, %287 : vector<8x32xf32>
    %c0_116 = arith.constant 0 : index
    %c0_117 = arith.constant 0 : index
    %289 = vector.load %arg18[%c0_116, %c0_117] : memref<1x32xf32, #tpu.memory_space<vmem>>, vector<1x32xf32>
    %290 = vector.broadcast %289 : vector<1x32xf32> to vector<8x32xf32>
    %291 = arith.addf %288, %290 : vector<8x32xf32>
    %c0_118 = arith.constant 0 : index
    %c0_119 = arith.constant 0 : index
    %292 = vector.load %arg19[%c0_118, %c0_119] : memref<32x64xf32, #tpu.memory_space<vmem>>, vector<32x64xf32>
    %cst_120 = arith.constant dense<0.000000e+00> : vector<8x64xf32>
    %293 = tpu.matmul %291, %292, %cst_120 {dimension_numbers = #tpu.dot_dimension_numbers<[1], [0], [0], [1], [0, 0, 1, 1], [], []>} : vector<8x32xf32>, vector<32x64xf32>, vector<8x64xf32> -> vector<8x64xf32>
    %c0_121 = arith.constant 0 : index
    %c0_122 = arith.constant 0 : index
    %294 = vector.load %arg20[%c0_121, %c0_122] : memref<1x64xf32, #tpu.memory_space<vmem>>, vector<1x64xf32>
    %295 = vector.broadcast %294 : vector<1x64xf32> to vector<8x64xf32>
    %296 = arith.addf %293, %295 : vector<8x64xf32>
    %cst_123 = arith.constant 0.000000e+00 : f32
    %297 = vector.broadcast %cst_123 : f32 to vector<8x64xf32>
    %298 = arith.maximumf %296, %297 : vector<8x64xf32>
    %c0_124 = arith.constant 0 : index
    %c0_125 = arith.constant 0 : index
    %299 = vector.load %arg21[%c0_124, %c0_125] : memref<64x32xf32, #tpu.memory_space<vmem>>, vector<64x32xf32>
    %cst_126 = arith.constant dense<0.000000e+00> : vector<8x32xf32>
    %300 = tpu.matmul %298, %299, %cst_126 {dimension_numbers = #tpu.dot_dimension_numbers<[1], [0], [0], [1], [0, 0, 1, 1], [], []>} : vector<8x64xf32>, vector<64x32xf32>, vector<8x32xf32> -> vector<8x32xf32>
    %c0_127 = arith.constant 0 : index
    %c0_128 = arith.constant 0 : index
    %301 = vector.load %arg22[%c0_127, %c0_128] : memref<1x32xf32, #tpu.memory_space<vmem>>, vector<1x32xf32>
    %302 = vector.broadcast %301 : vector<1x32xf32> to vector<8x32xf32>
    %303 = arith.addf %300, %302 : vector<8x32xf32>
    %304 = arith.addf %303, %291 : vector<8x32xf32>
    %cst_129 = arith.constant dense<0.000000e+00> : vector<8xf32>
    %305 = vector.multi_reduction <add>, %304, %cst_129 [1] : vector<8x32xf32> to vector<8xf32>
    %306 = vector.shape_cast %305 : vector<8xf32> to vector<8x1xf32>
    %cst_130 = arith.constant 3.200000e+01 : f32
    %307 = vector.broadcast %cst_130 : f32 to vector<8x1xf32>
    %308 = arith.divf %306, %307 : vector<8x1xf32>
    %309 = vector.broadcast %308 : vector<8x1xf32> to vector<8x32xf32>
    %310 = arith.subf %304, %309 : vector<8x32xf32>
    %311 = arith.mulf %310, %310 : vector<8x32xf32>
    %cst_131 = arith.constant dense<0.000000e+00> : vector<8xf32>
    %312 = vector.multi_reduction <add>, %311, %cst_131 [1] : vector<8x32xf32> to vector<8xf32>
    %313 = vector.shape_cast %312 : vector<8xf32> to vector<8x1xf32>
    %cst_132 = arith.constant 3.200000e+01 : f32
    %314 = vector.broadcast %cst_132 : f32 to vector<8x1xf32>
    %315 = arith.divf %313, %314 : vector<8x1xf32>
    %316 = vector.broadcast %308 : vector<8x1xf32> to vector<8x32xf32>
    %317 = arith.subf %304, %316 : vector<8x32xf32>
    %cst_133 = arith.constant 9.99999974E-6 : f32
    %318 = vector.broadcast %cst_133 : f32 to vector<8x1xf32>
    %319 = arith.addf %315, %318 : vector<8x1xf32>
    %320 = math.rsqrt %319 : vector<8x1xf32>
    %321 = vector.broadcast %320 : vector<8x1xf32> to vector<8x32xf32>
    %322 = arith.mulf %317, %321 : vector<8x32xf32>
    %c0_134 = arith.constant 0 : index
    %c0_135 = arith.constant 0 : index
    %323 = vector.load %arg23[%c0_134, %c0_135] : memref<1x32xf32, #tpu.memory_space<vmem>>, vector<1x32xf32>
    %324 = vector.broadcast %323 : vector<1x32xf32> to vector<8x32xf32>
    %325 = arith.mulf %322, %324 : vector<8x32xf32>
    %c0_136 = arith.constant 0 : index
    %c0_137 = arith.constant 0 : index
    %326 = vector.load %arg24[%c0_136, %c0_137] : memref<1x32xf32, #tpu.memory_space<vmem>>, vector<1x32xf32>
    %327 = vector.broadcast %326 : vector<1x32xf32> to vector<8x32xf32>
    %328 = arith.addf %325, %327 : vector<8x32xf32>
    %c0_138 = arith.constant 0 : index
    %c0_139 = arith.constant 0 : index
    %c0_140 = arith.constant 0 : index
    %329 = vector.load %arg25[%c0_138, %c0_139, %c0_140] : memref<1x8x32xf32, #tpu.memory_space<vmem>>, vector<1x8x32xf32>
    %330 = vector.shape_cast %329 : vector<1x8x32xf32> to vector<8x32xf32>
    %331 = vector.shape_cast %328 : vector<8x32xf32> to vector<1x8x32xf32>
    tpu.vector_store %arg25[%c0_138, %c0_139, %c0_140], %331 {strides = array<i32>} : memref<1x8x32xf32, #tpu.memory_space<vmem>>, vector<1x8x32xf32>,
    return
  }
  func.func @transform_0(%arg0: i32) -> (i32, i32, i32) {
    %c0_i32 = arith.constant 0 : i32
    %c0_i32_0 = arith.constant 0 : i32
    %c0_i32_1 = arith.constant 0 : i32
    return %arg0, %c0_i32, %c0_i32_0 : i32, i32, i32
  }
  func.func @transform_1(%arg0: i32) -> (i32, i32, i32) {
    %c0_i32 = arith.constant 0 : i32
    %c0_i32_0 = arith.constant 0 : i32
    %c0_i32_1 = arith.constant 0 : i32
    return %arg0, %c0_i32, %c0_i32_0 : i32, i32, i32
  }
  func.func @transform_2(%arg0: i32) -> (i32, i32, i32) {
    %c0_i32 = arith.constant 0 : i32
    %c0_i32_0 = arith.constant 0 : i32
    %c0_i32_1 = arith.constant 0 : i32
    return %arg0, %c0_i32, %c0_i32_0 : i32, i32, i32
  }
  func.func @transform_3(%arg0: i32) -> (i32, i32, i32) {
    %c0_i32 = arith.constant 0 : i32
    %c0_i32_0 = arith.constant 0 : i32
    %c0_i32_1 = arith.constant 0 : i32
    return %arg0, %c0_i32, %c0_i32_0 : i32, i32, i32
  }
  func.func @transform_4(%arg0: i32) -> (i32, i32) {
    %c0_i32 = arith.constant 0 : i32
    %c0_i32_0 = arith.constant 0 : i32
    %c0_i32_1 = arith.constant 0 : i32
    return %c0_i32, %c0_i32_0 : i32, i32
  }
  func.func @transform_5(%arg0: i32) -> (i32, i32) {
    %c0_i32 = arith.constant 0 : i32
    %c0_i32_0 = arith.constant 0 : i32
    %c0_i32_1 = arith.constant 0 : i32
    return %c0_i32, %c0_i32_0 : i32, i32
  }
  func.func @transform_6(%arg0: i32) -> (i32, i32) {
    %c0_i32 = arith.constant 0 : i32
    %c0_i32_0 = arith.constant 0 : i32
    %c0_i32_1 = arith.constant 0 : i32
    return %c0_i32, %c0_i32_0 : i32, i32
  }
  func.func @transform_7(%arg0: i32) -> (i32, i32) {
    %c0_i32 = arith.constant 0 : i32
    %c0_i32_0 = arith.constant 0 : i32
    %c0_i32_1 = arith.constant 0 : i32
    return %c0_i32, %c0_i32_0 : i32, i32
  }
  func.func @transform_8(%arg0: i32) -> (i32, i32) {
    %c0_i32 = arith.constant 0 : i32
    %c0_i32_0 = arith.constant 0 : i32
    %c0_i32_1 = arith.constant 0 : i32
    return %c0_i32, %c0_i32_0 : i32, i32
  }
  func.func @transform_9(%arg0: i32) -> (i32, i32) {
    %c0_i32 = arith.constant 0 : i32
    %c0_i32_0 = arith.constant 0 : i32
    %c0_i32_1 = arith.constant 0 : i32
    return %c0_i32, %c0_i32_0 : i32, i32
  }
  func.func @transform_10(%arg0: i32) -> (i32, i32) {
    %c0_i32 = arith.constant 0 : i32
    %c0_i32_0 = arith.constant 0 : i32
    %c0_i32_1 = arith.constant 0 : i32
    return %c0_i32, %c0_i32_0 : i32, i32
  }
  func.func @transform_11(%arg0: i32) -> (i32, i32) {
    %c0_i32 = arith.constant 0 : i32
    %c0_i32_0 = arith.constant 0 : i32
    %c0_i32_1 = arith.constant 0 : i32
    return %c0_i32, %c0_i32_0 : i32, i32
  }
  func.func @transform_12(%arg0: i32) -> (i32, i32) {
    %c0_i32 = arith.constant 0 : i32
    %c0_i32_0 = arith.constant 0 : i32
    %c0_i32_1 = arith.constant 0 : i32
    return %c0_i32, %c0_i32_0 : i32, i32
  }
  func.func @transform_13(%arg0: i32) -> (i32, i32) {
    %c0_i32 = arith.constant 0 : i32
    %c0_i32_0 = arith.constant 0 : i32
    %c0_i32_1 = arith.constant 0 : i32
    return %c0_i32, %c0_i32_0 : i32, i32
  }
  func.func @transform_14(%arg0: i32) -> (i32, i32) {
    %c0_i32 = arith.constant 0 : i32
    %c0_i32_0 = arith.constant 0 : i32
    %c0_i32_1 = arith.constant 0 : i32
    return %c0_i32, %c0_i32_0 : i32, i32
  }
  func.func @transform_15(%arg0: i32) -> (i32, i32) {
    %c0_i32 = arith.constant 0 : i32
    %c0_i32_0 = arith.constant 0 : i32
    %c0_i32_1 = arith.constant 0 : i32
    return %c0_i32, %c0_i32_0 : i32, i32
  }
  func.func @transform_16(%arg0: i32) -> (i32, i32) {
    %c0_i32 = arith.constant 0 : i32
    %c0_i32_0 = arith.constant 0 : i32
    %c0_i32_1 = arith.constant 0 : i32
    return %c0_i32, %c0_i32_0 : i32, i32
  }
  func.func @transform_17(%arg0: i32) -> (i32, i32) {
    %c0_i32 = arith.constant 0 : i32
    %c0_i32_0 = arith.constant 0 : i32
    %c0_i32_1 = arith.constant 0 : i32
    return %c0_i32, %c0_i32_0 : i32, i32
  }
  func.func @transform_18(%arg0: i32) -> (i32, i32) {
    %c0_i32 = arith.constant 0 : i32
    %c0_i32_0 = arith.constant 0 : i32
    %c0_i32_1 = arith.constant 0 : i32
    return %c0_i32, %c0_i32_0 : i32, i32
  }
  func.func @transform_19(%arg0: i32) -> (i32, i32) {
    %c0_i32 = arith.constant 0 : i32
    %c0_i32_0 = arith.constant 0 : i32
    %c0_i32_1 = arith.constant 0 : i32
    return %c0_i32, %c0_i32_0 : i32, i32
  }
  func.func @transform_20(%arg0: i32) -> (i32, i32) {
    %c0_i32 = arith.constant 0 : i32
    %c0_i32_0 = arith.constant 0 : i32
    %c0_i32_1 = arith.constant 0 : i32
    return %c0_i32, %c0_i32_0 : i32, i32
  }
  func.func @transform_21(%arg0: i32) -> (i32, i32) {
    %c0_i32 = arith.constant 0 : i32
    %c0_i32_0 = arith.constant 0 : i32
    %c0_i32_1 = arith.constant 0 : i32
    return %c0_i32, %c0_i32_0 : i32, i32
  }
  func.func @transform_22(%arg0: i32) -> (i32, i32) {
    %c0_i32 = arith.constant 0 : i32
    %c0_i32_0 = arith.constant 0 : i32
    %c0_i32_1 = arith.constant 0 : i32
    return %c0_i32, %c0_i32_0 : i32, i32
  }
  func.func @transform_23(%arg0: i32) -> (i32, i32) {
    %c0_i32 = arith.constant 0 : i32
    %c0_i32_0 = arith.constant 0 : i32
    %c0_i32_1 = arith.constant 0 : i32
    return %c0_i32, %c0_i32_0 : i32, i32
  }
  func.func @transform_24(%arg0: i32) -> (i32, i32, i32) {
    %c0_i32 = arith.constant 0 : i32
    %c0_i32_0 = arith.constant 0 : i32
    %c0_i32_1 = arith.constant 0 : i32
    return %arg0, %c0_i32, %c0_i32_0 : i32, i32, i32
  }
}

module attributes {stable_mosaic.version = 11 : i64} {
  func.func @_decoder_block_kernel(%arg0: i32, %arg1: memref<1x8x32xf32, #tpu.memory_space<vmem>>, %arg2: memref<1x8x32xf32, #tpu.memory_space<vmem>>, %arg3: memref<1x8x8xf32, #tpu.memory_space<vmem>>, %arg4: memref<1x8x8xf32, #tpu.memory_space<vmem>>, %arg5: memref<32x32xf32, #tpu.memory_space<vmem>>, %arg6: memref<32x32xf32, #tpu.memory_space<vmem>>, %arg7: memref<32x32xf32, #tpu.memory_space<vmem>>, %arg8: memref<32x32xf32, #tpu.memory_space<vmem>>, %arg9: memref<1x32xf32, #tpu.memory_space<vmem>>, %arg10: memref<1x32xf32, #tpu.memory_space<vmem>>, %arg11: memref<1x32xf32, #tpu.memory_space<vmem>>, %arg12: memref<32x32xf32, #tpu.memory_space<vmem>>, %arg13: memref<32x32xf32, #tpu.memory_space<vmem>>, %arg14: memref<32x32xf32, #tpu.memory_space<vmem>>, %arg15: memref<32x32xf32, #tpu.memory_space<vmem>>, %arg16: memref<1x32xf32, #tpu.memory_space<vmem>>, %arg17: memref<1x32xf32, #tpu.memory_space<vmem>>, %arg18: memref<1x32xf32, #tpu.memory_space<vmem>>, %arg19: memref<32x64xf32, #tpu.memory_space<vmem>>, %arg20: memref<1x64xf32, #tpu.memory_space<vmem>>, %arg21: memref<64x32xf32, #tpu.memory_space<vmem>>, %arg22: memref<1x32xf32, #tpu.memory_space<vmem>>, %arg23: memref<1x32xf32, #tpu.memory_space<vmem>>, %arg24: memref<1x32xf32, #tpu.memory_space<vmem>>, %arg25: memref<1x8x32xf32, #tpu.memory_space<vmem>>) attributes {dimension_semantics = [#tpu.dimension_semantics<parallel>], iteration_bounds = array<i64: 2>, scalar_prefetch = 0 : i64, scratch_operands = 0 : i64, tpu.core_type = #tpu.core_type<tc>, window_params = [{transform_indices = @transform_0, window_bounds = array<i64: 1, 8, 32>}, {transform_indices = @transform_1, window_bounds = array<i64: 1, 8, 32>}, {transform_indices = @transform_2, window_bounds = array<i64: 1, 8, 8>}, {transform_indices = @transform_3, window_bounds = array<i64: 1, 8, 8>}, {pipeline_mode = #tpu.pipeline_mode<synchronous>, transform_indices = @transform_4, window_bounds = array<i64: 32, 32>}, {pipeline_mode = #tpu.pipeline_mode<synchronous>, transform_indices = @transform_5, window_bounds = array<i64: 32, 32>}, {pipeline_mode = #tpu.pipeline_mode<synchronous>, transform_indices = @transform_6, window_bounds = array<i64: 32, 32>}, {pipeline_mode = #tpu.pipeline_mode<synchronous>, transform_indices = @transform_7, window_bounds = array<i64: 32, 32>}, {pipeline_mode = #tpu.pipeline_mode<synchronous>, transform_indices = @transform_8, window_bounds = array<i64: 1, 32>}, {pipeline_mode = #tpu.pipeline_mode<synchronous>, transform_indices = @transform_9, window_bounds = array<i64: 1, 32>}, {pipeline_mode = #tpu.pipeline_mode<synchronous>, transform_indices = @transform_10, window_bounds = array<i64: 1, 32>}, {pipeline_mode = #tpu.pipeline_mode<synchronous>, transform_indices = @transform_11, window_bounds = array<i64: 32, 32>}, {pipeline_mode = #tpu.pipeline_mode<synchronous>, transform_indices = @transform_12, window_bounds = array<i64: 32, 32>}, {pipeline_mode = #tpu.pipeline_mode<synchronous>, transform_indices = @transform_13, window_bounds = array<i64: 32, 32>}, {pipeline_mode = #tpu.pipeline_mode<synchronous>, transform_indices = @transform_14, window_bounds = array<i64: 32, 32>}, {pipeline_mode = #tpu.pipeline_mode<synchronous>, transform_indices = @transform_15, window_bounds = array<i64: 1, 32>}, {pipeline_mode = #tpu.pipeline_mode<synchronous>, transform_indices = @transform_16, window_bounds = array<i64: 1, 32>}, {pipeline_mode = #tpu.pipeline_mode<synchronous>, transform_indices = @transform_17, window_bounds = array<i64: 1, 32>}, {pipeline_mode = #tpu.pipeline_mode<synchronous>, transform_indices = @transform_18, window_bounds = array<i64: 32, 64>}, {pipeline_mode = #tpu.pipeline_mode<synchronous>, transform_indices = @transform_19, window_bounds = array<i64: 1, 64>}, {pipeline_mode = #tpu.pipeline_mode<synchronous>, transform_indices = @transform_20, window_bounds = array<i64: 64, 32>}, {pipeline_mode = #tpu.pipeline_mode<synchronous>, transform_indices = @transform_21, window_bounds = array<i64: 1, 32>}, {pipeline_mode = #tpu.pipeline_mode<synchronous>, transform_indices = @transform_22, window_bounds = array<i64: 1, 32>}, {pipeline_mode = #tpu.pipeline_mode<synchronous>, transform_indices = @transform_23, window_bounds = array<i64: 1, 32>}, {transform_indices = @transform_24, window_bounds = array<i64: 1, 8, 32>}]} {
    %c0 = arith.constant 0 : index
    %c0_0 = arith.constant 0 : index
    %c0_1 = arith.constant 0 : index
    %0 = vector.load %arg1[%c0, %c0_0, %c0_1] : memref<1x8x32xf32, #tpu.memory_space<vmem>>, vector<1x8x32xf32>
    %1 = vector.shape_cast %0 : vector<1x8x32xf32> to vector<8x32xf32>
    %c0_2 = arith.constant 0 : index
    %c0_3 = arith.constant 0 : index
    %c0_4 = arith.constant 0 : index
    %2 = vector.load %arg2[%c0_2, %c0_3, %c0_4] : memref<1x8x32xf32, #tpu.memory_space<vmem>>, vector<1x8x32xf32>
    %3 = vector.shape_cast %2 : vector<1x8x32xf32> to vector<8x32xf32>
    %c0_5 = arith.constant 0 : index
    %c0_6 = arith.constant 0 : index
    %c0_7 = arith.constant 0 : index
    %4 = vector.load %arg3[%c0_5, %c0_6, %c0_7] : memref<1x8x8xf32, #tpu.memory_space<vmem>>, vector<1x8x8xf32>
    %5 = vector.shape_cast %4 : vector<1x8x8xf32> to vector<8x8xf32>
    %cst = arith.constant 0.000000e+00 : f32
    %6 = vector.broadcast %cst : f32 to vector<8x8xf32>
    %7 = arith.cmpf oeq, %5, %6 : vector<8x8xf32>
    %cst_8 = arith.constant -1.000000e+30 : f32
    %cst_9 = arith.constant 0.000000e+00 : f32
    %8 = vector.broadcast %cst_8 : f32 to vector<8x8xf32>
    %9 = vector.broadcast %cst_9 : f32 to vector<8x8xf32>
    %10 = arith.select %7, %8, %9 : vector<8x8xi1>, vector<8x8xf32>
    %c0_10 = arith.constant 0 : index
    %c0_11 = arith.constant 0 : index
    %c0_12 = arith.constant 0 : index
    %11 = vector.load %arg4[%c0_10, %c0_11, %c0_12] : memref<1x8x8xf32, #tpu.memory_space<vmem>>, vector<1x8x8xf32>
    %12 = vector.shape_cast %11 : vector<1x8x8xf32> to vector<8x8xf32>
    %cst_13 = arith.constant 0.000000e+00 : f32
    %13 = vector.broadcast %cst_13 : f32 to vector<8x8xf32>
    %14 = arith.cmpf oeq, %12, %13 : vector<8x8xf32>
    %cst_14 = arith.constant -1.000000e+30 : f32
    %cst_15 = arith.constant 0.000000e+00 : f32
    %15 = vector.broadcast %cst_14 : f32 to vector<8x8xf32>
    %16 = vector.broadcast %cst_15 : f32 to vector<8x8xf32>
    %17 = arith.select %14, %15, %16 : vector<8x8xi1>, vector<8x8xf32>
    %c0_16 = arith.constant 0 : index
    %c0_17 = arith.constant 0 : index
    %18 = vector.load %arg5[%c0_16, %c0_17] : memref<32x32xf32, #tpu.memory_space<vmem>>, vector<32x32xf32>
    %cst_18 = arith.constant dense<0.000000e+00> : vector<8x32xf32>
    %19 = tpu.matmul %1, %18, %cst_18 {dimension_numbers = #tpu.dot_dimension_numbers<[1], [0], [0], [1], [0, 0, 1, 1], [], []>} : vector<8x32xf32>, vector<32x32xf32>, vector<8x32xf32> -> vector<8x32xf32>
    %c0_19 = arith.constant 0 : index
    %c0_20 = arith.constant 0 : index
    %20 = vector.load %arg6[%c0_19, %c0_20] : memref<32x32xf32, #tpu.memory_space<vmem>>, vector<32x32xf32>
    %cst_21 = arith.constant dense<0.000000e+00> : vector<8x32xf32>
    %21 = tpu.matmul %1, %20, %cst_21 {dimension_numbers = #tpu.dot_dimension_numbers<[1], [0], [0], [1], [0, 0, 1, 1], [], []>} : vector<8x32xf32>, vector<32x32xf32>, vector<8x32xf32> -> vector<8x32xf32>
    %c0_22 = arith.constant 0 : index
    %c0_23 = arith.constant 0 : index
    %22 = vector.load %arg7[%c0_22, %c0_23] : memref<32x32xf32, #tpu.memory_space<vmem>>, vector<32x32xf32>
    %cst_24 = arith.constant dense<0.000000e+00> : vector<8x32xf32>
    %23 = tpu.matmul %1, %22, %cst_24 {dimension_numbers = #tpu.dot_dimension_numbers<[1], [0], [0], [1], [0, 0, 1, 1], [], []>} : vector<8x32xf32>, vector<32x32xf32>, vector<8x32xf32> -> vector<8x32xf32>
    %24 = vector.extract_strided_slice %19 {offsets = [0, 0], sizes = [8, 8], strides = [1, 1]} : vector<8x32xf32> to vector<8x8xf32>
    %25 = vector.extract_strided_slice %21 {offsets = [0, 0], sizes = [8, 8], strides = [1, 1]} : vector<8x32xf32> to vector<8x8xf32>
    %cst_25 = arith.constant dense<0.000000e+00> : vector<8x8xf32>
    %26 = tpu.matmul %24, %25, %cst_25 {dimension_numbers = #tpu.dot_dimension_numbers<[1], [1], [0], [0], [0, 0, 1, 0], [], []>} : vector<8x8xf32>, vector<8x8xf32>, vector<8x8xf32> -> vector<8x8xf32>
    %cst_26 = arith.constant 0.176776692 : f32
    %27 = vector.broadcast %cst_26 : f32 to vector<8x8xf32>
    %28 = arith.mulf %26, %27 : vector<8x8xf32>
    %29 = arith.addf %28, %10 : vector<8x8xf32>
    %cst_27 = arith.constant dense<0xFF800000> : vector<8xf32>
    %30 = vector.multi_reduction <maximumf>, %29, %cst_27 [1] : vector<8x8xf32> to vector<8xf32>
    %cst_28 = arith.constant 0xFF800000 : f32
    %31 = vector.broadcast %cst_28 : f32 to vector<8xf32>
    %32 = arith.maximumf %31, %30 : vector<8xf32>
    %33 = vector.shape_cast %32 : vector<8xf32> to vector<8x1xf32>
    %34 = vector.broadcast %33 : vector<8x1xf32> to vector<8x8xf32>
    %35 = arith.subf %29, %34 : vector<8x8xf32>
    %36 = math.exp %35 : vector<8x8xf32>
    %cst_29 = arith.constant dense<0.000000e+00> : vector<8xf32>
    %37 = vector.multi_reduction <add>, %36, %cst_29 [1] : vector<8x8xf32> to vector<8xf32>
    %38 = vector.shape_cast %37 : vector<8xf32> to vector<8x1xf32>
    %39 = vector.broadcast %38 : vector<8x1xf32> to vector<8x8xf32>
    %40 = arith.divf %36, %39 : vector<8x8xf32>
    %cst_30 = arith.constant dense<0.000000e+00> : vector<8xf32>
    %41 = vector.multi_reduction <add>, %40, %cst_30 [1] : vector<8x8xf32> to vector<8xf32>
    %42 = vector.shape_cast %41 : vector<8xf32> to vector<8x1xf32>
    %43 = vector.extract_strided_slice %23 {offsets = [0, 0], sizes = [8, 8], strides = [1, 1]} : vector<8x32xf32> to vector<8x8xf32>
    %cst_31 = arith.constant dense<0.000000e+00> : vector<8xf32>
    %44 = vector.multi_reduction <add>, %43, %cst_31 [0] : vector<8x8xf32> to vector<8xf32>
    %45 = vector.shape_cast %44 : vector<8xf32> to vector<1x8xf32>
    %46 = vector.broadcast %42 : vector<8x1xf32> to vector<8x8xf32>
    %47 = vector.broadcast %45 : vector<1x8xf32> to vector<8x8xf32>
    %48 = arith.mulf %46, %47 : vector<8x8xf32>
    %49 = vector.extract_strided_slice %19 {offsets = [0, 8], sizes = [8, 8], strides = [1, 1]} : vector<8x32xf32> to vector<8x8xf32>
    %50 = vector.extract_strided_slice %21 {offsets = [0, 8], sizes = [8, 8], strides = [1, 1]} : vector<8x32xf32> to vector<8x8xf32>
    %cst_32 = arith.constant dense<0.000000e+00> : vector<8x8xf32>
    %51 = tpu.matmul %49, %50, %cst_32 {dimension_numbers = #tpu.dot_dimension_numbers<[1], [1], [0], [0], [0, 0, 1, 0], [], []>} : vector<8x8xf32>, vector<8x8xf32>, vector<8x8xf32> -> vector<8x8xf32>
    %cst_33 = arith.constant 0.176776692 : f32
    %52 = vector.broadcast %cst_33 : f32 to vector<8x8xf32>
    %53 = arith.mulf %51, %52 : vector<8x8xf32>
    %54 = arith.addf %53, %10 : vector<8x8xf32>
    %cst_34 = arith.constant dense<0xFF800000> : vector<8xf32>
    %55 = vector.multi_reduction <maximumf>, %54, %cst_34 [1] : vector<8x8xf32> to vector<8xf32>
    %cst_35 = arith.constant 0xFF800000 : f32
    %56 = vector.broadcast %cst_35 : f32 to vector<8xf32>
    %57 = arith.maximumf %56, %55 : vector<8xf32>
    %58 = vector.shape_cast %57 : vector<8xf32> to vector<8x1xf32>
    %59 = vector.broadcast %58 : vector<8x1xf32> to vector<8x8xf32>
    %60 = arith.subf %54, %59 : vector<8x8xf32>
    %61 = math.exp %60 : vector<8x8xf32>
    %cst_36 = arith.constant dense<0.000000e+00> : vector<8xf32>
    %62 = vector.multi_reduction <add>, %61, %cst_36 [1] : vector<8x8xf32> to vector<8xf32>
    %63 = vector.shape_cast %62 : vector<8xf32> to vector<8x1xf32>
    %64 = vector.broadcast %63 : vector<8x1xf32> to vector<8x8xf32>
    %65 = arith.divf %61, %64 : vector<8x8xf32>
    %cst_37 = arith.constant dense<0.000000e+00> : vector<8xf32>
    %66 = vector.multi_reduction <add>, %65, %cst_37 [1] : vector<8x8xf32> to vector<8xf32>
    %67 = vector.shape_cast %66 : vector<8xf32> to vector<8x1xf32>
    %68 = vector.extract_strided_slice %23 {offsets = [0, 8], sizes = [8, 8], strides = [1, 1]} : vector<8x32xf32> to vector<8x8xf32>
    %cst_38 = arith.constant dense<0.000000e+00> : vector<8xf32>
    %69 = vector.multi_reduction <add>, %68, %cst_38 [0] : vector<8x8xf32> to vector<8xf32>
    %70 = vector.shape_cast %69 : vector<8xf32> to vector<1x8xf32>
    %71 = vector.broadcast %67 : vector<8x1xf32> to vector<8x8xf32>
    %72 = vector.broadcast %70 : vector<1x8xf32> to vector<8x8xf32>
    %73 = arith.mulf %71, %72 : vector<8x8xf32>
    %74 = vector.extract_strided_slice %19 {offsets = [0, 16], sizes = [8, 8], strides = [1, 1]} : vector<8x32xf32> to vector<8x8xf32>
    %75 = vector.extract_strided_slice %21 {offsets = [0, 16], sizes = [8, 8], strides = [1, 1]} : vector<8x32xf32> to vector<8x8xf32>
    %cst_39 = arith.constant dense<0.000000e+00> : vector<8x8xf32>
    %76 = tpu.matmul %74, %75, %cst_39 {dimension_numbers = #tpu.dot_dimension_numbers<[1], [1], [0], [0], [0, 0, 1, 0], [], []>} : vector<8x8xf32>, vector<8x8xf32>, vector<8x8xf32> -> vector<8x8xf32>
    %cst_40 = arith.constant 0.176776692 : f32
    %77 = vector.broadcast %cst_40 : f32 to vector<8x8xf32>
    %78 = arith.mulf %76, %77 : vector<8x8xf32>
    %79 = arith.addf %78, %10 : vector<8x8xf32>
    %cst_41 = arith.constant dense<0xFF800000> : vector<8xf32>
    %80 = vector.multi_reduction <maximumf>, %79, %cst_41 [1] : vector<8x8xf32> to vector<8xf32>
    %cst_42 = arith.constant 0xFF800000 : f32
    %81 = vector.broadcast %cst_42 : f32 to vector<8xf32>
    %82 = arith.maximumf %81, %80 : vector<8xf32>
    %83 = vector.shape_cast %82 : vector<8xf32> to vector<8x1xf32>
    %84 = vector.broadcast %83 : vector<8x1xf32> to vector<8x8xf32>
    %85 = arith.subf %79, %84 : vector<8x8xf32>
    %86 = math.exp %85 : vector<8x8xf32>
    %cst_43 = arith.constant dense<0.000000e+00> : vector<8xf32>
    %87 = vector.multi_reduction <add>, %86, %cst_43 [1] : vector<8x8xf32> to vector<8xf32>
    %88 = vector.shape_cast %87 : vector<8xf32> to vector<8x1xf32>
    %89 = vector.broadcast %88 : vector<8x1xf32> to vector<8x8xf32>
    %90 = arith.divf %86, %89 : vector<8x8xf32>
    %cst_44 = arith.constant dense<0.000000e+00> : vector<8xf32>
    %91 = vector.multi_reduction <add>, %90, %cst_44 [1] : vector<8x8xf32> to vector<8xf32>
    %92 = vector.shape_cast %91 : vector<8xf32> to vector<8x1xf32>
    %93 = vector.extract_strided_slice %23 {offsets = [0, 16], sizes = [8, 8], strides = [1, 1]} : vector<8x32xf32> to vector<8x8xf32>
    %cst_45 = arith.constant dense<0.000000e+00> : vector<8xf32>
    %94 = vector.multi_reduction <add>, %93, %cst_45 [0] : vector<8x8xf32> to vector<8xf32>
    %95 = vector.shape_cast %94 : vector<8xf32> to vector<1x8xf32>
    %96 = vector.broadcast %92 : vector<8x1xf32> to vector<8x8xf32>
    %97 = vector.broadcast %95 : vector<1x8xf32> to vector<8x8xf32>
    %98 = arith.mulf %96, %97 : vector<8x8xf32>
    %99 = vector.extract_strided_slice %19 {offsets = [0, 24], sizes = [8, 8], strides = [1, 1]} : vector<8x32xf32> to vector<8x8xf32>
    %100 = vector.extract_strided_slice %21 {offsets = [0, 24], sizes = [8, 8], strides = [1, 1]} : vector<8x32xf32> to vector<8x8xf32>
    %cst_46 = arith.constant dense<0.000000e+00> : vector<8x8xf32>
    %101 = tpu.matmul %99, %100, %cst_46 {dimension_numbers = #tpu.dot_dimension_numbers<[1], [1], [0], [0], [0, 0, 1, 0], [], []>} : vector<8x8xf32>, vector<8x8xf32>, vector<8x8xf32> -> vector<8x8xf32>
    %cst_47 = arith.constant 0.176776692 : f32
    %102 = vector.broadcast %cst_47 : f32 to vector<8x8xf32>
    %103 = arith.mulf %101, %102 : vector<8x8xf32>
    %104 = arith.addf %103, %10 : vector<8x8xf32>
    %cst_48 = arith.constant dense<0xFF800000> : vector<8xf32>
    %105 = vector.multi_reduction <maximumf>, %104, %cst_48 [1] : vector<8x8xf32> to vector<8xf32>
    %cst_49 = arith.constant 0xFF800000 : f32
    %106 = vector.broadcast %cst_49 : f32 to vector<8xf32>
    %107 = arith.maximumf %106, %105 : vector<8xf32>
    %108 = vector.shape_cast %107 : vector<8xf32> to vector<8x1xf32>
    %109 = vector.broadcast %108 : vector<8x1xf32> to vector<8x8xf32>
    %110 = arith.subf %104, %109 : vector<8x8xf32>
    %111 = math.exp %110 : vector<8x8xf32>
    %cst_50 = arith.constant dense<0.000000e+00> : vector<8xf32>
    %112 = vector.multi_reduction <add>, %111, %cst_50 [1] : vector<8x8xf32> to vector<8xf32>
    %113 = vector.shape_cast %112 : vector<8xf32> to vector<8x1xf32>
    %114 = vector.broadcast %113 : vector<8x1xf32> to vector<8x8xf32>
    %115 = arith.divf %111, %114 : vector<8x8xf32>
    %cst_51 = arith.constant dense<0.000000e+00> : vector<8xf32>
    %116 = vector.multi_reduction <add>, %115, %cst_51 [1] : vector<8x8xf32> to vector<8xf32>
    %117 = vector.shape_cast %116 : vector<8xf32> to vector<8x1xf32>
    %118 = vector.extract_strided_slice %23 {offsets = [0, 24], sizes = [8, 8], strides = [1, 1]} : vector<8x32xf32> to vector<8x8xf32>
    %cst_52 = arith.constant dense<0.000000e+00> : vector<8xf32>
    %119 = vector.multi_reduction <add>, %118, %cst_52 [0] : vector<8x8xf32> to vector<8xf32>
    %120 = vector.shape_cast %119 : vector<8xf32> to vector<1x8xf32>
    %121 = vector.broadcast %117 : vector<8x1xf32> to vector<8x8xf32>
    %122 = vector.broadcast %120 : vector<1x8xf32> to vector<8x8xf32>
    %123 = arith.mulf %121, %122 : vector<8x8xf32>
    %124 = tpu.concatenate %48, %73, %98, %123 in 1 : vector<8x8xf32>, vector<8x8xf32>, vector<8x8xf32>, vector<8x8xf32> -> vector<8x32xf32>
    %c0_53 = arith.constant 0 : index
    %c0_54 = arith.constant 0 : index
    %125 = vector.load %arg8[%c0_53, %c0_54] : memref<32x32xf32, #tpu.memory_space<vmem>>, vector<32x32xf32>
    %cst_55 = arith.constant dense<0.000000e+00> : vector<8x32xf32>
    %126 = tpu.matmul %124, %125, %cst_55 {dimension_numbers = #tpu.dot_dimension_numbers<[1], [0], [0], [1], [0, 0, 1, 1], [], []>} : vector<8x32xf32>, vector<32x32xf32>, vector<8x32xf32> -> vector<8x32xf32>
    %c0_56 = arith.constant 0 : index
    %c0_57 = arith.constant 0 : index
    %127 = vector.load %arg9[%c0_56, %c0_57] : memref<1x32xf32, #tpu.memory_space<vmem>>, vector<1x32xf32>
    %128 = vector.broadcast %127 : vector<1x32xf32> to vector<8x32xf32>
    %129 = arith.addf %126, %128 : vector<8x32xf32>
    %130 = arith.addf %129, %1 : vector<8x32xf32>
    %cst_58 = arith.constant dense<0.000000e+00> : vector<8xf32>
    %131 = vector.multi_reduction <add>, %130, %cst_58 [1] : vector<8x32xf32> to vector<8xf32>
    %132 = vector.shape_cast %131 : vector<8xf32> to vector<8x1xf32>
    %cst_59 = arith.constant 3.200000e+01 : f32
    %133 = vector.broadcast %cst_59 : f32 to vector<8x1xf32>
    %134 = arith.divf %132, %133 : vector<8x1xf32>
    %135 = vector.broadcast %134 : vector<8x1xf32> to vector<8x32xf32>
    %136 = arith.subf %130, %135 : vector<8x32xf32>
    %137 = arith.mulf %136, %136 : vector<8x32xf32>
    %cst_60 = arith.constant dense<0.000000e+00> : vector<8xf32>
    %138 = vector.multi_reduction <add>, %137, %cst_60 [1] : vector<8x32xf32> to vector<8xf32>
    %139 = vector.shape_cast %138 : vector<8xf32> to vector<8x1xf32>
    %cst_61 = arith.constant 3.200000e+01 : f32
    %140 = vector.broadcast %cst_61 : f32 to vector<8x1xf32>
    %141 = arith.divf %139, %140 : vector<8x1xf32>
    %142 = vector.broadcast %134 : vector<8x1xf32> to vector<8x32xf32>
    %143 = arith.subf %130, %142 : vector<8x32xf32>
    %cst_62 = arith.constant 9.99999974E-6 : f32
    %144 = vector.broadcast %cst_62 : f32 to vector<8x1xf32>
    %145 = arith.addf %141, %144 : vector<8x1xf32>
    %146 = math.rsqrt %145 : vector<8x1xf32>
    %147 = vector.broadcast %146 : vector<8x1xf32> to vector<8x32xf32>
    %148 = arith.mulf %143, %147 : vector<8x32xf32>
    %c0_63 = arith.constant 0 : index
    %c0_64 = arith.constant 0 : index
    %149 = vector.load %arg10[%c0_63, %c0_64] : memref<1x32xf32, #tpu.memory_space<vmem>>, vector<1x32xf32>
    %150 = vector.broadcast %149 : vector<1x32xf32> to vector<8x32xf32>
    %151 = arith.mulf %148, %150 : vector<8x32xf32>
    %c0_65 = arith.constant 0 : index
    %c0_66 = arith.constant 0 : index
    %152 = vector.load %arg11[%c0_65, %c0_66] : memref<1x32xf32, #tpu.memory_space<vmem>>, vector<1x32xf32>
    %153 = vector.broadcast %152 : vector<1x32xf32> to vector<8x32xf32>
    %154 = arith.addf %151, %153 : vector<8x32xf32>
    %c0_67 = arith.constant 0 : index
    %c0_68 = arith.constant 0 : index
    %155 = vector.load %arg12[%c0_67, %c0_68] : memref<32x32xf32, #tpu.memory_space<vmem>>, vector<32x32xf32>
    %cst_69 = arith.constant dense<0.000000e+00> : vector<8x32xf32>
    %156 = tpu.matmul %154, %155, %cst_69 {dimension_numbers = #tpu.dot_dimension_numbers<[1], [0], [0], [1], [0, 0, 1, 1], [], []>} : vector<8x32xf32>, vector<32x32xf32>, vector<8x32xf32> -> vector<8x32xf32>
    %c0_70 = arith.constant 0 : index
    %c0_71 = arith.constant 0 : index
    %157 = vector.load %arg13[%c0_70, %c0_71] : memref<32x32xf32, #tpu.memory_space<vmem>>, vector<32x32xf32>
    %cst_72 = arith.constant dense<0.000000e+00> : vector<8x32xf32>
    %158 = tpu.matmul %3, %157, %cst_72 {dimension_numbers = #tpu.dot_dimension_numbers<[1], [0], [0], [1], [0, 0, 1, 1], [], []>} : vector<8x32xf32>, vector<32x32xf32>, vector<8x32xf32> -> vector<8x32xf32>
    %c0_73 = arith.constant 0 : index
    %c0_74 = arith.constant 0 : index
    %159 = vector.load %arg14[%c0_73, %c0_74] : memref<32x32xf32, #tpu.memory_space<vmem>>, vector<32x32xf32>
    %cst_75 = arith.constant dense<0.000000e+00> : vector<8x32xf32>
    %160 = tpu.matmul %3, %159, %cst_75 {dimension_numbers = #tpu.dot_dimension_numbers<[1], [0], [0], [1], [0, 0, 1, 1], [], []>} : vector<8x32xf32>, vector<32x32xf32>, vector<8x32xf32> -> vector<8x32xf32>
    %161 = vector.extract_strided_slice %156 {offsets = [0, 0], sizes = [8, 8], strides = [1, 1]} : vector<8x32xf32> to vector<8x8xf32>
    %162 = vector.extract_strided_slice %158 {offsets = [0, 0], sizes = [8, 8], strides = [1, 1]} : vector<8x32xf32> to vector<8x8xf32>
    %cst_76 = arith.constant dense<0.000000e+00> : vector<8x8xf32>
    %163 = tpu.matmul %161, %162, %cst_76 {dimension_numbers = #tpu.dot_dimension_numbers<[1], [1], [0], [0], [0, 0, 1, 0], [], []>} : vector<8x8xf32>, vector<8x8xf32>, vector<8x8xf32> -> vector<8x8xf32>
    %cst_77 = arith.constant 0.176776692 : f32
    %164 = vector.broadcast %cst_77 : f32 to vector<8x8xf32>
    %165 = arith.mulf %163, %164 : vector<8x8xf32>
    %166 = arith.addf %165, %17 : vector<8x8xf32>
    %cst_78 = arith.constant dense<0xFF800000> : vector<8xf32>
    %167 = vector.multi_reduction <maximumf>, %166, %cst_78 [1] : vector<8x8xf32> to vector<8xf32>
    %cst_79 = arith.constant 0xFF800000 : f32
    %168 = vector.broadcast %cst_79 : f32 to vector<8xf32>
    %169 = arith.maximumf %168, %167 : vector<8xf32>
    %170 = vector.shape_cast %169 : vector<8xf32> to vector<8x1xf32>
    %171 = vector.broadcast %170 : vector<8x1xf32> to vector<8x8xf32>
    %172 = arith.subf %166, %171 : vector<8x8xf32>
    %173 = math.exp %172 : vector<8x8xf32>
    %cst_80 = arith.constant dense<0.000000e+00> : vector<8xf32>
    %174 = vector.multi_reduction <add>, %173, %cst_80 [1] : vector<8x8xf32> to vector<8xf32>
    %175 = vector.shape_cast %174 : vector<8xf32> to vector<8x1xf32>
    %176 = vector.broadcast %175 : vector<8x1xf32> to vector<8x8xf32>
    %177 = arith.divf %173, %176 : vector<8x8xf32>
    %cst_81 = arith.constant dense<0.000000e+00> : vector<8xf32>
    %178 = vector.multi_reduction <add>, %177, %cst_81 [1] : vector<8x8xf32> to vector<8xf32>
    %179 = vector.shape_cast %178 : vector<8xf32> to vector<8x1xf32>
    %180 = vector.extract_strided_slice %160 {offsets = [0, 0], sizes = [8, 8], strides = [1, 1]} : vector<8x32xf32> to vector<8x8xf32>
    %cst_82 = arith.constant dense<0.000000e+00> : vector<8xf32>
    %181 = vector.multi_reduction <add>, %180, %cst_82 [0] : vector<8x8xf32> to vector<8xf32>
    %182 = vector.shape_cast %181 : vector<8xf32> to vector<1x8xf32>
    %183 = vector.broadcast %179 : vector<8x1xf32> to vector<8x8xf32>
    %184 = vector.broadcast %182 : vector<1x8xf32> to vector<8x8xf32>
    %185 = arith.mulf %183, %184 : vector<8x8xf32>
    %186 = vector.extract_strided_slice %156 {offsets = [0, 8], sizes = [8, 8], strides = [1, 1]} : vector<8x32xf32> to vector<8x8xf32>
    %187 = vector.extract_strided_slice %158 {offsets = [0, 8], sizes = [8, 8], strides = [1, 1]} : vector<8x32xf32> to vector<8x8xf32>
    %cst_83 = arith.constant dense<0.000000e+00> : vector<8x8xf32>
    %188 = tpu.matmul %186, %187, %cst_83 {dimension_numbers = #tpu.dot_dimension_numbers<[1], [1], [0], [0], [0, 0, 1, 0], [], []>} : vector<8x8xf32>, vector<8x8xf32>, vector<8x8xf32> -> vector<8x8xf32>
    %cst_84 = arith.constant 0.176776692 : f32
    %189 = vector.broadcast %cst_84 : f32 to vector<8x8xf32>
    %190 = arith.mulf %188, %189 : vector<8x8xf32>
    %191 = arith.addf %190, %17 : vector<8x8xf32>
    %cst_85 = arith.constant dense<0xFF800000> : vector<8xf32>
    %192 = vector.multi_reduction <maximumf>, %191, %cst_85 [1] : vector<8x8xf32> to vector<8xf32>
    %cst_86 = arith.constant 0xFF800000 : f32
    %193 = vector.broadcast %cst_86 : f32 to vector<8xf32>
    %194 = arith.maximumf %193, %192 : vector<8xf32>
    %195 = vector.shape_cast %194 : vector<8xf32> to vector<8x1xf32>
    %196 = vector.broadcast %195 : vector<8x1xf32> to vector<8x8xf32>
    %197 = arith.subf %191, %196 : vector<8x8xf32>
    %198 = math.exp %197 : vector<8x8xf32>
    %cst_87 = arith.constant dense<0.000000e+00> : vector<8xf32>
    %199 = vector.multi_reduction <add>, %198, %cst_87 [1] : vector<8x8xf32> to vector<8xf32>
    %200 = vector.shape_cast %199 : vector<8xf32> to vector<8x1xf32>
    %201 = vector.broadcast %200 : vector<8x1xf32> to vector<8x8xf32>
    %202 = arith.divf %198, %201 : vector<8x8xf32>
    %cst_88 = arith.constant dense<0.000000e+00> : vector<8xf32>
    %203 = vector.multi_reduction <add>, %202, %cst_88 [1] : vector<8x8xf32> to vector<8xf32>
    %204 = vector.shape_cast %203 : vector<8xf32> to vector<8x1xf32>
    %205 = vector.extract_strided_slice %160 {offsets = [0, 8], sizes = [8, 8], strides = [1, 1]} : vector<8x32xf32> to vector<8x8xf32>
    %cst_89 = arith.constant dense<0.000000e+00> : vector<8xf32>
    %206 = vector.multi_reduction <add>, %205, %cst_89 [0] : vector<8x8xf32> to vector<8xf32>
    %207 = vector.shape_cast %206 : vector<8xf32> to vector<1x8xf32>
    %208 = vector.broadcast %204 : vector<8x1xf32> to vector<8x8xf32>
    %209 = vector.broadcast %207 : vector<1x8xf32> to vector<8x8xf32>
    %210 = arith.mulf %208, %209 : vector<8x8xf32>
    %211 = vector.extract_strided_slice %156 {offsets = [0, 16], sizes = [8, 8], strides = [1, 1]} : vector<8x32xf32> to vector<8x8xf32>
    %212 = vector.extract_strided_slice %158 {offsets = [0, 16], sizes = [8, 8], strides = [1, 1]} : vector<8x32xf32> to vector<8x8xf32>
    %cst_90 = arith.constant dense<0.000000e+00> : vector<8x8xf32>
    %213 = tpu.matmul %211, %212, %cst_90 {dimension_numbers = #tpu.dot_dimension_numbers<[1], [1], [0], [0], [0, 0, 1, 0], [], []>} : vector<8x8xf32>, vector<8x8xf32>, vector<8x8xf32> -> vector<8x8xf32>
    %cst_91 = arith.constant 0.176776692 : f32
    %214 = vector.broadcast %cst_91 : f32 to vector<8x8xf32>
    %215 = arith.mulf %213, %214 : vector<8x8xf32>
    %216 = arith.addf %215, %17 : vector<8x8xf32>
    %cst_92 = arith.constant dense<0xFF800000> : vector<8xf32>
    %217 = vector.multi_reduction <maximumf>, %216, %cst_92 [1] : vector<8x8xf32> to vector<8xf32>
    %cst_93 = arith.constant 0xFF800000 : f32
    %218 = vector.broadcast %cst_93 : f32 to vector<8xf32>
    %219 = arith.maximumf %218, %217 : vector<8xf32>
    %220 = vector.shape_cast %219 : vector<8xf32> to vector<8x1xf32>
    %221 = vector.broadcast %220 : vector<8x1xf32> to vector<8x8xf32>
    %222 = arith.subf %216, %221 : vector<8x8xf32>
    %223 = math.exp %222 : vector<8x8xf32>
    %cst_94 = arith.constant dense<0.000000e+00> : vector<8xf32>
    %224 = vector.multi_reduction <add>, %223, %cst_94 [1] : vector<8x8xf32> to vector<8xf32>
    %225 = vector.shape_cast %224 : vector<8xf32> to vector<8x1xf32>
    %226 = vector.broadcast %225 : vector<8x1xf32> to vector<8x8xf32>
    %227 = arith.divf %223, %226 : vector<8x8xf32>
    %cst_95 = arith.constant dense<0.000000e+00> : vector<8xf32>
    %228 = vector.multi_reduction <add>, %227, %cst_95 [1] : vector<8x8xf32> to vector<8xf32>
    %229 = vector.shape_cast %228 : vector<8xf32> to vector<8x1xf32>
    %230 = vector.extract_strided_slice %160 {offsets = [0, 16], sizes = [8, 8], strides = [1, 1]} : vector<8x32xf32> to vector<8x8xf32>
    %cst_96 = arith.constant dense<0.000000e+00> : vector<8xf32>
    %231 = vector.multi_reduction <add>, %230, %cst_96 [0] : vector<8x8xf32> to vector<8xf32>
    %232 = vector.shape_cast %231 : vector<8xf32> to vector<1x8xf32>
    %233 = vector.broadcast %229 : vector<8x1xf32> to vector<8x8xf32>
    %234 = vector.broadcast %232 : vector<1x8xf32> to vector<8x8xf32>
    %235 = arith.mulf %233, %234 : vector<8x8xf32>
    %236 = vector.extract_strided_slice %156 {offsets = [0, 24], sizes = [8, 8], strides = [1, 1]} : vector<8x32xf32> to vector<8x8xf32>
    %237 = vector.extract_strided_slice %158 {offsets = [0, 24], sizes = [8, 8], strides = [1, 1]} : vector<8x32xf32> to vector<8x8xf32>
    %cst_97 = arith.constant dense<0.000000e+00> : vector<8x8xf32>
    %238 = tpu.matmul %236, %237, %cst_97 {dimension_numbers = #tpu.dot_dimension_numbers<[1], [1], [0], [0], [0, 0, 1, 0], [], []>} : vector<8x8xf32>, vector<8x8xf32>, vector<8x8xf32> -> vector<8x8xf32>
    %cst_98 = arith.constant 0.176776692 : f32
    %239 = vector.broadcast %cst_98 : f32 to vector<8x8xf32>
    %240 = arith.mulf %238, %239 : vector<8x8xf32>
    %241 = arith.addf %240, %17 : vector<8x8xf32>
    %cst_99 = arith.constant dense<0xFF800000> : vector<8xf32>
    %242 = vector.multi_reduction <maximumf>, %241, %cst_99 [1] : vector<8x8xf32> to vector<8xf32>
    %cst_100 = arith.constant 0xFF800000 : f32
    %243 = vector.broadcast %cst_100 : f32 to vector<8xf32>
    %244 = arith.maximumf %243, %242 : vector<8xf32>
    %245 = vector.shape_cast %244 : vector<8xf32> to vector<8x1xf32>
    %246 = vector.broadcast %245 : vector<8x1xf32> to vector<8x8xf32>
    %247 = arith.subf %241, %246 : vector<8x8xf32>
    %248 = math.exp %247 : vector<8x8xf32>
    %cst_101 = arith.constant dense<0.000000e+00> : vector<8xf32>
    %249 = vector.multi_reduction <add>, %248, %cst_101 [1] : vector<8x8xf32> to vector<8xf32>
    %250 = vector.shape_cast %249 : vector<8xf32> to vector<8x1xf32>
    %251 = vector.broadcast %250 : vector<8x1xf32> to vector<8x8xf32>
    %252 = arith.divf %248, %251 : vector<8x8xf32>
    %cst_102 = arith.constant dense<0.000000e+00> : vector<8xf32>
    %253 = vector.multi_reduction <add>, %252, %cst_102 [1] : vector<8x8xf32> to vector<8xf32>
    %254 = vector.shape_cast %253 : vector<8xf32> to vector<8x1xf32>
    %255 = vector.extract_strided_slice %160 {offsets = [0, 24], sizes = [8, 8], strides = [1, 1]} : vector<8x32xf32> to vector<8x8xf32>
    %cst_103 = arith.constant dense<0.000000e+00> : vector<8xf32>
    %256 = vector.multi_reduction <add>, %255, %cst_103 [0] : vector<8x8xf32> to vector<8xf32>
    %257 = vector.shape_cast %256 : vector<8xf32> to vector<1x8xf32>
    %258 = vector.broadcast %254 : vector<8x1xf32> to vector<8x8xf32>
    %259 = vector.broadcast %257 : vector<1x8xf32> to vector<8x8xf32>
    %260 = arith.mulf %258, %259 : vector<8x8xf32>
    %261 = tpu.concatenate %185, %210, %235, %260 in 1 : vector<8x8xf32>, vector<8x8xf32>, vector<8x8xf32>, vector<8x8xf32> -> vector<8x32xf32>
    %c0_104 = arith.constant 0 : index
    %c0_105 = arith.constant 0 : index
    %262 = vector.load %arg15[%c0_104, %c0_105] : memref<32x32xf32, #tpu.memory_space<vmem>>, vector<32x32xf32>
    %cst_106 = arith.constant dense<0.000000e+00> : vector<8x32xf32>
    %263 = tpu.matmul %261, %262, %cst_106 {dimension_numbers = #tpu.dot_dimension_numbers<[1], [0], [0], [1], [0, 0, 1, 1], [], []>} : vector<8x32xf32>, vector<32x32xf32>, vector<8x32xf32> -> vector<8x32xf32>
    %c0_107 = arith.constant 0 : index
    %c0_108 = arith.constant 0 : index
    %264 = vector.load %arg16[%c0_107, %c0_108] : memref<1x32xf32, #tpu.memory_space<vmem>>, vector<1x32xf32>
    %265 = vector.broadcast %264 : vector<1x32xf32> to vector<8x32xf32>
    %266 = arith.addf %263, %265 : vector<8x32xf32>
    %267 = arith.addf %266, %154 : vector<8x32xf32>
    %cst_109 = arith.constant dense<0.000000e+00> : vector<8xf32>
    %268 = vector.multi_reduction <add>, %267, %cst_109 [1] : vector<8x32xf32> to vector<8xf32>
    %269 = vector.shape_cast %268 : vector<8xf32> to vector<8x1xf32>
    %cst_110 = arith.constant 3.200000e+01 : f32
    %270 = vector.broadcast %cst_110 : f32 to vector<8x1xf32>
    %271 = arith.divf %269, %270 : vector<8x1xf32>
    %272 = vector.broadcast %271 : vector<8x1xf32> to vector<8x32xf32>
    %273 = arith.subf %267, %272 : vector<8x32xf32>
    %274 = arith.mulf %273, %273 : vector<8x32xf32>
    %cst_111 = arith.constant dense<0.000000e+00> : vector<8xf32>
    %275 = vector.multi_reduction <add>, %274, %cst_111 [1] : vector<8x32xf32> to vector<8xf32>
    %276 = vector.shape_cast %275 : vector<8xf32> to vector<8x1xf32>
    %cst_112 = arith.constant 3.200000e+01 : f32
    %277 = vector.broadcast %cst_112 : f32 to vector<8x1xf32>
    %278 = arith.divf %276, %277 : vector<8x1xf32>
    %279 = vector.broadcast %271 : vector<8x1xf32> to vector<8x32xf32>
    %280 = arith.subf %267, %279 : vector<8x32xf32>
    %cst_113 = arith.constant 9.99999974E-6 : f32
    %281 = vector.broadcast %cst_113 : f32 to vector<8x1xf32>
    %282 = arith.addf %278, %281 : vector<8x1xf32>
    %283 = math.rsqrt %282 : vector<8x1xf32>
    %284 = vector.broadcast %283 : vector<8x1xf32> to vector<8x32xf32>
    %285 = arith.mulf %280, %284 : vector<8x32xf32>
    %c0_114 = arith.constant 0 : index
    %c0_115 = arith.constant 0 : index
    %286 = vector.load %arg17[%c0_114, %c0_115] : memref<1x32xf32, #tpu.memory_space<vmem>>, vector<1x32xf32>
    %287 = vector.broadcast %286 : vector<1x32xf32> to vector<8x32xf32>
    %288 = arith.mulf %285, %287 : vector<8x32xf32>
    %c0_116 = arith.constant 0 : index
    %c0_117 = arith.constant 0 : index
    %289 = vector.load %arg18[%c0_116, %c0_117] : memref<1x32xf32, #tpu.memory_space<vmem>>, vector<1x32xf32>
    %290 = vector.broadcast %289 : vector<1x32xf32> to vector<8x32xf32>
    %291 = arith.addf %288, %290 : vector<8x32xf32>
    %c0_118 = arith.constant 0 : index
    %c0_119 = arith.constant 0 : index
    %292 = vector.load %arg19[%c0_118, %c0_119] : memref<32x64xf32, #tpu.memory_space<vmem>>, vector<32x64xf32>
    %cst_120 = arith.constant dense<0.000000e+00> : vector<8x64xf32>
    %293 = tpu.matmul %291, %292, %cst_120 {dimension_numbers = #tpu.dot_dimension_numbers<[1], [0], [0], [1], [0, 0, 1, 1], [], []>} : vector<8x32xf32>, vector<32x64xf32>, vector<8x64xf32> -> vector<8x64xf32>
    %c0_121 = arith.constant 0 : index
    %c0_122 = arith.constant 0 : index
    %294 = vector.load %arg20[%c0_121, %c0_122] : memref<1x64xf32, #tpu.memory_space<vmem>>, vector<1x64xf32>
    %295 = vector.broadcast %294 : vector<1x64xf32> to vector<8x64xf32>
    %296 = arith.addf %293, %295 : vector<8x64xf32>
    %cst_123 = arith.constant 0.000000e+00 : f32
    %297 = vector.broadcast %cst_123 : f32 to vector<8x64xf32>
    %298 = arith.maximumf %296, %297 : vector<8x64xf32>
    %c0_124 = arith.constant 0 : index
    %c0_125 = arith.constant 0 : index
    %299 = vector.load %arg21[%c0_124, %c0_125] : memref<64x32xf32, #tpu.memory_space<vmem>>, vector<64x32xf32>
    %cst_126 = arith.constant dense<0.000000e+00> : vector<8x32xf32>
    %300 = tpu.matmul %298, %299, %cst_126 {dimension_numbers = #tpu.dot_dimension_numbers<[1], [0], [0], [1], [0, 0, 1, 1], [], []>} : vector<8x64xf32>, vector<64x32xf32>, vector<8x32xf32> -> vector<8x32xf32>
    %c0_127 = arith.constant 0 : index
    %c0_128 = arith.constant 0 : index
    %301 = vector.load %arg22[%c0_127, %c0_128] : memref<1x32xf32, #tpu.memory_space<vmem>>, vector<1x32xf32>
    %302 = vector.broadcast %301 : vector<1x32xf32> to vector<8x32xf32>
    %303 = arith.addf %300, %302 : vector<8x32xf32>
    %304 = arith.addf %303, %291 : vector<8x32xf32>
    %cst_129 = arith.constant dense<0.000000e+00> : vector<8xf32>
    %305 = vector.multi_reduction <add>, %304, %cst_129 [1] : vector<8x32xf32> to vector<8xf32>
    %306 = vector.shape_cast %305 : vector<8xf32> to vector<8x1xf32>
    %cst_130 = arith.constant 3.200000e+01 : f32
    %307 = vector.broadcast %cst_130 : f32 to vector<8x1xf32>
    %308 = arith.divf %306, %307 : vector<8x1xf32>
    %309 = vector.broadcast %308 : vector<8x1xf32> to vector<8x32xf32>
    %310 = arith.subf %304, %309 : vector<8x32xf32>
    %311 = arith.mulf %310, %310 : vector<8x32xf32>
    %cst_131 = arith.constant dense<0.000000e+00> : vector<8xf32>
    %312 = vector.multi_reduction <add>, %311, %cst_131 [1] : vector<8x32xf32> to vector<8xf32>
    %313 = vector.shape_cast %312 : vector<8xf32> to vector<8x1xf32>
    %cst_132 = arith.constant 3.200000e+01 : f32
    %314 = vector.broadcast %cst_132 : f32 to vector<8x1xf32>
    %315 = arith.divf %313, %314 : vector<8x1xf32>
    %316 = vector.broadcast %308 : vector<8x1xf32> to vector<8x32xf32>
    %317 = arith.subf %304, %316 : vector<8x32xf32>
    %cst_133 = arith.constant 9.99999974E-6 : f32
    %318 = vector.broadcast %cst_133 : f32 to vector<8x1xf32>
    %319 = arith.addf %315, %318 : vector<8x1xf32>
    %320 = math.rsqrt %319 : vector<8x1xf32>
    %321 = vector.broadcast %320 : vector<8x1xf32> to vector<8x32xf32>
    %322 = arith.mulf %317, %321 : vector<8x32xf32>
    %c0_134 = arith.constant 0 : index
    %c0_135 = arith.constant 0 : index
    %323 = vector.load %arg23[%c0_134, %c0_135] : memref<1x32xf32, #tpu.memory_space<vmem>>, vector<1x32xf32>
    %324 = vector.broadcast %323 : vector<1x32xf32> to vector<8x32xf32>
    %325 = arith.mulf %322, %324 : vector<8x32xf32>
    %c0_136 = arith.constant 0 : index
    %c0_137 = arith.constant 0 : index
    %326 = vector.load %arg24[%c0_136, %c0_137] : memref<1x32xf32, #tpu.memory_space<vmem>>, vector<1x32xf32>
    %327 = vector.broadcast %326 : vector<1x32xf32> to vector<8x32xf32>
    %328 = arith.addf %325, %327 : vector<8x32xf32>
    %c0_138 = arith.constant 0 : index
    %c0_139 = arith.constant 0 : index
    %c0_140 = arith.constant 0 : index
    %329 = vector.load %arg25[%c0_138, %c0_139, %c0_140] : memref<1x8x32xf32, #tpu.memory_space<vmem>>, vector<1x8x32xf32>
    %330 = vector.shape_cast %329 : vector<1x8x32xf32> to vector<8x32xf32>
    %331 = vector.shape_cast %328 : vector<8x32xf32> to vector<1x8x32xf32>
    tpu.vector_store %arg25[%c0_138, %c0_139, %c0_140], %331 {strides = array<i32>} : memref<1x8x32xf32, #tpu.memory_space<vmem>>, vector<1x8x32xf32>,
    return
  }
  func.func @transform_0(%arg0: i32) -> (i32, i32, i32) {
    %c0_i32 = arith.constant 0 : i32
    %c0_i32_0 = arith.constant 0 : i32
    %c0_i32_1 = arith.constant 0 : i32
    return %arg0, %c0_i32, %c0_i32_0 : i32, i32, i32
  }
  func.func @transform_1(%arg0: i32) -> (i32, i32, i32) {
    %c0_i32 = arith.constant 0 : i32
    %c0_i32_0 = arith.constant 0 : i32
    %c0_i32_1 = arith.constant 0 : i32
    return %arg0, %c0_i32, %c0_i32_0 : i32, i32, i32
  }
  func.func @transform_2(%arg0: i32) -> (i32, i32, i32) {
    %c0_i32 = arith.constant 0 : i32
    %c0_i32_0 = arith.constant 0 : i32
    %c0_i32_1 = arith.constant 0 : i32
    return %arg0, %c0_i32, %c0_i32_0 : i32, i32, i32
  }
  func.func @transform_3(%arg0: i32) -> (i32, i32, i32) {
    %c0_i32 = arith.constant 0 : i32
    %c0_i32_0 = arith.constant 0 : i32
    %c0_i32_1 = arith.constant 0 : i32
    return %arg0, %c0_i32, %c0_i32_0 : i32, i32, i32
  }
  func.func @transform_4(%arg0: i32) -> (i32, i32) {
    %c0_i32 = arith.constant 0 : i32
    %c0_i32_0 = arith.constant 0 : i32
    %c0_i32_1 = arith.constant 0 : i32
    return %c0_i32, %c0_i32_0 : i32, i32
  }
  func.func @transform_5(%arg0: i32) -> (i32, i32) {
    %c0_i32 = arith.constant 0 : i32
    %c0_i32_0 = arith.constant 0 : i32
    %c0_i32_1 = arith.constant 0 : i32
    return %c0_i32, %c0_i32_0 : i32, i32
  }
  func.func @transform_6(%arg0: i32) -> (i32, i32) {
    %c0_i32 = arith.constant 0 : i32
    %c0_i32_0 = arith.constant 0 : i32
    %c0_i32_1 = arith.constant 0 : i32
    return %c0_i32, %c0_i32_0 : i32, i32
  }
  func.func @transform_7(%arg0: i32) -> (i32, i32) {
    %c0_i32 = arith.constant 0 : i32
    %c0_i32_0 = arith.constant 0 : i32
    %c0_i32_1 = arith.constant 0 : i32
    return %c0_i32, %c0_i32_0 : i32, i32
  }
  func.func @transform_8(%arg0: i32) -> (i32, i32) {
    %c0_i32 = arith.constant 0 : i32
    %c0_i32_0 = arith.constant 0 : i32
    %c0_i32_1 = arith.constant 0 : i32
    return %c0_i32, %c0_i32_0 : i32, i32
  }
  func.func @transform_9(%arg0: i32) -> (i32, i32) {
    %c0_i32 = arith.constant 0 : i32
    %c0_i32_0 = arith.constant 0 : i32
    %c0_i32_1 = arith.constant 0 : i32
    return %c0_i32, %c0_i32_0 : i32, i32
  }
  func.func @transform_10(%arg0: i32) -> (i32, i32) {
    %c0_i32 = arith.constant 0 : i32
    %c0_i32_0 = arith.constant 0 : i32
    %c0_i32_1 = arith.constant 0 : i32
    return %c0_i32, %c0_i32_0 : i32, i32
  }
  func.func @transform_11(%arg0: i32) -> (i32, i32) {
    %c0_i32 = arith.constant 0 : i32
    %c0_i32_0 = arith.constant 0 : i32
    %c0_i32_1 = arith.constant 0 : i32
    return %c0_i32, %c0_i32_0 : i32, i32
  }
  func.func @transform_12(%arg0: i32) -> (i32, i32) {
    %c0_i32 = arith.constant 0 : i32
    %c0_i32_0 = arith.constant 0 : i32
    %c0_i32_1 = arith.constant 0 : i32
    return %c0_i32, %c0_i32_0 : i32, i32
  }
  func.func @transform_13(%arg0: i32) -> (i32, i32) {
    %c0_i32 = arith.constant 0 : i32
    %c0_i32_0 = arith.constant 0 : i32
    %c0_i32_1 = arith.constant 0 : i32
    return %c0_i32, %c0_i32_0 : i32, i32
  }
  func.func @transform_14(%arg0: i32) -> (i32, i32) {
    %c0_i32 = arith.constant 0 : i32
    %c0_i32_0 = arith.constant 0 : i32
    %c0_i32_1 = arith.constant 0 : i32
    return %c0_i32, %c0_i32_0 : i32, i32
  }
  func.func @transform_15(%arg0: i32) -> (i32, i32) {
    %c0_i32 = arith.constant 0 : i32
    %c0_i32_0 = arith.constant 0 : i32
    %c0_i32_1 = arith.constant 0 : i32
    return %c0_i32, %c0_i32_0 : i32, i32
  }
  func.func @transform_16(%arg0: i32) -> (i32, i32) {
    %c0_i32 = arith.constant 0 : i32
    %c0_i32_0 = arith.constant 0 : i32
    %c0_i32_1 = arith.constant 0 : i32
    return %c0_i32, %c0_i32_0 : i32, i32
  }
  func.func @transform_17(%arg0: i32) -> (i32, i32) {
    %c0_i32 = arith.constant 0 : i32
    %c0_i32_0 = arith.constant 0 : i32
    %c0_i32_1 = arith.constant 0 : i32
    return %c0_i32, %c0_i32_0 : i32, i32
  }
  func.func @transform_18(%arg0: i32) -> (i32, i32) {
    %c0_i32 = arith.constant 0 : i32
    %c0_i32_0 = arith.constant 0 : i32
    %c0_i32_1 = arith.constant 0 : i32
    return %c0_i32, %c0_i32_0 : i32, i32
  }
  func.func @transform_19(%arg0: i32) -> (i32, i32) {
    %c0_i32 = arith.constant 0 : i32
    %c0_i32_0 = arith.constant 0 : i32
    %c0_i32_1 = arith.constant 0 : i32
    return %c0_i32, %c0_i32_0 : i32, i32
  }
  func.func @transform_20(%arg0: i32) -> (i32, i32) {
    %c0_i32 = arith.constant 0 : i32
    %c0_i32_0 = arith.constant 0 : i32
    %c0_i32_1 = arith.constant 0 : i32
    return %c0_i32, %c0_i32_0 : i32, i32
  }
  func.func @transform_21(%arg0: i32) -> (i32, i32) {
    %c0_i32 = arith.constant 0 : i32
    %c0_i32_0 = arith.constant 0 : i32
    %c0_i32_1 = arith.constant 0 : i32
    return %c0_i32, %c0_i32_0 : i32, i32
  }
  func.func @transform_22(%arg0: i32) -> (i32, i32) {
    %c0_i32 = arith.constant 0 : i32
    %c0_i32_0 = arith.constant 0 : i32
    %c0_i32_1 = arith.constant 0 : i32
    return %c0_i32, %c0_i32_0 : i32, i32
  }
  func.func @transform_23(%arg0: i32) -> (i32, i32) {
    %c0_i32 = arith.constant 0 : i32
    %c0_i32_0 = arith.constant 0 : i32
    %c0_i32_1 = arith.constant 0 : i32
    return %c0_i32, %c0_i32_0 : i32, i32
  }
  func.func @transform_24(%arg0: i32) -> (i32, i32, i32) {
    %c0_i32 = arith.constant 0 : i32
    %c0_i32_0 = arith.constant 0 : i32
    %c0_i32_1 = arith.constant 0 : i32
    return %arg0, %c0_i32, %c0_i32_0 : i32, i32, i32
  }
}

</mosaic_0001>

<llo_original>
// kernel: decoder_forward.5
$region0: #{decoder_forward.5}
  #allocation0 [shape = 'u32[]', space=smem, size = 0x4, offset = 0x4, fixed_abs, tag = 'smem constant byte address 0x4 - core index']
  #allocation1 [shape = 'u32[144,128]{1,0:T(1,128)}', space=vmem, size = 0x12000, scoped, tag = 'internal scratch']
  %s0 = inlined_call_operand.vmem [shape: f32[16,32], index: 0, kind: input, shape index: {}]
  %s1 = inlined_call_operand.vmem [shape: f32[32,128], index: 1, kind: input, shape index: {}]
  %s2 = inlined_call_operand.vmem [shape: f32[1,128], index: 2, kind: input, shape index: {}]
  %s3 = inlined_call_operand.vmem [shape: f32[16,128], index: 3, kind: output, shape index: {}]
  %s4 = sld [smem:[#allocation0]]
  $region22: #{decoder_forward.5} parent=0
    _
  %s6 = ssub.s32 1, %s4
  %s7 = scalar_select 0, %s6, %s4
  // Predicated region
  $region2: #{decoder_forward.5} parent=0 // pred_check
    _
  $region3: #{decoder_forward.5} parent=0 // pred_check_branch
    %9 = sbr.rel (0) target = $region5
  $region4: #{decoder_forward.5} parent=0 // pred_region
    _
  $region5: #{decoder_forward.5} parent=0 // pred_fallthru
    _
  // Predicated region
  $region6: #{decoder_forward.5} parent=0 // pred_check
    _
  $region7: #{decoder_forward.5} parent=0 // pred_check_branch
    %11 = sbr.rel (0) target = $region9
  $region8: #{decoder_forward.5} parent=0 // pred_region
    _
  $region9: #{decoder_forward.5} parent=0 // pred_fallthru
    _
  // Predicated region
  $region10: #{decoder_forward.5} parent=0 // pred_check
    _
  $region11: #{decoder_forward.5} parent=0 // pred_check_branch
    %13 = sbr.rel (0) target = $region13
  $region12: #{decoder_forward.5} parent=0 // pred_region
    _
  $region13: #{decoder_forward.5} parent=0 // pred_fallthru
    _
  %v14 = vld [vmem:[%s0] sm:$0xff]
  %v15 = vld [vmem:[%s0 + $0x8] sm:$0xff]
  %v16 = vld [vmem:[%s1] sm:$0xff]
  %v17 = vld [vmem:[%s1 + $0x8] sm:$0xff]
  %v18 = vld [vmem:[%s1 + $0x10] sm:$0xff]
  %v19 = vld [vmem:[%s1 + $0x18] sm:$0xff]
  %v20 = vld [vmem:[%s2] sm:$0x1]
  %v22 = vlaneseq
  %v23 = vshrl.u32 %v22, 7
  %v24 = vsub.s32 0, %v23
  %v25 = vrot.slane %v20, %v24
  %vm27 = vcmask 261120
  %v29 = vsel %vm27, %v14, 0
  %v32 = vsel %vm27, %v15, 0
  %34 = vmatprep.subr.mxu0 0.0
  %35 = vmatpush1.msra.mxu0 %v16
  %36 = vmatprep.subr.mxu0 0.0
  %37 = vmatpush1.msra.mxu0 %v17
  %38 = vmatprep.subr.mxu0 0.0
  %39 = vmatpush1.msra.mxu0 %v18
  %40 = vmatprep.subr.mxu0 0.0
  %41 = vmatpush1.msra.mxu0 %v19
  %42 = vmatprep.subr.mxu0 0.0
  %43 = vmatpush1.msra.mxu0 0.0
  %44 = vmatprep.subr.mxu0 0.0
  %45 = vmatpush1.msra.mxu0 0.0
  %46 = vmatprep.subr.mxu0 0.0
  %47 = vmatpush1.msra.mxu0 0.0
  %48 = vmatprep.subr.mxu0 0.0
  %49 = vmatpush1.msra.mxu0 0.0
  %50 = vmatprep.subr.mxu0 0.0
  %51 = vmatpush1.msra.mxu0 0.0
  %52 = vmatprep.subr.mxu0 0.0
  %53 = vmatpush1.msra.mxu0 0.0
  %54 = vmatprep.subr.mxu0 0.0
  %55 = vmatpush1.msra.mxu0 0.0
  %56 = vmatprep.subr.mxu0 0.0
  %57 = vmatpush1.msra.mxu0 0.0
  %58 = vmatprep.subr.mxu0 0.0
  %59 = vmatpush1.msra.mxu0 0.0
  %60 = vmatprep.subr.mxu0 0.0
  %61 = vmatpush1.msra.mxu0 0.0
  %62 = vmatprep.subr.mxu0 0.0
  %63 = vmatpush1.msra.mxu0 0.0
  %64 = vmatprep.subr.mxu0 0.0
  %65 = vmatpush1.msra.mxu0 0.0
  %66 = vmatprep.subr.mxu0 0.0
  %67 = vmatpush1.msra.mxu0 0.0
  %68 = vmatprep.subr.mxu0 0.0
  %69 = vmatpush1.msra.mxu0 0.0
  %70 = vmatprep.subr.mxu0 0.0
  %71 = vmatpush1.msra.mxu0 0.0
  %72 = vmatprep.subr.mxu0 0.0
  %73 = vmatpush1.msra.mxu0 0.0
  %74 = vmatprep.subr.mxu0 0.0
  %75 = vmatpush1.msra.mxu0 0.0
  %76 = vmatprep.subr.mxu0 0.0
  %77 = vmatpush1.msra.mxu0 0.0
  %78 = vmatprep.subr.mxu0 0.0
  %79 = vmatpush1.msra.mxu0 0.0
  %80 = vmatprep.subr.mxu0 0.0
  %81 = vmatpush1.msra.mxu0 0.0
  %82 = vmatprep.subr.mxu0 0.0
  %83 = vmatpush1.msra.mxu0 0.0
  %84 = vmatprep.subr.mxu0 0.0
  %85 = vmatpush1.msra.mxu0 0.0
  %86 = vmatprep.subr.mxu0 0.0
  %87 = vmatpush1.msra.mxu0 0.0
  %88 = vmatprep.subr.mxu0 0.0
  %89 = vmatpush1.msra.mxu0 0.0
  %90 = vmatprep.subr.mxu0 0.0
  %91 = vmatpush1.msra.mxu0 0.0
  %92 = vmatprep.subr.mxu0 0.0
  %93 = vmatpush1.msra.mxu0 0.0
  %94 = vmatprep.subr.mxu0 0.0
  %95 = vmatpush1.msra.mxu0 0.0
  %96 = vmatprep.subr.mxu0 0.0
  %97 = vmatpush1.msra.mxu0 0.0
  %98 = vmatprep.mubr.f32.mxu0 0.0
  %99 = vmatmul.mubr.f32.gmra.mrb[0].mxu0 %v29
  %v100 = vpop.f32.mrb[0].mxu0
  %v101 = vadd.f32 %v25, %v100
  %v102 = vpop.f32.mrb[0].mxu0
  %103 = vmatprep.mubr.f32.mxu0 0.0
  %104 = vmatmul.mubr.f32.gmra.mrb[0].mxu0 %v32
  %v105 = vpop.f32.mrb[0].mxu0
  %v106 = vadd.f32 %v25, %v105
  %v107 = vpop.f32.mrb[0].mxu0
  %108 = vdwg.mxu0
  %109 = vst [vmem:[%s3] sm:$0xff] %v101
  %110 = vst [vmem:[%s3 + $0x8] sm:$0xff] %v106
  // Predicated region
  $region14: #{decoder_forward.5} parent=0 // pred_check
    _
  $region15: #{decoder_forward.5} parent=0 // pred_check_branch
    %112 = sbr.rel (0) target = $region17
  $region16: #{decoder_forward.5} parent=0 // pred_region
    _
  $region17: #{decoder_forward.5} parent=0 // pred_fallthru
    _
  // Predicated region
  $region18: #{decoder_forward.5} parent=0 // pred_check
    _
  $region19: #{decoder_forward.5} parent=0 // pred_check_branch
    %114 = sbr.rel (0) target = $region21
  $region20: #{decoder_forward.5} parent=0 // pred_region
    _
  $region21: #{decoder_forward.5} parent=0 // pred_fallthru
    _

// kernel: decoder_forward.4
$region0: #{decoder_forward.4}
  #allocation0 [shape = 'u32[]', space=smem, size = 0x4, offset = 0x4, fixed_abs, tag = 'smem constant byte address 0x4 - core index']
  #allocation1 [shape = 'u32[144,128]{1,0:T(1,128)}', space=vmem, size = 0x12000, scoped, tag = 'internal scratch']
  %s0 = inlined_call_operand.vmem [shape: f32[2,8,32], index: 0, kind: input, shape index: {}]
  %s1 = inlined_call_operand.vmem [shape: f32[2,8,32], index: 1, kind: input, shape index: {}]
  %s2 = inlined_call_operand.vmem [shape: f32[2,8,8], index: 2, kind: input, shape index: {}]
  %s3 = inlined_call_operand.vmem [shape: f32[2,8,8], index: 3, kind: input, shape index: {}]
  %s4 = inlined_call_operand.vmem [shape: f32[32,32], index: 4, kind: input, shape index: {}]
  %s5 = inlined_call_operand.vmem [shape: f32[32,32], index: 5, kind: input, shape index: {}]
  %s6 = inlined_call_operand.vmem [shape: f32[32,32], index: 6, kind: input, shape index: {}]
  %s7 = inlined_call_operand.vmem [shape: f32[32,32], index: 7, kind: input, shape index: {}]
  %s8 = inlined_call_operand.vmem [shape: f32[1,32], index: 8, kind: input, shape index: {}]
  %s9 = inlined_call_operand.vmem [shape: f32[1,32], index: 9, kind: input, shape index: {}, may-alias: {9,16,22}]
  %s10 = inlined_call_operand.vmem [shape: f32[1,32], index: 10, kind: input, shape index: {}, may-alias: {10,17,23}]
  %s11 = inlined_call_operand.vmem [shape: f32[32,32], index: 11, kind: input, shape index: {}]
  %s12 = inlined_call_operand.vmem [shape: f32[32,32], index: 12, kind: input, shape index: {}]
  %s13 = inlined_call_operand.vmem [shape: f32[32,32], index: 13, kind: input, shape index: {}]
  %s14 = inlined_call_operand.vmem [shape: f32[32,32], index: 14, kind: input, shape index: {}]
  %s15 = inlined_call_operand.vmem [shape: f32[1,32], index: 15, kind: input, shape index: {}]
  %s16 = inlined_call_operand.vmem [shape: f32[1,32], index: 16, kind: input, shape index: {}, may-alias: {9,16,22}]
  %s17 = inlined_call_operand.vmem [shape: f32[1,32], index: 17, kind: input, shape index: {}, may-alias: {10,17,23}]
  %s18 = inlined_call_operand.vmem [shape: f32[32,64], index: 18, kind: input, shape index: {}]
  %s19 = inlined_call_operand.vmem [shape: f32[1,64], index: 19, kind: input, shape index: {}]
  %s20 = inlined_call_operand.vmem [shape: f32[64,32], index: 20, kind: input, shape index: {}]
  %s21 = inlined_call_operand.vmem [shape: f32[1,32], index: 21, kind: input, shape index: {}]
  %s22 = inlined_call_operand.vmem [shape: f32[1,32], index: 22, kind: input, shape index: {}, may-alias: {9,16,22}]
  %s23 = inlined_call_operand.vmem [shape: f32[1,32], index: 23, kind: input, shape index: {}, may-alias: {10,17,23}]
  %s24 = inlined_call_operand.vmem [shape: f32[2,8,32], index: 24, kind: output, shape index: {}]
  %s25 = sld [smem:[#allocation0]]
  $region129: #{decoder_forward.4} parent=0
    _
  %s27 = ssub.s32 1, %s25
  %s28 = scalar_select 0, %s27, %s25
  loop: start=0, step=1, limit=4
  $region2: #{decoder_forward.4} parent=0 // loop_pre_header
    _
  $region3: #{decoder_forward.4} parent=0 // loop_header
    %s30 = sphi 0, %s34
    %p31 = scmp.ge.s32.totalorder %s30, 4
    %s40 = sphi 0, %s42
    %s43 = sphi 0, %s40
    %s44 = sphi 0, %s43
    %s60 = sphi 0, %s44
    %s66 = sphi 0, %s68
    %s69 = sphi 0, %s66
    %s70 = sphi 0, %s69
    %s86 = sphi 0, %s70
    %s92 = sphi 0, %s94
    %s95 = sphi 0, %s92
    %s96 = sphi 0, %s95
    %s112 = sphi 0, %s96
    %s118 = sphi 0, %s120
    %s121 = sphi 0, %s118
    %s122 = sphi 0, %s121
    %s138 = sphi 0, %s122
    %s142 = sphi 0, %s142
    %s144 = sphi 0, %s142
    %s145 = sphi 0, %s144
    %s159 = sphi 0, %s145
    %s163 = sphi 0, %s163
    %s165 = sphi 0, %s163
    %s166 = sphi 0, %s165
    %s180 = sphi 0, %s166
    %s184 = sphi 0, %s184
    %s186 = sphi 0, %s184
    %s187 = sphi 0, %s186
    %s201 = sphi 0, %s187
    %s205 = sphi 0, %s205
    %s207 = sphi 0, %s205
    %s208 = sphi 0, %s207
    %s222 = sphi 0, %s208
    %s226 = sphi 0, %s226
    %s228 = sphi 0, %s226
    %s229 = sphi 0, %s228
    %s243 = sphi 0, %s229
    %s247 = sphi 0, %s247
    %s249 = sphi 0, %s247
    %s250 = sphi 0, %s249
    %s264 = sphi 0, %s250
    %s268 = sphi 0, %s268
    %s270 = sphi 0, %s268
    %s271 = sphi 0, %s270
    %s285 = sphi 0, %s271
    %s289 = sphi 0, %s289
    %s291 = sphi 0, %s289
    %s292 = sphi 0, %s291
    %s306 = sphi 0, %s292
    %s310 = sphi 0, %s310
    %s312 = sphi 0, %s310
    %s313 = sphi 0, %s312
    %s327 = sphi 0, %s313
    %s331 = sphi 0, %s331
    %s333 = sphi 0, %s331
    %s334 = sphi 0, %s333
    %s348 = sphi 0, %s334
    %s352 = sphi 0, %s352
    %s354 = sphi 0, %s352
    %s355 = sphi 0, %s354
    %s369 = sphi 0, %s355
    %s373 = sphi 0, %s373
    %s375 = sphi 0, %s373
    %s376 = sphi 0, %s375
    %s390 = sphi 0, %s376
    %s394 = sphi 0, %s394
    %s396 = sphi 0, %s394
    %s397 = sphi 0, %s396
    %s411 = sphi 0, %s397
    %s415 = sphi 0, %s415
    %s417 = sphi 0, %s415
    %s418 = sphi 0, %s417
    %s432 = sphi 0, %s418
    %s436 = sphi 0, %s436
    %s438 = sphi 0, %s436
    %s439 = sphi 0, %s438
    %s453 = sphi 0, %s439
    %s457 = sphi 0, %s457
    %s459 = sphi 0, %s457
    %s460 = sphi 0, %s459
    %s474 = sphi 0, %s460
    %s478 = sphi 0, %s478
    %s480 = sphi 0, %s478
    %s481 = sphi 0, %s480
    %s495 = sphi 0, %s481
    %s499 = sphi 0, %s499
    %s501 = sphi 0, %s499
    %s502 = sphi 0, %s501
    %s516 = sphi 0, %s502
    %s520 = sphi 0, %s520
    %s522 = sphi 0, %s520
    %s523 = sphi 0, %s522
    %s537 = sphi 0, %s523
    %s541 = sphi 0, %s541
    %s543 = sphi 0, %s541
    %s544 = sphi 0, %s543
    %s558 = sphi 0, %s544
    %s564 = sphi 0, %s566
    %s567 = sphi 0, %s564
    %s568 = sphi 0, %s567
    %s584 = sphi 0, %s568
  $region4: #{decoder_forward.4} parent=0 // loop_header_branch
    %33 = sbr.rel (%p31) target = $region8
  $region5: #{decoder_forward.4} parent=0 // loop_body
    %s35 = ssub.s32 %s30, 1
    %s36 = ssub.s32 %s30, 2
    %s37 = sadd.s32 %s30, 1
    %s38 = ssub.s32 %s30, %s37
    %p39 = scmp.eq.s32.totalorder %s38, 0
    %s41 = sadd.s32 %s40, 1
    %s42 = scalar_select %p39, %s40, %s41
    %p45 = pneg %p39
    %p46 = scmp.eq.s32.totalorder %s30, 1
    %p47 = por %p45, %p46
    %p48 = scmp.ne.s32.totalorder %s40, %s43
    %p49 = scmp.eq.s32.totalorder %s30, 0
    %p50 = por %p48, %p49
    %p51 = scmp.ne.s32.totalorder %s40, %s43
    %p52 = scmp.eq.s32.totalorder %s35, 1
    %p53 = por %p51, %p52
    %p54 = scmp.ne.s32.totalorder %s43, %s44
    %p55 = scmp.eq.s32.totalorder %s35, 0
    %p56 = por %p54, %p55
    %p57 = scmp.ne.s32.totalorder %s43, %s44
    %p58 = scmp.eq.s32.totalorder %s36, 1
    %p59 = por %p57, %p58
    %p61 = scmp.ne.s32.totalorder %s44, %s60
    %p62 = scmp.eq.s32.totalorder %s36, 0
    %p63 = por %p61, %p62
    %s64 = ssub.s32 %s30, %s37
    %p65 = scmp.eq.s32.totalorder %s64, 0
    %s67 = sadd.s32 %s66, 1
    %s68 = scalar_select %p65, %s66, %s67
    %p71 = pneg %p65
    %p72 = scmp.eq.s32.totalorder %s30, 1
    %p73 = por %p71, %p72
    %p74 = scmp.ne.s32.totalorder %s66, %s69
    %p75 = scmp.eq.s32.totalorder %s30, 0
    %p76 = por %p74, %p75
    %p77 = scmp.ne.s32.totalorder %s66, %s69
    %p78 = scmp.eq.s32.totalorder %s35, 1
    %p79 = por %p77, %p78
    %p80 = scmp.ne.s32.totalorder %s69, %s70
    %p81 = scmp.eq.s32.totalorder %s35, 0
    %p82 = por %p80, %p81
    %p83 = scmp.ne.s32.totalorder %s69, %s70
    %p84 = scmp.eq.s32.totalorder %s36, 1
    %p85 = por %p83, %p84
    %p87 = scmp.ne.s32.totalorder %s70, %s86
    %p88 = scmp.eq.s32.totalorder %s36, 0
    %p89 = por %p87, %p88
    %s90 = ssub.s32 %s30, %s37
    %p91 = scmp.eq.s32.totalorder %s90, 0
    %s93 = sadd.s32 %s92, 1
    %s94 = scalar_select %p91, %s92, %s93
    %p97 = pneg %p91
    %p98 = scmp.eq.s32.totalorder %s30, 1
    %p99 = por %p97, %p98
    %p100 = scmp.ne.s32.totalorder %s92, %s95
    %p101 = scmp.eq.s32.totalorder %s30, 0
    %p102 = por %p100, %p101
    %p103 = scmp.ne.s32.totalorder %s92, %s95
    %p104 = scmp.eq.s32.totalorder %s35, 1
    %p105 = por %p103, %p104
    %p106 = scmp.ne.s32.totalorder %s95, %s96
    %p107 = scmp.eq.s32.totalorder %s35, 0
    %p108 = por %p106, %p107
    %p109 = scmp.ne.s32.totalorder %s95, %s96
    %p110 = scmp.eq.s32.totalorder %s36, 1
    %p111 = por %p109, %p110
    %p113 = scmp.ne.s32.totalorder %s96, %s112
    %p114 = scmp.eq.s32.totalorder %s36, 0
    %p115 = por %p113, %p114
    %s116 = ssub.s32 %s30, %s37
    %p117 = scmp.eq.s32.totalorder %s116, 0
    %s119 = sadd.s32 %s118, 1
    %s120 = scalar_select %p117, %s118, %s119
    %p123 = pneg %p117
    %p124 = scmp.eq.s32.totalorder %s30, 1
    %p125 = por %p123, %p124
    %p126 = scmp.ne.s32.totalorder %s118, %s121
    %p127 = scmp.eq.s32.totalorder %s30, 0
    %p128 = por %p126, %p127
    %p129 = scmp.ne.s32.totalorder %s118, %s121
    %p130 = scmp.eq.s32.totalorder %s35, 1
    %p131 = por %p129, %p130
    %p132 = scmp.ne.s32.totalorder %s121, %s122
    %p133 = scmp.eq.s32.totalorder %s35, 0
    %p134 = por %p132, %p133
    %p135 = scmp.ne.s32.totalorder %s121, %s122
    %p136 = scmp.eq.s32.totalorder %s36, 1
    %p137 = por %p135, %p136
    %p139 = scmp.ne.s32.totalorder %s122, %s138
    %p140 = scmp.eq.s32.totalorder %s36, 0
    %p141 = por %p139, %p140
    %s143 = sadd.s32 %s142, 1
    %p146 = scmp.eq.s32.totalorder %s30, 1
    %p147 = scmp.ne.s32.totalorder %s142, %s144
    %p148 = scmp.eq.s32.totalorder %s30, 0
    %p149 = por %p147, %p148
    %p150 = scmp.ne.s32.totalorder %s142, %s144
    %p151 = scmp.eq.s32.totalorder %s35, 1
    %p152 = por %p150, %p151
    %p153 = scmp.ne.s32.totalorder %s144, %s145
    %p154 = scmp.eq.s32.totalorder %s35, 0
    %p155 = por %p153, %p154
    %p156 = scmp.ne.s32.totalorder %s144, %s145
    %p157 = scmp.eq.s32.totalorder %s36, 1
    %p158 = por %p156, %p157
    %p160 = scmp.ne.s32.totalorder %s145, %s159
    %p161 = scmp.eq.s32.totalorder %s36, 0
    %p162 = por %p160, %p161
    %s164 = sadd.s32 %s163, 1
    %p167 = scmp.eq.s32.totalorder %s30, 1
    %p168 = scmp.ne.s32.totalorder %s163, %s165
    %p169 = scmp.eq.s32.totalorder %s30, 0
    %p170 = por %p168, %p169
    %p171 = scmp.ne.s32.totalorder %s163, %s165
    %p172 = scmp.eq.s32.totalorder %s35, 1
    %p173 = por %p171, %p172
    %p174 = scmp.ne.s32.totalorder %s165, %s166
    %p175 = scmp.eq.s32.totalorder %s35, 0
    %p176 = por %p174, %p175
    %p177 = scmp.ne.s32.totalorder %s165, %s166
    %p178 = scmp.eq.s32.totalorder %s36, 1
    %p179 = por %p177, %p178
    %p181 = scmp.ne.s32.totalorder %s166, %s180
    %p182 = scmp.eq.s32.totalorder %s36, 0
    %p183 = por %p181, %p182
    %s185 = sadd.s32 %s184, 1
    %p188 = scmp.eq.s32.totalorder %s30, 1
    %p189 = scmp.ne.s32.totalorder %s184, %s186
    %p190 = scmp.eq.s32.totalorder %s30, 0
    %p191 = por %p189, %p190
    %p192 = scmp.ne.s32.totalorder %s184, %s186
    %p193 = scmp.eq.s32.totalorder %s35, 1
    %p194 = por %p192, %p193
    %p195 = scmp.ne.s32.totalorder %s186, %s187
    %p196 = scmp.eq.s32.totalorder %s35, 0
    %p197 = por %p195, %p196
    %p198 = scmp.ne.s32.totalorder %s186, %s187
    %p199 = scmp.eq.s32.totalorder %s36, 1
    %p200 = por %p198, %p199
    %p202 = scmp.ne.s32.totalorder %s187, %s201
    %p203 = scmp.eq.s32.totalorder %s36, 0
    %p204 = por %p202, %p203
    %s206 = sadd.s32 %s205, 1
    %p209 = scmp.eq.s32.totalorder %s30, 1
    %p210 = scmp.ne.s32.totalorder %s205, %s207
    %p211 = scmp.eq.s32.totalorder %s30, 0
    %p212 = por %p210, %p211
    %p213 = scmp.ne.s32.totalorder %s205, %s207
    %p214 = scmp.eq.s32.totalorder %s35, 1
    %p215 = por %p213, %p214
    %p216 = scmp.ne.s32.totalorder %s207, %s208
    %p217 = scmp.eq.s32.totalorder %s35, 0
    %p218 = por %p216, %p217
    %p219 = scmp.ne.s32.totalorder %s207, %s208
    %p220 = scmp.eq.s32.totalorder %s36, 1
    %p221 = por %p219, %p220
    %p223 = scmp.ne.s32.totalorder %s208, %s222
    %p224 = scmp.eq.s32.totalorder %s36, 0
    %p225 = por %p223, %p224
    %s227 = sadd.s32 %s226, 1
    %p230 = scmp.eq.s32.totalorder %s30, 1
    %p231 = scmp.ne.s32.totalorder %s226, %s228
    %p232 = scmp.eq.s32.totalorder %s30, 0
    %p233 = por %p231, %p232
    %p234 = scmp.ne.s32.totalorder %s226, %s228
    %p235 = scmp.eq.s32.totalorder %s35, 1
    %p236 = por %p234, %p235
    %p237 = scmp.ne.s32.totalorder %s228, %s229
    %p238 = scmp.eq.s32.totalorder %s35, 0
    %p239 = por %p237, %p238
    %p240 = scmp.ne.s32.totalorder %s228, %s229
    %p241 = scmp.eq.s32.totalorder %s36, 1
    %p242 = por %p240, %p241
    %p244 = scmp.ne.s32.totalorder %s229, %s243
    %p245 = scmp.eq.s32.totalorder %s36, 0
    %p246 = por %p244, %p245
    %s248 = sadd.s32 %s247, 1
    %p251 = scmp.eq.s32.totalorder %s30, 1
    %p252 = scmp.ne.s32.totalorder %s247, %s249
    %p253 = scmp.eq.s32.totalorder %s30, 0
    %p254 = por %p252, %p253
    %p255 = scmp.ne.s32.totalorder %s247, %s249
    %p256 = scmp.eq.s32.totalorder %s35, 1
    %p257 = por %p255, %p256
    %p258 = scmp.ne.s32.totalorder %s249, %s250
    %p259 = scmp.eq.s32.totalorder %s35, 0
    %p260 = por %p258, %p259
    %p261 = scmp.ne.s32.totalorder %s249, %s250
    %p262 = scmp.eq.s32.totalorder %s36, 1
    %p263 = por %p261, %p262
    %p265 = scmp.ne.s32.totalorder %s250, %s264
    %p266 = scmp.eq.s32.totalorder %s36, 0
    %p267 = por %p265, %p266
    %s269 = sadd.s32 %s268, 1
    %p272 = scmp.eq.s32.totalorder %s30, 1
    %p273 = scmp.ne.s32.totalorder %s268, %s270
    %p274 = scmp.eq.s32.totalorder %s30, 0
    %p275 = por %p273, %p274
    %p276 = scmp.ne.s32.totalorder %s268, %s270
    %p277 = scmp.eq.s32.totalorder %s35, 1
    %p278 = por %p276, %p277
    %p279 = scmp.ne.s32.totalorder %s270, %s271
    %p280 = scmp.eq.s32.totalorder %s35, 0
    %p281 = por %p279, %p280
    %p282 = scmp.ne.s32.totalorder %s270, %s271
    %p283 = scmp.eq.s32.totalorder %s36, 1
    %p284 = por %p282, %p283
    %p286 = scmp.ne.s32.totalorder %s271, %s285
    %p287 = scmp.eq.s32.totalorder %s36, 0
    %p288 = por %p286, %p287
    %s290 = sadd.s32 %s289, 1
    %p293 = scmp.eq.s32.totalorder %s30, 1
    %p294 = scmp.ne.s32.totalorder %s289, %s291
    %p295 = scmp.eq.s32.totalorder %s30, 0
    %p296 = por %p294, %p295
    %p297 = scmp.ne.s32.totalorder %s289, %s291
    %p298 = scmp.eq.s32.totalorder %s35, 1
    %p299 = por %p297, %p298
    %p300 = scmp.ne.s32.totalorder %s291, %s292
    %p301 = scmp.eq.s32.totalorder %s35, 0
    %p302 = por %p300, %p301
    %p303 = scmp.ne.s32.totalorder %s291, %s292
    %p304 = scmp.eq.s32.totalorder %s36, 1
    %p305 = por %p303, %p304
    %p307 = scmp.ne.s32.totalorder %s292, %s306
    %p308 = scmp.eq.s32.totalorder %s36, 0
    %p309 = por %p307, %p308
    %s311 = sadd.s32 %s310, 1
    %p314 = scmp.eq.s32.totalorder %s30, 1
    %p315 = scmp.ne.s32.totalorder %s310, %s312
    %p316 = scmp.eq.s32.totalorder %s30, 0
    %p317 = por %p315, %p316
    %p318 = scmp.ne.s32.totalorder %s310, %s312
    %p319 = scmp.eq.s32.totalorder %s35, 1
    %p320 = por %p318, %p319
    %p321 = scmp.ne.s32.totalorder %s312, %s313
    %p322 = scmp.eq.s32.totalorder %s35, 0
    %p323 = por %p321, %p322
    %p324 = scmp.ne.s32.totalorder %s312, %s313
    %p325 = scmp.eq.s32.totalorder %s36, 1
    %p326 = por %p324, %p325
    %p328 = scmp.ne.s32.totalorder %s313, %s327
    %p329 = scmp.eq.s32.totalorder %s36, 0
    %p330 = por %p328, %p329
    %s332 = sadd.s32 %s331, 1
    %p335 = scmp.eq.s32.totalorder %s30, 1
    %p336 = scmp.ne.s32.totalorder %s331, %s333
    %p337 = scmp.eq.s32.totalorder %s30, 0
    %p338 = por %p336, %p337
    %p339 = scmp.ne.s32.totalorder %s331, %s333
    %p340 = scmp.eq.s32.totalorder %s35, 1
    %p341 = por %p339, %p340
    %p342 = scmp.ne.s32.totalorder %s333, %s334
    %p343 = scmp.eq.s32.totalorder %s35, 0
    %p344 = por %p342, %p343
    %p345 = scmp.ne.s32.totalorder %s333, %s334
    %p346 = scmp.eq.s32.totalorder %s36, 1
    %p347 = por %p345, %p346
    %p349 = scmp.ne.s32.totalorder %s334, %s348
    %p350 = scmp.eq.s32.totalorder %s36, 0
    %p351 = por %p349, %p350
    %s353 = sadd.s32 %s352, 1
    %p356 = scmp.eq.s32.totalorder %s30, 1
    %p357 = scmp.ne.s32.totalorder %s352, %s354
    %p358 = scmp.eq.s32.totalorder %s30, 0
    %p359 = por %p357, %p358
    %p360 = scmp.ne.s32.totalorder %s352, %s354
    %p361 = scmp.eq.s32.totalorder %s35, 1
    %p362 = por %p360, %p361
    %p363 = scmp.ne.s32.totalorder %s354, %s355
    %p364 = scmp.eq.s32.totalorder %s35, 0
    %p365 = por %p363, %p364
    %p366 = scmp.ne.s32.totalorder %s354, %s355
    %p367 = scmp.eq.s32.totalorder %s36, 1
    %p368 = por %p366, %p367
    %p370 = scmp.ne.s32.totalorder %s355, %s369
    %p371 = scmp.eq.s32.totalorder %s36, 0
    %p372 = por %p370, %p371
    %s374 = sadd.s32 %s373, 1
    %p377 = scmp.eq.s32.totalorder %s30, 1
    %p378 = scmp.ne.s32.totalorder %s373, %s375
    %p379 = scmp.eq.s32.totalorder %s30, 0
    %p380 = por %p378, %p379
    %p381 = scmp.ne.s32.totalorder %s373, %s375
    %p382 = scmp.eq.s32.totalorder %s35, 1
    %p383 = por %p381, %p382
    %p384 = scmp.ne.s32.totalorder %s375, %s376
    %p385 = scmp.eq.s32.totalorder %s35, 0
    %p386 = por %p384, %p385
    %p387 = scmp.ne.s32.totalorder %s375, %s376
    %p388 = scmp.eq.s32.totalorder %s36, 1
    %p389 = por %p387, %p388
    %p391 = scmp.ne.s32.totalorder %s376, %s390
    %p392 = scmp.eq.s32.totalorder %s36, 0
    %p393 = por %p391, %p392
    %s395 = sadd.s32 %s394, 1
    %p398 = scmp.eq.s32.totalorder %s30, 1
    %p399 = scmp.ne.s32.totalorder %s394, %s396
    %p400 = scmp.eq.s32.totalorder %s30, 0
    %p401 = por %p399, %p400
    %p402 = scmp.ne.s32.totalorder %s394, %s396
    %p403 = scmp.eq.s32.totalorder %s35, 1
    %p404 = por %p402, %p403
    %p405 = scmp.ne.s32.totalorder %s396, %s397
    %p406 = scmp.eq.s32.totalorder %s35, 0
    %p407 = por %p405, %p406
    %p408 = scmp.ne.s32.totalorder %s396, %s397
    %p409 = scmp.eq.s32.totalorder %s36, 1
    %p410 = por %p408, %p409
    %p412 = scmp.ne.s32.totalorder %s397, %s411
    %p413 = scmp.eq.s32.totalorder %s36, 0
    %p414 = por %p412, %p413
    %s416 = sadd.s32 %s415, 1
    %p419 = scmp.eq.s32.totalorder %s30, 1
    %p420 = scmp.ne.s32.totalorder %s415, %s417
    %p421 = scmp.eq.s32.totalorder %s30, 0
    %p422 = por %p420, %p421
    %p423 = scmp.ne.s32.totalorder %s415, %s417
    %p424 = scmp.eq.s32.totalorder %s35, 1
    %p425 = por %p423, %p424
    %p426 = scmp.ne.s32.totalorder %s417, %s418
    %p427 = scmp.eq.s32.totalorder %s35, 0
    %p428 = por %p426, %p427
    %p429 = scmp.ne.s32.totalorder %s417, %s418
    %p430 = scmp.eq.s32.totalorder %s36, 1
    %p431 = por %p429, %p430
    %p433 = scmp.ne.s32.totalorder %s418, %s432
    %p434 = scmp.eq.s32.totalorder %s36, 0
    %p435 = por %p433, %p434
    %s437 = sadd.s32 %s436, 1
    %p440 = scmp.eq.s32.totalorder %s30, 1
    %p441 = scmp.ne.s32.totalorder %s436, %s438
    %p442 = scmp.eq.s32.totalorder %s30, 0
    %p443 = por %p441, %p442
    %p444 = scmp.ne.s32.totalorder %s436, %s438
    %p445 = scmp.eq.s32.totalorder %s35, 1
    %p446 = por %p444, %p445
    %p447 = scmp.ne.s32.totalorder %s438, %s439
    %p448 = scmp.eq.s32.totalorder %s35, 0
    %p449 = por %p447, %p448
    %p450 = scmp.ne.s32.totalorder %s438, %s439
    %p451 = scmp.eq.s32.totalorder %s36, 1
    %p452 = por %p450, %p451
    %p454 = scmp.ne.s32.totalorder %s439, %s453
    %p455 = scmp.eq.s32.totalorder %s36, 0
    %p456 = por %p454, %p455
    %s458 = sadd.s32 %s457, 1
    %p461 = scmp.eq.s32.totalorder %s30, 1
    %p462 = scmp.ne.s32.totalorder %s457, %s459
    %p463 = scmp.eq.s32.totalorder %s30, 0
    %p464 = por %p462, %p463
    %p465 = scmp.ne.s32.totalorder %s457, %s459
    %p466 = scmp.eq.s32.totalorder %s35, 1
    %p467 = por %p465, %p466
    %p468 = scmp.ne.s32.totalorder %s459, %s460
    %p469 = scmp.eq.s32.totalorder %s35, 0
    %p470 = por %p468, %p469
    %p471 = scmp.ne.s32.totalorder %s459, %s460
    %p472 = scmp.eq.s32.totalorder %s36, 1
    %p473 = por %p471, %p472
    %p475 = scmp.ne.s32.totalorder %s460, %s474
    %p476 = scmp.eq.s32.totalorder %s36, 0
    %p477 = por %p475, %p476
    %s479 = sadd.s32 %s478, 1
    %p482 = scmp.eq.s32.totalorder %s30, 1
    %p483 = scmp.ne.s32.totalorder %s478, %s480
    %p484 = scmp.eq.s32.totalorder %s30, 0
    %p485 = por %p483, %p484
    %p486 = scmp.ne.s32.totalorder %s478, %s480
    %p487 = scmp.eq.s32.totalorder %s35, 1
    %p488 = por %p486, %p487
    %p489 = scmp.ne.s32.totalorder %s480, %s481
    %p490 = scmp.eq.s32.totalorder %s35, 0
    %p491 = por %p489, %p490
    %p492 = scmp.ne.s32.totalorder %s480, %s481
    %p493 = scmp.eq.s32.totalorder %s36, 1
    %p494 = por %p492, %p493
    %p496 = scmp.ne.s32.totalorder %s481, %s495
    %p497 = scmp.eq.s32.totalorder %s36, 0
    %p498 = por %p496, %p497
    %s500 = sadd.s32 %s499, 1
    %p503 = scmp.eq.s32.totalorder %s30, 1
    %p504 = scmp.ne.s32.totalorder %s499, %s501
    %p505 = scmp.eq.s32.totalorder %s30, 0
    %p506 = por %p504, %p505
    %p507 = scmp.ne.s32.totalorder %s499, %s501
    %p508 = scmp.eq.s32.totalorder %s35, 1
    %p509 = por %p507, %p508
    %p510 = scmp.ne.s32.totalorder %s501, %s502
    %p511 = scmp.eq.s32.totalorder %s35, 0
    %p512 = por %p510, %p511
    %p513 = scmp.ne.s32.totalorder %s501, %s502
    %p514 = scmp.eq.s32.totalorder %s36, 1
    %p515 = por %p513, %p514
    %p517 = scmp.ne.s32.totalorder %s502, %s516
    %p518 = scmp.eq.s32.totalorder %s36, 0
    %p519 = por %p517, %p518
    %s521 = sadd.s32 %s520, 1
    %p524 = scmp.eq.s32.totalorder %s30, 1
    %p525 = scmp.ne.s32.totalorder %s520, %s522
    %p526 = scmp.eq.s32.totalorder %s30, 0
    %p527 = por %p525, %p526
    %p528 = scmp.ne.s32.totalorder %s520, %s522
    %p529 = scmp.eq.s32.totalorder %s35, 1
    %p530 = por %p528, %p529
    %p531 = scmp.ne.s32.totalorder %s522, %s523
    %p532 = scmp.eq.s32.totalorder %s35, 0
    %p533 = por %p531, %p532
    %p534 = scmp.ne.s32.totalorder %s522, %s523
    %p535 = scmp.eq.s32.totalorder %s36, 1
    %p536 = por %p534, %p535
    %p538 = scmp.ne.s32.totalorder %s523, %s537
    %p539 = scmp.eq.s32.totalorder %s36, 0
    %p540 = por %p538, %p539
    %s542 = sadd.s32 %s541, 1
    %p545 = scmp.eq.s32.totalorder %s30, 1
    %p546 = scmp.ne.s32.totalorder %s541, %s543
    %p547 = scmp.eq.s32.totalorder %s30, 0
    %p548 = por %p546, %p547
    %p549 = scmp.ne.s32.totalorder %s541, %s543
    %p550 = scmp.eq.s32.totalorder %s35, 1
    %p551 = por %p549, %p550
    %p552 = scmp.ne.s32.totalorder %s543, %s544
    %p553 = scmp.eq.s32.totalorder %s35, 0
    %p554 = por %p552, %p553
    %p555 = scmp.ne.s32.totalorder %s543, %s544
    %p556 = scmp.eq.s32.totalorder %s36, 1
    %p557 = por %p555, %p556
    %p559 = scmp.ne.s32.totalorder %s544, %s558
    %p560 = scmp.eq.s32.totalorder %s36, 0
    %p561 = por %p559, %p560
    %s562 = ssub.s32 %s30, %s37
    %p563 = scmp.eq.s32.totalorder %s562, 0
    %s565 = sadd.s32 %s564, 1
    %s566 = scalar_select %p563, %s564, %s565
    %p569 = pneg %p563
    %p570 = scmp.eq.s32.totalorder %s30, 1
    %p571 = por %p569, %p570
    %p572 = scmp.ne.s32.totalorder %s564, %s567
    %p573 = scmp.eq.s32.totalorder %s30, 0
    %p574 = por %p572, %p573
    %p575 = scmp.ne.s32.totalorder %s564, %s567
    %p576 = scmp.eq.s32.totalorder %s35, 1
    %p577 = por %p575, %p576
    %p578 = scmp.ne.s32.totalorder %s567, %s568
    %p579 = scmp.eq.s32.totalorder %s35, 0
    %p580 = por %p578, %p579
    %p581 = scmp.ne.s32.totalorder %s567, %s568
    %p582 = scmp.eq.s32.totalorder %s36, 1
    %p583 = por %p581, %p582
    %p585 = scmp.ne.s32.totalorder %s568, %s584
    %p586 = scmp.eq.s32.totalorder %s36, 0
    %p587 = por %p585, %p586
    %p588 = scmp.le.s32.totalorder 1, %s30
    %p589 = scmp.lt.s32.totalorder %s30, 3
    %p590 = pnand %p588, %p589
    %p591 = pneg %p590
    // Predicated region
    $region9: #{decoder_forward.4} parent=5 // pred_check
      _
    $region10: #{decoder_forward.4} parent=5 // pred_check_branch
      %593 = sbr.rel (%p590) target = $region12
    $region11: #{decoder_forward.4} parent=5 // pred_region
      %s594 = ssub.s32 %s30, 1
      // Predicated region
      $region13: #{decoder_forward.4} parent=11 // pred_check
        %p595 = pneg %p155
      $region14: #{decoder_forward.4} parent=11 // pred_check_branch
        %597 = sbr.rel (%p595) target = $region16
      $region15: #{decoder_forward.4} parent=11 // pred_region
        _
      $region16: #{decoder_forward.4} parent=11 // pred_fallthru
        _
      // Predicated region
      $region17: #{decoder_forward.4} parent=11 // pred_check
        %p598 = pneg %p176
      $region18: #{decoder_forward.4} parent=11 // pred_check_branch
        %600 = sbr.rel (%p598) target = $region20
      $region19: #{decoder_forward.4} parent=11 // pred_region
        _
      $region20: #{decoder_forward.4} parent=11 // pred_fallthru
        _
      // Predicated region
      $region21: #{decoder_forward.4} parent=11 // pred_check
        %p601 = pneg %p197
      $region22: #{decoder_forward.4} parent=11 // pred_check_branch
        %603 = sbr.rel (%p601) target = $region24
      $region23: #{decoder_forward.4} parent=11 // pred_region
        _
      $region24: #{decoder_forward.4} parent=11 // pred_fallthru
        _
      // Predicated region
      $region25: #{decoder_forward.4} parent=11 // pred_check
        %p604 = pneg %p218
      $region26: #{decoder_forward.4} parent=11 // pred_check_branch
        %606 = sbr.rel (%p604) target = $region28
      $region27: #{decoder_forward.4} parent=11 // pred_region
        _
      $region28: #{decoder_forward.4} parent=11 // pred_fallthru
        _
      // Predicated region
      $region29: #{decoder_forward.4} parent=11 // pred_check
        %p607 = pneg %p239
      $region30: #{decoder_forward.4} parent=11 // pred_check_branch
        %609 = sbr.rel (%p607) target = $region32
      $region31: #{decoder_forward.4} parent=11 // pred_region
        _
      $region32: #{decoder_forward.4} parent=11 // pred_fallthru
        _
      // Predicated region
      $region33: #{decoder_forward.4} parent=11 // pred_check
        %p610 = pneg %p260
      $region34: #{decoder_forward.4} parent=11 // pred_check_branch
        %612 = sbr.rel (%p610) target = $region36
      $region35: #{decoder_forward.4} parent=11 // pred_region
        _
      $region36: #{decoder_forward.4} parent=11 // pred_fallthru
        _
      // Predicated region
      $region37: #{decoder_forward.4} parent=11 // pred_check
        %p613 = pneg %p281
      $region38: #{decoder_forward.4} parent=11 // pred_check_branch
        %615 = sbr.rel (%p613) target = $region40
      $region39: #{decoder_forward.4} parent=11 // pred_region
        _
      $region40: #{decoder_forward.4} parent=11 // pred_fallthru
        _
      // Predicated region
      $region41: #{decoder_forward.4} parent=11 // pred_check
        %p616 = pneg %p302
      $region42: #{decoder_forward.4} parent=11 // pred_check_branch
        %618 = sbr.rel (%p616) target = $region44
      $region43: #{decoder_forward.4} parent=11 // pred_region
        _
      $region44: #{decoder_forward.4} parent=11 // pred_fallthru
        _
      // Predicated region
      $region45: #{decoder_forward.4} parent=11 // pred_check
        %p619 = pneg %p323
      $region46: #{decoder_forward.4} parent=11 // pred_check_branch
        %621 = sbr.rel (%p619) target = $region48
      $region47: #{decoder_forward.4} parent=11 // pred_region
        _
      $region48: #{decoder_forward.4} parent=11 // pred_fallthru
        _
      // Predicated region
      $region49: #{decoder_forward.4} parent=11 // pred_check
        %p622 = pneg %p344
      $region50: #{decoder_forward.4} parent=11 // pred_check_branch
        %624 = sbr.rel (%p622) target = $region52
      $region51: #{decoder_forward.4} parent=11 // pred_region
        _
      $region52: #{decoder_forward.4} parent=11 // pred_fallthru
        _
      // Predicated region
      $region53: #{decoder_forward.4} parent=11 // pred_check
        %p625 = pneg %p365
      $region54: #{decoder_forward.4} parent=11 // pred_check_branch
        %627 = sbr.rel (%p625) target = $region56
      $region55: #{decoder_forward.4} parent=11 // pred_region
        _
      $region56: #{decoder_forward.4} parent=11 // pred_fallthru
        _
      // Predicated region
      $region57: #{decoder_forward.4} parent=11 // pred_check
        %p628 = pneg %p386
      $region58: #{decoder_forward.4} parent=11 // pred_check_branch
        %630 = sbr.rel (%p628) target = $region60
      $region59: #{decoder_forward.4} parent=11 // pred_region
        _
      $region60: #{decoder_forward.4} parent=11 // pred_fallthru
        _
      // Predicated region
      $region61: #{decoder_forward.4} parent=11 // pred_check
        %p631 = pneg %p407
      $region62: #{decoder_forward.4} parent=11 // pred_check_branch
        %633 = sbr.rel (%p631) target = $region64
      $region63: #{decoder_forward.4} parent=11 // pred_region
        _
      $region64: #{decoder_forward.4} parent=11 // pred_fallthru
        _
      // Predicated region
      $region65: #{decoder_forward.4} parent=11 // pred_check
        %p634 = pneg %p428
      $region66: #{decoder_forward.4} parent=11 // pred_check_branch
        %636 = sbr.rel (%p634) target = $region68
      $region67: #{decoder_forward.4} parent=11 // pred_region
        _
      $region68: #{decoder_forward.4} parent=11 // pred_fallthru
        _
      // Predicated region
      $region69: #{decoder_forward.4} parent=11 // pred_check
        %p637 = pneg %p449
      $region70: #{decoder_forward.4} parent=11 // pred_check_branch
        %639 = sbr.rel (%p637) target = $region72
      $region71: #{decoder_forward.4} parent=11 // pred_region
        _
      $region72: #{decoder_forward.4} parent=11 // pred_fallthru
        _
      // Predicated region
      $region73: #{decoder_forward.4} parent=11 // pred_check
        %p640 = pneg %p470
      $region74: #{decoder_forward.4} parent=11 // pred_check_branch
        %642 = sbr.rel (%p640) target = $region76
      $region75: #{decoder_forward.4} parent=11 // pred_region
        _
      $region76: #{decoder_forward.4} parent=11 // pred_fallthru
        _
      // Predicated region
      $region77: #{decoder_forward.4} parent=11 // pred_check
        %p643 = pneg %p491
      $region78: #{decoder_forward.4} parent=11 // pred_check_branch
        %645 = sbr.rel (%p643) target = $region80
      $region79: #{decoder_forward.4} parent=11 // pred_region
        _
      $region80: #{decoder_forward.4} parent=11 // pred_fallthru
        _
      // Predicated region
      $region81: #{decoder_forward.4} parent=11 // pred_check
        %p646 = pneg %p512
      $region82: #{decoder_forward.4} parent=11 // pred_check_branch
        %648 = sbr.rel (%p646) target = $region84
      $region83: #{decoder_forward.4} parent=11 // pred_region
        _
      $region84: #{decoder_forward.4} parent=11 // pred_fallthru
        _
      // Predicated region
      $region85: #{decoder_forward.4} parent=11 // pred_check
        %p649 = pneg %p533
      $region86: #{decoder_forward.4} parent=11 // pred_check_branch
        %651 = sbr.rel (%p649) target = $region88
      $region87: #{decoder_forward.4} parent=11 // pred_region
        _
      $region88: #{decoder_forward.4} parent=11 // pred_fallthru
        _
      // Predicated region
      $region89: #{decoder_forward.4} parent=11 // pred_check
        %p652 = pneg %p554
      $region90: #{decoder_forward.4} parent=11 // pred_check_branch
        %654 = sbr.rel (%p652) target = $region92
      $region91: #{decoder_forward.4} parent=11 // pred_region
        _
      $region92: #{decoder_forward.4} parent=11 // pred_fallthru
        _
    $region12: #{decoder_forward.4} parent=5 // pred_fallthru
      _
    %p655 = scmp.lt.s32.totalorder %s30, 2
    // Predicated region
    $region93: #{decoder_forward.4} parent=5 // pred_check
      %p656 = pneg %p655
    $region94: #{decoder_forward.4} parent=5 // pred_check_branch
      %658 = sbr.rel (%p656) target = $region96
    $region95: #{decoder_forward.4} parent=5 // pred_region
      // Predicated region
      $region97: #{decoder_forward.4} parent=95 // pred_check
        %p659 = pneg %p50
      $region98: #{decoder_forward.4} parent=95 // pred_check_branch
        %661 = sbr.rel (%p659) target = $region100
      $region99: #{decoder_forward.4} parent=95 // pred_region
        %p662 = scmp.lt.s32.totalorder %s30, 1
        %s663 = scalar_select %p662, %s30, 1
        %s664 = smul.addr %s663, 8
        %s665 = scalar_lea.vmem %s0, %s664
      $region100: #{decoder_forward.4} parent=95 // pred_fallthru
        _
      // Predicated region
      $region101: #{decoder_forward.4} parent=95 // pred_check
        %p666 = pneg %p76
      $region102: #{decoder_forward.4} parent=95 // pred_check_branch
        %668 = sbr.rel (%p666) target = $region104
      $region103: #{decoder_forward.4} parent=95 // pred_region
        %p669 = scmp.lt.s32.totalorder %s30, 1
        %s670 = scalar_select %p669, %s30, 1
        %s671 = smul.addr %s670, 8
        %s672 = scalar_lea.vmem %s1, %s671
      $region104: #{decoder_forward.4} parent=95 // pred_fallthru
        _
      // Predicated region
      $region105: #{decoder_forward.4} parent=95 // pred_check
        %p673 = pneg %p102
      $region106: #{decoder_forward.4} parent=95 // pred_check_branch
        %675 = sbr.rel (%p673) target = $region108
      $region107: #{decoder_forward.4} parent=95 // pred_region
        %p676 = scmp.lt.s32.totalorder %s30, 1
        %s677 = scalar_select %p676, %s30, 1
        %s678 = smul.addr %s677, 8
        %s679 = scalar_lea.vmem %s2, %s678
      $region108: #{decoder_forward.4} parent=95 // pred_fallthru
        _
      // Predicated region
      $region109: #{decoder_forward.4} parent=95 // pred_check
        %p680 = pneg %p128
      $region110: #{decoder_forward.4} parent=95 // pred_check_branch
        %682 = sbr.rel (%p680) target = $region112
      $region111: #{decoder_forward.4} parent=95 // pred_region
        %p683 = scmp.lt.s32.totalorder %s30, 1
        %s684 = scalar_select %p683, %s30, 1
        %s685 = smul.addr %s684, 8
        %s686 = scalar_lea.vmem %s3, %s685
      $region112: #{decoder_forward.4} parent=95 // pred_fallthru
        _
    $region96: #{decoder_forward.4} parent=5 // pred_fallthru
      _
    %p687 = scmp.le.s32.totalorder 1, %s30
    %p688 = scmp.lt.s32.totalorder %s30, 3
    %p689 = pnand %p687, %p688
    %p690 = pneg %p689
    // Predicated region
    $region113: #{decoder_forward.4} parent=5 // pred_check
      _
    $region114: #{decoder_forward.4} parent=5 // pred_check_branch
      %692 = sbr.rel (%p689) target = $region116
    $region115: #{decoder_forward.4} parent=5 // pred_region
      %s693 = ssub.s32 %s30, 1
      %p694 = scmp.lt.s32.totalorder %s35, 1
      %s695 = scalar_select %p694, %s35, 1
      %s696 = smul.addr %s695, 8
      %s697 = scalar_lea.vmem %s0, %s696
      %p698 = pneg %p56
      %p699 = pneg %p53
      %p700 = scmp.lt.s32.totalorder %s35, 1
      %s701 = scalar_select %p700, %s35, 1
      %s702 = smul.addr %s701, 8
      %s703 = scalar_lea.vmem %s1, %s702
      %p704 = pneg %p82
      %p705 = pneg %p79
      %p706 = scmp.lt.s32.totalorder %s35, 1
      %s707 = scalar_select %p706, %s35, 1
      %s708 = smul.addr %s707, 8
      %s709 = scalar_lea.vmem %s2, %s708
      %p710 = pneg %p108
      %p711 = pneg %p105
      %p712 = scmp.lt.s32.totalorder %s35, 1
      %s713 = scalar_select %p712, %s35, 1
      %s714 = smul.addr %s713, 8
      %s715 = scalar_lea.vmem %s3, %s714
      %p716 = pneg %p134
      %p717 = pneg %p131
      %p718 = pneg %p155
      %p719 = pneg %p152
      %p720 = pneg %p176
      %p721 = pneg %p173
      %p722 = pneg %p197
      %p723 = pneg %p194
      %p724 = pneg %p218
      %p725 = pneg %p215
      %p726 = pneg %p239
      %p727 = pneg %p236
      %p728 = pneg %p260
      %p729 = pneg %p257
      %p730 = pneg %p281
      %p731 = pneg %p278
      %p732 = pneg %p302
      %p733 = pneg %p299
      %p734 = pneg %p323
      %p735 = pneg %p320
      %p736 = pneg %p344
      %p737 = pneg %p341
      %p738 = pneg %p365
      %p739 = pneg %p362
      %p740 = pneg %p386
      %p741 = pneg %p383
      %p742 = pneg %p407
      %p743 = pneg %p404
      %p744 = pneg %p428
      %p745 = pneg %p425
      %p746 = pneg %p449
      %p747 = pneg %p446
      %p748 = pneg %p470
      %p749 = pneg %p467
      %p750 = pneg %p491
      %p751 = pneg %p488
      %p752 = pneg %p512
      %p753 = pneg %p509
      %p754 = pneg %p533
      %p755 = pneg %p530
      %p756 = pneg %p554
      %p757 = pneg %p551
      %p758 = pneg %p580
      %p759 = pneg %p577
      %p760 = scmp.lt.s32.totalorder %s35, 1
      %s761 = scalar_select %p760, %s35, 1
      %s762 = smul.addr %s761, 8
      %s763 = scalar_lea.vmem %s24, %s762
      %p764 = scmp.lt.s32.totalorder %s35, 1
      %s765 = scalar_select %p764, %s35, 1
      %s766 = smul.addr %s765, 8
      %s767 = scalar_lea.vmem %s0, %s766
      %p768 = scmp.lt.s32.totalorder %s35, 1
      %s769 = scalar_select %p768, %s35, 1
      %s770 = smul.addr %s769, 8
      %s771 = scalar_lea.vmem %s1, %s770
      %p772 = scmp.lt.s32.totalorder %s35, 1
      %s773 = scalar_select %p772, %s35, 1
      %s774 = smul.addr %s773, 8
      %s775 = scalar_lea.vmem %s2, %s774
      %p776 = scmp.lt.s32.totalorder %s35, 1
      %s777 = scalar_select %p776, %s35, 1
      %s778 = smul.addr %s777, 8
      %s779 = scalar_lea.vmem %s3, %s778
      %p780 = scmp.lt.s32.totalorder %s35, 1
      %s781 = scalar_select %p780, %s35, 1
      %s782 = smul.addr %s781, 8
      %s783 = scalar_lea.vmem %s24, %s782
      %v784 = vld [vmem:[%s767] sm:$0xff]
      %v785 = vld [vmem:[%s771] sm:$0xff]
      %v786 = vld [vmem:[%s775] sm:$0xff]
      %vm787 = vcmp.eq.f32.partialorder %v786, 0.0
      %v788 = vsel %vm787, -1e+30, 0.0
      %v789 = vld [vmem:[%s779] sm:$0xff]
      %vm790 = vcmp.eq.f32.partialorder %v789, 0.0
      %v791 = vsel %vm790, -1e+30, 0.0
      %v792 = vld [vmem:[%s4] sm:$0xff]
      %v793 = vld [vmem:[%s4 + $0x8] sm:$0xff]
      %v794 = vld [vmem:[%s4 + $0x10] sm:$0xff]
      %v795 = vld [vmem:[%s4 + $0x18] sm:$0xff]
      %vm796 = vcmask 261120
      %v798 = vsel %vm796, %v784, 0
      %800 = vmatprep.subr.mxu0 0.0
      %801 = vmatpush1.msra.mxu0 %v792
      %802 = vmatprep.subr.mxu0 0.0
      %803 = vmatpush1.msra.mxu0 %v793
      %804 = vmatprep.subr.mxu0 0.0
      %805 = vmatpush1.msra.mxu0 %v794
      %806 = vmatprep.subr.mxu0 0.0
      %807 = vmatpush1.msra.mxu0 %v795
      %808 = vmatprep.subr.mxu0 0.0
      %809 = vmatpush1.msra.mxu0 0.0
      %810 = vmatprep.subr.mxu0 0.0
      %811 = vmatpush1.msra.mxu0 0.0
      %812 = vmatprep.subr.mxu0 0.0
      %813 = vmatpush1.msra.mxu0 0.0
      %814 = vmatprep.subr.mxu0 0.0
      %815 = vmatpush1.msra.mxu0 0.0
      %816 = vmatprep.subr.mxu0 0.0
      %817 = vmatpush1.msra.mxu0 0.0
      %818 = vmatprep.subr.mxu0 0.0
      %819 = vmatpush1.msra.mxu0 0.0
      %820 = vmatprep.subr.mxu0 0.0
      %821 = vmatpush1.msra.mxu0 0.0
      %822 = vmatprep.subr.mxu0 0.0
      %823 = vmatpush1.msra.mxu0 0.0
      %824 = vmatprep.subr.mxu0 0.0
      %825 = vmatpush1.msra.mxu0 0.0
      %826 = vmatprep.subr.mxu0 0.0
      %827 = vmatpush1.msra.mxu0 0.0
      %828 = vmatprep.subr.mxu0 0.0
      %829 = vmatpush1.msra.mxu0 0.0
      %830 = vmatprep.subr.mxu0 0.0
      %831 = vmatpush1.msra.mxu0 0.0
      %832 = vmatprep.subr.mxu0 0.0
      %833 = vmatpush1.msra.mxu0 0.0
      %834 = vmatprep.subr.mxu0 0.0
      %835 = vmatpush1.msra.mxu0 0.0
      %836 = vmatprep.subr.mxu0 0.0
      %837 = vmatpush1.msra.mxu0 0.0
      %838 = vmatprep.subr.mxu0 0.0
      %839 = vmatpush1.msra.mxu0 0.0
      %840 = vmatprep.subr.mxu0 0.0
      %841 = vmatpush1.msra.mxu0 0.0
      %842 = vmatprep.subr.mxu0 0.0
      %843 = vmatpush1.msra.mxu0 0.0
      %844 = vmatprep.subr.mxu0 0.0
      %845 = vmatpush1.msra.mxu0 0.0
      %846 = vmatprep.subr.mxu0 0.0
      %847 = vmatpush1.msra.mxu0 0.0
      %848 = vmatprep.subr.mxu0 0.0
      %849 = vmatpush1.msra.mxu0 0.0
      %850 = vmatprep.subr.mxu0 0.0
      %851 = vmatpush1.msra.mxu0 0.0
      %852 = vmatprep.subr.mxu0 0.0
      %853 = vmatpush1.msra.mxu0 0.0
      %854 = vmatprep.subr.mxu0 0.0
      %855 = vmatpush1.msra.mxu0 0.0
      %856 = vmatprep.subr.mxu0 0.0
      %857 = vmatpush1.msra.mxu0 0.0
      %858 = vmatprep.subr.mxu0 0.0
      %859 = vmatpush1.msra.mxu0 0.0
      %860 = vmatprep.subr.mxu0 0.0
      %861 = vmatpush1.msra.mxu0 0.0
      %862 = vmatprep.subr.mxu0 0.0
      %863 = vmatpush1.msra.mxu0 0.0
      %864 = vmatprep.mubr.f32.mxu0 0.0
      %865 = vmatmul.mubr.f32.gmra.mrb[0].mxu0 %v798
      %v866 = vpop.f32.mrb[0].mxu0
      %v867 = vadd.f32 0.0, %v866
      %v868 = vpop.f32.mrb[0].mxu0
      %869 = vdwg.mxu0
      %v870 = vld [vmem:[%s5] sm:$0xff]
      %v871 = vld [vmem:[%s5 + $0x8] sm:$0xff]
      %v872 = vld [vmem:[%s5 + $0x10] sm:$0xff]
      %v873 = vld [vmem:[%s5 + $0x18] sm:$0xff]
      %874 = vmatprep.subr.mxu0 0.0
      %875 = vmatpush1.msra.mxu0 %v870
      %876 = vmatprep.subr.mxu0 0.0
      %877 = vmatpush1.msra.mxu0 %v871
      %878 = vmatprep.subr.mxu0 0.0
      %879 = vmatpush1.msra.mxu0 %v872
      %880 = vmatprep.subr.mxu0 0.0
      %881 = vmatpush1.msra.mxu0 %v873
      %882 = vmatprep.subr.mxu0 0.0
      %883 = vmatpush1.msra.mxu0 0.0
      %884 = vmatprep.subr.mxu0 0.0
      %885 = vmatpush1.msra.mxu0 0.0
      %886 = vmatprep.subr.mxu0 0.0
      %887 = vmatpush1.msra.mxu0 0.0
      %888 = vmatprep.subr.mxu0 0.0
      %889 = vmatpush1.msra.mxu0 0.0
      %890 = vmatprep.subr.mxu0 0.0
      %891 = vmatpush1.msra.mxu0 0.0
      %892 = vmatprep.subr.mxu0 0.0
      %893 = vmatpush1.msra.mxu0 0.0
      %894 = vmatprep.subr.mxu0 0.0
      %895 = vmatpush1.msra.mxu0 0.0
      %896 = vmatprep.subr.mxu0 0.0
      %897 = vmatpush1.msra.mxu0 0.0
      %898 = vmatprep.subr.mxu0 0.0
      %899 = vmatpush1.msra.mxu0 0.0
      %900 = vmatprep.subr.mxu0 0.0
      %901 = vmatpush1.msra.mxu0 0.0
      %902 = vmatprep.subr.mxu0 0.0
      %903 = vmatpush1.msra.mxu0 0.0
      %904 = vmatprep.subr.mxu0 0.0
      %905 = vmatpush1.msra.mxu0 0.0
      %906 = vmatprep.subr.mxu0 0.0
      %907 = vmatpush1.msra.mxu0 0.0
      %908 = vmatprep.subr.mxu0 0.0
      %909 = vmatpush1.msra.mxu0 0.0
      %910 = vmatprep.subr.mxu0 0.0
      %911 = vmatpush1.msra.mxu0 0.0
      %912 = vmatprep.subr.mxu0 0.0
      %913 = vmatpush1.msra.mxu0 0.0
      %914 = vmatprep.subr.mxu0 0.0
      %915 = vmatpush1.msra.mxu0 0.0
      %916 = vmatprep.subr.mxu0 0.0
      %917 = vmatpush1.msra.mxu0 0.0
      %918 = vmatprep.subr.mxu0 0.0
      %919 = vmatpush1.msra.mxu0 0.0
      %920 = vmatprep.subr.mxu0 0.0
      %921 = vmatpush1.msra.mxu0 0.0
      %922 = vmatprep.subr.mxu0 0.0
      %923 = vmatpush1.msra.mxu0 0.0
      %924 = vmatprep.subr.mxu0 0.0
      %925 = vmatpush1.msra.mxu0 0.0
      %926 = vmatprep.subr.mxu0 0.0
      %927 = vmatpush1.msra.mxu0 0.0
      %928 = vmatprep.subr.mxu0 0.0
      %929 = vmatpush1.msra.mxu0 0.0
      %930 = vmatprep.subr.mxu0 0.0
      %931 = vmatpush1.msra.mxu0 0.0
      %932 = vmatprep.subr.mxu0 0.0
      %933 = vmatpush1.msra.mxu0 0.0
      %934 = vmatprep.subr.mxu0 0.0
      %935 = vmatpush1.msra.mxu0 0.0
      %936 = vmatprep.subr.mxu0 0.0
      %937 = vmatpush1.msra.mxu0 0.0
      %938 = vmatprep.mubr.f32.mxu0 0.0
      %939 = vmatmul.mubr.f32.gmra.mrb[0].mxu0 %v798
      %v940 = vpop.f32.mrb[0].mxu0
      %v941 = vadd.f32 0.0, %v940
      %v942 = vpop.f32.mrb[0].mxu0
      %943 = vdwg.mxu0
      %v944 = vld [vmem:[%s6] sm:$0xff]
      %v945 = vld [vmem:[%s6 + $0x8] sm:$0xff]
      %v946 = vld [vmem:[%s6 + $0x10] sm:$0xff]
      %v947 = vld [vmem:[%s6 + $0x18] sm:$0xff]
      %948 = vmatprep.subr.mxu0 0.0
      %949 = vmatpush1.msra.mxu0 %v944
      %950 = vmatprep.subr.mxu0 0.0
      %951 = vmatpush1.msra.mxu0 %v945
      %952 = vmatprep.subr.mxu0 0.0
      %953 = vmatpush1.msra.mxu0 %v946
      %954 = vmatprep.subr.mxu0 0.0
      %955 = vmatpush1.msra.mxu0 %v947
      %956 = vmatprep.subr.mxu0 0.0
      %957 = vmatpush1.msra.mxu0 0.0
      %958 = vmatprep.subr.mxu0 0.0
      %959 = vmatpush1.msra.mxu0 0.0
      %960 = vmatprep.subr.mxu0 0.0
      %961 = vmatpush1.msra.mxu0 0.0
      %962 = vmatprep.subr.mxu0 0.0
      %963 = vmatpush1.msra.mxu0 0.0
      %964 = vmatprep.subr.mxu0 0.0
      %965 = vmatpush1.msra.mxu0 0.0
      %966 = vmatprep.subr.mxu0 0.0
      %967 = vmatpush1.msra.mxu0 0.0
      %968 = vmatprep.subr.mxu0 0.0
      %969 = vmatpush1.msra.mxu0 0.0
      %970 = vmatprep.subr.mxu0 0.0
      %971 = vmatpush1.msra.mxu0 0.0
      %972 = vmatprep.subr.mxu0 0.0
      %973 = vmatpush1.msra.mxu0 0.0
      %974 = vmatprep.subr.mxu0 0.0
      %975 = vmatpush1.msra.mxu0 0.0
      %976 = vmatprep.subr.mxu0 0.0
      %977 = vmatpush1.msra.mxu0 0.0
      %978 = vmatprep.subr.mxu0 0.0
      %979 = vmatpush1.msra.mxu0 0.0
      %980 = vmatprep.subr.mxu0 0.0
      %981 = vmatpush1.msra.mxu0 0.0
      %982 = vmatprep.subr.mxu0 0.0
      %983 = vmatpush1.msra.mxu0 0.0
      %984 = vmatprep.subr.mxu0 0.0
      %985 = vmatpush1.msra.mxu0 0.0
      %986 = vmatprep.subr.mxu0 0.0
      %987 = vmatpush1.msra.mxu0 0.0
      %988 = vmatprep.subr.mxu0 0.0
      %989 = vmatpush1.msra.mxu0 0.0
      %990 = vmatprep.subr.mxu0 0.0
      %991 = vmatpush1.msra.mxu0 0.0
      %992 = vmatprep.subr.mxu0 0.0
      %993 = vmatpush1.msra.mxu0 0.0
      %994 = vmatprep.subr.mxu0 0.0
      %995 = vmatpush1.msra.mxu0 0.0
      %996 = vmatprep.subr.mxu0 0.0
      %997 = vmatpush1.msra.mxu0 0.0
      %998 = vmatprep.subr.mxu0 0.0
      %999 = vmatpush1.msra.mxu0 0.0
      %1000 = vmatprep.subr.mxu0 0.0
      %1001 = vmatpush1.msra.mxu0 0.0
      %1002 = vmatprep.subr.mxu0 0.0
      %1003 = vmatpush1.msra.mxu0 0.0
      %1004 = vmatprep.subr.mxu0 0.0
      %1005 = vmatpush1.msra.mxu0 0.0
      %1006 = vmatprep.subr.mxu0 0.0
      %1007 = vmatpush1.msra.mxu0 0.0
      %1008 = vmatprep.subr.mxu0 0.0
      %1009 = vmatpush1.msra.mxu0 0.0
      %1010 = vmatprep.subr.mxu0 0.0
      %1011 = vmatpush1.msra.mxu0 0.0
      %1012 = vmatprep.mubr.f32.mxu0 0.0
      %1013 = vmatmul.mubr.f32.gmra.mrb[0].mxu0 %v798
      %v1014 = vpop.f32.mrb[0].mxu0
      %v1015 = vadd.f32 0.0, %v1014
      %v1016 = vpop.f32.mrb[0].mxu0
      %1017 = vdwg.mxu0
      %vm1018 = vcmask 64512
      %v1020 = vsel %vm1018, %v867, 0
      %v1023 = vsel %vm1018, %v941, 0
      %1025 = vmatprep.subr.mxu0 0.0
      %1026 = vmatpush1.xpose.msra.mxu0 %v1023
      %1027 = vmatprep.subr.mxu0 0.0
      %1028 = vmatpush1.xpose.msra.mxu0 0.0
      %1029 = vmatprep.subr.mxu0 0.0
      %1030 = vmatpush1.xpose.msra.mxu0 0.0
      %1031 = vmatprep.subr.mxu0 0.0
      %1032 = vmatpush1.xpose.msra.mxu0 0.0
      %1033 = vmatprep.subr.mxu0 0.0
      %1034 = vmatpush1.xpose.msra.mxu0 0.0
      %1035 = vmatprep.subr.mxu0 0.0
      %1036 = vmatpush1.xpose.msra.mxu0 0.0
      %1037 = vmatprep.subr.mxu0 0.0
      %1038 = vmatpush1.xpose.msra.mxu0 0.0
      %1039 = vmatprep.subr.mxu0 0.0
      %1040 = vmatpush1.xpose.msra.mxu0 0.0
      %1041 = vmatprep.subr.mxu0 0.0
      %1042 = vmatpush1.xpose.msra.mxu0 0.0
      %1043 = vmatprep.subr.mxu0 0.0
      %1044 = vmatpush1.xpose.msra.mxu0 0.0
      %1045 = vmatprep.subr.mxu0 0.0
      %1046 = vmatpush1.xpose.msra.mxu0 0.0
      %1047 = vmatprep.subr.mxu0 0.0
      %1048 = vmatpush1.xpose.msra.mxu0 0.0
      %1049 = vmatprep.subr.mxu0 0.0
      %1050 = vmatpush1.xpose.msra.mxu0 0.0
      %1051 = vmatprep.subr.mxu0 0.0
      %1052 = vmatpush1.xpose.msra.mxu0 0.0
      %1053 = vmatprep.subr.mxu0 0.0
      %1054 = vmatpush1.xpose.msra.mxu0 0.0
      %1055 = vmatprep.subr.mxu0 0.0
      %1056 = vmatpush1.xpose.msra.mxu0 0.0
      %1057 = vmatprep.subr.mxu0 0.0
      %1058 = vmatpush1.xpose.msra.mxu0 0.0
      %1059 = vmatprep.subr.mxu0 0.0
      %1060 = vmatpush1.xpose.msra.mxu0 0.0
      %1061 = vmatprep.subr.mxu0 0.0
      %1062 = vmatpush1.xpose.msra.mxu0 0.0
      %1063 = vmatprep.subr.mxu0 0.0
      %1064 = vmatpush1.xpose.msra.mxu0 0.0
      %1065 = vmatprep.subr.mxu0 0.0
      %1066 = vmatpush1.xpose.msra.mxu0 0.0
      %1067 = vmatprep.subr.mxu0 0.0
      %1068 = vmatpush1.xpose.msra.mxu0 0.0
      %1069 = vmatprep.subr.mxu0 0.0
      %1070 = vmatpush1.xpose.msra.mxu0 0.0
      %1071 = vmatprep.subr.mxu0 0.0
      %1072 = vmatpush1.xpose.msra.mxu0 0.0
      %1073 = vmatprep.subr.mxu0 0.0
      %1074 = vmatpush1.xpose.msra.mxu0 0.0
      %1075 = vmatprep.subr.mxu0 0.0
      %1076 = vmatpush1.xpose.msra.mxu0 0.0
      %1077 = vmatprep.subr.mxu0 0.0
      %1078 = vmatpush1.xpose.msra.mxu0 0.0
      %1079 = vmatprep.subr.mxu0 0.0
      %1080 = vmatpush1.xpose.msra.mxu0 0.0
      %1081 = vmatprep.subr.mxu0 0.0
      %1082 = vmatpush1.xpose.msra.mxu0 0.0
      %1083 = vmatprep.subr.mxu0 0.0
      %1084 = vmatpush1.xpose.msra.mxu0 0.0
      %1085 = vmatprep.subr.mxu0 0.0
      %1086 = vmatpush1.xpose.msra.mxu0 0.0
      %1087 = vmatprep.subr.mxu0 0.0
      %1088 = vmatpush1.xpose.msra.mxu0 0.0
      %1089 = vmatprep.mubr.f32.mxu0 0.0
      %1090 = vmatmul.mubr.f32.gmra.mrb[0].mxu0 %v1020
      %v1091 = vpop.f32.mrb[0].mxu0
      %v1092 = vadd.f32 0.0, %v1091
      %v1093 = vpop.f32.mrb[0].mxu0
      %1094 = vdwg.mxu0
      %v1095 = vmul.f32 %v1092, 0.17677669
      %v1096 = vadd.f32 %v1095, %v788
      %v1097 = vsel %vm1018, %v1096, -inf
      %1098 = vmax.xlane.f32.xlu0 %v1097
      %v1099 = vpop.xlane.xlu0 %1098
      %v1100 = vsub.f32 %v1096, %v1099
      %v1101 = vmul.f32 %v1100, 1.442695
      %v1102 = vpow.pop %v1101
      %v1103 = vsel %vm1018, %v1102, 0.0
      %1104 = vadd.xlane.f32.xlu0 %v1103
      %v1105 = vpop.xlane.xlu0 %1104
      %v1106 = vrcp.pop %v1105
      %v1107 = vmul.f32 %v1102, %v1106
      %v1108 = vsel %vm1018, %v1107, 0.0
      %1109 = vadd.xlane.f32.xlu0 %v1108
      %v1110 = vpop.xlane.xlu0 %1109
      %v1111 = vsel %vm1018, %v1015, 0.0
      %v1112 = vrot.slane %v1111, 4
      %v1113 = vadd.f32 %v1111, %v1112
      %v1114 = vrot.slane %v1113, 2
      %v1115 = vadd.f32 %v1113, %v1114
      %v1116 = vrot.slane %v1115, 1
      %v1117 = vadd.f32 %v1115, %v1116
      %v1118 = vmul.f32 %v1110, %v1117
      %1119 = vrot.lane.b32.xlu0 %v867, 120
      %v1120 = vpop.permute.xlu0 %1119
      %1121 = vrot.lane.b32.xlu0 %v941, 120
      %v1122 = vpop.permute.xlu0 %1121
      %v1123 = vsel %vm1018, %v1120, 0
      %v1125 = vsel %vm1018, %v1122, 0
      %1127 = vmatprep.subr.mxu0 0.0
      %1128 = vmatpush1.xpose.msra.mxu0 %v1125
      %1129 = vmatprep.subr.mxu0 0.0
      %1130 = vmatpush1.xpose.msra.mxu0 0.0
      %1131 = vmatprep.subr.mxu0 0.0
      %1132 = vmatpush1.xpose.msra.mxu0 0.0
      %1133 = vmatprep.subr.mxu0 0.0
      %1134 = vmatpush1.xpose.msra.mxu0 0.0
      %1135 = vmatprep.subr.mxu0 0.0
      %1136 = vmatpush1.xpose.msra.mxu0 0.0
      %1137 = vmatprep.subr.mxu0 0.0
      %1138 = vmatpush1.xpose.msra.mxu0 0.0
      %1139 = vmatprep.subr.mxu0 0.0
      %1140 = vmatpush1.xpose.msra.mxu0 0.0
      %1141 = vmatprep.subr.mxu0 0.0
      %1142 = vmatpush1.xpose.msra.mxu0 0.0
      %1143 = vmatprep.subr.mxu0 0.0
      %1144 = vmatpush1.xpose.msra.mxu0 0.0
      %1145 = vmatprep.subr.mxu0 0.0
      %1146 = vmatpush1.xpose.msra.mxu0 0.0
      %1147 = vmatprep.subr.mxu0 0.0
      %1148 = vmatpush1.xpose.msra.mxu0 0.0
      %1149 = vmatprep.subr.mxu0 0.0
      %1150 = vmatpush1.xpose.msra.mxu0 0.0
      %1151 = vmatprep.subr.mxu0 0.0
      %1152 = vmatpush1.xpose.msra.mxu0 0.0
      %1153 = vmatprep.subr.mxu0 0.0
      %1154 = vmatpush1.xpose.msra.mxu0 0.0
      %1155 = vmatprep.subr.mxu0 0.0
      %1156 = vmatpush1.xpose.msra.mxu0 0.0
      %1157 = vmatprep.subr.mxu0 0.0
      %1158 = vmatpush1.xpose.msra.mxu0 0.0
      %1159 = vmatprep.subr.mxu0 0.0
      %1160 = vmatpush1.xpose.msra.mxu0 0.0
      %1161 = vmatprep.subr.mxu0 0.0
      %1162 = vmatpush1.xpose.msra.mxu0 0.0
      %1163 = vmatprep.subr.mxu0 0.0
      %1164 = vmatpush1.xpose.msra.mxu0 0.0
      %1165 = vmatprep.subr.mxu0 0.0
      %1166 = vmatpush1.xpose.msra.mxu0 0.0
      %1167 = vmatprep.subr.mxu0 0.0
      %1168 = vmatpush1.xpose.msra.mxu0 0.0
      %1169 = vmatprep.subr.mxu0 0.0
      %1170 = vmatpush1.xpose.msra.mxu0 0.0
      %1171 = vmatprep.subr.mxu0 0.0
      %1172 = vmatpush1.xpose.msra.mxu0 0.0
      %1173 = vmatprep.subr.mxu0 0.0
      %1174 = vmatpush1.xpose.msra.mxu0 0.0
      %1175 = vmatprep.subr.mxu0 0.0
      %1176 = vmatpush1.xpose.msra.mxu0 0.0
      %1177 = vmatprep.subr.mxu0 0.0
      %1178 = vmatpush1.xpose.msra.mxu0 0.0
      %1179 = vmatprep.subr.mxu0 0.0
      %1180 = vmatpush1.xpose.msra.mxu0 0.0
      %1181 = vmatprep.subr.mxu0 0.0
      %1182 = vmatpush1.xpose.msra.mxu0 0.0
      %1183 = vmatprep.subr.mxu0 0.0
      %1184 = vmatpush1.xpose.msra.mxu0 0.0
      %1185 = vmatprep.subr.mxu0 0.0
      %1186 = vmatpush1.xpose.msra.mxu0 0.0
      %1187 = vmatprep.subr.mxu0 0.0
      %1188 = vmatpush1.xpose.msra.mxu0 0.0
      %1189 = vmatprep.subr.mxu0 0.0
      %1190 = vmatpush1.xpose.msra.mxu0 0.0
      %1191 = vmatprep.mubr.f32.mxu0 0.0
      %1192 = vmatmul.mubr.f32.gmra.mrb[0].mxu0 %v1123
      %v1193 = vpop.f32.mrb[0].mxu0
      %v1194 = vadd.f32 0.0, %v1193
      %v1195 = vpop.f32.mrb[0].mxu0
      %1196 = vdwg.mxu0
      %v1197 = vmul.f32 %v1194, 0.17677669
      %v1198 = vadd.f32 %v1197, %v788
      %v1199 = vsel %vm1018, %v1198, -inf
      %1200 = vmax.xlane.f32.xlu0 %v1199
      %v1201 = vpop.xlane.xlu0 %1200
      %v1202 = vsub.f32 %v1198, %v1201
      %v1203 = vmul.f32 %v1202, 1.442695
      %v1204 = vpow.pop %v1203
      %v1205 = vsel %vm1018, %v1204, 0.0
      %1206 = vadd.xlane.f32.xlu0 %v1205
      %v1207 = vpop.xlane.xlu0 %1206
      %v1208 = vrcp.pop %v1207
      %v1209 = vmul.f32 %v1204, %v1208
      %v1210 = vsel %vm1018, %v1209, 0.0
      %1211 = vadd.xlane.f32.xlu0 %v1210
      %v1212 = vpop.xlane.xlu0 %1211
      %vm1213 = vcmask 130112
      %v1214 = vsel %vm1213, %v1015, 0.0
      %v1215 = vrot.slane %v1214, 4
      %v1216 = vadd.f32 %v1214, %v1215
      %v1217 = vrot.slane %v1216, 2
      %v1218 = vadd.f32 %v1216, %v1217
      %v1219 = vrot.slane %v1218, 1
      %v1220 = vadd.f32 %v1218, %v1219
      %v1221 = vmul.f32 %v1212, %v1220
      %1222 = vrot.lane.b32.xlu0 %v867, 112
      %v1223 = vpop.permute.xlu0 %1222
      %1224 = vrot.lane.b32.xlu0 %v941, 112
      %v1225 = vpop.permute.xlu0 %1224
      %v1226 = vsel %vm1018, %v1223, 0
      %v1228 = vsel %vm1018, %v1225, 0
      %1230 = vmatprep.subr.mxu0 0.0
      %1231 = vmatpush1.xpose.msra.mxu0 %v1228
      %1232 = vmatprep.subr.mxu0 0.0
      %1233 = vmatpush1.xpose.msra.mxu0 0.0
      %1234 = vmatprep.subr.mxu0 0.0
      %1235 = vmatpush1.xpose.msra.mxu0 0.0
      %1236 = vmatprep.subr.mxu0 0.0
      %1237 = vmatpush1.xpose.msra.mxu0 0.0
      %1238 = vmatprep.subr.mxu0 0.0
      %1239 = vmatpush1.xpose.msra.mxu0 0.0
      %1240 = vmatprep.subr.mxu0 0.0
      %1241 = vmatpush1.xpose.msra.mxu0 0.0
      %1242 = vmatprep.subr.mxu0 0.0
      %1243 = vmatpush1.xpose.msra.mxu0 0.0
      %1244 = vmatprep.subr.mxu0 0.0
      %1245 = vmatpush1.xpose.msra.mxu0 0.0
      %1246 = vmatprep.subr.mxu0 0.0
      %1247 = vmatpush1.xpose.msra.mxu0 0.0
      %1248 = vmatprep.subr.mxu0 0.0
      %1249 = vmatpush1.xpose.msra.mxu0 0.0
      %1250 = vmatprep.subr.mxu0 0.0
      %1251 = vmatpush1.xpose.msra.mxu0 0.0
      %1252 = vmatprep.subr.mxu0 0.0
      %1253 = vmatpush1.xpose.msra.mxu0 0.0
      %1254 = vmatprep.subr.mxu0 0.0
      %1255 = vmatpush1.xpose.msra.mxu0 0.0
      %1256 = vmatprep.subr.mxu0 0.0
      %1257 = vmatpush1.xpose.msra.mxu0 0.0
      %1258 = vmatprep.subr.mxu0 0.0
      %1259 = vmatpush1.xpose.msra.mxu0 0.0
      %1260 = vmatprep.subr.mxu0 0.0
      %1261 = vmatpush1.xpose.msra.mxu0 0.0
      %1262 = vmatprep.subr.mxu0 0.0
      %1263 = vmatpush1.xpose.msra.mxu0 0.0
      %1264 = vmatprep.subr.mxu0 0.0
      %1265 = vmatpush1.xpose.msra.mxu0 0.0
      %1266 = vmatprep.subr.mxu0 0.0
      %1267 = vmatpush1.xpose.msra.mxu0 0.0
      %1268 = vmatprep.subr.mxu0 0.0
      %1269 = vmatpush1.xpose.msra.mxu0 0.0
      %1270 = vmatprep.subr.mxu0 0.0
      %1271 = vmatpush1.xpose.msra.mxu0 0.0
      %1272 = vmatprep.subr.mxu0 0.0
      %1273 = vmatpush1.xpose.msra.mxu0 0.0
      %1274 = vmatprep.subr.mxu0 0.0
      %1275 = vmatpush1.xpose.msra.mxu0 0.0
      %1276 = vmatprep.subr.mxu0 0.0
      %1277 = vmatpush1.xpose.msra.mxu0 0.0
      %1278 = vmatprep.subr.mxu0 0.0
      %1279 = vmatpush1.xpose.msra.mxu0 0.0
      %1280 = vmatprep.subr.mxu0 0.0
      %1281 = vmatpush1.xpose.msra.mxu0 0.0
      %1282 = vmatprep.subr.mxu0 0.0
      %1283 = vmatpush1.xpose.msra.mxu0 0.0
      %1284 = vmatprep.subr.mxu0 0.0
      %1285 = vmatpush1.xpose.msra.mxu0 0.0
      %1286 = vmatprep.subr.mxu0 0.0
      %1287 = vmatpush1.xpose.msra.mxu0 0.0
      %1288 = vmatprep.subr.mxu0 0.0
      %1289 = vmatpush1.xpose.msra.mxu0 0.0
      %1290 = vmatprep.subr.mxu0 0.0
      %1291 = vmatpush1.xpose.msra.mxu0 0.0
      %1292 = vmatprep.subr.mxu0 0.0
      %1293 = vmatpush1.xpose.msra.mxu0 0.0
      %1294 = vmatprep.mubr.f32.mxu0 0.0
      %1295 = vmatmul.mubr.f32.gmra.mrb[0].mxu0 %v1226
      %v1296 = vpop.f32.mrb[0].mxu0
      %v1297 = vadd.f32 0.0, %v1296
      %v1298 = vpop.f32.mrb[0].mxu0
      %1299 = vdwg.mxu0
      %v1300 = vmul.f32 %v1297, 0.17677669
      %v1301 = vadd.f32 %v1300, %v788
      %v1302 = vsel %vm1018, %v1301, -inf
      %1303 = vmax.xlane.f32.xlu0 %v1302
      %v1304 = vpop.xlane.xlu0 %1303
      %v1305 = vsub.f32 %v1301, %v1304
      %v1306 = vmul.f32 %v1305, 1.442695
      %v1307 = vpow.pop %v1306
      %v1308 = vsel %vm1018, %v1307, 0.0
      %1309 = vadd.xlane.f32.xlu0 %v1308
      %v1310 = vpop.xlane.xlu0 %1309
      %v1311 = vrcp.pop %v1310
      %v1312 = vmul.f32 %v1307, %v1311
      %v1313 = vsel %vm1018, %v1312, 0.0
      %1314 = vadd.xlane.f32.xlu0 %v1313
      %v1315 = vpop.xlane.xlu0 %1314
      %vm1316 = vcmask 195712
      %v1317 = vsel %vm1316, %v1015, 0.0
      %v1318 = vrot.slane %v1317, 4
      %v1319 = vadd.f32 %v1317, %v1318
      %v1320 = vrot.slane %v1319, 2
      %v1321 = vadd.f32 %v1319, %v1320
      %v1322 = vrot.slane %v1321, 1
      %v1323 = vadd.f32 %v1321, %v1322
      %v1324 = vmul.f32 %v1315, %v1323
      %1325 = vrot.lane.b32.xlu0 %v867, 104
      %v1326 = vpop.permute.xlu0 %1325
      %1327 = vrot.lane.b32.xlu0 %v941, 104
      %v1328 = vpop.permute.xlu0 %1327
      %v1329 = vsel %vm1018, %v1326, 0
      %v1331 = vsel %vm1018, %v1328, 0
      %1333 = vmatprep.subr.mxu0 0.0
      %1334 = vmatpush1.xpose.msra.mxu0 %v1331
      %1335 = vmatprep.subr.mxu0 0.0
      %1336 = vmatpush1.xpose.msra.mxu0 0.0
      %1337 = vmatprep.subr.mxu0 0.0
      %1338 = vmatpush1.xpose.msra.mxu0 0.0
      %1339 = vmatprep.subr.mxu0 0.0
      %1340 = vmatpush1.xpose.msra.mxu0 0.0
      %1341 = vmatprep.subr.mxu0 0.0
      %1342 = vmatpush1.xpose.msra.mxu0 0.0
      %1343 = vmatprep.subr.mxu0 0.0
      %1344 = vmatpush1.xpose.msra.mxu0 0.0
      %1345 = vmatprep.subr.mxu0 0.0
      %1346 = vmatpush1.xpose.msra.mxu0 0.0
      %1347 = vmatprep.subr.mxu0 0.0
      %1348 = vmatpush1.xpose.msra.mxu0 0.0
      %1349 = vmatprep.subr.mxu0 0.0
      %1350 = vmatpush1.xpose.msra.mxu0 0.0
      %1351 = vmatprep.subr.mxu0 0.0
      %1352 = vmatpush1.xpose.msra.mxu0 0.0
      %1353 = vmatprep.subr.mxu0 0.0
      %1354 = vmatpush1.xpose.msra.mxu0 0.0
      %1355 = vmatprep.subr.mxu0 0.0
      %1356 = vmatpush1.xpose.msra.mxu0 0.0
      %1357 = vmatprep.subr.mxu0 0.0
      %1358 = vmatpush1.xpose.msra.mxu0 0.0
      %1359 = vmatprep.subr.mxu0 0.0
      %1360 = vmatpush1.xpose.msra.mxu0 0.0
      %1361 = vmatprep.subr.mxu0 0.0
      %1362 = vmatpush1.xpose.msra.mxu0 0.0
      %1363 = vmatprep.subr.mxu0 0.0
      %1364 = vmatpush1.xpose.msra.mxu0 0.0
      %1365 = vmatprep.subr.mxu0 0.0
      %1366 = vmatpush1.xpose.msra.mxu0 0.0
      %1367 = vmatprep.subr.mxu0 0.0
      %1368 = vmatpush1.xpose.msra.mxu0 0.0
      %1369 = vmatprep.subr.mxu0 0.0
      %1370 = vmatpush1.xpose.msra.mxu0 0.0
      %1371 = vmatprep.subr.mxu0 0.0
      %1372 = vmatpush1.xpose.msra.mxu0 0.0
      %1373 = vmatprep.subr.mxu0 0.0
      %1374 = vmatpush1.xpose.msra.mxu0 0.0
      %1375 = vmatprep.subr.mxu0 0.0
      %1376 = vmatpush1.xpose.msra.mxu0 0.0
      %1377 = vmatprep.subr.mxu0 0.0
      %1378 = vmatpush1.xpose.msra.mxu0 0.0
      %1379 = vmatprep.subr.mxu0 0.0
      %1380 = vmatpush1.xpose.msra.mxu0 0.0
      %1381 = vmatprep.subr.mxu0 0.0
      %1382 = vmatpush1.xpose.msra.mxu0 0.0
      %1383 = vmatprep.subr.mxu0 0.0
      %1384 = vmatpush1.xpose.msra.mxu0 0.0
      %1385 = vmatprep.subr.mxu0 0.0
      %1386 = vmatpush1.xpose.msra.mxu0 0.0
      %1387 = vmatprep.subr.mxu0 0.0
      %1388 = vmatpush1.xpose.msra.mxu0 0.0
      %1389 = vmatprep.subr.mxu0 0.0
      %1390 = vmatpush1.xpose.msra.mxu0 0.0
      %1391 = vmatprep.subr.mxu0 0.0
      %1392 = vmatpush1.xpose.msra.mxu0 0.0
      %1393 = vmatprep.subr.mxu0 0.0
      %1394 = vmatpush1.xpose.msra.mxu0 0.0
      %1395 = vmatprep.subr.mxu0 0.0
      %1396 = vmatpush1.xpose.msra.mxu0 0.0
      %1397 = vmatprep.mubr.f32.mxu0 0.0
      %1398 = vmatmul.mubr.f32.gmra.mrb[0].mxu0 %v1329
      %v1399 = vpop.f32.mrb[0].mxu0
      %v1400 = vadd.f32 0.0, %v1399
      %v1401 = vpop.f32.mrb[0].mxu0
      %1402 = vdwg.mxu0
      %v1403 = vmul.f32 %v1400, 0.17677669
      %v1404 = vadd.f32 %v1403, %v788
      %v1405 = vsel %vm1018, %v1404, -inf
      %1406 = vmax.xlane.f32.xlu0 %v1405
      %v1407 = vpop.xlane.xlu0 %1406
      %v1408 = vsub.f32 %v1404, %v1407
      %v1409 = vmul.f32 %v1408, 1.442695
      %v1410 = vpow.pop %v1409
      %v1411 = vsel %vm1018, %v1410, 0.0
      %1412 = vadd.xlane.f32.xlu0 %v1411
      %v1413 = vpop.xlane.xlu0 %1412
      %v1414 = vrcp.pop %v1413
      %v1415 = vmul.f32 %v1410, %v1414
      %v1416 = vsel %vm1018, %v1415, 0.0
      %1417 = vadd.xlane.f32.xlu0 %v1416
      %v1418 = vpop.xlane.xlu0 %1417
      %vm1419 = vcmask 261312
      %v1420 = vsel %vm1419, %v1015, 0.0
      %v1421 = vrot.slane %v1420, 4
      %v1422 = vadd.f32 %v1420, %v1421
      %v1423 = vrot.slane %v1422, 2
      %v1424 = vadd.f32 %v1422, %v1423
      %v1425 = vrot.slane %v1424, 1
      %v1426 = vadd.f32 %v1424, %v1425
      %v1427 = vmul.f32 %v1418, %v1426
      %v1428 = vsel %vm1018, %v1118, %v1221
      %vm1429 = vcmask 130048
      %v1430 = vsel %vm1429, %v1428, %v1324
      %vm1431 = vcmask 195584
      %v1432 = vsel %vm1431, %v1430, %v1427
      %v1433 = vld [vmem:[%s7] sm:$0xff]
      %v1434 = vld [vmem:[%s7 + $0x8] sm:$0xff]
      %v1435 = vld [vmem:[%s7 + $0x10] sm:$0xff]
      %v1436 = vld [vmem:[%s7 + $0x18] sm:$0xff]
      %v1437 = vld [vmem:[%s8] sm:$0x1]
      %v1439 = vlaneseq
      %v1440 = vshrl.u32 %v1439, 7
      %v1441 = vsub.s32 0, %v1440
      %v1442 = vrot.slane %v1437, %v1441
      %v1445 = vsel %vm796, %v1432, 0
      %1447 = vmatprep.subr.mxu0 0.0
      %1448 = vmatpush1.msra.mxu0 %v1433
      %1449 = vmatprep.subr.mxu0 0.0
      %1450 = vmatpush1.msra.mxu0 %v1434
      %1451 = vmatprep.subr.mxu0 0.0
      %1452 = vmatpush1.msra.mxu0 %v1435
      %1453 = vmatprep.subr.mxu0 0.0
      %1454 = vmatpush1.msra.mxu0 %v1436
      %1455 = vmatprep.subr.mxu0 0.0
      %1456 = vmatpush1.msra.mxu0 0.0
      %1457 = vmatprep.subr.mxu0 0.0
      %1458 = vmatpush1.msra.mxu0 0.0
      %1459 = vmatprep.subr.mxu0 0.0
      %1460 = vmatpush1.msra.mxu0 0.0
      %1461 = vmatprep.subr.mxu0 0.0
      %1462 = vmatpush1.msra.mxu0 0.0
      %1463 = vmatprep.subr.mxu0 0.0
      %1464 = vmatpush1.msra.mxu0 0.0
      %1465 = vmatprep.subr.mxu0 0.0
      %1466 = vmatpush1.msra.mxu0 0.0
      %1467 = vmatprep.subr.mxu0 0.0
      %1468 = vmatpush1.msra.mxu0 0.0
      %1469 = vmatprep.subr.mxu0 0.0
      %1470 = vmatpush1.msra.mxu0 0.0
      %1471 = vmatprep.subr.mxu0 0.0
      %1472 = vmatpush1.msra.mxu0 0.0
      %1473 = vmatprep.subr.mxu0 0.0
      %1474 = vmatpush1.msra.mxu0 0.0
      %1475 = vmatprep.subr.mxu0 0.0
      %1476 = vmatpush1.msra.mxu0 0.0
      %1477 = vmatprep.subr.mxu0 0.0
      %1478 = vmatpush1.msra.mxu0 0.0
      %1479 = vmatprep.subr.mxu0 0.0
      %1480 = vmatpush1.msra.mxu0 0.0
      %1481 = vmatprep.subr.mxu0 0.0
      %1482 = vmatpush1.msra.mxu0 0.0
      %1483 = vmatprep.subr.mxu0 0.0
      %1484 = vmatpush1.msra.mxu0 0.0
      %1485 = vmatprep.subr.mxu0 0.0
      %1486 = vmatpush1.msra.mxu0 0.0
      %1487 = vmatprep.subr.mxu0 0.0
      %1488 = vmatpush1.msra.mxu0 0.0
      %1489 = vmatprep.subr.mxu0 0.0
      %1490 = vmatpush1.msra.mxu0 0.0
      %1491 = vmatprep.subr.mxu0 0.0
      %1492 = vmatpush1.msra.mxu0 0.0
      %1493 = vmatprep.subr.mxu0 0.0
      %1494 = vmatpush1.msra.mxu0 0.0
      %1495 = vmatprep.subr.mxu0 0.0
      %1496 = vmatpush1.msra.mxu0 0.0
      %1497 = vmatprep.subr.mxu0 0.0
      %1498 = vmatpush1.msra.mxu0 0.0
      %1499 = vmatprep.subr.mxu0 0.0
      %1500 = vmatpush1.msra.mxu0 0.0
      %1501 = vmatprep.subr.mxu0 0.0
      %1502 = vmatpush1.msra.mxu0 0.0
      %1503 = vmatprep.subr.mxu0 0.0
      %1504 = vmatpush1.msra.mxu0 0.0
      %1505 = vmatprep.subr.mxu0 0.0
      %1506 = vmatpush1.msra.mxu0 0.0
      %1507 = vmatprep.subr.mxu0 0.0
      %1508 = vmatpush1.msra.mxu0 0.0
      %1509 = vmatprep.subr.mxu0 0.0
      %1510 = vmatpush1.msra.mxu0 0.0
      %1511 = vmatprep.mubr.f32.mxu0 0.0
      %1512 = vmatmul.mubr.f32.gmra.mrb[0].mxu0 %v1445
      %v1513 = vpop.f32.mrb[0].mxu0
      %v1514 = vadd.f32 %v1442, %v1513
      %v1515 = vpop.f32.mrb[0].mxu0
      %1516 = vdwg.mxu0
      %v1517 = vadd.f32 %v1514, %v784
      %v1518 = vsel %vm796, %v1517, 0.0
      %1519 = vadd.xlane.f32.xlu0 %v1518
      %v1520 = vpop.xlane.xlu0 %1519
      %v1521 = vrcp.pop 32.0
      %v1522 = vmul.f32 %v1520, %v1521
      %v1523 = vsub.f32 %v1517, %v1522
      %v1524 = vmul.f32 %v1523, %v1523
      %v1525 = vsel %vm796, %v1524, 0.0
      %1526 = vadd.xlane.f32.xlu0 %v1525
      %v1527 = vpop.xlane.xlu0 %1526
      %v1528 = vmul.f32 %v1527, %v1521
      %v1529 = vadd.f32 %v1528, 1e-05
      %v1530 = vrsqrt.pop %v1529
      %v1531 = vmul.f32 %v1523, %v1530
      %v1532 = vld [vmem:[%s9] sm:$0x1]
      %v1534 = vlaneseq
      %v1535 = vshrl.u32 %v1534, 7
      %v1536 = vsub.s32 0, %v1535
      %v1537 = vrot.slane %v1532, %v1536
      %v1539 = vmul.f32 %v1531, %v1537
      %v1540 = vld [vmem:[%s10] sm:$0x1]
      %v1542 = vlaneseq
      %v1543 = vshrl.u32 %v1542, 7
      %v1544 = vsub.s32 0, %v1543
      %v1545 = vrot.slane %v1540, %v1544
      %v1547 = vadd.f32 %v1539, %v1545
      %v1548 = vld [vmem:[%s11] sm:$0xff]
      %v1549 = vld [vmem:[%s11 + $0x8] sm:$0xff]
      %v1550 = vld [vmem:[%s11 + $0x10] sm:$0xff]
      %v1551 = vld [vmem:[%s11 + $0x18] sm:$0xff]
      %v1553 = vsel %vm796, %v1547, 0
      %1555 = vmatprep.subr.mxu0 0.0
      %1556 = vmatpush1.msra.mxu0 %v1548
      %1557 = vmatprep.subr.mxu0 0.0
      %1558 = vmatpush1.msra.mxu0 %v1549
      %1559 = vmatprep.subr.mxu0 0.0
      %1560 = vmatpush1.msra.mxu0 %v1550
      %1561 = vmatprep.subr.mxu0 0.0
      %1562 = vmatpush1.msra.mxu0 %v1551
      %1563 = vmatprep.subr.mxu0 0.0
      %1564 = vmatpush1.msra.mxu0 0.0
      %1565 = vmatprep.subr.mxu0 0.0
      %1566 = vmatpush1.msra.mxu0 0.0
      %1567 = vmatprep.subr.mxu0 0.0
      %1568 = vmatpush1.msra.mxu0 0.0
      %1569 = vmatprep.subr.mxu0 0.0
      %1570 = vmatpush1.msra.mxu0 0.0
      %1571 = vmatprep.subr.mxu0 0.0
      %1572 = vmatpush1.msra.mxu0 0.0
      %1573 = vmatprep.subr.mxu0 0.0
      %1574 = vmatpush1.msra.mxu0 0.0
      %1575 = vmatprep.subr.mxu0 0.0
      %1576 = vmatpush1.msra.mxu0 0.0
      %1577 = vmatprep.subr.mxu0 0.0
      %1578 = vmatpush1.msra.mxu0 0.0
      %1579 = vmatprep.subr.mxu0 0.0
      %1580 = vmatpush1.msra.mxu0 0.0
      %1581 = vmatprep.subr.mxu0 0.0
      %1582 = vmatpush1.msra.mxu0 0.0
      %1583 = vmatprep.subr.mxu0 0.0
      %1584 = vmatpush1.msra.mxu0 0.0
      %1585 = vmatprep.subr.mxu0 0.0
      %1586 = vmatpush1.msra.mxu0 0.0
      %1587 = vmatprep.subr.mxu0 0.0
      %1588 = vmatpush1.msra.mxu0 0.0
      %1589 = vmatprep.subr.mxu0 0.0
      %1590 = vmatpush1.msra.mxu0 0.0
      %1591 = vmatprep.subr.mxu0 0.0
      %1592 = vmatpush1.msra.mxu0 0.0
      %1593 = vmatprep.subr.mxu0 0.0
      %1594 = vmatpush1.msra.mxu0 0.0
      %1595 = vmatprep.subr.mxu0 0.0
      %1596 = vmatpush1.msra.mxu0 0.0
      %1597 = vmatprep.subr.mxu0 0.0
      %1598 = vmatpush1.msra.mxu0 0.0
      %1599 = vmatprep.subr.mxu0 0.0
      %1600 = vmatpush1.msra.mxu0 0.0
      %1601 = vmatprep.subr.mxu0 0.0
      %1602 = vmatpush1.msra.mxu0 0.0
      %1603 = vmatprep.subr.mxu0 0.0
      %1604 = vmatpush1.msra.mxu0 0.0
      %1605 = vmatprep.subr.mxu0 0.0
      %1606 = vmatpush1.msra.mxu0 0.0
      %1607 = vmatprep.subr.mxu0 0.0
      %1608 = vmatpush1.msra.mxu0 0.0
      %1609 = vmatprep.subr.mxu0 0.0
      %1610 = vmatpush1.msra.mxu0 0.0
      %1611 = vmatprep.subr.mxu0 0.0
      %1612 = vmatpush1.msra.mxu0 0.0
      %1613 = vmatprep.subr.mxu0 0.0
      %1614 = vmatpush1.msra.mxu0 0.0
      %1615 = vmatprep.subr.mxu0 0.0
      %1616 = vmatpush1.msra.mxu0 0.0
      %1617 = vmatprep.subr.mxu0 0.0
      %1618 = vmatpush1.msra.mxu0 0.0
      %1619 = vmatprep.mubr.f32.mxu0 0.0
      %1620 = vmatmul.mubr.f32.gmra.mrb[0].mxu0 %v1553
      %v1621 = vpop.f32.mrb[0].mxu0
      %v1622 = vadd.f32 0.0, %v1621
      %v1623 = vpop.f32.mrb[0].mxu0
      %1624 = vdwg.mxu0
      %v1625 = vld [vmem:[%s12] sm:$0xff]
      %v1626 = vld [vmem:[%s12 + $0x8] sm:$0xff]
      %v1627 = vld [vmem:[%s12 + $0x10] sm:$0xff]
      %v1628 = vld [vmem:[%s12 + $0x18] sm:$0xff]
      %v1630 = vsel %vm796, %v785, 0
      %1632 = vmatprep.subr.mxu0 0.0
      %1633 = vmatpush1.msra.mxu0 %v1625
      %1634 = vmatprep.subr.mxu0 0.0
      %1635 = vmatpush1.msra.mxu0 %v1626
      %1636 = vmatprep.subr.mxu0 0.0
      %1637 = vmatpush1.msra.mxu0 %v1627
      %1638 = vmatprep.subr.mxu0 0.0
      %1639 = vmatpush1.msra.mxu0 %v1628
      %1640 = vmatprep.subr.mxu0 0.0
      %1641 = vmatpush1.msra.mxu0 0.0
      %1642 = vmatprep.subr.mxu0 0.0
      %1643 = vmatpush1.msra.mxu0 0.0
      %1644 = vmatprep.subr.mxu0 0.0
      %1645 = vmatpush1.msra.mxu0 0.0
      %1646 = vmatprep.subr.mxu0 0.0
      %1647 = vmatpush1.msra.mxu0 0.0
      %1648 = vmatprep.subr.mxu0 0.0
      %1649 = vmatpush1.msra.mxu0 0.0
      %1650 = vmatprep.subr.mxu0 0.0
      %1651 = vmatpush1.msra.mxu0 0.0
      %1652 = vmatprep.subr.mxu0 0.0
      %1653 = vmatpush1.msra.mxu0 0.0
      %1654 = vmatprep.subr.mxu0 0.0
      %1655 = vmatpush1.msra.mxu0 0.0
      %1656 = vmatprep.subr.mxu0 0.0
      %1657 = vmatpush1.msra.mxu0 0.0
      %1658 = vmatprep.subr.mxu0 0.0
      %1659 = vmatpush1.msra.mxu0 0.0
      %1660 = vmatprep.subr.mxu0 0.0
      %1661 = vmatpush1.msra.mxu0 0.0
      %1662 = vmatprep.subr.mxu0 0.0
      %1663 = vmatpush1.msra.mxu0 0.0
      %1664 = vmatprep.subr.mxu0 0.0
      %1665 = vmatpush1.msra.mxu0 0.0
      %1666 = vmatprep.subr.mxu0 0.0
      %1667 = vmatpush1.msra.mxu0 0.0
      %1668 = vmatprep.subr.mxu0 0.0
      %1669 = vmatpush1.msra.mxu0 0.0
      %1670 = vmatprep.subr.mxu0 0.0
      %1671 = vmatpush1.msra.mxu0 0.0
      %1672 = vmatprep.subr.mxu0 0.0
      %1673 = vmatpush1.msra.mxu0 0.0
      %1674 = vmatprep.subr.mxu0 0.0
      %1675 = vmatpush1.msra.mxu0 0.0
      %1676 = vmatprep.subr.mxu0 0.0
      %1677 = vmatpush1.msra.mxu0 0.0
      %1678 = vmatprep.subr.mxu0 0.0
      %1679 = vmatpush1.msra.mxu0 0.0
      %1680 = vmatprep.subr.mxu0 0.0
      %1681 = vmatpush1.msra.mxu0 0.0
      %1682 = vmatprep.subr.mxu0 0.0
      %1683 = vmatpush1.msra.mxu0 0.0
      %1684 = vmatprep.subr.mxu0 0.0
      %1685 = vmatpush1.msra.mxu0 0.0
      %1686 = vmatprep.subr.mxu0 0.0
      %1687 = vmatpush1.msra.mxu0 0.0
      %1688 = vmatprep.subr.mxu0 0.0
      %1689 = vmatpush1.msra.mxu0 0.0
      %1690 = vmatprep.subr.mxu0 0.0
      %1691 = vmatpush1.msra.mxu0 0.0
      %1692 = vmatprep.subr.mxu0 0.0
      %1693 = vmatpush1.msra.mxu0 0.0
      %1694 = vmatprep.subr.mxu0 0.0
      %1695 = vmatpush1.msra.mxu0 0.0
      %1696 = vmatprep.mubr.f32.mxu0 0.0
      %1697 = vmatmul.mubr.f32.gmra.mrb[0].mxu0 %v1630
      %v1698 = vpop.f32.mrb[0].mxu0
      %v1699 = vadd.f32 0.0, %v1698
      %v1700 = vpop.f32.mrb[0].mxu0
      %1701 = vdwg.mxu0
      %v1702 = vld [vmem:[%s13] sm:$0xff]
      %v1703 = vld [vmem:[%s13 + $0x8] sm:$0xff]
      %v1704 = vld [vmem:[%s13 + $0x10] sm:$0xff]
      %v1705 = vld [vmem:[%s13 + $0x18] sm:$0xff]
      %1706 = vmatprep.subr.mxu0 0.0
      %1707 = vmatpush1.msra.mxu0 %v1702
      %1708 = vmatprep.subr.mxu0 0.0
      %1709 = vmatpush1.msra.mxu0 %v1703
      %1710 = vmatprep.subr.mxu0 0.0
      %1711 = vmatpush1.msra.mxu0 %v1704
      %1712 = vmatprep.subr.mxu0 0.0
      %1713 = vmatpush1.msra.mxu0 %v1705
      %1714 = vmatprep.subr.mxu0 0.0
      %1715 = vmatpush1.msra.mxu0 0.0
      %1716 = vmatprep.subr.mxu0 0.0
      %1717 = vmatpush1.msra.mxu0 0.0
      %1718 = vmatprep.subr.mxu0 0.0
      %1719 = vmatpush1.msra.mxu0 0.0
      %1720 = vmatprep.subr.mxu0 0.0
      %1721 = vmatpush1.msra.mxu0 0.0
      %1722 = vmatprep.subr.mxu0 0.0
      %1723 = vmatpush1.msra.mxu0 0.0
      %1724 = vmatprep.subr.mxu0 0.0
      %1725 = vmatpush1.msra.mxu0 0.0
      %1726 = vmatprep.subr.mxu0 0.0
      %1727 = vmatpush1.msra.mxu0 0.0
      %1728 = vmatprep.subr.mxu0 0.0
      %1729 = vmatpush1.msra.mxu0 0.0
      %1730 = vmatprep.subr.mxu0 0.0
      %1731 = vmatpush1.msra.mxu0 0.0
      %1732 = vmatprep.subr.mxu0 0.0
      %1733 = vmatpush1.msra.mxu0 0.0
      %1734 = vmatprep.subr.mxu0 0.0
      %1735 = vmatpush1.msra.mxu0 0.0
      %1736 = vmatprep.subr.mxu0 0.0
      %1737 = vmatpush1.msra.mxu0 0.0
      %1738 = vmatprep.subr.mxu0 0.0
      %1739 = vmatpush1.msra.mxu0 0.0
      %1740 = vmatprep.subr.mxu0 0.0
      %1741 = vmatpush1.msra.mxu0 0.0
      %1742 = vmatprep.subr.mxu0 0.0
      %1743 = vmatpush1.msra.mxu0 0.0
      %1744 = vmatprep.subr.mxu0 0.0
      %1745 = vmatpush1.msra.mxu0 0.0
      %1746 = vmatprep.subr.mxu0 0.0
      %1747 = vmatpush1.msra.mxu0 0.0
      %1748 = vmatprep.subr.mxu0 0.0
      %1749 = vmatpush1.msra.mxu0 0.0
      %1750 = vmatprep.subr.mxu0 0.0
      %1751 = vmatpush1.msra.mxu0 0.0
      %1752 = vmatprep.subr.mxu0 0.0
      %1753 = vmatpush1.msra.mxu0 0.0
      %1754 = vmatprep.subr.mxu0 0.0
      %1755 = vmatpush1.msra.mxu0 0.0
      %1756 = vmatprep.subr.mxu0 0.0
      %1757 = vmatpush1.msra.mxu0 0.0
      %1758 = vmatprep.subr.mxu0 0.0
      %1759 = vmatpush1.msra.mxu0 0.0
      %1760 = vmatprep.subr.mxu0 0.0
      %1761 = vmatpush1.msra.mxu0 0.0
      %1762 = vmatprep.subr.mxu0 0.0
      %1763 = vmatpush1.msra.mxu0 0.0
      %1764 = vmatprep.subr.mxu0 0.0
      %1765 = vmatpush1.msra.mxu0 0.0
      %1766 = vmatprep.subr.mxu0 0.0
      %1767 = vmatpush1.msra.mxu0 0.0
      %1768 = vmatprep.subr.mxu0 0.0
      %1769 = vmatpush1.msra.mxu0 0.0
      %1770 = vmatprep.mubr.f32.mxu0 0.0
      %1771 = vmatmul.mubr.f32.gmra.mrb[0].mxu0 %v1630
      %v1772 = vpop.f32.mrb[0].mxu0
      %v1773 = vadd.f32 0.0, %v1772
      %v1774 = vpop.f32.mrb[0].mxu0
      %1775 = vdwg.mxu0
      %v1777 = vsel %vm1018, %v1622, 0
      %v1780 = vsel %vm1018, %v1699, 0
      %1782 = vmatprep.subr.mxu0 0.0
      %1783 = vmatpush1.xpose.msra.mxu0 %v1780
      %1784 = vmatprep.subr.mxu0 0.0
      %1785 = vmatpush1.xpose.msra.mxu0 0.0
      %1786 = vmatprep.subr.mxu0 0.0
      %1787 = vmatpush1.xpose.msra.mxu0 0.0
      %1788 = vmatprep.subr.mxu0 0.0
      %1789 = vmatpush1.xpose.msra.mxu0 0.0
      %1790 = vmatprep.subr.mxu0 0.0
      %1791 = vmatpush1.xpose.msra.mxu0 0.0
      %1792 = vmatprep.subr.mxu0 0.0
      %1793 = vmatpush1.xpose.msra.mxu0 0.0
      %1794 = vmatprep.subr.mxu0 0.0
      %1795 = vmatpush1.xpose.msra.mxu0 0.0
      %1796 = vmatprep.subr.mxu0 0.0
      %1797 = vmatpush1.xpose.msra.mxu0 0.0
      %1798 = vmatprep.subr.mxu0 0.0
      %1799 = vmatpush1.xpose.msra.mxu0 0.0
      %1800 = vmatprep.subr.mxu0 0.0
      %1801 = vmatpush1.xpose.msra.mxu0 0.0
      %1802 = vmatprep.subr.mxu0 0.0
      %1803 = vmatpush1.xpose.msra.mxu0 0.0
      %1804 = vmatprep.subr.mxu0 0.0
      %1805 = vmatpush1.xpose.msra.mxu0 0.0
      %1806 = vmatprep.subr.mxu0 0.0
      %1807 = vmatpush1.xpose.msra.mxu0 0.0
      %1808 = vmatprep.subr.mxu0 0.0
      %1809 = vmatpush1.xpose.msra.mxu0 0.0
      %1810 = vmatprep.subr.mxu0 0.0
      %1811 = vmatpush1.xpose.msra.mxu0 0.0
      %1812 = vmatprep.subr.mxu0 0.0
      %1813 = vmatpush1.xpose.msra.mxu0 0.0
      %1814 = vmatprep.subr.mxu0 0.0
      %1815 = vmatpush1.xpose.msra.mxu0 0.0
      %1816 = vmatprep.subr.mxu0 0.0
      %1817 = vmatpush1.xpose.msra.mxu0 0.0
      %1818 = vmatprep.subr.mxu0 0.0
      %1819 = vmatpush1.xpose.msra.mxu0 0.0
      %1820 = vmatprep.subr.mxu0 0.0
      %1821 = vmatpush1.xpose.msra.mxu0 0.0
      %1822 = vmatprep.subr.mxu0 0.0
      %1823 = vmatpush1.xpose.msra.mxu0 0.0
      %1824 = vmatprep.subr.mxu0 0.0
      %1825 = vmatpush1.xpose.msra.mxu0 0.0
      %1826 = vmatprep.subr.mxu0 0.0
      %1827 = vmatpush1.xpose.msra.mxu0 0.0
      %1828 = vmatprep.subr.mxu0 0.0
      %1829 = vmatpush1.xpose.msra.mxu0 0.0
      %1830 = vmatprep.subr.mxu0 0.0
      %1831 = vmatpush1.xpose.msra.mxu0 0.0
      %1832 = vmatprep.subr.mxu0 0.0
      %1833 = vmatpush1.xpose.msra.mxu0 0.0
      %1834 = vmatprep.subr.mxu0 0.0
      %1835 = vmatpush1.xpose.msra.mxu0 0.0
      %1836 = vmatprep.subr.mxu0 0.0
      %1837 = vmatpush1.xpose.msra.mxu0 0.0
      %1838 = vmatprep.subr.mxu0 0.0
      %1839 = vmatpush1.xpose.msra.mxu0 0.0
      %1840 = vmatprep.subr.mxu0 0.0
      %1841 = vmatpush1.xpose.msra.mxu0 0.0
      %1842 = vmatprep.subr.mxu0 0.0
      %1843 = vmatpush1.xpose.msra.mxu0 0.0
      %1844 = vmatprep.subr.mxu0 0.0
      %1845 = vmatpush1.xpose.msra.mxu0 0.0
      %1846 = vmatprep.mubr.f32.mxu0 0.0
      %1847 = vmatmul.mubr.f32.gmra.mrb[0].mxu0 %v1777
      %v1848 = vpop.f32.mrb[0].mxu0
      %v1849 = vadd.f32 0.0, %v1848
      %v1850 = vpop.f32.mrb[0].mxu0
      %1851 = vdwg.mxu0
      %v1852 = vmul.f32 %v1849, 0.17677669
      %v1853 = vadd.f32 %v1852, %v791
      %v1854 = vsel %vm1018, %v1853, -inf
      %1855 = vmax.xlane.f32.xlu0 %v1854
      %v1856 = vpop.xlane.xlu0 %1855
      %v1857 = vsub.f32 %v1853, %v1856
      %v1858 = vmul.f32 %v1857, 1.442695
      %v1859 = vpow.pop %v1858
      %v1860 = vsel %vm1018, %v1859, 0.0
      %1861 = vadd.xlane.f32.xlu0 %v1860
      %v1862 = vpop.xlane.xlu0 %1861
      %v1863 = vrcp.pop %v1862
      %v1864 = vmul.f32 %v1859, %v1863
      %v1865 = vsel %vm1018, %v1864, 0.0
      %1866 = vadd.xlane.f32.xlu0 %v1865
      %v1867 = vpop.xlane.xlu0 %1866
      %v1868 = vsel %vm1018, %v1773, 0.0
      %v1869 = vrot.slane %v1868, 4
      %v1870 = vadd.f32 %v1868, %v1869
      %v1871 = vrot.slane %v1870, 2
      %v1872 = vadd.f32 %v1870, %v1871
      %v1873 = vrot.slane %v1872, 1
      %v1874 = vadd.f32 %v1872, %v1873
      %v1875 = vmul.f32 %v1867, %v1874
      %1876 = vrot.lane.b32.xlu0 %v1622, 120
      %v1877 = vpop.permute.xlu0 %1876
      %1878 = vrot.lane.b32.xlu0 %v1699, 120
      %v1879 = vpop.permute.xlu0 %1878
      %v1880 = vsel %vm1018, %v1877, 0
      %v1882 = vsel %vm1018, %v1879, 0
      %1884 = vmatprep.subr.mxu0 0.0
      %1885 = vmatpush1.xpose.msra.mxu0 %v1882
      %1886 = vmatprep.subr.mxu0 0.0
      %1887 = vmatpush1.xpose.msra.mxu0 0.0
      %1888 = vmatprep.subr.mxu0 0.0
      %1889 = vmatpush1.xpose.msra.mxu0 0.0
      %1890 = vmatprep.subr.mxu0 0.0
      %1891 = vmatpush1.xpose.msra.mxu0 0.0
      %1892 = vmatprep.subr.mxu0 0.0
      %1893 = vmatpush1.xpose.msra.mxu0 0.0
      %1894 = vmatprep.subr.mxu0 0.0
      %1895 = vmatpush1.xpose.msra.mxu0 0.0
      %1896 = vmatprep.subr.mxu0 0.0
      %1897 = vmatpush1.xpose.msra.mxu0 0.0
      %1898 = vmatprep.subr.mxu0 0.0
      %1899 = vmatpush1.xpose.msra.mxu0 0.0
      %1900 = vmatprep.subr.mxu0 0.0
      %1901 = vmatpush1.xpose.msra.mxu0 0.0
      %1902 = vmatprep.subr.mxu0 0.0
      %1903 = vmatpush1.xpose.msra.mxu0 0.0
      %1904 = vmatprep.subr.mxu0 0.0
      %1905 = vmatpush1.xpose.msra.mxu0 0.0
      %1906 = vmatprep.subr.mxu0 0.0
      %1907 = vmatpush1.xpose.msra.mxu0 0.0
      %1908 = vmatprep.subr.mxu0 0.0
      %1909 = vmatpush1.xpose.msra.mxu0 0.0
      %1910 = vmatprep.subr.mxu0 0.0
      %1911 = vmatpush1.xpose.msra.mxu0 0.0
      %1912 = vmatprep.subr.mxu0 0.0
      %1913 = vmatpush1.xpose.msra.mxu0 0.0
      %1914 = vmatprep.subr.mxu0 0.0
      %1915 = vmatpush1.xpose.msra.mxu0 0.0
      %1916 = vmatprep.subr.mxu0 0.0
      %1917 = vmatpush1.xpose.msra.mxu0 0.0
      %1918 = vmatprep.subr.mxu0 0.0
      %1919 = vmatpush1.xpose.msra.mxu0 0.0
      %1920 = vmatprep.subr.mxu0 0.0
      %1921 = vmatpush1.xpose.msra.mxu0 0.0
      %1922 = vmatprep.subr.mxu0 0.0
      %1923 = vmatpush1.xpose.msra.mxu0 0.0
      %1924 = vmatprep.subr.mxu0 0.0
      %1925 = vmatpush1.xpose.msra.mxu0 0.0
      %1926 = vmatprep.subr.mxu0 0.0
      %1927 = vmatpush1.xpose.msra.mxu0 0.0
      %1928 = vmatprep.subr.mxu0 0.0
      %1929 = vmatpush1.xpose.msra.mxu0 0.0
      %1930 = vmatprep.subr.mxu0 0.0
      %1931 = vmatpush1.xpose.msra.mxu0 0.0
      %1932 = vmatprep.subr.mxu0 0.0
      %1933 = vmatpush1.xpose.msra.mxu0 0.0
      %1934 = vmatprep.subr.mxu0 0.0
      %1935 = vmatpush1.xpose.msra.mxu0 0.0
      %1936 = vmatprep.subr.mxu0 0.0
      %1937 = vmatpush1.xpose.msra.mxu0 0.0
      %1938 = vmatprep.subr.mxu0 0.0
      %1939 = vmatpush1.xpose.msra.mxu0 0.0
      %1940 = vmatprep.subr.mxu0 0.0
      %1941 = vmatpush1.xpose.msra.mxu0 0.0
      %1942 = vmatprep.subr.mxu0 0.0
      %1943 = vmatpush1.xpose.msra.mxu0 0.0
      %1944 = vmatprep.subr.mxu0 0.0
      %1945 = vmatpush1.xpose.msra.mxu0 0.0
      %1946 = vmatprep.subr.mxu0 0.0
      %1947 = vmatpush1.xpose.msra.mxu0 0.0
      %1948 = vmatprep.mubr.f32.mxu0 0.0
      %1949 = vmatmul.mubr.f32.gmra.mrb[0].mxu0 %v1880
      %v1950 = vpop.f32.mrb[0].mxu0
      %v1951 = vadd.f32 0.0, %v1950
      %v1952 = vpop.f32.mrb[0].mxu0
      %1953 = vdwg.mxu0
      %v1954 = vmul.f32 %v1951, 0.17677669
      %v1955 = vadd.f32 %v1954, %v791
      %v1956 = vsel %vm1018, %v1955, -inf
      %1957 = vmax.xlane.f32.xlu0 %v1956
      %v1958 = vpop.xlane.xlu0 %1957
      %v1959 = vsub.f32 %v1955, %v1958
      %v1960 = vmul.f32 %v1959, 1.442695
      %v1961 = vpow.pop %v1960
      %v1962 = vsel %vm1018, %v1961, 0.0
      %1963 = vadd.xlane.f32.xlu0 %v1962
      %v1964 = vpop.xlane.xlu0 %1963
      %v1965 = vrcp.pop %v1964
      %v1966 = vmul.f32 %v1961, %v1965
      %v1967 = vsel %vm1018, %v1966, 0.0
      %1968 = vadd.xlane.f32.xlu0 %v1967
      %v1969 = vpop.xlane.xlu0 %1968
      %v1970 = vsel %vm1213, %v1773, 0.0
      %v1971 = vrot.slane %v1970, 4
      %v1972 = vadd.f32 %v1970, %v1971
      %v1973 = vrot.slane %v1972, 2
      %v1974 = vadd.f32 %v1972, %v1973
      %v1975 = vrot.slane %v1974, 1
      %v1976 = vadd.f32 %v1974, %v1975
      %v1977 = vmul.f32 %v1969, %v1976
      %1978 = vrot.lane.b32.xlu0 %v1622, 112
      %v1979 = vpop.permute.xlu0 %1978
      %1980 = vrot.lane.b32.xlu0 %v1699, 112
      %v1981 = vpop.permute.xlu0 %1980
      %v1982 = vsel %vm1018, %v1979, 0
      %v1984 = vsel %vm1018, %v1981, 0
      %1986 = vmatprep.subr.mxu0 0.0
      %1987 = vmatpush1.xpose.msra.mxu0 %v1984
      %1988 = vmatprep.subr.mxu0 0.0
      %1989 = vmatpush1.xpose.msra.mxu0 0.0
      %1990 = vmatprep.subr.mxu0 0.0
      %1991 = vmatpush1.xpose.msra.mxu0 0.0
      %1992 = vmatprep.subr.mxu0 0.0
      %1993 = vmatpush1.xpose.msra.mxu0 0.0
      %1994 = vmatprep.subr.mxu0 0.0
      %1995 = vmatpush1.xpose.msra.mxu0 0.0
      %1996 = vmatprep.subr.mxu0 0.0
      %1997 = vmatpush1.xpose.msra.mxu0 0.0
      %1998 = vmatprep.subr.mxu0 0.0
      %1999 = vmatpush1.xpose.msra.mxu0 0.0
      %2000 = vmatprep.subr.mxu0 0.0
      %2001 = vmatpush1.xpose.msra.mxu0 0.0
      %2002 = vmatprep.subr.mxu0 0.0
      %2003 = vmatpush1.xpose.msra.mxu0 0.0
      %2004 = vmatprep.subr.mxu0 0.0
      %2005 = vmatpush1.xpose.msra.mxu0 0.0
      %2006 = vmatprep.subr.mxu0 0.0
      %2007 = vmatpush1.xpose.msra.mxu0 0.0
      %2008 = vmatprep.subr.mxu0 0.0
      %2009 = vmatpush1.xpose.msra.mxu0 0.0
      %2010 = vmatprep.subr.mxu0 0.0
      %2011 = vmatpush1.xpose.msra.mxu0 0.0
      %2012 = vmatprep.subr.mxu0 0.0
      %2013 = vmatpush1.xpose.msra.mxu0 0.0
      %2014 = vmatprep.subr.mxu0 0.0
      %2015 = vmatpush1.xpose.msra.mxu0 0.0
      %2016 = vmatprep.subr.mxu0 0.0
      %2017 = vmatpush1.xpose.msra.mxu0 0.0
      %2018 = vmatprep.subr.mxu0 0.0
      %2019 = vmatpush1.xpose.msra.mxu0 0.0
      %2020 = vmatprep.subr.mxu0 0.0
      %2021 = vmatpush1.xpose.msra.mxu0 0.0
      %2022 = vmatprep.subr.mxu0 0.0
      %2023 = vmatpush1.xpose.msra.mxu0 0.0
      %2024 = vmatprep.subr.mxu0 0.0
      %2025 = vmatpush1.xpose.msra.mxu0 0.0
      %2026 = vmatprep.subr.mxu0 0.0
      %2027 = vmatpush1.xpose.msra.mxu0 0.0
      %2028 = vmatprep.subr.mxu0 0.0
      %2029 = vmatpush1.xpose.msra.mxu0 0.0
      %2030 = vmatprep.subr.mxu0 0.0
      %2031 = vmatpush1.xpose.msra.mxu0 0.0
      %2032 = vmatprep.subr.mxu0 0.0
      %2033 = vmatpush1.xpose.msra.mxu0 0.0
      %2034 = vmatprep.subr.mxu0 0.0
      %2035 = vmatpush1.xpose.msra.mxu0 0.0
      %2036 = vmatprep.subr.mxu0 0.0
      %2037 = vmatpush1.xpose.msra.mxu0 0.0
      %2038 = vmatprep.subr.mxu0 0.0
      %2039 = vmatpush1.xpose.msra.mxu0 0.0
      %2040 = vmatprep.subr.mxu0 0.0
      %2041 = vmatpush1.xpose.msra.mxu0 0.0
      %2042 = vmatprep.subr.mxu0 0.0
      %2043 = vmatpush1.xpose.msra.mxu0 0.0
      %2044 = vmatprep.subr.mxu0 0.0
      %2045 = vmatpush1.xpose.msra.mxu0 0.0
      %2046 = vmatprep.subr.mxu0 0.0
      %2047 = vmatpush1.xpose.msra.mxu0 0.0
      %2048 = vmatprep.subr.mxu0 0.0
      %2049 = vmatpush1.xpose.msra.mxu0 0.0
      %2050 = vmatprep.mubr.f32.mxu0 0.0
      %2051 = vmatmul.mubr.f32.gmra.mrb[0].mxu0 %v1982
      %v2052 = vpop.f32.mrb[0].mxu0
      %v2053 = vadd.f32 0.0, %v2052
      %v2054 = vpop.f32.mrb[0].mxu0
      %2055 = vdwg.mxu0
      %v2056 = vmul.f32 %v2053, 0.17677669
      %v2057 = vadd.f32 %v2056, %v791
      %v2058 = vsel %vm1018, %v2057, -inf
      %2059 = vmax.xlane.f32.xlu0 %v2058
      %v2060 = vpop.xlane.xlu0 %2059
      %v2061 = vsub.f32 %v2057, %v2060
      %v2062 = vmul.f32 %v2061, 1.442695
      %v2063 = vpow.pop %v2062
      %v2064 = vsel %vm1018, %v2063, 0.0
      %2065 = vadd.xlane.f32.xlu0 %v2064
      %v2066 = vpop.xlane.xlu0 %2065
      %v2067 = vrcp.pop %v2066
      %v2068 = vmul.f32 %v2063, %v2067
      %v2069 = vsel %vm1018, %v2068, 0.0
      %2070 = vadd.xlane.f32.xlu0 %v2069
      %v2071 = vpop.xlane.xlu0 %2070
      %v2072 = vsel %vm1316, %v1773, 0.0
      %v2073 = vrot.slane %v2072, 4
      %v2074 = vadd.f32 %v2072, %v2073
      %v2075 = vrot.slane %v2074, 2
      %v2076 = vadd.f32 %v2074, %v2075
      %v2077 = vrot.slane %v2076, 1
      %v2078 = vadd.f32 %v2076, %v2077
      %v2079 = vmul.f32 %v2071, %v2078
      %2080 = vrot.lane.b32.xlu0 %v1622, 104
      %v2081 = vpop.permute.xlu0 %2080
      %2082 = vrot.lane.b32.xlu0 %v1699, 104
      %v2083 = vpop.permute.xlu0 %2082
      %v2084 = vsel %vm1018, %v2081, 0
      %v2086 = vsel %vm1018, %v2083, 0
      %2088 = vmatprep.subr.mxu0 0.0
      %2089 = vmatpush1.xpose.msra.mxu0 %v2086
      %2090 = vmatprep.subr.mxu0 0.0
      %2091 = vmatpush1.xpose.msra.mxu0 0.0
      %2092 = vmatprep.subr.mxu0 0.0
      %2093 = vmatpush1.xpose.msra.mxu0 0.0
      %2094 = vmatprep.subr.mxu0 0.0
      %2095 = vmatpush1.xpose.msra.mxu0 0.0
      %2096 = vmatprep.subr.mxu0 0.0
      %2097 = vmatpush1.xpose.msra.mxu0 0.0
      %2098 = vmatprep.subr.mxu0 0.0
      %2099 = vmatpush1.xpose.msra.mxu0 0.0
      %2100 = vmatprep.subr.mxu0 0.0
      %2101 = vmatpush1.xpose.msra.mxu0 0.0
      %2102 = vmatprep.subr.mxu0 0.0
      %2103 = vmatpush1.xpose.msra.mxu0 0.0
      %2104 = vmatprep.subr.mxu0 0.0
      %2105 = vmatpush1.xpose.msra.mxu0 0.0
      %2106 = vmatprep.subr.mxu0 0.0
      %2107 = vmatpush1.xpose.msra.mxu0 0.0
      %2108 = vmatprep.subr.mxu0 0.0
      %2109 = vmatpush1.xpose.msra.mxu0 0.0
      %2110 = vmatprep.subr.mxu0 0.0
      %2111 = vmatpush1.xpose.msra.mxu0 0.0
      %2112 = vmatprep.subr.mxu0 0.0
      %2113 = vmatpush1.xpose.msra.mxu0 0.0
      %2114 = vmatprep.subr.mxu0 0.0
      %2115 = vmatpush1.xpose.msra.mxu0 0.0
      %2116 = vmatprep.subr.mxu0 0.0
      %2117 = vmatpush1.xpose.msra.mxu0 0.0
      %2118 = vmatprep.subr.mxu0 0.0
      %2119 = vmatpush1.xpose.msra.mxu0 0.0
      %2120 = vmatprep.subr.mxu0 0.0
      %2121 = vmatpush1.xpose.msra.mxu0 0.0
      %2122 = vmatprep.subr.mxu0 0.0
      %2123 = vmatpush1.xpose.msra.mxu0 0.0
      %2124 = vmatprep.subr.mxu0 0.0
      %2125 = vmatpush1.xpose.msra.mxu0 0.0
      %2126 = vmatprep.subr.mxu0 0.0
      %2127 = vmatpush1.xpose.msra.mxu0 0.0
      %2128 = vmatprep.subr.mxu0 0.0
      %2129 = vmatpush1.xpose.msra.mxu0 0.0
      %2130 = vmatprep.subr.mxu0 0.0
      %2131 = vmatpush1.xpose.msra.mxu0 0.0
      %2132 = vmatprep.subr.mxu0 0.0
      %2133 = vmatpush1.xpose.msra.mxu0 0.0
      %2134 = vmatprep.subr.mxu0 0.0
      %2135 = vmatpush1.xpose.msra.mxu0 0.0
      %2136 = vmatprep.subr.mxu0 0.0
      %2137 = vmatpush1.xpose.msra.mxu0 0.0
      %2138 = vmatprep.subr.mxu0 0.0
      %2139 = vmatpush1.xpose.msra.mxu0 0.0
      %2140 = vmatprep.subr.mxu0 0.0
      %2141 = vmatpush1.xpose.msra.mxu0 0.0
      %2142 = vmatprep.subr.mxu0 0.0
      %2143 = vmatpush1.xpose.msra.mxu0 0.0
      %2144 = vmatprep.subr.mxu0 0.0
      %2145 = vmatpush1.xpose.msra.mxu0 0.0
      %2146 = vmatprep.subr.mxu0 0.0
      %2147 = vmatpush1.xpose.msra.mxu0 0.0
      %2148 = vmatprep.subr.mxu0 0.0
      %2149 = vmatpush1.xpose.msra.mxu0 0.0
      %2150 = vmatprep.subr.mxu0 0.0
      %2151 = vmatpush1.xpose.msra.mxu0 0.0
      %2152 = vmatprep.mubr.f32.mxu0 0.0
      %2153 = vmatmul.mubr.f32.gmra.mrb[0].mxu0 %v2084
      %v2154 = vpop.f32.mrb[0].mxu0
      %v2155 = vadd.f32 0.0, %v2154
      %v2156 = vpop.f32.mrb[0].mxu0
      %2157 = vdwg.mxu0
      %v2158 = vmul.f32 %v2155, 0.17677669
      %v2159 = vadd.f32 %v2158, %v791
      %v2160 = vsel %vm1018, %v2159, -inf
      %2161 = vmax.xlane.f32.xlu0 %v2160
      %v2162 = vpop.xlane.xlu0 %2161
      %v2163 = vsub.f32 %v2159, %v2162
      %v2164 = vmul.f32 %v2163, 1.442695
      %v2165 = vpow.pop %v2164
      %v2166 = vsel %vm1018, %v2165, 0.0
      %2167 = vadd.xlane.f32.xlu0 %v2166
      %v2168 = vpop.xlane.xlu0 %2167
      %v2169 = vrcp.pop %v2168
      %v2170 = vmul.f32 %v2165, %v2169
      %v2171 = vsel %vm1018, %v2170, 0.0
      %2172 = vadd.xlane.f32.xlu0 %v2171
      %v2173 = vpop.xlane.xlu0 %2172
      %v2174 = vsel %vm1419, %v1773, 0.0
      %v2175 = vrot.slane %v2174, 4
      %v2176 = vadd.f32 %v2174, %v2175
      %v2177 = vrot.slane %v2176, 2
      %v2178 = vadd.f32 %v2176, %v2177
      %v2179 = vrot.slane %v2178, 1
      %v2180 = vadd.f32 %v2178, %v2179
      %v2181 = vmul.f32 %v2173, %v2180
      %v2182 = vsel %vm1018, %v1875, %v1977
      %v2183 = vsel %vm1429, %v2182, %v2079
      %v2184 = vsel %vm1431, %v2183, %v2181
      %v2185 = vld [vmem:[%s14] sm:$0xff]
      %v2186 = vld [vmem:[%s14 + $0x8] sm:$0xff]
      %v2187 = vld [vmem:[%s14 + $0x10] sm:$0xff]
      %v2188 = vld [vmem:[%s14 + $0x18] sm:$0xff]
      %v2189 = vld [vmem:[%s15] sm:$0x1]
      %v2191 = vlaneseq
      %v2192 = vshrl.u32 %v2191, 7
      %v2193 = vsub.s32 0, %v2192
      %v2194 = vrot.slane %v2189, %v2193
      %v2197 = vsel %vm796, %v2184, 0
      %2199 = vmatprep.subr.mxu0 0.0
      %2200 = vmatpush1.msra.mxu0 %v2185
      %2201 = vmatprep.subr.mxu0 0.0
      %2202 = vmatpush1.msra.mxu0 %v2186
      %2203 = vmatprep.subr.mxu0 0.0
      %2204 = vmatpush1.msra.mxu0 %v2187
      %2205 = vmatprep.subr.mxu0 0.0
      %2206 = vmatpush1.msra.mxu0 %v2188
      %2207 = vmatprep.subr.mxu0 0.0
      %2208 = vmatpush1.msra.mxu0 0.0
      %2209 = vmatprep.subr.mxu0 0.0
      %2210 = vmatpush1.msra.mxu0 0.0
      %2211 = vmatprep.subr.mxu0 0.0
      %2212 = vmatpush1.msra.mxu0 0.0
      %2213 = vmatprep.subr.mxu0 0.0
      %2214 = vmatpush1.msra.mxu0 0.0
      %2215 = vmatprep.subr.mxu0 0.0
      %2216 = vmatpush1.msra.mxu0 0.0
      %2217 = vmatprep.subr.mxu0 0.0
      %2218 = vmatpush1.msra.mxu0 0.0
      %2219 = vmatprep.subr.mxu0 0.0
      %2220 = vmatpush1.msra.mxu0 0.0
      %2221 = vmatprep.subr.mxu0 0.0
      %2222 = vmatpush1.msra.mxu0 0.0
      %2223 = vmatprep.subr.mxu0 0.0
      %2224 = vmatpush1.msra.mxu0 0.0
      %2225 = vmatprep.subr.mxu0 0.0
      %2226 = vmatpush1.msra.mxu0 0.0
      %2227 = vmatprep.subr.mxu0 0.0
      %2228 = vmatpush1.msra.mxu0 0.0
      %2229 = vmatprep.subr.mxu0 0.0
      %2230 = vmatpush1.msra.mxu0 0.0
      %2231 = vmatprep.subr.mxu0 0.0
      %2232 = vmatpush1.msra.mxu0 0.0
      %2233 = vmatprep.subr.mxu0 0.0
      %2234 = vmatpush1.msra.mxu0 0.0
      %2235 = vmatprep.subr.mxu0 0.0
      %2236 = vmatpush1.msra.mxu0 0.0
      %2237 = vmatprep.subr.mxu0 0.0
      %2238 = vmatpush1.msra.mxu0 0.0
      %2239 = vmatprep.subr.mxu0 0.0
      %2240 = vmatpush1.msra.mxu0 0.0
      %2241 = vmatprep.subr.mxu0 0.0
      %2242 = vmatpush1.msra.mxu0 0.0
      %2243 = vmatprep.subr.mxu0 0.0
      %2244 = vmatpush1.msra.mxu0 0.0
      %2245 = vmatprep.subr.mxu0 0.0
      %2246 = vmatpush1.msra.mxu0 0.0
      %2247 = vmatprep.subr.mxu0 0.0
      %2248 = vmatpush1.msra.mxu0 0.0
      %2249 = vmatprep.subr.mxu0 0.0
      %2250 = vmatpush1.msra.mxu0 0.0
      %2251 = vmatprep.subr.mxu0 0.0
      %2252 = vmatpush1.msra.mxu0 0.0
      %2253 = vmatprep.subr.mxu0 0.0
      %2254 = vmatpush1.msra.mxu0 0.0
      %2255 = vmatprep.subr.mxu0 0.0
      %2256 = vmatpush1.msra.mxu0 0.0
      %2257 = vmatprep.subr.mxu0 0.0
      %2258 = vmatpush1.msra.mxu0 0.0
      %2259 = vmatprep.subr.mxu0 0.0
      %2260 = vmatpush1.msra.mxu0 0.0
      %2261 = vmatprep.subr.mxu0 0.0
      %2262 = vmatpush1.msra.mxu0 0.0
      %2263 = vmatprep.mubr.f32.mxu0 0.0
      %2264 = vmatmul.mubr.f32.gmra.mrb[0].mxu0 %v2197
      %v2265 = vpop.f32.mrb[0].mxu0
      %v2266 = vadd.f32 %v2194, %v2265
      %v2267 = vpop.f32.mrb[0].mxu0
      %2268 = vdwg.mxu0
      %v2269 = vadd.f32 %v2266, %v1547
      %v2270 = vsel %vm796, %v2269, 0.0
      %2271 = vadd.xlane.f32.xlu0 %v2270
      %v2272 = vpop.xlane.xlu0 %2271
      %v2273 = vmul.f32 %v2272, %v1521
      %v2274 = vsub.f32 %v2269, %v2273
      %v2275 = vmul.f32 %v2274, %v2274
      %v2276 = vsel %vm796, %v2275, 0.0
      %2277 = vadd.xlane.f32.xlu0 %v2276
      %v2278 = vpop.xlane.xlu0 %2277
      %v2279 = vmul.f32 %v2278, %v1521
      %v2280 = vadd.f32 %v2279, 1e-05
      %v2281 = vrsqrt.pop %v2280
      %v2282 = vmul.f32 %v2274, %v2281
      %v2283 = vld [vmem:[%s16] sm:$0x1]
      %v2285 = vlaneseq
      %v2286 = vshrl.u32 %v2285, 7
      %v2287 = vsub.s32 0, %v2286
      %v2288 = vrot.slane %v2283, %v2287
      %v2290 = vmul.f32 %v2282, %v2288
      %v2291 = vld [vmem:[%s17] sm:$0x1]
      %v2293 = vlaneseq
      %v2294 = vshrl.u32 %v2293, 7
      %v2295 = vsub.s32 0, %v2294
      %v2296 = vrot.slane %v2291, %v2295
      %v2298 = vadd.f32 %v2290, %v2296
      %v2299 = vld [vmem:[%s18] sm:$0xff]
      %v2300 = vld [vmem:[%s18 + $0x8] sm:$0xff]
      %v2301 = vld [vmem:[%s18 + $0x10] sm:$0xff]
      %v2302 = vld [vmem:[%s18 + $0x18] sm:$0xff]
      %v2303 = vld [vmem:[%s19] sm:$0x1]
      %v2305 = vlaneseq
      %v2306 = vshrl.u32 %v2305, 7
      %v2307 = vsub.s32 0, %v2306
      %v2308 = vrot.slane %v2303, %v2307
      %v2311 = vsel %vm796, %v2298, 0
      %2313 = vmatprep.subr.mxu0 0.0
      %2314 = vmatpush1.msra.mxu0 %v2299
      %2315 = vmatprep.subr.mxu0 0.0
      %2316 = vmatpush1.msra.mxu0 %v2300
      %2317 = vmatprep.subr.mxu0 0.0
      %2318 = vmatpush1.msra.mxu0 %v2301
      %2319 = vmatprep.subr.mxu0 0.0
      %2320 = vmatpush1.msra.mxu0 %v2302
      %2321 = vmatprep.subr.mxu0 0.0
      %2322 = vmatpush1.msra.mxu0 0.0
      %2323 = vmatprep.subr.mxu0 0.0
      %2324 = vmatpush1.msra.mxu0 0.0
      %2325 = vmatprep.subr.mxu0 0.0
      %2326 = vmatpush1.msra.mxu0 0.0
      %2327 = vmatprep.subr.mxu0 0.0
      %2328 = vmatpush1.msra.mxu0 0.0
      %2329 = vmatprep.subr.mxu0 0.0
      %2330 = vmatpush1.msra.mxu0 0.0
      %2331 = vmatprep.subr.mxu0 0.0
      %2332 = vmatpush1.msra.mxu0 0.0
      %2333 = vmatprep.subr.mxu0 0.0
      %2334 = vmatpush1.msra.mxu0 0.0
      %2335 = vmatprep.subr.mxu0 0.0
      %2336 = vmatpush1.msra.mxu0 0.0
      %2337 = vmatprep.subr.mxu0 0.0
      %2338 = vmatpush1.msra.mxu0 0.0
      %2339 = vmatprep.subr.mxu0 0.0
      %2340 = vmatpush1.msra.mxu0 0.0
      %2341 = vmatprep.subr.mxu0 0.0
      %2342 = vmatpush1.msra.mxu0 0.0
      %2343 = vmatprep.subr.mxu0 0.0
      %2344 = vmatpush1.msra.mxu0 0.0
      %2345 = vmatprep.subr.mxu0 0.0
      %2346 = vmatpush1.msra.mxu0 0.0
      %2347 = vmatprep.subr.mxu0 0.0
      %2348 = vmatpush1.msra.mxu0 0.0
      %2349 = vmatprep.subr.mxu0 0.0
      %2350 = vmatpush1.msra.mxu0 0.0
      %2351 = vmatprep.subr.mxu0 0.0
      %2352 = vmatpush1.msra.mxu0 0.0
      %2353 = vmatprep.subr.mxu0 0.0
      %2354 = vmatpush1.msra.mxu0 0.0
      %2355 = vmatprep.subr.mxu0 0.0
      %2356 = vmatpush1.msra.mxu0 0.0
      %2357 = vmatprep.subr.mxu0 0.0
      %2358 = vmatpush1.msra.mxu0 0.0
      %2359 = vmatprep.subr.mxu0 0.0
      %2360 = vmatpush1.msra.mxu0 0.0
      %2361 = vmatprep.subr.mxu0 0.0
      %2362 = vmatpush1.msra.mxu0 0.0
      %2363 = vmatprep.subr.mxu0 0.0
      %2364 = vmatpush1.msra.mxu0 0.0
      %2365 = vmatprep.subr.mxu0 0.0
      %2366 = vmatpush1.msra.mxu0 0.0
      %2367 = vmatprep.subr.mxu0 0.0
      %2368 = vmatpush1.msra.mxu0 0.0
      %2369 = vmatprep.subr.mxu0 0.0
      %2370 = vmatpush1.msra.mxu0 0.0
      %2371 = vmatprep.subr.mxu0 0.0
      %2372 = vmatpush1.msra.mxu0 0.0
      %2373 = vmatprep.subr.mxu0 0.0
      %2374 = vmatpush1.msra.mxu0 0.0
      %2375 = vmatprep.subr.mxu0 0.0
      %2376 = vmatpush1.msra.mxu0 0.0
      %2377 = vmatprep.mubr.f32.mxu0 0.0
      %2378 = vmatmul.mubr.f32.gmra.mrb[0].mxu0 %v2311
      %v2379 = vpop.f32.mrb[0].mxu0
      %v2380 = vadd.f32 %v2308, %v2379
      %v2381 = vpop.f32.mrb[0].mxu0
      %2382 = vdwg.mxu0
      %v2383 = vmax.f32 %v2380, 0.0
      %v2384 = vld [vmem:[%s20] sm:$0xff]
      %v2385 = vld [vmem:[%s20 + $0x8] sm:$0xff]
      %v2386 = vld [vmem:[%s20 + $0x10] sm:$0xff]
      %v2387 = vld [vmem:[%s20 + $0x18] sm:$0xff]
      %v2388 = vld [vmem:[%s20 + $0x20] sm:$0xff]
      %v2389 = vld [vmem:[%s20 + $0x28] sm:$0xff]
      %v2390 = vld [vmem:[%s20 + $0x30] sm:$0xff]
      %v2391 = vld [vmem:[%s20 + $0x38] sm:$0xff]
      %v2392 = vld [vmem:[%s21] sm:$0x1]
      %v2394 = vlaneseq
      %v2395 = vshrl.u32 %v2394, 7
      %v2396 = vsub.s32 0, %v2395
      %v2397 = vrot.slane %v2392, %v2396
      %vm2399 = vcmask 523264
      %v2401 = vsel %vm2399, %v2383, 0
      %2403 = vmatprep.subr.mxu0 0.0
      %2404 = vmatpush1.msra.mxu0 %v2384
      %2405 = vmatprep.subr.mxu0 0.0
      %2406 = vmatpush1.msra.mxu0 %v2385
      %2407 = vmatprep.subr.mxu0 0.0
      %2408 = vmatpush1.msra.mxu0 %v2386
      %2409 = vmatprep.subr.mxu0 0.0
      %2410 = vmatpush1.msra.mxu0 %v2387
      %2411 = vmatprep.subr.mxu0 0.0
      %2412 = vmatpush1.msra.mxu0 %v2388
      %2413 = vmatprep.subr.mxu0 0.0
      %2414 = vmatpush1.msra.mxu0 %v2389
      %2415 = vmatprep.subr.mxu0 0.0
      %2416 = vmatpush1.msra.mxu0 %v2390
      %2417 = vmatprep.subr.mxu0 0.0
      %2418 = vmatpush1.msra.mxu0 %v2391
      %2419 = vmatprep.subr.mxu0 0.0
      %2420 = vmatpush1.msra.mxu0 0.0
      %2421 = vmatprep.subr.mxu0 0.0
      %2422 = vmatpush1.msra.mxu0 0.0
      %2423 = vmatprep.subr.mxu0 0.0
      %2424 = vmatpush1.msra.mxu0 0.0
      %2425 = vmatprep.subr.mxu0 0.0
      %2426 = vmatpush1.msra.mxu0 0.0
      %2427 = vmatprep.subr.mxu0 0.0
      %2428 = vmatpush1.msra.mxu0 0.0
      %2429 = vmatprep.subr.mxu0 0.0
      %2430 = vmatpush1.msra.mxu0 0.0
      %2431 = vmatprep.subr.mxu0 0.0
      %2432 = vmatpush1.msra.mxu0 0.0
      %2433 = vmatprep.subr.mxu0 0.0
      %2434 = vmatpush1.msra.mxu0 0.0
      %2435 = vmatprep.subr.mxu0 0.0
      %2436 = vmatpush1.msra.mxu0 0.0
      %2437 = vmatprep.subr.mxu0 0.0
      %2438 = vmatpush1.msra.mxu0 0.0
      %2439 = vmatprep.subr.mxu0 0.0
      %2440 = vmatpush1.msra.mxu0 0.0
      %2441 = vmatprep.subr.mxu0 0.0
      %2442 = vmatpush1.msra.mxu0 0.0
      %2443 = vmatprep.subr.mxu0 0.0
      %2444 = vmatpush1.msra.mxu0 0.0
      %2445 = vmatprep.subr.mxu0 0.0
      %2446 = vmatpush1.msra.mxu0 0.0
      %2447 = vmatprep.subr.mxu0 0.0
      %2448 = vmatpush1.msra.mxu0 0.0
      %2449 = vmatprep.subr.mxu0 0.0
      %2450 = vmatpush1.msra.mxu0 0.0
      %2451 = vmatprep.subr.mxu0 0.0
      %2452 = vmatpush1.msra.mxu0 0.0
      %2453 = vmatprep.subr.mxu0 0.0
      %2454 = vmatpush1.msra.mxu0 0.0
      %2455 = vmatprep.subr.mxu0 0.0
      %2456 = vmatpush1.msra.mxu0 0.0
      %2457 = vmatprep.subr.mxu0 0.0
      %2458 = vmatpush1.msra.mxu0 0.0
      %2459 = vmatprep.subr.mxu0 0.0
      %2460 = vmatpush1.msra.mxu0 0.0
      %2461 = vmatprep.subr.mxu0 0.0
      %2462 = vmatpush1.msra.mxu0 0.0
      %2463 = vmatprep.subr.mxu0 0.0
      %2464 = vmatpush1.msra.mxu0 0.0
      %2465 = vmatprep.subr.mxu0 0.0
      %2466 = vmatpush1.msra.mxu0 0.0
      %2467 = vmatprep.mubr.f32.mxu0 0.0
      %2468 = vmatmul.mubr.f32.gmra.mrb[0].mxu0 %v2401
      %v2469 = vpop.f32.mrb[0].mxu0
      %v2470 = vadd.f32 %v2397, %v2469
      %v2471 = vpop.f32.mrb[0].mxu0
      %2472 = vdwg.mxu0
      %v2473 = vadd.f32 %v2470, %v2298
      %v2474 = vsel %vm796, %v2473, 0.0
      %2475 = vadd.xlane.f32.xlu0 %v2474
      %v2476 = vpop.xlane.xlu0 %2475
      %v2477 = vmul.f32 %v2476, %v1521
      %v2478 = vsub.f32 %v2473, %v2477
      %v2479 = vmul.f32 %v2478, %v2478
      %v2480 = vsel %vm796, %v2479, 0.0
      %2481 = vadd.xlane.f32.xlu0 %v2480
      %v2482 = vpop.xlane.xlu0 %2481
      %v2483 = vmul.f32 %v2482, %v1521
      %v2484 = vadd.f32 %v2483, 1e-05
      %v2485 = vrsqrt.pop %v2484
      %v2486 = vmul.f32 %v2478, %v2485
      %v2487 = vld [vmem:[%s22] sm:$0x1]
      %v2489 = vlaneseq
      %v2490 = vshrl.u32 %v2489, 7
      %v2491 = vsub.s32 0, %v2490
      %v2492 = vrot.slane %v2487, %v2491
      %v2494 = vmul.f32 %v2486, %v2492
      %v2495 = vld [vmem:[%s23] sm:$0x1]
      %v2497 = vlaneseq
      %v2498 = vshrl.u32 %v2497, 7
      %v2499 = vsub.s32 0, %v2498
      %v2500 = vrot.slane %v2495, %v2499
      %v2502 = vadd.f32 %v2494, %v2500
      %2503 = vst.msk [vmem:[%s783] sm:$0xff] %vm796, %v2502
      %p2504 = scmp.lt.s32.totalorder %s35, 1
      %s2505 = scalar_select %p2504, %s35, 1
      %s2506 = smul.addr %s2505, 8
      %s2507 = scalar_lea.vmem %s24, %s2506
      // Predicated region
      $region117: #{decoder_forward.4} parent=115 // pred_check
        %p2508 = pneg %p577
      $region118: #{decoder_forward.4} parent=115 // pred_check_branch
        %2510 = sbr.rel (%p2508) target = $region120
      $region119: #{decoder_forward.4} parent=115 // pred_region
        _
      $region120: #{decoder_forward.4} parent=115 // pred_fallthru
        _
    $region116: #{decoder_forward.4} parent=5 // pred_fallthru
      _
    %p2511 = scmp.le.s32.totalorder 2, %s30
    // Predicated region
    $region121: #{decoder_forward.4} parent=5 // pred_check
      %p2512 = pneg %p2511
    $region122: #{decoder_forward.4} parent=5 // pred_check_branch
      %2514 = sbr.rel (%p2512) target = $region124
    $region123: #{decoder_forward.4} parent=5 // pred_region
      %s2515 = ssub.s32 %s30, 2
      // Predicated region
      $region125: #{decoder_forward.4} parent=123 // pred_check
        %p2516 = pneg %p583
      $region126: #{decoder_forward.4} parent=123 // pred_check_branch
        %2518 = sbr.rel (%p2516) target = $region128
      $region127: #{decoder_forward.4} parent=123 // pred_region
        %p2519 = scmp.lt.s32.totalorder %s36, 1
        %s2520 = scalar_select %p2519, %s36, 1
        %s2521 = smul.addr %s2520, 8
        %s2522 = scalar_lea.vmem %s24, %s2521
      $region128: #{decoder_forward.4} parent=123 // pred_fallthru
        _
    $region124: #{decoder_forward.4} parent=5 // pred_fallthru
      _
  $region6: #{decoder_forward.4} parent=0 // loop_footer
    %s34 = sadd.s32 1, %s30
  $region7: #{decoder_forward.4} parent=0 // loop_footer_branch
    %29 = sbr.rel target = $region3
  $region8: #{decoder_forward.4} parent=0 // loop_exit
    _

// kernel: decoder_forward.3
$region0: #{decoder_forward.3}
  #allocation0 [shape = 'u32[]', space=smem, size = 0x4, offset = 0x4, fixed_abs, tag = 'smem constant byte address 0x4 - core index']
  #allocation1 [shape = 'u32[144,128]{1,0:T(1,128)}', space=vmem, size = 0x12000, scoped, tag = 'internal scratch']
  %s0 = inlined_call_operand.vmem [shape: f32[2,8,32], index: 0, kind: input, shape index: {}]
  %s1 = inlined_call_operand.vmem [shape: f32[2,8,32], index: 1, kind: input, shape index: {}]
  %s2 = inlined_call_operand.vmem [shape: f32[2,8,8], index: 2, kind: input, shape index: {}]
  %s3 = inlined_call_operand.vmem [shape: f32[2,8,8], index: 3, kind: input, shape index: {}]
  %s4 = inlined_call_operand.hbm [shape: f32[32,32], index: 4, kind: input, shape index: {}]
  %s5 = inlined_call_operand.hbm [shape: f32[32,32], index: 5, kind: input, shape index: {}]
  %s6 = inlined_call_operand.hbm [shape: f32[32,32], index: 6, kind: input, shape index: {}]
  %s7 = inlined_call_operand.hbm [shape: f32[32,32], index: 7, kind: input, shape index: {}]
  %s8 = inlined_call_operand.vmem [shape: f32[1,32], index: 8, kind: input, shape index: {}]
  %s9 = inlined_call_operand.vmem [shape: f32[1,32], index: 9, kind: input, shape index: {}, may-alias: {9,16,22}]
  %s10 = inlined_call_operand.vmem [shape: f32[1,32], index: 10, kind: input, shape index: {}, may-alias: {10,17,23}]
  %s11 = inlined_call_operand.vmem [shape: f32[32,32], index: 11, kind: input, shape index: {}]
  %s12 = inlined_call_operand.vmem [shape: f32[32,32], index: 12, kind: input, shape index: {}]
  %s13 = inlined_call_operand.vmem [shape: f32[32,32], index: 13, kind: input, shape index: {}]
  %s14 = inlined_call_operand.vmem [shape: f32[32,32], index: 14, kind: input, shape index: {}]
  %s15 = inlined_call_operand.vmem [shape: f32[1,32], index: 15, kind: input, shape index: {}]
  %s16 = inlined_call_operand.vmem [shape: f32[1,32], index: 16, kind: input, shape index: {}, may-alias: {9,16,22}]
  %s17 = inlined_call_operand.vmem [shape: f32[1,32], index: 17, kind: input, shape index: {}, may-alias: {10,17,23}]
  %s18 = inlined_call_operand.vmem [shape: f32[32,64], index: 18, kind: input, shape index: {}]
  %s19 = inlined_call_operand.vmem [shape: f32[1,64], index: 19, kind: input, shape index: {}]
  %s20 = inlined_call_operand.vmem [shape: f32[64,32], index: 20, kind: input, shape index: {}]
  %s21 = inlined_call_operand.vmem [shape: f32[1,32], index: 21, kind: input, shape index: {}]
  %s22 = inlined_call_operand.vmem [shape: f32[1,32], index: 22, kind: input, shape index: {}, may-alias: {9,16,22}]
  %s23 = inlined_call_operand.vmem [shape: f32[1,32], index: 23, kind: input, shape index: {}, may-alias: {10,17,23}]
  %s24 = inlined_call_operand.vmem [shape: f32[2,8,32], index: 24, kind: output, shape index: {}]
  %s25 = sld [smem:[#allocation0]]
  $region145: #{decoder_forward.3} parent=0
    _
  %s27 = ssub.s32 1, %s25
  %s28 = scalar_select 0, %s27, %s25
  $region1: #{decoder_forward.3} parent=0
    #allocation2 [shape = 'u8[16384]{0}', space=vmem, size = 0x4000, scoped, tag = 'input window, operand 4, single buffered']
    #allocation3 [shape = 's32[2]{0}', space=sflag, size = 0x8, scoped, tag = 'scoped memory for decoder_forward.3']
    #allocation4 [shape = 'u8[16384]{0}', space=vmem, size = 0x4000, scoped, tag = 'input window, operand 5, single buffered']
    #allocation5 [shape = 's32[1]{0}', space=sflag, size = 0x4, scoped, tag = 'scoped memory for decoder_forward.3']
    #allocation6 [shape = 'u8[16384]{0}', space=vmem, size = 0x4000, scoped, tag = 'input window, operand 6, single buffered']
    #allocation7 [shape = 'u8[16384]{0}', space=vmem, size = 0x4000, scoped, tag = 'input window, operand 7, single buffered']
    #allocation8 [shape = 's32[1]{0}', space=sflag, size = 0x4, scoped, tag = 'scoped memory for decoder_forward.3']
    %29 = vsyncpa [#allocation3], 0
    %30 = vsyncpa [#allocation5], 0
    %31 = vsyncpa [#allocation8], 0
    loop: start=0, step=1, limit=4
    $region2: #{decoder_forward.3} parent=1 // loop_pre_header
      _
    $region3: #{decoder_forward.3} parent=1 // loop_header
      %s33 = sphi 0, %s37
      %p34 = scmp.ge.s32.totalorder %s33, 4
      %s43 = sphi 0, %s45
      %s46 = sphi 0, %s43
      %s47 = sphi 0, %s46
      %s63 = sphi 0, %s47
      %s69 = sphi 0, %s71
      %s72 = sphi 0, %s69
      %s73 = sphi 0, %s72
      %s89 = sphi 0, %s73
      %s95 = sphi 0, %s97
      %s98 = sphi 0, %s95
      %s99 = sphi 0, %s98
      %s115 = sphi 0, %s99
      %s121 = sphi 0, %s123
      %s124 = sphi 0, %s121
      %s125 = sphi 0, %s124
      %s141 = sphi 0, %s125
      %s145 = sphi 0, %s145
      %s147 = sphi 0, %s145
      %s148 = sphi 0, %s147
      %s162 = sphi 0, %s148
      %s166 = sphi 0, %s166
      %s168 = sphi 0, %s166
      %s169 = sphi 0, %s168
      %s183 = sphi 0, %s169
      %s187 = sphi 0, %s187
      %s189 = sphi 0, %s187
      %s190 = sphi 0, %s189
      %s204 = sphi 0, %s190
      %s208 = sphi 0, %s208
      %s210 = sphi 0, %s208
      %s211 = sphi 0, %s210
      %s225 = sphi 0, %s211
      %s229 = sphi 0, %s229
      %s231 = sphi 0, %s229
      %s232 = sphi 0, %s231
      %s246 = sphi 0, %s232
      %s250 = sphi 0, %s250
      %s252 = sphi 0, %s250
      %s253 = sphi 0, %s252
      %s267 = sphi 0, %s253
      %s271 = sphi 0, %s271
      %s273 = sphi 0, %s271
      %s274 = sphi 0, %s273
      %s288 = sphi 0, %s274
      %s292 = sphi 0, %s292
      %s294 = sphi 0, %s292
      %s295 = sphi 0, %s294
      %s309 = sphi 0, %s295
      %s313 = sphi 0, %s313
      %s315 = sphi 0, %s313
      %s316 = sphi 0, %s315
      %s330 = sphi 0, %s316
      %s334 = sphi 0, %s334
      %s336 = sphi 0, %s334
      %s337 = sphi 0, %s336
      %s351 = sphi 0, %s337
      %s355 = sphi 0, %s355
      %s357 = sphi 0, %s355
      %s358 = sphi 0, %s357
      %s372 = sphi 0, %s358
      %s376 = sphi 0, %s376
      %s378 = sphi 0, %s376
      %s379 = sphi 0, %s378
      %s393 = sphi 0, %s379
      %s397 = sphi 0, %s397
      %s399 = sphi 0, %s397
      %s400 = sphi 0, %s399
      %s414 = sphi 0, %s400
      %s418 = sphi 0, %s418
      %s420 = sphi 0, %s418
      %s421 = sphi 0, %s420
      %s435 = sphi 0, %s421
      %s439 = sphi 0, %s439
      %s441 = sphi 0, %s439
      %s442 = sphi 0, %s441
      %s456 = sphi 0, %s442
      %s460 = sphi 0, %s460
      %s462 = sphi 0, %s460
      %s463 = sphi 0, %s462
      %s477 = sphi 0, %s463
      %s481 = sphi 0, %s481
      %s483 = sphi 0, %s481
      %s484 = sphi 0, %s483
      %s498 = sphi 0, %s484
      %s502 = sphi 0, %s502
      %s504 = sphi 0, %s502
      %s505 = sphi 0, %s504
      %s519 = sphi 0, %s505
      %s523 = sphi 0, %s523
      %s525 = sphi 0, %s523
      %s526 = sphi 0, %s525
      %s540 = sphi 0, %s526
      %s544 = sphi 0, %s544
      %s546 = sphi 0, %s544
      %s547 = sphi 0, %s546
      %s561 = sphi 0, %s547
      %s567 = sphi 0, %s569
      %s570 = sphi 0, %s567
      %s571 = sphi 0, %s570
      %s587 = sphi 0, %s571
    $region4: #{decoder_forward.3} parent=1 // loop_header_branch
      %36 = sbr.rel (%p34) target = $region8
    $region5: #{decoder_forward.3} parent=1 // loop_body
      %s38 = ssub.s32 %s33, 1
      %s39 = ssub.s32 %s33, 2
      %s40 = sadd.s32 %s33, 1
      %s41 = ssub.s32 %s33, %s40
      %p42 = scmp.eq.s32.totalorder %s41, 0
      %s44 = sadd.s32 %s43, 1
      %s45 = scalar_select %p42, %s43, %s44
      %p48 = pneg %p42
      %p49 = scmp.eq.s32.totalorder %s33, 1
      %p50 = por %p48, %p49
      %p51 = scmp.ne.s32.totalorder %s43, %s46
      %p52 = scmp.eq.s32.totalorder %s33, 0
      %p53 = por %p51, %p52
      %p54 = scmp.ne.s32.totalorder %s43, %s46
      %p55 = scmp.eq.s32.totalorder %s38, 1
      %p56 = por %p54, %p55
      %p57 = scmp.ne.s32.totalorder %s46, %s47
      %p58 = scmp.eq.s32.totalorder %s38, 0
      %p59 = por %p57, %p58
      %p60 = scmp.ne.s32.totalorder %s46, %s47
      %p61 = scmp.eq.s32.totalorder %s39, 1
      %p62 = por %p60, %p61
      %p64 = scmp.ne.s32.totalorder %s47, %s63
      %p65 = scmp.eq.s32.totalorder %s39, 0
      %p66 = por %p64, %p65
      %s67 = ssub.s32 %s33, %s40
      %p68 = scmp.eq.s32.totalorder %s67, 0
      %s70 = sadd.s32 %s69, 1
      %s71 = scalar_select %p68, %s69, %s70
      %p74 = pneg %p68
      %p75 = scmp.eq.s32.totalorder %s33, 1
      %p76 = por %p74, %p75
      %p77 = scmp.ne.s32.totalorder %s69, %s72
      %p78 = scmp.eq.s32.totalorder %s33, 0
      %p79 = por %p77, %p78
      %p80 = scmp.ne.s32.totalorder %s69, %s72
      %p81 = scmp.eq.s32.totalorder %s38, 1
      %p82 = por %p80, %p81
      %p83 = scmp.ne.s32.totalorder %s72, %s73
      %p84 = scmp.eq.s32.totalorder %s38, 0
      %p85 = por %p83, %p84
      %p86 = scmp.ne.s32.totalorder %s72, %s73
      %p87 = scmp.eq.s32.totalorder %s39, 1
      %p88 = por %p86, %p87
      %p90 = scmp.ne.s32.totalorder %s73, %s89
      %p91 = scmp.eq.s32.totalorder %s39, 0
      %p92 = por %p90, %p91
      %s93 = ssub.s32 %s33, %s40
      %p94 = scmp.eq.s32.totalorder %s93, 0
      %s96 = sadd.s32 %s95, 1
      %s97 = scalar_select %p94, %s95, %s96
      %p100 = pneg %p94
      %p101 = scmp.eq.s32.totalorder %s33, 1
      %p102 = por %p100, %p101
      %p103 = scmp.ne.s32.totalorder %s95, %s98
      %p104 = scmp.eq.s32.totalorder %s33, 0
      %p105 = por %p103, %p104
      %p106 = scmp.ne.s32.totalorder %s95, %s98
      %p107 = scmp.eq.s32.totalorder %s38, 1
      %p108 = por %p106, %p107
      %p109 = scmp.ne.s32.totalorder %s98, %s99
      %p110 = scmp.eq.s32.totalorder %s38, 0
      %p111 = por %p109, %p110
      %p112 = scmp.ne.s32.totalorder %s98, %s99
      %p113 = scmp.eq.s32.totalorder %s39, 1
      %p114 = por %p112, %p113
      %p116 = scmp.ne.s32.totalorder %s99, %s115
      %p117 = scmp.eq.s32.totalorder %s39, 0
      %p118 = por %p116, %p117
      %s119 = ssub.s32 %s33, %s40
      %p120 = scmp.eq.s32.totalorder %s119, 0
      %s122 = sadd.s32 %s121, 1
      %s123 = scalar_select %p120, %s121, %s122
      %p126 = pneg %p120
      %p127 = scmp.eq.s32.totalorder %s33, 1
      %p128 = por %p126, %p127
      %p129 = scmp.ne.s32.totalorder %s121, %s124
      %p130 = scmp.eq.s32.totalorder %s33, 0
      %p131 = por %p129, %p130
      %p132 = scmp.ne.s32.totalorder %s121, %s124
      %p133 = scmp.eq.s32.totalorder %s38, 1
      %p134 = por %p132, %p133
      %p135 = scmp.ne.s32.totalorder %s124, %s125
      %p136 = scmp.eq.s32.totalorder %s38, 0
      %p137 = por %p135, %p136
      %p138 = scmp.ne.s32.totalorder %s124, %s125
      %p139 = scmp.eq.s32.totalorder %s39, 1
      %p140 = por %p138, %p139
      %p142 = scmp.ne.s32.totalorder %s125, %s141
      %p143 = scmp.eq.s32.totalorder %s39, 0
      %p144 = por %p142, %p143
      %s146 = sadd.s32 %s145, 1
      %p149 = scmp.eq.s32.totalorder %s33, 1
      %p150 = scmp.ne.s32.totalorder %s145, %s147
      %p151 = scmp.eq.s32.totalorder %s33, 0
      %p152 = por %p150, %p151
      %p153 = scmp.ne.s32.totalorder %s145, %s147
      %p154 = scmp.eq.s32.totalorder %s38, 1
      %p155 = por %p153, %p154
      %p156 = scmp.ne.s32.totalorder %s147, %s148
      %p157 = scmp.eq.s32.totalorder %s38, 0
      %p158 = por %p156, %p157
      %p159 = scmp.ne.s32.totalorder %s147, %s148
      %p160 = scmp.eq.s32.totalorder %s39, 1
      %p161 = por %p159, %p160
      %p163 = scmp.ne.s32.totalorder %s148, %s162
      %p164 = scmp.eq.s32.totalorder %s39, 0
      %p165 = por %p163, %p164
      %s167 = sadd.s32 %s166, 1
      %p170 = scmp.eq.s32.totalorder %s33, 1
      %p171 = scmp.ne.s32.totalorder %s166, %s168
      %p172 = scmp.eq.s32.totalorder %s33, 0
      %p173 = por %p171, %p172
      %p174 = scmp.ne.s32.totalorder %s166, %s168
      %p175 = scmp.eq.s32.totalorder %s38, 1
      %p176 = por %p174, %p175
      %p177 = scmp.ne.s32.totalorder %s168, %s169
      %p178 = scmp.eq.s32.totalorder %s38, 0
      %p179 = por %p177, %p178
      %p180 = scmp.ne.s32.totalorder %s168, %s169
      %p181 = scmp.eq.s32.totalorder %s39, 1
      %p182 = por %p180, %p181
      %p184 = scmp.ne.s32.totalorder %s169, %s183
      %p185 = scmp.eq.s32.totalorder %s39, 0
      %p186 = por %p184, %p185
      %s188 = sadd.s32 %s187, 1
      %p191 = scmp.eq.s32.totalorder %s33, 1
      %p192 = scmp.ne.s32.totalorder %s187, %s189
      %p193 = scmp.eq.s32.totalorder %s33, 0
      %p194 = por %p192, %p193
      %p195 = scmp.ne.s32.totalorder %s187, %s189
      %p196 = scmp.eq.s32.totalorder %s38, 1
      %p197 = por %p195, %p196
      %p198 = scmp.ne.s32.totalorder %s189, %s190
      %p199 = scmp.eq.s32.totalorder %s38, 0
      %p200 = por %p198, %p199
      %p201 = scmp.ne.s32.totalorder %s189, %s190
      %p202 = scmp.eq.s32.totalorder %s39, 1
      %p203 = por %p201, %p202
      %p205 = scmp.ne.s32.totalorder %s190, %s204
      %p206 = scmp.eq.s32.totalorder %s39, 0
      %p207 = por %p205, %p206
      %s209 = sadd.s32 %s208, 1
      %p212 = scmp.eq.s32.totalorder %s33, 1
      %p213 = scmp.ne.s32.totalorder %s208, %s210
      %p214 = scmp.eq.s32.totalorder %s33, 0
      %p215 = por %p213, %p214
      %p216 = scmp.ne.s32.totalorder %s208, %s210
      %p217 = scmp.eq.s32.totalorder %s38, 1
      %p218 = por %p216, %p217
      %p219 = scmp.ne.s32.totalorder %s210, %s211
      %p220 = scmp.eq.s32.totalorder %s38, 0
      %p221 = por %p219, %p220
      %p222 = scmp.ne.s32.totalorder %s210, %s211
      %p223 = scmp.eq.s32.totalorder %s39, 1
      %p224 = por %p222, %p223
      %p226 = scmp.ne.s32.totalorder %s211, %s225
      %p227 = scmp.eq.s32.totalorder %s39, 0
      %p228 = por %p226, %p227
      %s230 = sadd.s32 %s229, 1
      %p233 = scmp.eq.s32.totalorder %s33, 1
      %p234 = scmp.ne.s32.totalorder %s229, %s231
      %p235 = scmp.eq.s32.totalorder %s33, 0
      %p236 = por %p234, %p235
      %p237 = scmp.ne.s32.totalorder %s229, %s231
      %p238 = scmp.eq.s32.totalorder %s38, 1
      %p239 = por %p237, %p238
      %p240 = scmp.ne.s32.totalorder %s231, %s232
      %p241 = scmp.eq.s32.totalorder %s38, 0
      %p242 = por %p240, %p241
      %p243 = scmp.ne.s32.totalorder %s231, %s232
      %p244 = scmp.eq.s32.totalorder %s39, 1
      %p245 = por %p243, %p244
      %p247 = scmp.ne.s32.totalorder %s232, %s246
      %p248 = scmp.eq.s32.totalorder %s39, 0
      %p249 = por %p247, %p248
      %s251 = sadd.s32 %s250, 1
      %p254 = scmp.eq.s32.totalorder %s33, 1
      %p255 = scmp.ne.s32.totalorder %s250, %s252
      %p256 = scmp.eq.s32.totalorder %s33, 0
      %p257 = por %p255, %p256
      %p258 = scmp.ne.s32.totalorder %s250, %s252
      %p259 = scmp.eq.s32.totalorder %s38, 1
      %p260 = por %p258, %p259
      %p261 = scmp.ne.s32.totalorder %s252, %s253
      %p262 = scmp.eq.s32.totalorder %s38, 0
      %p263 = por %p261, %p262
      %p264 = scmp.ne.s32.totalorder %s252, %s253
      %p265 = scmp.eq.s32.totalorder %s39, 1
      %p266 = por %p264, %p265
      %p268 = scmp.ne.s32.totalorder %s253, %s267
      %p269 = scmp.eq.s32.totalorder %s39, 0
      %p270 = por %p268, %p269
      %s272 = sadd.s32 %s271, 1
      %p275 = scmp.eq.s32.totalorder %s33, 1
      %p276 = scmp.ne.s32.totalorder %s271, %s273
      %p277 = scmp.eq.s32.totalorder %s33, 0
      %p278 = por %p276, %p277
      %p279 = scmp.ne.s32.totalorder %s271, %s273
      %p280 = scmp.eq.s32.totalorder %s38, 1
      %p281 = por %p279, %p280
      %p282 = scmp.ne.s32.totalorder %s273, %s274
      %p283 = scmp.eq.s32.totalorder %s38, 0
      %p284 = por %p282, %p283
      %p285 = scmp.ne.s32.totalorder %s273, %s274
      %p286 = scmp.eq.s32.totalorder %s39, 1
      %p287 = por %p285, %p286
      %p289 = scmp.ne.s32.totalorder %s274, %s288
      %p290 = scmp.eq.s32.totalorder %s39, 0
      %p291 = por %p289, %p290
      %s293 = sadd.s32 %s292, 1
      %p296 = scmp.eq.s32.totalorder %s33, 1
      %p297 = scmp.ne.s32.totalorder %s292, %s294
      %p298 = scmp.eq.s32.totalorder %s33, 0
      %p299 = por %p297, %p298
      %p300 = scmp.ne.s32.totalorder %s292, %s294
      %p301 = scmp.eq.s32.totalorder %s38, 1
      %p302 = por %p300, %p301
      %p303 = scmp.ne.s32.totalorder %s294, %s295
      %p304 = scmp.eq.s32.totalorder %s38, 0
      %p305 = por %p303, %p304
      %p306 = scmp.ne.s32.totalorder %s294, %s295
      %p307 = scmp.eq.s32.totalorder %s39, 1
      %p308 = por %p306, %p307
      %p310 = scmp.ne.s32.totalorder %s295, %s309
      %p311 = scmp.eq.s32.totalorder %s39, 0
      %p312 = por %p310, %p311
      %s314 = sadd.s32 %s313, 1
      %p317 = scmp.eq.s32.totalorder %s33, 1
      %p318 = scmp.ne.s32.totalorder %s313, %s315
      %p319 = scmp.eq.s32.totalorder %s33, 0
      %p320 = por %p318, %p319
      %p321 = scmp.ne.s32.totalorder %s313, %s315
      %p322 = scmp.eq.s32.totalorder %s38, 1
      %p323 = por %p321, %p322
      %p324 = scmp.ne.s32.totalorder %s315, %s316
      %p325 = scmp.eq.s32.totalorder %s38, 0
      %p326 = por %p324, %p325
      %p327 = scmp.ne.s32.totalorder %s315, %s316
      %p328 = scmp.eq.s32.totalorder %s39, 1
      %p329 = por %p327, %p328
      %p331 = scmp.ne.s32.totalorder %s316, %s330
      %p332 = scmp.eq.s32.totalorder %s39, 0
      %p333 = por %p331, %p332
      %s335 = sadd.s32 %s334, 1
      %p338 = scmp.eq.s32.totalorder %s33, 1
      %p339 = scmp.ne.s32.totalorder %s334, %s336
      %p340 = scmp.eq.s32.totalorder %s33, 0
      %p341 = por %p339, %p340
      %p342 = scmp.ne.s32.totalorder %s334, %s336
      %p343 = scmp.eq.s32.totalorder %s38, 1
      %p344 = por %p342, %p343
      %p345 = scmp.ne.s32.totalorder %s336, %s337
      %p346 = scmp.eq.s32.totalorder %s38, 0
      %p347 = por %p345, %p346
      %p348 = scmp.ne.s32.totalorder %s336, %s337
      %p349 = scmp.eq.s32.totalorder %s39, 1
      %p350 = por %p348, %p349
      %p352 = scmp.ne.s32.totalorder %s337, %s351
      %p353 = scmp.eq.s32.totalorder %s39, 0
      %p354 = por %p352, %p353
      %s356 = sadd.s32 %s355, 1
      %p359 = scmp.eq.s32.totalorder %s33, 1
      %p360 = scmp.ne.s32.totalorder %s355, %s357
      %p361 = scmp.eq.s32.totalorder %s33, 0
      %p362 = por %p360, %p361
      %p363 = scmp.ne.s32.totalorder %s355, %s357
      %p364 = scmp.eq.s32.totalorder %s38, 1
      %p365 = por %p363, %p364
      %p366 = scmp.ne.s32.totalorder %s357, %s358
      %p367 = scmp.eq.s32.totalorder %s38, 0
      %p368 = por %p366, %p367
      %p369 = scmp.ne.s32.totalorder %s357, %s358
      %p370 = scmp.eq.s32.totalorder %s39, 1
      %p371 = por %p369, %p370
      %p373 = scmp.ne.s32.totalorder %s358, %s372
      %p374 = scmp.eq.s32.totalorder %s39, 0
      %p375 = por %p373, %p374
      %s377 = sadd.s32 %s376, 1
      %p380 = scmp.eq.s32.totalorder %s33, 1
      %p381 = scmp.ne.s32.totalorder %s376, %s378
      %p382 = scmp.eq.s32.totalorder %s33, 0
      %p383 = por %p381, %p382
      %p384 = scmp.ne.s32.totalorder %s376, %s378
      %p385 = scmp.eq.s32.totalorder %s38, 1
      %p386 = por %p384, %p385
      %p387 = scmp.ne.s32.totalorder %s378, %s379
      %p388 = scmp.eq.s32.totalorder %s38, 0
      %p389 = por %p387, %p388
      %p390 = scmp.ne.s32.totalorder %s378, %s379
      %p391 = scmp.eq.s32.totalorder %s39, 1
      %p392 = por %p390, %p391
      %p394 = scmp.ne.s32.totalorder %s379, %s393
      %p395 = scmp.eq.s32.totalorder %s39, 0
      %p396 = por %p394, %p395
      %s398 = sadd.s32 %s397, 1
      %p401 = scmp.eq.s32.totalorder %s33, 1
      %p402 = scmp.ne.s32.totalorder %s397, %s399
      %p403 = scmp.eq.s32.totalorder %s33, 0
      %p404 = por %p402, %p403
      %p405 = scmp.ne.s32.totalorder %s397, %s399
      %p406 = scmp.eq.s32.totalorder %s38, 1
      %p407 = por %p405, %p406
      %p408 = scmp.ne.s32.totalorder %s399, %s400
      %p409 = scmp.eq.s32.totalorder %s38, 0
      %p410 = por %p408, %p409
      %p411 = scmp.ne.s32.totalorder %s399, %s400
      %p412 = scmp.eq.s32.totalorder %s39, 1
      %p413 = por %p411, %p412
      %p415 = scmp.ne.s32.totalorder %s400, %s414
      %p416 = scmp.eq.s32.totalorder %s39, 0
      %p417 = por %p415, %p416
      %s419 = sadd.s32 %s418, 1
      %p422 = scmp.eq.s32.totalorder %s33, 1
      %p423 = scmp.ne.s32.totalorder %s418, %s420
      %p424 = scmp.eq.s32.totalorder %s33, 0
      %p425 = por %p423, %p424
      %p426 = scmp.ne.s32.totalorder %s418, %s420
      %p427 = scmp.eq.s32.totalorder %s38, 1
      %p428 = por %p426, %p427
      %p429 = scmp.ne.s32.totalorder %s420, %s421
      %p430 = scmp.eq.s32.totalorder %s38, 0
      %p431 = por %p429, %p430
      %p432 = scmp.ne.s32.totalorder %s420, %s421
      %p433 = scmp.eq.s32.totalorder %s39, 1
      %p434 = por %p432, %p433
      %p436 = scmp.ne.s32.totalorder %s421, %s435
      %p437 = scmp.eq.s32.totalorder %s39, 0
      %p438 = por %p436, %p437
      %s440 = sadd.s32 %s439, 1
      %p443 = scmp.eq.s32.totalorder %s33, 1
      %p444 = scmp.ne.s32.totalorder %s439, %s441
      %p445 = scmp.eq.s32.totalorder %s33, 0
      %p446 = por %p444, %p445
      %p447 = scmp.ne.s32.totalorder %s439, %s441
      %p448 = scmp.eq.s32.totalorder %s38, 1
      %p449 = por %p447, %p448
      %p450 = scmp.ne.s32.totalorder %s441, %s442
      %p451 = scmp.eq.s32.totalorder %s38, 0
      %p452 = por %p450, %p451
      %p453 = scmp.ne.s32.totalorder %s441, %s442
      %p454 = scmp.eq.s32.totalorder %s39, 1
      %p455 = por %p453, %p454
      %p457 = scmp.ne.s32.totalorder %s442, %s456
      %p458 = scmp.eq.s32.totalorder %s39, 0
      %p459 = por %p457, %p458
      %s461 = sadd.s32 %s460, 1
      %p464 = scmp.eq.s32.totalorder %s33, 1
      %p465 = scmp.ne.s32.totalorder %s460, %s462
      %p466 = scmp.eq.s32.totalorder %s33, 0
      %p467 = por %p465, %p466
      %p468 = scmp.ne.s32.totalorder %s460, %s462
      %p469 = scmp.eq.s32.totalorder %s38, 1
      %p470 = por %p468, %p469
      %p471 = scmp.ne.s32.totalorder %s462, %s463
      %p472 = scmp.eq.s32.totalorder %s38, 0
      %p473 = por %p471, %p472
      %p474 = scmp.ne.s32.totalorder %s462, %s463
      %p475 = scmp.eq.s32.totalorder %s39, 1
      %p476 = por %p474, %p475
      %p478 = scmp.ne.s32.totalorder %s463, %s477
      %p479 = scmp.eq.s32.totalorder %s39, 0
      %p480 = por %p478, %p479
      %s482 = sadd.s32 %s481, 1
      %p485 = scmp.eq.s32.totalorder %s33, 1
      %p486 = scmp.ne.s32.totalorder %s481, %s483
      %p487 = scmp.eq.s32.totalorder %s33, 0
      %p488 = por %p486, %p487
      %p489 = scmp.ne.s32.totalorder %s481, %s483
      %p490 = scmp.eq.s32.totalorder %s38, 1
      %p491 = por %p489, %p490
      %p492 = scmp.ne.s32.totalorder %s483, %s484
      %p493 = scmp.eq.s32.totalorder %s38, 0
      %p494 = por %p492, %p493
      %p495 = scmp.ne.s32.totalorder %s483, %s484
      %p496 = scmp.eq.s32.totalorder %s39, 1
      %p497 = por %p495, %p496
      %p499 = scmp.ne.s32.totalorder %s484, %s498
      %p500 = scmp.eq.s32.totalorder %s39, 0
      %p501 = por %p499, %p500
      %s503 = sadd.s32 %s502, 1
      %p506 = scmp.eq.s32.totalorder %s33, 1
      %p507 = scmp.ne.s32.totalorder %s502, %s504
      %p508 = scmp.eq.s32.totalorder %s33, 0
      %p509 = por %p507, %p508
      %p510 = scmp.ne.s32.totalorder %s502, %s504
      %p511 = scmp.eq.s32.totalorder %s38, 1
      %p512 = por %p510, %p511
      %p513 = scmp.ne.s32.totalorder %s504, %s505
      %p514 = scmp.eq.s32.totalorder %s38, 0
      %p515 = por %p513, %p514
      %p516 = scmp.ne.s32.totalorder %s504, %s505
      %p517 = scmp.eq.s32.totalorder %s39, 1
      %p518 = por %p516, %p517
      %p520 = scmp.ne.s32.totalorder %s505, %s519
      %p521 = scmp.eq.s32.totalorder %s39, 0
      %p522 = por %p520, %p521
      %s524 = sadd.s32 %s523, 1
      %p527 = scmp.eq.s32.totalorder %s33, 1
      %p528 = scmp.ne.s32.totalorder %s523, %s525
      %p529 = scmp.eq.s32.totalorder %s33, 0
      %p530 = por %p528, %p529
      %p531 = scmp.ne.s32.totalorder %s523, %s525
      %p532 = scmp.eq.s32.totalorder %s38, 1
      %p533 = por %p531, %p532
      %p534 = scmp.ne.s32.totalorder %s525, %s526
      %p535 = scmp.eq.s32.totalorder %s38, 0
      %p536 = por %p534, %p535
      %p537 = scmp.ne.s32.totalorder %s525, %s526
      %p538 = scmp.eq.s32.totalorder %s39, 1
      %p539 = por %p537, %p538
      %p541 = scmp.ne.s32.totalorder %s526, %s540
      %p542 = scmp.eq.s32.totalorder %s39, 0
      %p543 = por %p541, %p542
      %s545 = sadd.s32 %s544, 1
      %p548 = scmp.eq.s32.totalorder %s33, 1
      %p549 = scmp.ne.s32.totalorder %s544, %s546
      %p550 = scmp.eq.s32.totalorder %s33, 0
      %p551 = por %p549, %p550
      %p552 = scmp.ne.s32.totalorder %s544, %s546
      %p553 = scmp.eq.s32.totalorder %s38, 1
      %p554 = por %p552, %p553
      %p555 = scmp.ne.s32.totalorder %s546, %s547
      %p556 = scmp.eq.s32.totalorder %s38, 0
      %p557 = por %p555, %p556
      %p558 = scmp.ne.s32.totalorder %s546, %s547
      %p559 = scmp.eq.s32.totalorder %s39, 1
      %p560 = por %p558, %p559
      %p562 = scmp.ne.s32.totalorder %s547, %s561
      %p563 = scmp.eq.s32.totalorder %s39, 0
      %p564 = por %p562, %p563
      %s565 = ssub.s32 %s33, %s40
      %p566 = scmp.eq.s32.totalorder %s565, 0
      %s568 = sadd.s32 %s567, 1
      %s569 = scalar_select %p566, %s567, %s568
      %p572 = pneg %p566
      %p573 = scmp.eq.s32.totalorder %s33, 1
      %p574 = por %p572, %p573
      %p575 = scmp.ne.s32.totalorder %s567, %s570
      %p576 = scmp.eq.s32.totalorder %s33, 0
      %p577 = por %p575, %p576
      %p578 = scmp.ne.s32.totalorder %s567, %s570
      %p579 = scmp.eq.s32.totalorder %s38, 1
      %p580 = por %p578, %p579
      %p581 = scmp.ne.s32.totalorder %s570, %s571
      %p582 = scmp.eq.s32.totalorder %s38, 0
      %p583 = por %p581, %p582
      %p584 = scmp.ne.s32.totalorder %s570, %s571
      %p585 = scmp.eq.s32.totalorder %s39, 1
      %p586 = por %p584, %p585
      %p588 = scmp.ne.s32.totalorder %s571, %s587
      %p589 = scmp.eq.s32.totalorder %s39, 0
      %p590 = por %p588, %p589
      %p591 = scmp.le.s32.totalorder 1, %s33
      %p592 = scmp.lt.s32.totalorder %s33, 3
      %p593 = pnand %p591, %p592
      %p594 = pneg %p593
      // Predicated region
      $region9: #{decoder_forward.3} parent=5 // pred_check
        _
      $region10: #{decoder_forward.3} parent=5 // pred_check_branch
        %596 = sbr.rel (%p593) target = $region12
      $region11: #{decoder_forward.3} parent=5 // pred_region
        %s597 = ssub.s32 %s33, 1
        // Predicated region
        $region13: #{decoder_forward.3} parent=11 // pred_check
          %p598 = pneg %p158
        $region14: #{decoder_forward.3} parent=11 // pred_check_branch
          %600 = sbr.rel (%p598) target = $region16
        $region15: #{decoder_forward.3} parent=11 // pred_region
          %s602 = ssub.s32 512, 512
          %603 = vsyncadd [#allocation3], %s602
          %s604 = sshll.u32 [#allocation2], 4
          %s605 = int_to_ptr.vmem [resolvable:$true] %s604
          %610 = dma.hbm_to_vmem [thread:$0]  %s4, 512, %s605, [#allocation3], 128, 128, 8
        $region16: #{decoder_forward.3} parent=11 // pred_fallthru
          _
        // Predicated region
        $region17: #{decoder_forward.3} parent=11 // pred_check
          %p611 = pneg %p179
        $region18: #{decoder_forward.3} parent=11 // pred_check_branch
          %613 = sbr.rel (%p611) target = $region20
        $region19: #{decoder_forward.3} parent=11 // pred_region
          %s615 = ssub.s32 512, 512
          %616 = vsyncadd [#allocation5], %s615
          %s617 = sshll.u32 [#allocation4], 4
          %s618 = int_to_ptr.vmem [resolvable:$true] %s617
          %623 = dma.hbm_to_vmem [thread:$0]  %s5, 512, %s618, [#allocation5], 128, 128, 8
        $region20: #{decoder_forward.3} parent=11 // pred_fallthru
          _
        // Predicated region
        $region21: #{decoder_forward.3} parent=11 // pred_check
          %p624 = pneg %p200
        $region22: #{decoder_forward.3} parent=11 // pred_check_branch
          %626 = sbr.rel (%p624) target = $region24
        $region23: #{decoder_forward.3} parent=11 // pred_region
          %s628 = ssub.s32 512, 512
          %629 = vsyncadd [#allocation5], %s628
          %s630 = sshll.u32 [#allocation6], 4
          %s631 = int_to_ptr.vmem [resolvable:$true] %s630
          %636 = dma.hbm_to_vmem [thread:$0]  %s6, 512, %s631, [#allocation5], 128, 128, 8
        $region24: #{decoder_forward.3} parent=11 // pred_fallthru
          _
        // Predicated region
        $region25: #{decoder_forward.3} parent=11 // pred_check
          %p637 = pneg %p221
        $region26: #{decoder_forward.3} parent=11 // pred_check_branch
          %639 = sbr.rel (%p637) target = $region28
        $region27: #{decoder_forward.3} parent=11 // pred_region
          %s641 = ssub.s32 512, 512
          %642 = vsyncadd [#allocation8], %s641
          %s643 = sshll.u32 [#allocation7], 4
          %s644 = int_to_ptr.vmem [resolvable:$true] %s643
          %649 = dma.hbm_to_vmem [thread:$0]  %s7, 512, %s644, [#allocation8], 128, 128, 8
        $region28: #{decoder_forward.3} parent=11 // pred_fallthru
          _
        // Predicated region
        $region29: #{decoder_forward.3} parent=11 // pred_check
          %p650 = pneg %p242
        $region30: #{decoder_forward.3} parent=11 // pred_check_branch
          %652 = sbr.rel (%p650) target = $region32
        $region31: #{decoder_forward.3} parent=11 // pred_region
          _
        $region32: #{decoder_forward.3} parent=11 // pred_fallthru
          _
        // Predicated region
        $region33: #{decoder_forward.3} parent=11 // pred_check
          %p653 = pneg %p263
        $region34: #{decoder_forward.3} parent=11 // pred_check_branch
          %655 = sbr.rel (%p653) target = $region36
        $region35: #{decoder_forward.3} parent=11 // pred_region
          _
        $region36: #{decoder_forward.3} parent=11 // pred_fallthru
          _
        // Predicated region
        $region37: #{decoder_forward.3} parent=11 // pred_check
          %p656 = pneg %p284
        $region38: #{decoder_forward.3} parent=11 // pred_check_branch
          %658 = sbr.rel (%p656) target = $region40
        $region39: #{decoder_forward.3} parent=11 // pred_region
          _
        $region40: #{decoder_forward.3} parent=11 // pred_fallthru
          _
        // Predicated region
        $region41: #{decoder_forward.3} parent=11 // pred_check
          %p659 = pneg %p305
        $region42: #{decoder_forward.3} parent=11 // pred_check_branch
          %661 = sbr.rel (%p659) target = $region44
        $region43: #{decoder_forward.3} parent=11 // pred_region
          _
        $region44: #{decoder_forward.3} parent=11 // pred_fallthru
          _
        // Predicated region
        $region45: #{decoder_forward.3} parent=11 // pred_check
          %p662 = pneg %p326
        $region46: #{decoder_forward.3} parent=11 // pred_check_branch
          %664 = sbr.rel (%p662) target = $region48
        $region47: #{decoder_forward.3} parent=11 // pred_region
          _
        $region48: #{decoder_forward.3} parent=11 // pred_fallthru
          _
        // Predicated region
        $region49: #{decoder_forward.3} parent=11 // pred_check
          %p665 = pneg %p347
        $region50: #{decoder_forward.3} parent=11 // pred_check_branch
          %667 = sbr.rel (%p665) target = $region52
        $region51: #{decoder_forward.3} parent=11 // pred_region
          _
        $region52: #{decoder_forward.3} parent=11 // pred_fallthru
          _
        // Predicated region
        $region53: #{decoder_forward.3} parent=11 // pred_check
          %p668 = pneg %p368
        $region54: #{decoder_forward.3} parent=11 // pred_check_branch
          %670 = sbr.rel (%p668) target = $region56
        $region55: #{decoder_forward.3} parent=11 // pred_region
          _
        $region56: #{decoder_forward.3} parent=11 // pred_fallthru
          _
        // Predicated region
        $region57: #{decoder_forward.3} parent=11 // pred_check
          %p671 = pneg %p389
        $region58: #{decoder_forward.3} parent=11 // pred_check_branch
          %673 = sbr.rel (%p671) target = $region60
        $region59: #{decoder_forward.3} parent=11 // pred_region
          _
        $region60: #{decoder_forward.3} parent=11 // pred_fallthru
          _
        // Predicated region
        $region61: #{decoder_forward.3} parent=11 // pred_check
          %p674 = pneg %p410
        $region62: #{decoder_forward.3} parent=11 // pred_check_branch
          %676 = sbr.rel (%p674) target = $region64
        $region63: #{decoder_forward.3} parent=11 // pred_region
          _
        $region64: #{decoder_forward.3} parent=11 // pred_fallthru
          _
        // Predicated region
        $region65: #{decoder_forward.3} parent=11 // pred_check
          %p677 = pneg %p431
        $region66: #{decoder_forward.3} parent=11 // pred_check_branch
          %679 = sbr.rel (%p677) target = $region68
        $region67: #{decoder_forward.3} parent=11 // pred_region
          _
        $region68: #{decoder_forward.3} parent=11 // pred_fallthru
          _
        // Predicated region
        $region69: #{decoder_forward.3} parent=11 // pred_check
          %p680 = pneg %p452
        $region70: #{decoder_forward.3} parent=11 // pred_check_branch
          %682 = sbr.rel (%p680) target = $region72
        $region71: #{decoder_forward.3} parent=11 // pred_region
          _
        $region72: #{decoder_forward.3} parent=11 // pred_fallthru
          _
        // Predicated region
        $region73: #{decoder_forward.3} parent=11 // pred_check
          %p683 = pneg %p473
        $region74: #{decoder_forward.3} parent=11 // pred_check_branch
          %685 = sbr.rel (%p683) target = $region76
        $region75: #{decoder_forward.3} parent=11 // pred_region
          _
        $region76: #{decoder_forward.3} parent=11 // pred_fallthru
          _
        // Predicated region
        $region77: #{decoder_forward.3} parent=11 // pred_check
          %p686 = pneg %p494
        $region78: #{decoder_forward.3} parent=11 // pred_check_branch
          %688 = sbr.rel (%p686) target = $region80
        $region79: #{decoder_forward.3} parent=11 // pred_region
          _
        $region80: #{decoder_forward.3} parent=11 // pred_fallthru
          _
        // Predicated region
        $region81: #{decoder_forward.3} parent=11 // pred_check
          %p689 = pneg %p515
        $region82: #{decoder_forward.3} parent=11 // pred_check_branch
          %691 = sbr.rel (%p689) target = $region84
        $region83: #{decoder_forward.3} parent=11 // pred_region
          _
        $region84: #{decoder_forward.3} parent=11 // pred_fallthru
          _
        // Predicated region
        $region85: #{decoder_forward.3} parent=11 // pred_check
          %p692 = pneg %p536
        $region86: #{decoder_forward.3} parent=11 // pred_check_branch
          %694 = sbr.rel (%p692) target = $region88
        $region87: #{decoder_forward.3} parent=11 // pred_region
          _
        $region88: #{decoder_forward.3} parent=11 // pred_fallthru
          _
        // Predicated region
        $region89: #{decoder_forward.3} parent=11 // pred_check
          %p695 = pneg %p557
        $region90: #{decoder_forward.3} parent=11 // pred_check_branch
          %697 = sbr.rel (%p695) target = $region92
        $region91: #{decoder_forward.3} parent=11 // pred_region
          _
        $region92: #{decoder_forward.3} parent=11 // pred_fallthru
          _
      $region12: #{decoder_forward.3} parent=5 // pred_fallthru
        _
      %p698 = scmp.lt.s32.totalorder %s33, 2
      // Predicated region
      $region93: #{decoder_forward.3} parent=5 // pred_check
        %p699 = pneg %p698
      $region94: #{decoder_forward.3} parent=5 // pred_check_branch
        %701 = sbr.rel (%p699) target = $region96
      $region95: #{decoder_forward.3} parent=5 // pred_region
        // Predicated region
        $region97: #{decoder_forward.3} parent=95 // pred_check
          %p702 = pneg %p53
        $region98: #{decoder_forward.3} parent=95 // pred_check_branch
          %704 = sbr.rel (%p702) target = $region100
        $region99: #{decoder_forward.3} parent=95 // pred_region
          %p705 = scmp.lt.s32.totalorder %s33, 1
          %s706 = scalar_select %p705, %s33, 1
          %s707 = smul.addr %s706, 8
          %s708 = scalar_lea.vmem %s0, %s707
        $region100: #{decoder_forward.3} parent=95 // pred_fallthru
          _
        // Predicated region
        $region101: #{decoder_forward.3} parent=95 // pred_check
          %p709 = pneg %p79
        $region102: #{decoder_forward.3} parent=95 // pred_check_branch
          %711 = sbr.rel (%p709) target = $region104
        $region103: #{decoder_forward.3} parent=95 // pred_region
          %p712 = scmp.lt.s32.totalorder %s33, 1
          %s713 = scalar_select %p712, %s33, 1
          %s714 = smul.addr %s713, 8
          %s715 = scalar_lea.vmem %s1, %s714
        $region104: #{decoder_forward.3} parent=95 // pred_fallthru
          _
        // Predicated region
        $region105: #{decoder_forward.3} parent=95 // pred_check
          %p716 = pneg %p105
        $region106: #{decoder_forward.3} parent=95 // pred_check_branch
          %718 = sbr.rel (%p716) target = $region108
        $region107: #{decoder_forward.3} parent=95 // pred_region
          %p719 = scmp.lt.s32.totalorder %s33, 1
          %s720 = scalar_select %p719, %s33, 1
          %s721 = smul.addr %s720, 8
          %s722 = scalar_lea.vmem %s2, %s721
        $region108: #{decoder_forward.3} parent=95 // pred_fallthru
          _
        // Predicated region
        $region109: #{decoder_forward.3} parent=95 // pred_check
          %p723 = pneg %p131
        $region110: #{decoder_forward.3} parent=95 // pred_check_branch
          %725 = sbr.rel (%p723) target = $region112
        $region111: #{decoder_forward.3} parent=95 // pred_region
          %p726 = scmp.lt.s32.totalorder %s33, 1
          %s727 = scalar_select %p726, %s33, 1
          %s728 = smul.addr %s727, 8
          %s729 = scalar_lea.vmem %s3, %s728
        $region112: #{decoder_forward.3} parent=95 // pred_fallthru
          _
      $region96: #{decoder_forward.3} parent=5 // pred_fallthru
        _
      %p730 = scmp.le.s32.totalorder 1, %s33
      %p731 = scmp.lt.s32.totalorder %s33, 3
      %p732 = pnand %p730, %p731
      %p733 = pneg %p732
      // Predicated region
      $region113: #{decoder_forward.3} parent=5 // pred_check
        _
      $region114: #{decoder_forward.3} parent=5 // pred_check_branch
        %735 = sbr.rel (%p732) target = $region116
      $region115: #{decoder_forward.3} parent=5 // pred_region
        %s736 = ssub.s32 %s33, 1
        // Predicated region
        $region117: #{decoder_forward.3} parent=115 // pred_check
          %p737 = pneg %p158
        $region118: #{decoder_forward.3} parent=115 // pred_check_branch
          %739 = sbr.rel (%p737) target = $region120
        $region119: #{decoder_forward.3} parent=115 // pred_region
          %740 = dma.done [#allocation3], 512
        $region120: #{decoder_forward.3} parent=115 // pred_fallthru
          _
        // Predicated region
        $region121: #{decoder_forward.3} parent=115 // pred_check
          %p741 = pneg %p179
        $region122: #{decoder_forward.3} parent=115 // pred_check_branch
          %743 = sbr.rel (%p741) target = $region124
        $region123: #{decoder_forward.3} parent=115 // pred_region
          %744 = dma.done [#allocation5], 512
        $region124: #{decoder_forward.3} parent=115 // pred_fallthru
          _
        // Predicated region
        $region125: #{decoder_forward.3} parent=115 // pred_check
          %p745 = pneg %p200
        $region126: #{decoder_forward.3} parent=115 // pred_check_branch
          %747 = sbr.rel (%p745) target = $region128
        $region127: #{decoder_forward.3} parent=115 // pred_region
          %748 = dma.done [#allocation5], 512
        $region128: #{decoder_forward.3} parent=115 // pred_fallthru
          _
        // Predicated region
        $region129: #{decoder_forward.3} parent=115 // pred_check
          %p749 = pneg %p221
        $region130: #{decoder_forward.3} parent=115 // pred_check_branch
          %751 = sbr.rel (%p749) target = $region132
        $region131: #{decoder_forward.3} parent=115 // pred_region
          %752 = dma.done [#allocation8], 512
        $region132: #{decoder_forward.3} parent=115 // pred_fallthru
          _
        %p753 = scmp.lt.s32.totalorder %s38, 1
        %s754 = scalar_select %p753, %s38, 1
        %s755 = smul.addr %s754, 8
        %s756 = scalar_lea.vmem %s0, %s755
        %p757 = pneg %p59
        %p758 = pneg %p56
        %p759 = scmp.lt.s32.totalorder %s38, 1
        %s760 = scalar_select %p759, %s38, 1
        %s761 = smul.addr %s760, 8
        %s762 = scalar_lea.vmem %s1, %s761
        %p763 = pneg %p85
        %p764 = pneg %p82
        %p765 = scmp.lt.s32.totalorder %s38, 1
        %s766 = scalar_select %p765, %s38, 1
        %s767 = smul.addr %s766, 8
        %s768 = scalar_lea.vmem %s2, %s767
        %p769 = pneg %p111
        %p770 = pneg %p108
        %p771 = scmp.lt.s32.totalorder %s38, 1
        %s772 = scalar_select %p771, %s38, 1
        %s773 = smul.addr %s772, 8
        %s774 = scalar_lea.vmem %s3, %s773
        %p775 = pneg %p137
        %p776 = pneg %p134
        %p777 = pneg %p158
        %p778 = pneg %p155
        %p779 = pneg %p179
        %p780 = pneg %p176
        %p781 = pneg %p200
        %p782 = pneg %p197
        %p783 = pneg %p221
        %p784 = pneg %p218
        %p785 = pneg %p242
        %p786 = pneg %p239
        %p787 = pneg %p263
        %p788 = pneg %p260
        %p789 = pneg %p284
        %p790 = pneg %p281
        %p791 = pneg %p305
        %p792 = pneg %p302
        %p793 = pneg %p326
        %p794 = pneg %p323
        %p795 = pneg %p347
        %p796 = pneg %p344
        %p797 = pneg %p368
        %p798 = pneg %p365
        %p799 = pneg %p389
        %p800 = pneg %p386
        %p801 = pneg %p410
        %p802 = pneg %p407
        %p803 = pneg %p431
        %p804 = pneg %p428
        %p805 = pneg %p452
        %p806 = pneg %p449
        %p807 = pneg %p473
        %p808 = pneg %p470
        %p809 = pneg %p494
        %p810 = pneg %p491
        %p811 = pneg %p515
        %p812 = pneg %p512
        %p813 = pneg %p536
        %p814 = pneg %p533
        %p815 = pneg %p557
        %p816 = pneg %p554
        %p817 = pneg %p583
        %p818 = pneg %p580
        %p819 = scmp.lt.s32.totalorder %s38, 1
        %s820 = scalar_select %p819, %s38, 1
        %s821 = smul.addr %s820, 8
        %s822 = scalar_lea.vmem %s24, %s821
        %p823 = scmp.lt.s32.totalorder %s38, 1
        %s824 = scalar_select %p823, %s38, 1
        %s825 = smul.addr %s824, 8
        %s826 = scalar_lea.vmem %s0, %s825
        %p827 = scmp.lt.s32.totalorder %s38, 1
        %s828 = scalar_select %p827, %s38, 1
        %s829 = smul.addr %s828, 8
        %s830 = scalar_lea.vmem %s1, %s829
        %p831 = scmp.lt.s32.totalorder %s38, 1
        %s832 = scalar_select %p831, %s38, 1
        %s833 = smul.addr %s832, 8
        %s834 = scalar_lea.vmem %s2, %s833
        %p835 = scmp.lt.s32.totalorder %s38, 1
        %s836 = scalar_select %p835, %s38, 1
        %s837 = smul.addr %s836, 8
        %s838 = scalar_lea.vmem %s3, %s837
        %p839 = scmp.lt.s32.totalorder %s38, 1
        %s840 = scalar_select %p839, %s38, 1
        %s841 = smul.addr %s840, 8
        %s842 = scalar_lea.vmem %s24, %s841
        %v843 = vld [vmem:[%s826] sm:$0xff]
        %v844 = vld [vmem:[%s830] sm:$0xff]
        %v845 = vld [vmem:[%s834] sm:$0xff]
        %vm846 = vcmp.eq.f32.partialorder %v845, 0.0
        %v847 = vsel %vm846, -1e+30, 0.0
        %v848 = vld [vmem:[%s838] sm:$0xff]
        %vm849 = vcmp.eq.f32.partialorder %v848, 0.0
        %v850 = vsel %vm849, -1e+30, 0.0
        %v851 = vld [vmem:[#allocation2] sm:$0xff]
        %v852 = vld [vmem:[#allocation2 + $0x8] sm:$0xff]
        %v853 = vld [vmem:[#allocation2 + $0x10] sm:$0xff]
        %v854 = vld [vmem:[#allocation2 + $0x18] sm:$0xff]
        %vm855 = vcmask 261120
        %v857 = vsel %vm855, %v843, 0
        %859 = vmatprep.subr.mxu0 0.0
        %860 = vmatpush1.msra.mxu0 %v851
        %861 = vmatprep.subr.mxu0 0.0
        %862 = vmatpush1.msra.mxu0 %v852
        %863 = vmatprep.subr.mxu0 0.0
        %864 = vmatpush1.msra.mxu0 %v853
        %865 = vmatprep.subr.mxu0 0.0
        %866 = vmatpush1.msra.mxu0 %v854
        %867 = vmatprep.subr.mxu0 0.0
        %868 = vmatpush1.msra.mxu0 0.0
        %869 = vmatprep.subr.mxu0 0.0
        %870 = vmatpush1.msra.mxu0 0.0
        %871 = vmatprep.subr.mxu0 0.0
        %872 = vmatpush1.msra.mxu0 0.0
        %873 = vmatprep.subr.mxu0 0.0
        %874 = vmatpush1.msra.mxu0 0.0
        %875 = vmatprep.subr.mxu0 0.0
        %876 = vmatpush1.msra.mxu0 0.0
        %877 = vmatprep.subr.mxu0 0.0
        %878 = vmatpush1.msra.mxu0 0.0
        %879 = vmatprep.subr.mxu0 0.0
        %880 = vmatpush1.msra.mxu0 0.0
        %881 = vmatprep.subr.mxu0 0.0
        %882 = vmatpush1.msra.mxu0 0.0
        %883 = vmatprep.subr.mxu0 0.0
        %884 = vmatpush1.msra.mxu0 0.0
        %885 = vmatprep.subr.mxu0 0.0
        %886 = vmatpush1.msra.mxu0 0.0
        %887 = vmatprep.subr.mxu0 0.0
        %888 = vmatpush1.msra.mxu0 0.0
        %889 = vmatprep.subr.mxu0 0.0
        %890 = vmatpush1.msra.mxu0 0.0
        %891 = vmatprep.subr.mxu0 0.0
        %892 = vmatpush1.msra.mxu0 0.0
        %893 = vmatprep.subr.mxu0 0.0
        %894 = vmatpush1.msra.mxu0 0.0
        %895 = vmatprep.subr.mxu0 0.0
        %896 = vmatpush1.msra.mxu0 0.0
        %897 = vmatprep.subr.mxu0 0.0
        %898 = vmatpush1.msra.mxu0 0.0
        %899 = vmatprep.subr.mxu0 0.0
        %900 = vmatpush1.msra.mxu0 0.0
        %901 = vmatprep.subr.mxu0 0.0
        %902 = vmatpush1.msra.mxu0 0.0
        %903 = vmatprep.subr.mxu0 0.0
        %904 = vmatpush1.msra.mxu0 0.0
        %905 = vmatprep.subr.mxu0 0.0
        %906 = vmatpush1.msra.mxu0 0.0
        %907 = vmatprep.subr.mxu0 0.0
        %908 = vmatpush1.msra.mxu0 0.0
        %909 = vmatprep.subr.mxu0 0.0
        %910 = vmatpush1.msra.mxu0 0.0
        %911 = vmatprep.subr.mxu0 0.0
        %912 = vmatpush1.msra.mxu0 0.0
        %913 = vmatprep.subr.mxu0 0.0
        %914 = vmatpush1.msra.mxu0 0.0
        %915 = vmatprep.subr.mxu0 0.0
        %916 = vmatpush1.msra.mxu0 0.0
        %917 = vmatprep.subr.mxu0 0.0
        %918 = vmatpush1.msra.mxu0 0.0
        %919 = vmatprep.subr.mxu0 0.0
        %920 = vmatpush1.msra.mxu0 0.0
        %921 = vmatprep.subr.mxu0 0.0
        %922 = vmatpush1.msra.mxu0 0.0
        %923 = vmatprep.mubr.f32.mxu0 0.0
        %924 = vmatmul.mubr.f32.gmra.mrb[0].mxu0 %v857
        %v925 = vpop.f32.mrb[0].mxu0
        %v926 = vadd.f32 0.0, %v925
        %v927 = vpop.f32.mrb[0].mxu0
        %928 = vdwg.mxu0
        %v929 = vld [vmem:[#allocation4] sm:$0xff]
        %v930 = vld [vmem:[#allocation4 + $0x8] sm:$0xff]
        %v931 = vld [vmem:[#allocation4 + $0x10] sm:$0xff]
        %v932 = vld [vmem:[#allocation4 + $0x18] sm:$0xff]
        %933 = vmatprep.subr.mxu0 0.0
        %934 = vmatpush1.msra.mxu0 %v929
        %935 = vmatprep.subr.mxu0 0.0
        %936 = vmatpush1.msra.mxu0 %v930
        %937 = vmatprep.subr.mxu0 0.0
        %938 = vmatpush1.msra.mxu0 %v931
        %939 = vmatprep.subr.mxu0 0.0
        %940 = vmatpush1.msra.mxu0 %v932
        %941 = vmatprep.subr.mxu0 0.0
        %942 = vmatpush1.msra.mxu0 0.0
        %943 = vmatprep.subr.mxu0 0.0
        %944 = vmatpush1.msra.mxu0 0.0
        %945 = vmatprep.subr.mxu0 0.0
        %946 = vmatpush1.msra.mxu0 0.0
        %947 = vmatprep.subr.mxu0 0.0
        %948 = vmatpush1.msra.mxu0 0.0
        %949 = vmatprep.subr.mxu0 0.0
        %950 = vmatpush1.msra.mxu0 0.0
        %951 = vmatprep.subr.mxu0 0.0
        %952 = vmatpush1.msra.mxu0 0.0
        %953 = vmatprep.subr.mxu0 0.0
        %954 = vmatpush1.msra.mxu0 0.0
        %955 = vmatprep.subr.mxu0 0.0
        %956 = vmatpush1.msra.mxu0 0.0
        %957 = vmatprep.subr.mxu0 0.0
        %958 = vmatpush1.msra.mxu0 0.0
        %959 = vmatprep.subr.mxu0 0.0
        %960 = vmatpush1.msra.mxu0 0.0
        %961 = vmatprep.subr.mxu0 0.0
        %962 = vmatpush1.msra.mxu0 0.0
        %963 = vmatprep.subr.mxu0 0.0
        %964 = vmatpush1.msra.mxu0 0.0
        %965 = vmatprep.subr.mxu0 0.0
        %966 = vmatpush1.msra.mxu0 0.0
        %967 = vmatprep.subr.mxu0 0.0
        %968 = vmatpush1.msra.mxu0 0.0
        %969 = vmatprep.subr.mxu0 0.0
        %970 = vmatpush1.msra.mxu0 0.0
        %971 = vmatprep.subr.mxu0 0.0
        %972 = vmatpush1.msra.mxu0 0.0
        %973 = vmatprep.subr.mxu0 0.0
        %974 = vmatpush1.msra.mxu0 0.0
        %975 = vmatprep.subr.mxu0 0.0
        %976 = vmatpush1.msra.mxu0 0.0
        %977 = vmatprep.subr.mxu0 0.0
        %978 = vmatpush1.msra.mxu0 0.0
        %979 = vmatprep.subr.mxu0 0.0
        %980 = vmatpush1.msra.mxu0 0.0
        %981 = vmatprep.subr.mxu0 0.0
        %982 = vmatpush1.msra.mxu0 0.0
        %983 = vmatprep.subr.mxu0 0.0
        %984 = vmatpush1.msra.mxu0 0.0
        %985 = vmatprep.subr.mxu0 0.0
        %986 = vmatpush1.msra.mxu0 0.0
        %987 = vmatprep.subr.mxu0 0.0
        %988 = vmatpush1.msra.mxu0 0.0
        %989 = vmatprep.subr.mxu0 0.0
        %990 = vmatpush1.msra.mxu0 0.0
        %991 = vmatprep.subr.mxu0 0.0
        %992 = vmatpush1.msra.mxu0 0.0
        %993 = vmatprep.subr.mxu0 0.0
        %994 = vmatpush1.msra.mxu0 0.0
        %995 = vmatprep.subr.mxu0 0.0
        %996 = vmatpush1.msra.mxu0 0.0
        %997 = vmatprep.mubr.f32.mxu0 0.0
        %998 = vmatmul.mubr.f32.gmra.mrb[0].mxu0 %v857
        %v999 = vpop.f32.mrb[0].mxu0
        %v1000 = vadd.f32 0.0, %v999
        %v1001 = vpop.f32.mrb[0].mxu0
        %1002 = vdwg.mxu0
        %v1003 = vld [vmem:[#allocation6] sm:$0xff]
        %v1004 = vld [vmem:[#allocation6 + $0x8] sm:$0xff]
        %v1005 = vld [vmem:[#allocation6 + $0x10] sm:$0xff]
        %v1006 = vld [vmem:[#allocation6 + $0x18] sm:$0xff]
        %1007 = vmatprep.subr.mxu0 0.0
        %1008 = vmatpush1.msra.mxu0 %v1003
        %1009 = vmatprep.subr.mxu0 0.0
        %1010 = vmatpush1.msra.mxu0 %v1004
        %1011 = vmatprep.subr.mxu0 0.0
        %1012 = vmatpush1.msra.mxu0 %v1005
        %1013 = vmatprep.subr.mxu0 0.0
        %1014 = vmatpush1.msra.mxu0 %v1006
        %1015 = vmatprep.subr.mxu0 0.0
        %1016 = vmatpush1.msra.mxu0 0.0
        %1017 = vmatprep.subr.mxu0 0.0
        %1018 = vmatpush1.msra.mxu0 0.0
        %1019 = vmatprep.subr.mxu0 0.0
        %1020 = vmatpush1.msra.mxu0 0.0
        %1021 = vmatprep.subr.mxu0 0.0
        %1022 = vmatpush1.msra.mxu0 0.0
        %1023 = vmatprep.subr.mxu0 0.0
        %1024 = vmatpush1.msra.mxu0 0.0
        %1025 = vmatprep.subr.mxu0 0.0
        %1026 = vmatpush1.msra.mxu0 0.0
        %1027 = vmatprep.subr.mxu0 0.0
        %1028 = vmatpush1.msra.mxu0 0.0
        %1029 = vmatprep.subr.mxu0 0.0
        %1030 = vmatpush1.msra.mxu0 0.0
        %1031 = vmatprep.subr.mxu0 0.0
        %1032 = vmatpush1.msra.mxu0 0.0
        %1033 = vmatprep.subr.mxu0 0.0
        %1034 = vmatpush1.msra.mxu0 0.0
        %1035 = vmatprep.subr.mxu0 0.0
        %1036 = vmatpush1.msra.mxu0 0.0
        %1037 = vmatprep.subr.mxu0 0.0
        %1038 = vmatpush1.msra.mxu0 0.0
        %1039 = vmatprep.subr.mxu0 0.0
        %1040 = vmatpush1.msra.mxu0 0.0
        %1041 = vmatprep.subr.mxu0 0.0
        %1042 = vmatpush1.msra.mxu0 0.0
        %1043 = vmatprep.subr.mxu0 0.0
        %1044 = vmatpush1.msra.mxu0 0.0
        %1045 = vmatprep.subr.mxu0 0.0
        %1046 = vmatpush1.msra.mxu0 0.0
        %1047 = vmatprep.subr.mxu0 0.0
        %1048 = vmatpush1.msra.mxu0 0.0
        %1049 = vmatprep.subr.mxu0 0.0
        %1050 = vmatpush1.msra.mxu0 0.0
        %1051 = vmatprep.subr.mxu0 0.0
        %1052 = vmatpush1.msra.mxu0 0.0
        %1053 = vmatprep.subr.mxu0 0.0
        %1054 = vmatpush1.msra.mxu0 0.0
        %1055 = vmatprep.subr.mxu0 0.0
        %1056 = vmatpush1.msra.mxu0 0.0
        %1057 = vmatprep.subr.mxu0 0.0
        %1058 = vmatpush1.msra.mxu0 0.0
        %1059 = vmatprep.subr.mxu0 0.0
        %1060 = vmatpush1.msra.mxu0 0.0
        %1061 = vmatprep.subr.mxu0 0.0
        %1062 = vmatpush1.msra.mxu0 0.0
        %1063 = vmatprep.subr.mxu0 0.0
        %1064 = vmatpush1.msra.mxu0 0.0
        %1065 = vmatprep.subr.mxu0 0.0
        %1066 = vmatpush1.msra.mxu0 0.0
        %1067 = vmatprep.subr.mxu0 0.0
        %1068 = vmatpush1.msra.mxu0 0.0
        %1069 = vmatprep.subr.mxu0 0.0
        %1070 = vmatpush1.msra.mxu0 0.0
        %1071 = vmatprep.mubr.f32.mxu0 0.0
        %1072 = vmatmul.mubr.f32.gmra.mrb[0].mxu0 %v857
        %v1073 = vpop.f32.mrb[0].mxu0
        %v1074 = vadd.f32 0.0, %v1073
        %v1075 = vpop.f32.mrb[0].mxu0
        %1076 = vdwg.mxu0
        %vm1077 = vcmask 64512
        %v1079 = vsel %vm1077, %v926, 0
        %v1082 = vsel %vm1077, %v1000, 0
        %1084 = vmatprep.subr.mxu0 0.0
        %1085 = vmatpush1.xpose.msra.mxu0 %v1082
        %1086 = vmatprep.subr.mxu0 0.0
        %1087 = vmatpush1.xpose.msra.mxu0 0.0
        %1088 = vmatprep.subr.mxu0 0.0
        %1089 = vmatpush1.xpose.msra.mxu0 0.0
        %1090 = vmatprep.subr.mxu0 0.0
        %1091 = vmatpush1.xpose.msra.mxu0 0.0
        %1092 = vmatprep.subr.mxu0 0.0
        %1093 = vmatpush1.xpose.msra.mxu0 0.0
        %1094 = vmatprep.subr.mxu0 0.0
        %1095 = vmatpush1.xpose.msra.mxu0 0.0
        %1096 = vmatprep.subr.mxu0 0.0
        %1097 = vmatpush1.xpose.msra.mxu0 0.0
        %1098 = vmatprep.subr.mxu0 0.0
        %1099 = vmatpush1.xpose.msra.mxu0 0.0
        %1100 = vmatprep.subr.mxu0 0.0
        %1101 = vmatpush1.xpose.msra.mxu0 0.0
        %1102 = vmatprep.subr.mxu0 0.0
        %1103 = vmatpush1.xpose.msra.mxu0 0.0
        %1104 = vmatprep.subr.mxu0 0.0
        %1105 = vmatpush1.xpose.msra.mxu0 0.0
        %1106 = vmatprep.subr.mxu0 0.0
        %1107 = vmatpush1.xpose.msra.mxu0 0.0
        %1108 = vmatprep.subr.mxu0 0.0
        %1109 = vmatpush1.xpose.msra.mxu0 0.0
        %1110 = vmatprep.subr.mxu0 0.0
        %1111 = vmatpush1.xpose.msra.mxu0 0.0
        %1112 = vmatprep.subr.mxu0 0.0
        %1113 = vmatpush1.xpose.msra.mxu0 0.0
        %1114 = vmatprep.subr.mxu0 0.0
        %1115 = vmatpush1.xpose.msra.mxu0 0.0
        %1116 = vmatprep.subr.mxu0 0.0
        %1117 = vmatpush1.xpose.msra.mxu0 0.0
        %1118 = vmatprep.subr.mxu0 0.0
        %1119 = vmatpush1.xpose.msra.mxu0 0.0
        %1120 = vmatprep.subr.mxu0 0.0
        %1121 = vmatpush1.xpose.msra.mxu0 0.0
        %1122 = vmatprep.subr.mxu0 0.0
        %1123 = vmatpush1.xpose.msra.mxu0 0.0
        %1124 = vmatprep.subr.mxu0 0.0
        %1125 = vmatpush1.xpose.msra.mxu0 0.0
        %1126 = vmatprep.subr.mxu0 0.0
        %1127 = vmatpush1.xpose.msra.mxu0 0.0
        %1128 = vmatprep.subr.mxu0 0.0
        %1129 = vmatpush1.xpose.msra.mxu0 0.0
        %1130 = vmatprep.subr.mxu0 0.0
        %1131 = vmatpush1.xpose.msra.mxu0 0.0
        %1132 = vmatprep.subr.mxu0 0.0
        %1133 = vmatpush1.xpose.msra.mxu0 0.0
        %1134 = vmatprep.subr.mxu0 0.0
        %1135 = vmatpush1.xpose.msra.mxu0 0.0
        %1136 = vmatprep.subr.mxu0 0.0
        %1137 = vmatpush1.xpose.msra.mxu0 0.0
        %1138 = vmatprep.subr.mxu0 0.0
        %1139 = vmatpush1.xpose.msra.mxu0 0.0
        %1140 = vmatprep.subr.mxu0 0.0
        %1141 = vmatpush1.xpose.msra.mxu0 0.0
        %1142 = vmatprep.subr.mxu0 0.0
        %1143 = vmatpush1.xpose.msra.mxu0 0.0
        %1144 = vmatprep.subr.mxu0 0.0
        %1145 = vmatpush1.xpose.msra.mxu0 0.0
        %1146 = vmatprep.subr.mxu0 0.0
        %1147 = vmatpush1.xpose.msra.mxu0 0.0
        %1148 = vmatprep.mubr.f32.mxu0 0.0
        %1149 = vmatmul.mubr.f32.gmra.mrb[0].mxu0 %v1079
        %v1150 = vpop.f32.mrb[0].mxu0
        %v1151 = vadd.f32 0.0, %v1150
        %v1152 = vpop.f32.mrb[0].mxu0
        %1153 = vdwg.mxu0
        %v1154 = vmul.f32 %v1151, 0.17677669
        %v1155 = vadd.f32 %v1154, %v847
        %v1156 = vsel %vm1077, %v1155, -inf
        %1157 = vmax.xlane.f32.xlu0 %v1156
        %v1158 = vpop.xlane.xlu0 %1157
        %v1159 = vsub.f32 %v1155, %v1158
        %v1160 = vmul.f32 %v1159, 1.442695
        %v1161 = vpow.pop %v1160
        %v1162 = vsel %vm1077, %v1161, 0.0
        %1163 = vadd.xlane.f32.xlu0 %v1162
        %v1164 = vpop.xlane.xlu0 %1163
        %v1165 = vrcp.pop %v1164
        %v1166 = vmul.f32 %v1161, %v1165
        %v1167 = vsel %vm1077, %v1166, 0.0
        %1168 = vadd.xlane.f32.xlu0 %v1167
        %v1169 = vpop.xlane.xlu0 %1168
        %v1170 = vsel %vm1077, %v1074, 0.0
        %v1171 = vrot.slane %v1170, 4
        %v1172 = vadd.f32 %v1170, %v1171
        %v1173 = vrot.slane %v1172, 2
        %v1174 = vadd.f32 %v1172, %v1173
        %v1175 = vrot.slane %v1174, 1
        %v1176 = vadd.f32 %v1174, %v1175
        %v1177 = vmul.f32 %v1169, %v1176
        %1178 = vrot.lane.b32.xlu0 %v926, 120
        %v1179 = vpop.permute.xlu0 %1178
        %1180 = vrot.lane.b32.xlu0 %v1000, 120
        %v1181 = vpop.permute.xlu0 %1180
        %v1182 = vsel %vm1077, %v1179, 0
        %v1184 = vsel %vm1077, %v1181, 0
        %1186 = vmatprep.subr.mxu0 0.0
        %1187 = vmatpush1.xpose.msra.mxu0 %v1184
        %1188 = vmatprep.subr.mxu0 0.0
        %1189 = vmatpush1.xpose.msra.mxu0 0.0
        %1190 = vmatprep.subr.mxu0 0.0
        %1191 = vmatpush1.xpose.msra.mxu0 0.0
        %1192 = vmatprep.subr.mxu0 0.0
        %1193 = vmatpush1.xpose.msra.mxu0 0.0
        %1194 = vmatprep.subr.mxu0 0.0
        %1195 = vmatpush1.xpose.msra.mxu0 0.0
        %1196 = vmatprep.subr.mxu0 0.0
        %1197 = vmatpush1.xpose.msra.mxu0 0.0
        %1198 = vmatprep.subr.mxu0 0.0
        %1199 = vmatpush1.xpose.msra.mxu0 0.0
        %1200 = vmatprep.subr.mxu0 0.0
        %1201 = vmatpush1.xpose.msra.mxu0 0.0
        %1202 = vmatprep.subr.mxu0 0.0
        %1203 = vmatpush1.xpose.msra.mxu0 0.0
        %1204 = vmatprep.subr.mxu0 0.0
        %1205 = vmatpush1.xpose.msra.mxu0 0.0
        %1206 = vmatprep.subr.mxu0 0.0
        %1207 = vmatpush1.xpose.msra.mxu0 0.0
        %1208 = vmatprep.subr.mxu0 0.0
        %1209 = vmatpush1.xpose.msra.mxu0 0.0
        %1210 = vmatprep.subr.mxu0 0.0
        %1211 = vmatpush1.xpose.msra.mxu0 0.0
        %1212 = vmatprep.subr.mxu0 0.0
        %1213 = vmatpush1.xpose.msra.mxu0 0.0
        %1214 = vmatprep.subr.mxu0 0.0
        %1215 = vmatpush1.xpose.msra.mxu0 0.0
        %1216 = vmatprep.subr.mxu0 0.0
        %1217 = vmatpush1.xpose.msra.mxu0 0.0
        %1218 = vmatprep.subr.mxu0 0.0
        %1219 = vmatpush1.xpose.msra.mxu0 0.0
        %1220 = vmatprep.subr.mxu0 0.0
        %1221 = vmatpush1.xpose.msra.mxu0 0.0
        %1222 = vmatprep.subr.mxu0 0.0
        %1223 = vmatpush1.xpose.msra.mxu0 0.0
        %1224 = vmatprep.subr.mxu0 0.0
        %1225 = vmatpush1.xpose.msra.mxu0 0.0
        %1226 = vmatprep.subr.mxu0 0.0
        %1227 = vmatpush1.xpose.msra.mxu0 0.0
        %1228 = vmatprep.subr.mxu0 0.0
        %1229 = vmatpush1.xpose.msra.mxu0 0.0
        %1230 = vmatprep.subr.mxu0 0.0
        %1231 = vmatpush1.xpose.msra.mxu0 0.0
        %1232 = vmatprep.subr.mxu0 0.0
        %1233 = vmatpush1.xpose.msra.mxu0 0.0
        %1234 = vmatprep.subr.mxu0 0.0
        %1235 = vmatpush1.xpose.msra.mxu0 0.0
        %1236 = vmatprep.subr.mxu0 0.0
        %1237 = vmatpush1.xpose.msra.mxu0 0.0
        %1238 = vmatprep.subr.mxu0 0.0
        %1239 = vmatpush1.xpose.msra.mxu0 0.0
        %1240 = vmatprep.subr.mxu0 0.0
        %1241 = vmatpush1.xpose.msra.mxu0 0.0
        %1242 = vmatprep.subr.mxu0 0.0
        %1243 = vmatpush1.xpose.msra.mxu0 0.0
        %1244 = vmatprep.subr.mxu0 0.0
        %1245 = vmatpush1.xpose.msra.mxu0 0.0
        %1246 = vmatprep.subr.mxu0 0.0
        %1247 = vmatpush1.xpose.msra.mxu0 0.0
        %1248 = vmatprep.subr.mxu0 0.0
        %1249 = vmatpush1.xpose.msra.mxu0 0.0
        %1250 = vmatprep.mubr.f32.mxu0 0.0
        %1251 = vmatmul.mubr.f32.gmra.mrb[0].mxu0 %v1182
        %v1252 = vpop.f32.mrb[0].mxu0
        %v1253 = vadd.f32 0.0, %v1252
        %v1254 = vpop.f32.mrb[0].mxu0
        %1255 = vdwg.mxu0
        %v1256 = vmul.f32 %v1253, 0.17677669
        %v1257 = vadd.f32 %v1256, %v847
        %v1258 = vsel %vm1077, %v1257, -inf
        %1259 = vmax.xlane.f32.xlu0 %v1258
        %v1260 = vpop.xlane.xlu0 %1259
        %v1261 = vsub.f32 %v1257, %v1260
        %v1262 = vmul.f32 %v1261, 1.442695
        %v1263 = vpow.pop %v1262
        %v1264 = vsel %vm1077, %v1263, 0.0
        %1265 = vadd.xlane.f32.xlu0 %v1264
        %v1266 = vpop.xlane.xlu0 %1265
        %v1267 = vrcp.pop %v1266
        %v1268 = vmul.f32 %v1263, %v1267
        %v1269 = vsel %vm1077, %v1268, 0.0
        %1270 = vadd.xlane.f32.xlu0 %v1269
        %v1271 = vpop.xlane.xlu0 %1270
        %vm1272 = vcmask 130112
        %v1273 = vsel %vm1272, %v1074, 0.0
        %v1274 = vrot.slane %v1273, 4
        %v1275 = vadd.f32 %v1273, %v1274
        %v1276 = vrot.slane %v1275, 2
        %v1277 = vadd.f32 %v1275, %v1276
        %v1278 = vrot.slane %v1277, 1
        %v1279 = vadd.f32 %v1277, %v1278
        %v1280 = vmul.f32 %v1271, %v1279
        %1281 = vrot.lane.b32.xlu0 %v926, 112
        %v1282 = vpop.permute.xlu0 %1281
        %1283 = vrot.lane.b32.xlu0 %v1000, 112
        %v1284 = vpop.permute.xlu0 %1283
        %v1285 = vsel %vm1077, %v1282, 0
        %v1287 = vsel %vm1077, %v1284, 0
        %1289 = vmatprep.subr.mxu0 0.0
        %1290 = vmatpush1.xpose.msra.mxu0 %v1287
        %1291 = vmatprep.subr.mxu0 0.0
        %1292 = vmatpush1.xpose.msra.mxu0 0.0
        %1293 = vmatprep.subr.mxu0 0.0
        %1294 = vmatpush1.xpose.msra.mxu0 0.0
        %1295 = vmatprep.subr.mxu0 0.0
        %1296 = vmatpush1.xpose.msra.mxu0 0.0
        %1297 = vmatprep.subr.mxu0 0.0
        %1298 = vmatpush1.xpose.msra.mxu0 0.0
        %1299 = vmatprep.subr.mxu0 0.0
        %1300 = vmatpush1.xpose.msra.mxu0 0.0
        %1301 = vmatprep.subr.mxu0 0.0
        %1302 = vmatpush1.xpose.msra.mxu0 0.0
        %1303 = vmatprep.subr.mxu0 0.0
        %1304 = vmatpush1.xpose.msra.mxu0 0.0
        %1305 = vmatprep.subr.mxu0 0.0
        %1306 = vmatpush1.xpose.msra.mxu0 0.0
        %1307 = vmatprep.subr.mxu0 0.0
        %1308 = vmatpush1.xpose.msra.mxu0 0.0
        %1309 = vmatprep.subr.mxu0 0.0
        %1310 = vmatpush1.xpose.msra.mxu0 0.0
        %1311 = vmatprep.subr.mxu0 0.0
        %1312 = vmatpush1.xpose.msra.mxu0 0.0
        %1313 = vmatprep.subr.mxu0 0.0
        %1314 = vmatpush1.xpose.msra.mxu0 0.0
        %1315 = vmatprep.subr.mxu0 0.0
        %1316 = vmatpush1.xpose.msra.mxu0 0.0
        %1317 = vmatprep.subr.mxu0 0.0
        %1318 = vmatpush1.xpose.msra.mxu0 0.0
        %1319 = vmatprep.subr.mxu0 0.0
        %1320 = vmatpush1.xpose.msra.mxu0 0.0
        %1321 = vmatprep.subr.mxu0 0.0
        %1322 = vmatpush1.xpose.msra.mxu0 0.0
        %1323 = vmatprep.subr.mxu0 0.0
        %1324 = vmatpush1.xpose.msra.mxu0 0.0
        %1325 = vmatprep.subr.mxu0 0.0
        %1326 = vmatpush1.xpose.msra.mxu0 0.0
        %1327 = vmatprep.subr.mxu0 0.0
        %1328 = vmatpush1.xpose.msra.mxu0 0.0
        %1329 = vmatprep.subr.mxu0 0.0
        %1330 = vmatpush1.xpose.msra.mxu0 0.0
        %1331 = vmatprep.subr.mxu0 0.0
        %1332 = vmatpush1.xpose.msra.mxu0 0.0
        %1333 = vmatprep.subr.mxu0 0.0
        %1334 = vmatpush1.xpose.msra.mxu0 0.0
        %1335 = vmatprep.subr.mxu0 0.0
        %1336 = vmatpush1.xpose.msra.mxu0 0.0
        %1337 = vmatprep.subr.mxu0 0.0
        %1338 = vmatpush1.xpose.msra.mxu0 0.0
        %1339 = vmatprep.subr.mxu0 0.0
        %1340 = vmatpush1.xpose.msra.mxu0 0.0
        %1341 = vmatprep.subr.mxu0 0.0
        %1342 = vmatpush1.xpose.msra.mxu0 0.0
        %1343 = vmatprep.subr.mxu0 0.0
        %1344 = vmatpush1.xpose.msra.mxu0 0.0
        %1345 = vmatprep.subr.mxu0 0.0
        %1346 = vmatpush1.xpose.msra.mxu0 0.0
        %1347 = vmatprep.subr.mxu0 0.0
        %1348 = vmatpush1.xpose.msra.mxu0 0.0
        %1349 = vmatprep.subr.mxu0 0.0
        %1350 = vmatpush1.xpose.msra.mxu0 0.0
        %1351 = vmatprep.subr.mxu0 0.0
        %1352 = vmatpush1.xpose.msra.mxu0 0.0
        %1353 = vmatprep.mubr.f32.mxu0 0.0
        %1354 = vmatmul.mubr.f32.gmra.mrb[0].mxu0 %v1285
        %v1355 = vpop.f32.mrb[0].mxu0
        %v1356 = vadd.f32 0.0, %v1355
        %v1357 = vpop.f32.mrb[0].mxu0
        %1358 = vdwg.mxu0
        %v1359 = vmul.f32 %v1356, 0.17677669
        %v1360 = vadd.f32 %v1359, %v847
        %v1361 = vsel %vm1077, %v1360, -inf
        %1362 = vmax.xlane.f32.xlu0 %v1361
        %v1363 = vpop.xlane.xlu0 %1362
        %v1364 = vsub.f32 %v1360, %v1363
        %v1365 = vmul.f32 %v1364, 1.442695
        %v1366 = vpow.pop %v1365
        %v1367 = vsel %vm1077, %v1366, 0.0
        %1368 = vadd.xlane.f32.xlu0 %v1367
        %v1369 = vpop.xlane.xlu0 %1368
        %v1370 = vrcp.pop %v1369
        %v1371 = vmul.f32 %v1366, %v1370
        %v1372 = vsel %vm1077, %v1371, 0.0
        %1373 = vadd.xlane.f32.xlu0 %v1372
        %v1374 = vpop.xlane.xlu0 %1373
        %vm1375 = vcmask 195712
        %v1376 = vsel %vm1375, %v1074, 0.0
        %v1377 = vrot.slane %v1376, 4
        %v1378 = vadd.f32 %v1376, %v1377
        %v1379 = vrot.slane %v1378, 2
        %v1380 = vadd.f32 %v1378, %v1379
        %v1381 = vrot.slane %v1380, 1
        %v1382 = vadd.f32 %v1380, %v1381
        %v1383 = vmul.f32 %v1374, %v1382
        %1384 = vrot.lane.b32.xlu0 %v926, 104
        %v1385 = vpop.permute.xlu0 %1384
        %1386 = vrot.lane.b32.xlu0 %v1000, 104
        %v1387 = vpop.permute.xlu0 %1386
        %v1388 = vsel %vm1077, %v1385, 0
        %v1390 = vsel %vm1077, %v1387, 0
        %1392 = vmatprep.subr.mxu0 0.0
        %1393 = vmatpush1.xpose.msra.mxu0 %v1390
        %1394 = vmatprep.subr.mxu0 0.0
        %1395 = vmatpush1.xpose.msra.mxu0 0.0
        %1396 = vmatprep.subr.mxu0 0.0
        %1397 = vmatpush1.xpose.msra.mxu0 0.0
        %1398 = vmatprep.subr.mxu0 0.0
        %1399 = vmatpush1.xpose.msra.mxu0 0.0
        %1400 = vmatprep.subr.mxu0 0.0
        %1401 = vmatpush1.xpose.msra.mxu0 0.0
        %1402 = vmatprep.subr.mxu0 0.0
        %1403 = vmatpush1.xpose.msra.mxu0 0.0
        %1404 = vmatprep.subr.mxu0 0.0
        %1405 = vmatpush1.xpose.msra.mxu0 0.0
        %1406 = vmatprep.subr.mxu0 0.0
        %1407 = vmatpush1.xpose.msra.mxu0 0.0
        %1408 = vmatprep.subr.mxu0 0.0
        %1409 = vmatpush1.xpose.msra.mxu0 0.0
        %1410 = vmatprep.subr.mxu0 0.0
        %1411 = vmatpush1.xpose.msra.mxu0 0.0
        %1412 = vmatprep.subr.mxu0 0.0
        %1413 = vmatpush1.xpose.msra.mxu0 0.0
        %1414 = vmatprep.subr.mxu0 0.0
        %1415 = vmatpush1.xpose.msra.mxu0 0.0
        %1416 = vmatprep.subr.mxu0 0.0
        %1417 = vmatpush1.xpose.msra.mxu0 0.0
        %1418 = vmatprep.subr.mxu0 0.0
        %1419 = vmatpush1.xpose.msra.mxu0 0.0
        %1420 = vmatprep.subr.mxu0 0.0
        %1421 = vmatpush1.xpose.msra.mxu0 0.0
        %1422 = vmatprep.subr.mxu0 0.0
        %1423 = vmatpush1.xpose.msra.mxu0 0.0
        %1424 = vmatprep.subr.mxu0 0.0
        %1425 = vmatpush1.xpose.msra.mxu0 0.0
        %1426 = vmatprep.subr.mxu0 0.0
        %1427 = vmatpush1.xpose.msra.mxu0 0.0
        %1428 = vmatprep.subr.mxu0 0.0
        %1429 = vmatpush1.xpose.msra.mxu0 0.0
        %1430 = vmatprep.subr.mxu0 0.0
        %1431 = vmatpush1.xpose.msra.mxu0 0.0
        %1432 = vmatprep.subr.mxu0 0.0
        %1433 = vmatpush1.xpose.msra.mxu0 0.0
        %1434 = vmatprep.subr.mxu0 0.0
        %1435 = vmatpush1.xpose.msra.mxu0 0.0
        %1436 = vmatprep.subr.mxu0 0.0
        %1437 = vmatpush1.xpose.msra.mxu0 0.0
        %1438 = vmatprep.subr.mxu0 0.0
        %1439 = vmatpush1.xpose.msra.mxu0 0.0
        %1440 = vmatprep.subr.mxu0 0.0
        %1441 = vmatpush1.xpose.msra.mxu0 0.0
        %1442 = vmatprep.subr.mxu0 0.0
        %1443 = vmatpush1.xpose.msra.mxu0 0.0
        %1444 = vmatprep.subr.mxu0 0.0
        %1445 = vmatpush1.xpose.msra.mxu0 0.0
        %1446 = vmatprep.subr.mxu0 0.0
        %1447 = vmatpush1.xpose.msra.mxu0 0.0
        %1448 = vmatprep.subr.mxu0 0.0
        %1449 = vmatpush1.xpose.msra.mxu0 0.0
        %1450 = vmatprep.subr.mxu0 0.0
        %1451 = vmatpush1.xpose.msra.mxu0 0.0
        %1452 = vmatprep.subr.mxu0 0.0
        %1453 = vmatpush1.xpose.msra.mxu0 0.0
        %1454 = vmatprep.subr.mxu0 0.0
        %1455 = vmatpush1.xpose.msra.mxu0 0.0
        %1456 = vmatprep.mubr.f32.mxu0 0.0
        %1457 = vmatmul.mubr.f32.gmra.mrb[0].mxu0 %v1388
        %v1458 = vpop.f32.mrb[0].mxu0
        %v1459 = vadd.f32 0.0, %v1458
        %v1460 = vpop.f32.mrb[0].mxu0
        %1461 = vdwg.mxu0
        %v1462 = vmul.f32 %v1459, 0.17677669
        %v1463 = vadd.f32 %v1462, %v847
        %v1464 = vsel %vm1077, %v1463, -inf
        %1465 = vmax.xlane.f32.xlu0 %v1464
        %v1466 = vpop.xlane.xlu0 %1465
        %v1467 = vsub.f32 %v1463, %v1466
        %v1468 = vmul.f32 %v1467, 1.442695
        %v1469 = vpow.pop %v1468
        %v1470 = vsel %vm1077, %v1469, 0.0
        %1471 = vadd.xlane.f32.xlu0 %v1470
        %v1472 = vpop.xlane.xlu0 %1471
        %v1473 = vrcp.pop %v1472
        %v1474 = vmul.f32 %v1469, %v1473
        %v1475 = vsel %vm1077, %v1474, 0.0
        %1476 = vadd.xlane.f32.xlu0 %v1475
        %v1477 = vpop.xlane.xlu0 %1476
        %vm1478 = vcmask 261312
        %v1479 = vsel %vm1478, %v1074, 0.0
        %v1480 = vrot.slane %v1479, 4
        %v1481 = vadd.f32 %v1479, %v1480
        %v1482 = vrot.slane %v1481, 2
        %v1483 = vadd.f32 %v1481, %v1482
        %v1484 = vrot.slane %v1483, 1
        %v1485 = vadd.f32 %v1483, %v1484
        %v1486 = vmul.f32 %v1477, %v1485
        %v1487 = vsel %vm1077, %v1177, %v1280
        %vm1488 = vcmask 130048
        %v1489 = vsel %vm1488, %v1487, %v1383
        %vm1490 = vcmask 195584
        %v1491 = vsel %vm1490, %v1489, %v1486
        %v1492 = vld [vmem:[#allocation7] sm:$0xff]
        %v1493 = vld [vmem:[#allocation7 + $0x8] sm:$0xff]
        %v1494 = vld [vmem:[#allocation7 + $0x10] sm:$0xff]
        %v1495 = vld [vmem:[#allocation7 + $0x18] sm:$0xff]
        %v1496 = vld [vmem:[%s8] sm:$0x1]
        %v1498 = vlaneseq
        %v1499 = vshrl.u32 %v1498, 7
        %v1500 = vsub.s32 0, %v1499
        %v1501 = vrot.slane %v1496, %v1500
        %v1504 = vsel %vm855, %v1491, 0
        %1506 = vmatprep.subr.mxu0 0.0
        %1507 = vmatpush1.msra.mxu0 %v1492
        %1508 = vmatprep.subr.mxu0 0.0
        %1509 = vmatpush1.msra.mxu0 %v1493
        %1510 = vmatprep.subr.mxu0 0.0
        %1511 = vmatpush1.msra.mxu0 %v1494
        %1512 = vmatprep.subr.mxu0 0.0
        %1513 = vmatpush1.msra.mxu0 %v1495
        %1514 = vmatprep.subr.mxu0 0.0
        %1515 = vmatpush1.msra.mxu0 0.0
        %1516 = vmatprep.subr.mxu0 0.0
        %1517 = vmatpush1.msra.mxu0 0.0
        %1518 = vmatprep.subr.mxu0 0.0
        %1519 = vmatpush1.msra.mxu0 0.0
        %1520 = vmatprep.subr.mxu0 0.0
        %1521 = vmatpush1.msra.mxu0 0.0
        %1522 = vmatprep.subr.mxu0 0.0
        %1523 = vmatpush1.msra.mxu0 0.0
        %1524 = vmatprep.subr.mxu0 0.0
        %1525 = vmatpush1.msra.mxu0 0.0
        %1526 = vmatprep.subr.mxu0 0.0
        %1527 = vmatpush1.msra.mxu0 0.0
        %1528 = vmatprep.subr.mxu0 0.0
        %1529 = vmatpush1.msra.mxu0 0.0
        %1530 = vmatprep.subr.mxu0 0.0
        %1531 = vmatpush1.msra.mxu0 0.0
        %1532 = vmatprep.subr.mxu0 0.0
        %1533 = vmatpush1.msra.mxu0 0.0
        %1534 = vmatprep.subr.mxu0 0.0
        %1535 = vmatpush1.msra.mxu0 0.0
        %1536 = vmatprep.subr.mxu0 0.0
        %1537 = vmatpush1.msra.mxu0 0.0
        %1538 = vmatprep.subr.mxu0 0.0
        %1539 = vmatpush1.msra.mxu0 0.0
        %1540 = vmatprep.subr.mxu0 0.0
        %1541 = vmatpush1.msra.mxu0 0.0
        %1542 = vmatprep.subr.mxu0 0.0
        %1543 = vmatpush1.msra.mxu0 0.0
        %1544 = vmatprep.subr.mxu0 0.0
        %1545 = vmatpush1.msra.mxu0 0.0
        %1546 = vmatprep.subr.mxu0 0.0
        %1547 = vmatpush1.msra.mxu0 0.0
        %1548 = vmatprep.subr.mxu0 0.0
        %1549 = vmatpush1.msra.mxu0 0.0
        %1550 = vmatprep.subr.mxu0 0.0
        %1551 = vmatpush1.msra.mxu0 0.0
        %1552 = vmatprep.subr.mxu0 0.0
        %1553 = vmatpush1.msra.mxu0 0.0
        %1554 = vmatprep.subr.mxu0 0.0
        %1555 = vmatpush1.msra.mxu0 0.0
        %1556 = vmatprep.subr.mxu0 0.0
        %1557 = vmatpush1.msra.mxu0 0.0
        %1558 = vmatprep.subr.mxu0 0.0
        %1559 = vmatpush1.msra.mxu0 0.0
        %1560 = vmatprep.subr.mxu0 0.0
        %1561 = vmatpush1.msra.mxu0 0.0
        %1562 = vmatprep.subr.mxu0 0.0
        %1563 = vmatpush1.msra.mxu0 0.0
        %1564 = vmatprep.subr.mxu0 0.0
        %1565 = vmatpush1.msra.mxu0 0.0
        %1566 = vmatprep.subr.mxu0 0.0
        %1567 = vmatpush1.msra.mxu0 0.0
        %1568 = vmatprep.subr.mxu0 0.0
        %1569 = vmatpush1.msra.mxu0 0.0
        %1570 = vmatprep.mubr.f32.mxu0 0.0
        %1571 = vmatmul.mubr.f32.gmra.mrb[0].mxu0 %v1504
        %v1572 = vpop.f32.mrb[0].mxu0
        %v1573 = vadd.f32 %v1501, %v1572
        %v1574 = vpop.f32.mrb[0].mxu0
        %1575 = vdwg.mxu0
        %v1576 = vadd.f32 %v1573, %v843
        %v1577 = vsel %vm855, %v1576, 0.0
        %1578 = vadd.xlane.f32.xlu0 %v1577
        %v1579 = vpop.xlane.xlu0 %1578
        %v1580 = vrcp.pop 32.0
        %v1581 = vmul.f32 %v1579, %v1580
        %v1582 = vsub.f32 %v1576, %v1581
        %v1583 = vmul.f32 %v1582, %v1582
        %v1584 = vsel %vm855, %v1583, 0.0
        %1585 = vadd.xlane.f32.xlu0 %v1584
        %v1586 = vpop.xlane.xlu0 %1585
        %v1587 = vmul.f32 %v1586, %v1580
        %v1588 = vadd.f32 %v1587, 1e-05
        %v1589 = vrsqrt.pop %v1588
        %v1590 = vmul.f32 %v1582, %v1589
        %v1591 = vld [vmem:[%s9] sm:$0x1]
        %v1593 = vlaneseq
        %v1594 = vshrl.u32 %v1593, 7
        %v1595 = vsub.s32 0, %v1594
        %v1596 = vrot.slane %v1591, %v1595
        %v1598 = vmul.f32 %v1590, %v1596
        %v1599 = vld [vmem:[%s10] sm:$0x1]
        %v1601 = vlaneseq
        %v1602 = vshrl.u32 %v1601, 7
        %v1603 = vsub.s32 0, %v1602
        %v1604 = vrot.slane %v1599, %v1603
        %v1606 = vadd.f32 %v1598, %v1604
        %v1607 = vld [vmem:[%s11] sm:$0xff]
        %v1608 = vld [vmem:[%s11 + $0x8] sm:$0xff]
        %v1609 = vld [vmem:[%s11 + $0x10] sm:$0xff]
        %v1610 = vld [vmem:[%s11 + $0x18] sm:$0xff]
        %v1612 = vsel %vm855, %v1606, 0
        %1614 = vmatprep.subr.mxu0 0.0
        %1615 = vmatpush1.msra.mxu0 %v1607
        %1616 = vmatprep.subr.mxu0 0.0
        %1617 = vmatpush1.msra.mxu0 %v1608
        %1618 = vmatprep.subr.mxu0 0.0
        %1619 = vmatpush1.msra.mxu0 %v1609
        %1620 = vmatprep.subr.mxu0 0.0
        %1621 = vmatpush1.msra.mxu0 %v1610
        %1622 = vmatprep.subr.mxu0 0.0
        %1623 = vmatpush1.msra.mxu0 0.0
        %1624 = vmatprep.subr.mxu0 0.0
        %1625 = vmatpush1.msra.mxu0 0.0
        %1626 = vmatprep.subr.mxu0 0.0
        %1627 = vmatpush1.msra.mxu0 0.0
        %1628 = vmatprep.subr.mxu0 0.0
        %1629 = vmatpush1.msra.mxu0 0.0
        %1630 = vmatprep.subr.mxu0 0.0
        %1631 = vmatpush1.msra.mxu0 0.0
        %1632 = vmatprep.subr.mxu0 0.0
        %1633 = vmatpush1.msra.mxu0 0.0
        %1634 = vmatprep.subr.mxu0 0.0
        %1635 = vmatpush1.msra.mxu0 0.0
        %1636 = vmatprep.subr.mxu0 0.0
        %1637 = vmatpush1.msra.mxu0 0.0
        %1638 = vmatprep.subr.mxu0 0.0
        %1639 = vmatpush1.msra.mxu0 0.0
        %1640 = vmatprep.subr.mxu0 0.0
        %1641 = vmatpush1.msra.mxu0 0.0
        %1642 = vmatprep.subr.mxu0 0.0
        %1643 = vmatpush1.msra.mxu0 0.0
        %1644 = vmatprep.subr.mxu0 0.0
        %1645 = vmatpush1.msra.mxu0 0.0
        %1646 = vmatprep.subr.mxu0 0.0
        %1647 = vmatpush1.msra.mxu0 0.0
        %1648 = vmatprep.subr.mxu0 0.0
        %1649 = vmatpush1.msra.mxu0 0.0
        %1650 = vmatprep.subr.mxu0 0.0
        %1651 = vmatpush1.msra.mxu0 0.0
        %1652 = vmatprep.subr.mxu0 0.0
        %1653 = vmatpush1.msra.mxu0 0.0
        %1654 = vmatprep.subr.mxu0 0.0
        %1655 = vmatpush1.msra.mxu0 0.0
        %1656 = vmatprep.subr.mxu0 0.0
        %1657 = vmatpush1.msra.mxu0 0.0
        %1658 = vmatprep.subr.mxu0 0.0
        %1659 = vmatpush1.msra.mxu0 0.0
        %1660 = vmatprep.subr.mxu0 0.0
        %1661 = vmatpush1.msra.mxu0 0.0
        %1662 = vmatprep.subr.mxu0 0.0
        %1663 = vmatpush1.msra.mxu0 0.0
        %1664 = vmatprep.subr.mxu0 0.0
        %1665 = vmatpush1.msra.mxu0 0.0
        %1666 = vmatprep.subr.mxu0 0.0
        %1667 = vmatpush1.msra.mxu0 0.0
        %1668 = vmatprep.subr.mxu0 0.0
        %1669 = vmatpush1.msra.mxu0 0.0
        %1670 = vmatprep.subr.mxu0 0.0
        %1671 = vmatpush1.msra.mxu0 0.0
        %1672 = vmatprep.subr.mxu0 0.0
        %1673 = vmatpush1.msra.mxu0 0.0
        %1674 = vmatprep.subr.mxu0 0.0
        %1675 = vmatpush1.msra.mxu0 0.0
        %1676 = vmatprep.subr.mxu0 0.0
        %1677 = vmatpush1.msra.mxu0 0.0
        %1678 = vmatprep.mubr.f32.mxu0 0.0
        %1679 = vmatmul.mubr.f32.gmra.mrb[0].mxu0 %v1612
        %v1680 = vpop.f32.mrb[0].mxu0
        %v1681 = vadd.f32 0.0, %v1680
        %v1682 = vpop.f32.mrb[0].mxu0
        %1683 = vdwg.mxu0
        %v1684 = vld [vmem:[%s12] sm:$0xff]
        %v1685 = vld [vmem:[%s12 + $0x8] sm:$0xff]
        %v1686 = vld [vmem:[%s12 + $0x10] sm:$0xff]
        %v1687 = vld [vmem:[%s12 + $0x18] sm:$0xff]
        %v1689 = vsel %vm855, %v844, 0
        %1691 = vmatprep.subr.mxu0 0.0
        %1692 = vmatpush1.msra.mxu0 %v1684
        %1693 = vmatprep.subr.mxu0 0.0
        %1694 = vmatpush1.msra.mxu0 %v1685
        %1695 = vmatprep.subr.mxu0 0.0
        %1696 = vmatpush1.msra.mxu0 %v1686
        %1697 = vmatprep.subr.mxu0 0.0
        %1698 = vmatpush1.msra.mxu0 %v1687
        %1699 = vmatprep.subr.mxu0 0.0
        %1700 = vmatpush1.msra.mxu0 0.0
        %1701 = vmatprep.subr.mxu0 0.0
        %1702 = vmatpush1.msra.mxu0 0.0
        %1703 = vmatprep.subr.mxu0 0.0
        %1704 = vmatpush1.msra.mxu0 0.0
        %1705 = vmatprep.subr.mxu0 0.0
        %1706 = vmatpush1.msra.mxu0 0.0
        %1707 = vmatprep.subr.mxu0 0.0
        %1708 = vmatpush1.msra.mxu0 0.0
        %1709 = vmatprep.subr.mxu0 0.0
        %1710 = vmatpush1.msra.mxu0 0.0
        %1711 = vmatprep.subr.mxu0 0.0
        %1712 = vmatpush1.msra.mxu0 0.0
        %1713 = vmatprep.subr.mxu0 0.0
        %1714 = vmatpush1.msra.mxu0 0.0
        %1715 = vmatprep.subr.mxu0 0.0
        %1716 = vmatpush1.msra.mxu0 0.0
        %1717 = vmatprep.subr.mxu0 0.0
        %1718 = vmatpush1.msra.mxu0 0.0
        %1719 = vmatprep.subr.mxu0 0.0
        %1720 = vmatpush1.msra.mxu0 0.0
        %1721 = vmatprep.subr.mxu0 0.0
        %1722 = vmatpush1.msra.mxu0 0.0
        %1723 = vmatprep.subr.mxu0 0.0
        %1724 = vmatpush1.msra.mxu0 0.0
        %1725 = vmatprep.subr.mxu0 0.0
        %1726 = vmatpush1.msra.mxu0 0.0
        %1727 = vmatprep.subr.mxu0 0.0
        %1728 = vmatpush1.msra.mxu0 0.0
        %1729 = vmatprep.subr.mxu0 0.0
        %1730 = vmatpush1.msra.mxu0 0.0
        %1731 = vmatprep.subr.mxu0 0.0
        %1732 = vmatpush1.msra.mxu0 0.0
        %1733 = vmatprep.subr.mxu0 0.0
        %1734 = vmatpush1.msra.mxu0 0.0
        %1735 = vmatprep.subr.mxu0 0.0
        %1736 = vmatpush1.msra.mxu0 0.0
        %1737 = vmatprep.subr.mxu0 0.0
        %1738 = vmatpush1.msra.mxu0 0.0
        %1739 = vmatprep.subr.mxu0 0.0
        %1740 = vmatpush1.msra.mxu0 0.0
        %1741 = vmatprep.subr.mxu0 0.0
        %1742 = vmatpush1.msra.mxu0 0.0
        %1743 = vmatprep.subr.mxu0 0.0
        %1744 = vmatpush1.msra.mxu0 0.0
        %1745 = vmatprep.subr.mxu0 0.0
        %1746 = vmatpush1.msra.mxu0 0.0
        %1747 = vmatprep.subr.mxu0 0.0
        %1748 = vmatpush1.msra.mxu0 0.0
        %1749 = vmatprep.subr.mxu0 0.0
        %1750 = vmatpush1.msra.mxu0 0.0
        %1751 = vmatprep.subr.mxu0 0.0
        %1752 = vmatpush1.msra.mxu0 0.0
        %1753 = vmatprep.subr.mxu0 0.0
        %1754 = vmatpush1.msra.mxu0 0.0
        %1755 = vmatprep.mubr.f32.mxu0 0.0
        %1756 = vmatmul.mubr.f32.gmra.mrb[0].mxu0 %v1689
        %v1757 = vpop.f32.mrb[0].mxu0
        %v1758 = vadd.f32 0.0, %v1757
        %v1759 = vpop.f32.mrb[0].mxu0
        %1760 = vdwg.mxu0
        %v1761 = vld [vmem:[%s13] sm:$0xff]
        %v1762 = vld [vmem:[%s13 + $0x8] sm:$0xff]
        %v1763 = vld [vmem:[%s13 + $0x10] sm:$0xff]
        %v1764 = vld [vmem:[%s13 + $0x18] sm:$0xff]
        %1765 = vmatprep.subr.mxu0 0.0
        %1766 = vmatpush1.msra.mxu0 %v1761
        %1767 = vmatprep.subr.mxu0 0.0
        %1768 = vmatpush1.msra.mxu0 %v1762
        %1769 = vmatprep.subr.mxu0 0.0
        %1770 = vmatpush1.msra.mxu0 %v1763
        %1771 = vmatprep.subr.mxu0 0.0
        %1772 = vmatpush1.msra.mxu0 %v1764
        %1773 = vmatprep.subr.mxu0 0.0
        %1774 = vmatpush1.msra.mxu0 0.0
        %1775 = vmatprep.subr.mxu0 0.0
        %1776 = vmatpush1.msra.mxu0 0.0
        %1777 = vmatprep.subr.mxu0 0.0
        %1778 = vmatpush1.msra.mxu0 0.0
        %1779 = vmatprep.subr.mxu0 0.0
        %1780 = vmatpush1.msra.mxu0 0.0
        %1781 = vmatprep.subr.mxu0 0.0
        %1782 = vmatpush1.msra.mxu0 0.0
        %1783 = vmatprep.subr.mxu0 0.0
        %1784 = vmatpush1.msra.mxu0 0.0
        %1785 = vmatprep.subr.mxu0 0.0
        %1786 = vmatpush1.msra.mxu0 0.0
        %1787 = vmatprep.subr.mxu0 0.0
        %1788 = vmatpush1.msra.mxu0 0.0
        %1789 = vmatprep.subr.mxu0 0.0
        %1790 = vmatpush1.msra.mxu0 0.0
        %1791 = vmatprep.subr.mxu0 0.0
        %1792 = vmatpush1.msra.mxu0 0.0
        %1793 = vmatprep.subr.mxu0 0.0
        %1794 = vmatpush1.msra.mxu0 0.0
        %1795 = vmatprep.subr.mxu0 0.0
        %1796 = vmatpush1.msra.mxu0 0.0
        %1797 = vmatprep.subr.mxu0 0.0
        %1798 = vmatpush1.msra.mxu0 0.0
        %1799 = vmatprep.subr.mxu0 0.0
        %1800 = vmatpush1.msra.mxu0 0.0
        %1801 = vmatprep.subr.mxu0 0.0
        %1802 = vmatpush1.msra.mxu0 0.0
        %1803 = vmatprep.subr.mxu0 0.0
        %1804 = vmatpush1.msra.mxu0 0.0
        %1805 = vmatprep.subr.mxu0 0.0
        %1806 = vmatpush1.msra.mxu0 0.0
        %1807 = vmatprep.subr.mxu0 0.0
        %1808 = vmatpush1.msra.mxu0 0.0
        %1809 = vmatprep.subr.mxu0 0.0
        %1810 = vmatpush1.msra.mxu0 0.0
        %1811 = vmatprep.subr.mxu0 0.0
        %1812 = vmatpush1.msra.mxu0 0.0
        %1813 = vmatprep.subr.mxu0 0.0
        %1814 = vmatpush1.msra.mxu0 0.0
        %1815 = vmatprep.subr.mxu0 0.0
        %1816 = vmatpush1.msra.mxu0 0.0
        %1817 = vmatprep.subr.mxu0 0.0
        %1818 = vmatpush1.msra.mxu0 0.0
        %1819 = vmatprep.subr.mxu0 0.0
        %1820 = vmatpush1.msra.mxu0 0.0
        %1821 = vmatprep.subr.mxu0 0.0
        %1822 = vmatpush1.msra.mxu0 0.0
        %1823 = vmatprep.subr.mxu0 0.0
        %1824 = vmatpush1.msra.mxu0 0.0
        %1825 = vmatprep.subr.mxu0 0.0
        %1826 = vmatpush1.msra.mxu0 0.0
        %1827 = vmatprep.subr.mxu0 0.0
        %1828 = vmatpush1.msra.mxu0 0.0
        %1829 = vmatprep.mubr.f32.mxu0 0.0
        %1830 = vmatmul.mubr.f32.gmra.mrb[0].mxu0 %v1689
        %v1831 = vpop.f32.mrb[0].mxu0
        %v1832 = vadd.f32 0.0, %v1831
        %v1833 = vpop.f32.mrb[0].mxu0
        %1834 = vdwg.mxu0
        %v1836 = vsel %vm1077, %v1681, 0
        %v1839 = vsel %vm1077, %v1758, 0
        %1841 = vmatprep.subr.mxu0 0.0
        %1842 = vmatpush1.xpose.msra.mxu0 %v1839
        %1843 = vmatprep.subr.mxu0 0.0
        %1844 = vmatpush1.xpose.msra.mxu0 0.0
        %1845 = vmatprep.subr.mxu0 0.0
        %1846 = vmatpush1.xpose.msra.mxu0 0.0
        %1847 = vmatprep.subr.mxu0 0.0
        %1848 = vmatpush1.xpose.msra.mxu0 0.0
        %1849 = vmatprep.subr.mxu0 0.0
        %1850 = vmatpush1.xpose.msra.mxu0 0.0
        %1851 = vmatprep.subr.mxu0 0.0
        %1852 = vmatpush1.xpose.msra.mxu0 0.0
        %1853 = vmatprep.subr.mxu0 0.0
        %1854 = vmatpush1.xpose.msra.mxu0 0.0
        %1855 = vmatprep.subr.mxu0 0.0
        %1856 = vmatpush1.xpose.msra.mxu0 0.0
        %1857 = vmatprep.subr.mxu0 0.0
        %1858 = vmatpush1.xpose.msra.mxu0 0.0
        %1859 = vmatprep.subr.mxu0 0.0
        %1860 = vmatpush1.xpose.msra.mxu0 0.0
        %1861 = vmatprep.subr.mxu0 0.0
        %1862 = vmatpush1.xpose.msra.mxu0 0.0
        %1863 = vmatprep.subr.mxu0 0.0
        %1864 = vmatpush1.xpose.msra.mxu0 0.0
        %1865 = vmatprep.subr.mxu0 0.0
        %1866 = vmatpush1.xpose.msra.mxu0 0.0
        %1867 = vmatprep.subr.mxu0 0.0
        %1868 = vmatpush1.xpose.msra.mxu0 0.0
        %1869 = vmatprep.subr.mxu0 0.0
        %1870 = vmatpush1.xpose.msra.mxu0 0.0
        %1871 = vmatprep.subr.mxu0 0.0
        %1872 = vmatpush1.xpose.msra.mxu0 0.0
        %1873 = vmatprep.subr.mxu0 0.0
        %1874 = vmatpush1.xpose.msra.mxu0 0.0
        %1875 = vmatprep.subr.mxu0 0.0
        %1876 = vmatpush1.xpose.msra.mxu0 0.0
        %1877 = vmatprep.subr.mxu0 0.0
        %1878 = vmatpush1.xpose.msra.mxu0 0.0
        %1879 = vmatprep.subr.mxu0 0.0
        %1880 = vmatpush1.xpose.msra.mxu0 0.0
        %1881 = vmatprep.subr.mxu0 0.0
        %1882 = vmatpush1.xpose.msra.mxu0 0.0
        %1883 = vmatprep.subr.mxu0 0.0
        %1884 = vmatpush1.xpose.msra.mxu0 0.0
        %1885 = vmatprep.subr.mxu0 0.0
        %1886 = vmatpush1.xpose.msra.mxu0 0.0
        %1887 = vmatprep.subr.mxu0 0.0
        %1888 = vmatpush1.xpose.msra.mxu0 0.0
        %1889 = vmatprep.subr.mxu0 0.0
        %1890 = vmatpush1.xpose.msra.mxu0 0.0
        %1891 = vmatprep.subr.mxu0 0.0
        %1892 = vmatpush1.xpose.msra.mxu0 0.0
        %1893 = vmatprep.subr.mxu0 0.0
        %1894 = vmatpush1.xpose.msra.mxu0 0.0
        %1895 = vmatprep.subr.mxu0 0.0
        %1896 = vmatpush1.xpose.msra.mxu0 0.0
        %1897 = vmatprep.subr.mxu0 0.0
        %1898 = vmatpush1.xpose.msra.mxu0 0.0
        %1899 = vmatprep.subr.mxu0 0.0
        %1900 = vmatpush1.xpose.msra.mxu0 0.0
        %1901 = vmatprep.subr.mxu0 0.0
        %1902 = vmatpush1.xpose.msra.mxu0 0.0
        %1903 = vmatprep.subr.mxu0 0.0
        %1904 = vmatpush1.xpose.msra.mxu0 0.0
        %1905 = vmatprep.mubr.f32.mxu0 0.0
        %1906 = vmatmul.mubr.f32.gmra.mrb[0].mxu0 %v1836
        %v1907 = vpop.f32.mrb[0].mxu0
        %v1908 = vadd.f32 0.0, %v1907
        %v1909 = vpop.f32.mrb[0].mxu0
        %1910 = vdwg.mxu0
        %v1911 = vmul.f32 %v1908, 0.17677669
        %v1912 = vadd.f32 %v1911, %v850
        %v1913 = vsel %vm1077, %v1912, -inf
        %1914 = vmax.xlane.f32.xlu0 %v1913
        %v1915 = vpop.xlane.xlu0 %1914
        %v1916 = vsub.f32 %v1912, %v1915
        %v1917 = vmul.f32 %v1916, 1.442695
        %v1918 = vpow.pop %v1917
        %v1919 = vsel %vm1077, %v1918, 0.0
        %1920 = vadd.xlane.f32.xlu0 %v1919
        %v1921 = vpop.xlane.xlu0 %1920
        %v1922 = vrcp.pop %v1921
        %v1923 = vmul.f32 %v1918, %v1922
        %v1924 = vsel %vm1077, %v1923, 0.0
        %1925 = vadd.xlane.f32.xlu0 %v1924
        %v1926 = vpop.xlane.xlu0 %1925
        %v1927 = vsel %vm1077, %v1832, 0.0
        %v1928 = vrot.slane %v1927, 4
        %v1929 = vadd.f32 %v1927, %v1928
        %v1930 = vrot.slane %v1929, 2
        %v1931 = vadd.f32 %v1929, %v1930
        %v1932 = vrot.slane %v1931, 1
        %v1933 = vadd.f32 %v1931, %v1932
        %v1934 = vmul.f32 %v1926, %v1933
        %1935 = vrot.lane.b32.xlu0 %v1681, 120
        %v1936 = vpop.permute.xlu0 %1935
        %1937 = vrot.lane.b32.xlu0 %v1758, 120
        %v1938 = vpop.permute.xlu0 %1937
        %v1939 = vsel %vm1077, %v1936, 0
        %v1941 = vsel %vm1077, %v1938, 0
        %1943 = vmatprep.subr.mxu0 0.0
        %1944 = vmatpush1.xpose.msra.mxu0 %v1941
        %1945 = vmatprep.subr.mxu0 0.0
        %1946 = vmatpush1.xpose.msra.mxu0 0.0
        %1947 = vmatprep.subr.mxu0 0.0
        %1948 = vmatpush1.xpose.msra.mxu0 0.0
        %1949 = vmatprep.subr.mxu0 0.0
        %1950 = vmatpush1.xpose.msra.mxu0 0.0
        %1951 = vmatprep.subr.mxu0 0.0
        %1952 = vmatpush1.xpose.msra.mxu0 0.0
        %1953 = vmatprep.subr.mxu0 0.0
        %1954 = vmatpush1.xpose.msra.mxu0 0.0
        %1955 = vmatprep.subr.mxu0 0.0
        %1956 = vmatpush1.xpose.msra.mxu0 0.0
        %1957 = vmatprep.subr.mxu0 0.0
        %1958 = vmatpush1.xpose.msra.mxu0 0.0
        %1959 = vmatprep.subr.mxu0 0.0
        %1960 = vmatpush1.xpose.msra.mxu0 0.0
        %1961 = vmatprep.subr.mxu0 0.0
        %1962 = vmatpush1.xpose.msra.mxu0 0.0
        %1963 = vmatprep.subr.mxu0 0.0
        %1964 = vmatpush1.xpose.msra.mxu0 0.0
        %1965 = vmatprep.subr.mxu0 0.0
        %1966 = vmatpush1.xpose.msra.mxu0 0.0
        %1967 = vmatprep.subr.mxu0 0.0
        %1968 = vmatpush1.xpose.msra.mxu0 0.0
        %1969 = vmatprep.subr.mxu0 0.0
        %1970 = vmatpush1.xpose.msra.mxu0 0.0
        %1971 = vmatprep.subr.mxu0 0.0
        %1972 = vmatpush1.xpose.msra.mxu0 0.0
        %1973 = vmatprep.subr.mxu0 0.0
        %1974 = vmatpush1.xpose.msra.mxu0 0.0
        %1975 = vmatprep.subr.mxu0 0.0
        %1976 = vmatpush1.xpose.msra.mxu0 0.0
        %1977 = vmatprep.subr.mxu0 0.0
        %1978 = vmatpush1.xpose.msra.mxu0 0.0
        %1979 = vmatprep.subr.mxu0 0.0
        %1980 = vmatpush1.xpose.msra.mxu0 0.0
        %1981 = vmatprep.subr.mxu0 0.0
        %1982 = vmatpush1.xpose.msra.mxu0 0.0
        %1983 = vmatprep.subr.mxu0 0.0
        %1984 = vmatpush1.xpose.msra.mxu0 0.0
        %1985 = vmatprep.subr.mxu0 0.0
        %1986 = vmatpush1.xpose.msra.mxu0 0.0
        %1987 = vmatprep.subr.mxu0 0.0
        %1988 = vmatpush1.xpose.msra.mxu0 0.0
        %1989 = vmatprep.subr.mxu0 0.0
        %1990 = vmatpush1.xpose.msra.mxu0 0.0
        %1991 = vmatprep.subr.mxu0 0.0
        %1992 = vmatpush1.xpose.msra.mxu0 0.0
        %1993 = vmatprep.subr.mxu0 0.0
        %1994 = vmatpush1.xpose.msra.mxu0 0.0
        %1995 = vmatprep.subr.mxu0 0.0
        %1996 = vmatpush1.xpose.msra.mxu0 0.0
        %1997 = vmatprep.subr.mxu0 0.0
        %1998 = vmatpush1.xpose.msra.mxu0 0.0
        %1999 = vmatprep.subr.mxu0 0.0
        %2000 = vmatpush1.xpose.msra.mxu0 0.0
        %2001 = vmatprep.subr.mxu0 0.0
        %2002 = vmatpush1.xpose.msra.mxu0 0.0
        %2003 = vmatprep.subr.mxu0 0.0
        %2004 = vmatpush1.xpose.msra.mxu0 0.0
        %2005 = vmatprep.subr.mxu0 0.0
        %2006 = vmatpush1.xpose.msra.mxu0 0.0
        %2007 = vmatprep.mubr.f32.mxu0 0.0
        %2008 = vmatmul.mubr.f32.gmra.mrb[0].mxu0 %v1939
        %v2009 = vpop.f32.mrb[0].mxu0
        %v2010 = vadd.f32 0.0, %v2009
        %v2011 = vpop.f32.mrb[0].mxu0
        %2012 = vdwg.mxu0
        %v2013 = vmul.f32 %v2010, 0.17677669
        %v2014 = vadd.f32 %v2013, %v850
        %v2015 = vsel %vm1077, %v2014, -inf
        %2016 = vmax.xlane.f32.xlu0 %v2015
        %v2017 = vpop.xlane.xlu0 %2016
        %v2018 = vsub.f32 %v2014, %v2017
        %v2019 = vmul.f32 %v2018, 1.442695
        %v2020 = vpow.pop %v2019
        %v2021 = vsel %vm1077, %v2020, 0.0
        %2022 = vadd.xlane.f32.xlu0 %v2021
        %v2023 = vpop.xlane.xlu0 %2022
        %v2024 = vrcp.pop %v2023
        %v2025 = vmul.f32 %v2020, %v2024
        %v2026 = vsel %vm1077, %v2025, 0.0
        %2027 = vadd.xlane.f32.xlu0 %v2026
        %v2028 = vpop.xlane.xlu0 %2027
        %v2029 = vsel %vm1272, %v1832, 0.0
        %v2030 = vrot.slane %v2029, 4
        %v2031 = vadd.f32 %v2029, %v2030
        %v2032 = vrot.slane %v2031, 2
        %v2033 = vadd.f32 %v2031, %v2032
        %v2034 = vrot.slane %v2033, 1
        %v2035 = vadd.f32 %v2033, %v2034
        %v2036 = vmul.f32 %v2028, %v2035
        %2037 = vrot.lane.b32.xlu0 %v1681, 112
        %v2038 = vpop.permute.xlu0 %2037
        %2039 = vrot.lane.b32.xlu0 %v1758, 112
        %v2040 = vpop.permute.xlu0 %2039
        %v2041 = vsel %vm1077, %v2038, 0
        %v2043 = vsel %vm1077, %v2040, 0
        %2045 = vmatprep.subr.mxu0 0.0
        %2046 = vmatpush1.xpose.msra.mxu0 %v2043
        %2047 = vmatprep.subr.mxu0 0.0
        %2048 = vmatpush1.xpose.msra.mxu0 0.0
        %2049 = vmatprep.subr.mxu0 0.0
        %2050 = vmatpush1.xpose.msra.mxu0 0.0
        %2051 = vmatprep.subr.mxu0 0.0
        %2052 = vmatpush1.xpose.msra.mxu0 0.0
        %2053 = vmatprep.subr.mxu0 0.0
        %2054 = vmatpush1.xpose.msra.mxu0 0.0
        %2055 = vmatprep.subr.mxu0 0.0
        %2056 = vmatpush1.xpose.msra.mxu0 0.0
        %2057 = vmatprep.subr.mxu0 0.0
        %2058 = vmatpush1.xpose.msra.mxu0 0.0
        %2059 = vmatprep.subr.mxu0 0.0
        %2060 = vmatpush1.xpose.msra.mxu0 0.0
        %2061 = vmatprep.subr.mxu0 0.0
        %2062 = vmatpush1.xpose.msra.mxu0 0.0
        %2063 = vmatprep.subr.mxu0 0.0
        %2064 = vmatpush1.xpose.msra.mxu0 0.0
        %2065 = vmatprep.subr.mxu0 0.0
        %2066 = vmatpush1.xpose.msra.mxu0 0.0
        %2067 = vmatprep.subr.mxu0 0.0
        %2068 = vmatpush1.xpose.msra.mxu0 0.0
        %2069 = vmatprep.subr.mxu0 0.0
        %2070 = vmatpush1.xpose.msra.mxu0 0.0
        %2071 = vmatprep.subr.mxu0 0.0
        %2072 = vmatpush1.xpose.msra.mxu0 0.0
        %2073 = vmatprep.subr.mxu0 0.0
        %2074 = vmatpush1.xpose.msra.mxu0 0.0
        %2075 = vmatprep.subr.mxu0 0.0
        %2076 = vmatpush1.xpose.msra.mxu0 0.0
        %2077 = vmatprep.subr.mxu0 0.0
        %2078 = vmatpush1.xpose.msra.mxu0 0.0
        %2079 = vmatprep.subr.mxu0 0.0
        %2080 = vmatpush1.xpose.msra.mxu0 0.0
        %2081 = vmatprep.subr.mxu0 0.0
        %2082 = vmatpush1.xpose.msra.mxu0 0.0
        %2083 = vmatprep.subr.mxu0 0.0
        %2084 = vmatpush1.xpose.msra.mxu0 0.0
        %2085 = vmatprep.subr.mxu0 0.0
        %2086 = vmatpush1.xpose.msra.mxu0 0.0
        %2087 = vmatprep.subr.mxu0 0.0
        %2088 = vmatpush1.xpose.msra.mxu0 0.0
        %2089 = vmatprep.subr.mxu0 0.0
        %2090 = vmatpush1.xpose.msra.mxu0 0.0
        %2091 = vmatprep.subr.mxu0 0.0
        %2092 = vmatpush1.xpose.msra.mxu0 0.0
        %2093 = vmatprep.subr.mxu0 0.0
        %2094 = vmatpush1.xpose.msra.mxu0 0.0
        %2095 = vmatprep.subr.mxu0 0.0
        %2096 = vmatpush1.xpose.msra.mxu0 0.0
        %2097 = vmatprep.subr.mxu0 0.0
        %2098 = vmatpush1.xpose.msra.mxu0 0.0
        %2099 = vmatprep.subr.mxu0 0.0
        %2100 = vmatpush1.xpose.msra.mxu0 0.0
        %2101 = vmatprep.subr.mxu0 0.0
        %2102 = vmatpush1.xpose.msra.mxu0 0.0
        %2103 = vmatprep.subr.mxu0 0.0
        %2104 = vmatpush1.xpose.msra.mxu0 0.0
        %2105 = vmatprep.subr.mxu0 0.0
        %2106 = vmatpush1.xpose.msra.mxu0 0.0
        %2107 = vmatprep.subr.mxu0 0.0
        %2108 = vmatpush1.xpose.msra.mxu0 0.0
        %2109 = vmatprep.mubr.f32.mxu0 0.0
        %2110 = vmatmul.mubr.f32.gmra.mrb[0].mxu0 %v2041
        %v2111 = vpop.f32.mrb[0].mxu0
        %v2112 = vadd.f32 0.0, %v2111
        %v2113 = vpop.f32.mrb[0].mxu0
        %2114 = vdwg.mxu0
        %v2115 = vmul.f32 %v2112, 0.17677669
        %v2116 = vadd.f32 %v2115, %v850
        %v2117 = vsel %vm1077, %v2116, -inf
        %2118 = vmax.xlane.f32.xlu0 %v2117
        %v2119 = vpop.xlane.xlu0 %2118
        %v2120 = vsub.f32 %v2116, %v2119
        %v2121 = vmul.f32 %v2120, 1.442695
        %v2122 = vpow.pop %v2121
        %v2123 = vsel %vm1077, %v2122, 0.0
        %2124 = vadd.xlane.f32.xlu0 %v2123
        %v2125 = vpop.xlane.xlu0 %2124
        %v2126 = vrcp.pop %v2125
        %v2127 = vmul.f32 %v2122, %v2126
        %v2128 = vsel %vm1077, %v2127, 0.0
        %2129 = vadd.xlane.f32.xlu0 %v2128
        %v2130 = vpop.xlane.xlu0 %2129
        %v2131 = vsel %vm1375, %v1832, 0.0
        %v2132 = vrot.slane %v2131, 4
        %v2133 = vadd.f32 %v2131, %v2132
        %v2134 = vrot.slane %v2133, 2
        %v2135 = vadd.f32 %v2133, %v2134
        %v2136 = vrot.slane %v2135, 1
        %v2137 = vadd.f32 %v2135, %v2136
        %v2138 = vmul.f32 %v2130, %v2137
        %2139 = vrot.lane.b32.xlu0 %v1681, 104
        %v2140 = vpop.permute.xlu0 %2139
        %2141 = vrot.lane.b32.xlu0 %v1758, 104
        %v2142 = vpop.permute.xlu0 %2141
        %v2143 = vsel %vm1077, %v2140, 0
        %v2145 = vsel %vm1077, %v2142, 0
        %2147 = vmatprep.subr.mxu0 0.0
        %2148 = vmatpush1.xpose.msra.mxu0 %v2145
        %2149 = vmatprep.subr.mxu0 0.0
        %2150 = vmatpush1.xpose.msra.mxu0 0.0
        %2151 = vmatprep.subr.mxu0 0.0
        %2152 = vmatpush1.xpose.msra.mxu0 0.0
        %2153 = vmatprep.subr.mxu0 0.0
        %2154 = vmatpush1.xpose.msra.mxu0 0.0
        %2155 = vmatprep.subr.mxu0 0.0
        %2156 = vmatpush1.xpose.msra.mxu0 0.0
        %2157 = vmatprep.subr.mxu0 0.0
        %2158 = vmatpush1.xpose.msra.mxu0 0.0
        %2159 = vmatprep.subr.mxu0 0.0
        %2160 = vmatpush1.xpose.msra.mxu0 0.0
        %2161 = vmatprep.subr.mxu0 0.0
        %2162 = vmatpush1.xpose.msra.mxu0 0.0
        %2163 = vmatprep.subr.mxu0 0.0
        %2164 = vmatpush1.xpose.msra.mxu0 0.0
        %2165 = vmatprep.subr.mxu0 0.0
        %2166 = vmatpush1.xpose.msra.mxu0 0.0
        %2167 = vmatprep.subr.mxu0 0.0
        %2168 = vmatpush1.xpose.msra.mxu0 0.0
        %2169 = vmatprep.subr.mxu0 0.0
        %2170 = vmatpush1.xpose.msra.mxu0 0.0
        %2171 = vmatprep.subr.mxu0 0.0
        %2172 = vmatpush1.xpose.msra.mxu0 0.0
        %2173 = vmatprep.subr.mxu0 0.0
        %2174 = vmatpush1.xpose.msra.mxu0 0.0
        %2175 = vmatprep.subr.mxu0 0.0
        %2176 = vmatpush1.xpose.msra.mxu0 0.0
        %2177 = vmatprep.subr.mxu0 0.0
        %2178 = vmatpush1.xpose.msra.mxu0 0.0
        %2179 = vmatprep.subr.mxu0 0.0
        %2180 = vmatpush1.xpose.msra.mxu0 0.0
        %2181 = vmatprep.subr.mxu0 0.0
        %2182 = vmatpush1.xpose.msra.mxu0 0.0
        %2183 = vmatprep.subr.mxu0 0.0
        %2184 = vmatpush1.xpose.msra.mxu0 0.0
        %2185 = vmatprep.subr.mxu0 0.0
        %2186 = vmatpush1.xpose.msra.mxu0 0.0
        %2187 = vmatprep.subr.mxu0 0.0
        %2188 = vmatpush1.xpose.msra.mxu0 0.0
        %2189 = vmatprep.subr.mxu0 0.0
        %2190 = vmatpush1.xpose.msra.mxu0 0.0
        %2191 = vmatprep.subr.mxu0 0.0
        %2192 = vmatpush1.xpose.msra.mxu0 0.0
        %2193 = vmatprep.subr.mxu0 0.0
        %2194 = vmatpush1.xpose.msra.mxu0 0.0
        %2195 = vmatprep.subr.mxu0 0.0
        %2196 = vmatpush1.xpose.msra.mxu0 0.0
        %2197 = vmatprep.subr.mxu0 0.0
        %2198 = vmatpush1.xpose.msra.mxu0 0.0
        %2199 = vmatprep.subr.mxu0 0.0
        %2200 = vmatpush1.xpose.msra.mxu0 0.0
        %2201 = vmatprep.subr.mxu0 0.0
        %2202 = vmatpush1.xpose.msra.mxu0 0.0
        %2203 = vmatprep.subr.mxu0 0.0
        %2204 = vmatpush1.xpose.msra.mxu0 0.0
        %2205 = vmatprep.subr.mxu0 0.0
        %2206 = vmatpush1.xpose.msra.mxu0 0.0
        %2207 = vmatprep.subr.mxu0 0.0
        %2208 = vmatpush1.xpose.msra.mxu0 0.0
        %2209 = vmatprep.subr.mxu0 0.0
        %2210 = vmatpush1.xpose.msra.mxu0 0.0
        %2211 = vmatprep.mubr.f32.mxu0 0.0
        %2212 = vmatmul.mubr.f32.gmra.mrb[0].mxu0 %v2143
        %v2213 = vpop.f32.mrb[0].mxu0
        %v2214 = vadd.f32 0.0, %v2213
        %v2215 = vpop.f32.mrb[0].mxu0
        %2216 = vdwg.mxu0
        %v2217 = vmul.f32 %v2214, 0.17677669
        %v2218 = vadd.f32 %v2217, %v850
        %v2219 = vsel %vm1077, %v2218, -inf
        %2220 = vmax.xlane.f32.xlu0 %v2219
        %v2221 = vpop.xlane.xlu0 %2220
        %v2222 = vsub.f32 %v2218, %v2221
        %v2223 = vmul.f32 %v2222, 1.442695
        %v2224 = vpow.pop %v2223
        %v2225 = vsel %vm1077, %v2224, 0.0
        %2226 = vadd.xlane.f32.xlu0 %v2225
        %v2227 = vpop.xlane.xlu0 %2226
        %v2228 = vrcp.pop %v2227
        %v2229 = vmul.f32 %v2224, %v2228
        %v2230 = vsel %vm1077, %v2229, 0.0
        %2231 = vadd.xlane.f32.xlu0 %v2230
        %v2232 = vpop.xlane.xlu0 %2231
        %v2233 = vsel %vm1478, %v1832, 0.0
        %v2234 = vrot.slane %v2233, 4
        %v2235 = vadd.f32 %v2233, %v2234
        %v2236 = vrot.slane %v2235, 2
        %v2237 = vadd.f32 %v2235, %v2236
        %v2238 = vrot.slane %v2237, 1
        %v2239 = vadd.f32 %v2237, %v2238
        %v2240 = vmul.f32 %v2232, %v2239
        %v2241 = vsel %vm1077, %v1934, %v2036
        %v2242 = vsel %vm1488, %v2241, %v2138
        %v2243 = vsel %vm1490, %v2242, %v2240
        %v2244 = vld [vmem:[%s14] sm:$0xff]
        %v2245 = vld [vmem:[%s14 + $0x8] sm:$0xff]
        %v2246 = vld [vmem:[%s14 + $0x10] sm:$0xff]
        %v2247 = vld [vmem:[%s14 + $0x18] sm:$0xff]
        %v2248 = vld [vmem:[%s15] sm:$0x1]
        %v2250 = vlaneseq
        %v2251 = vshrl.u32 %v2250, 7
        %v2252 = vsub.s32 0, %v2251
        %v2253 = vrot.slane %v2248, %v2252
        %v2256 = vsel %vm855, %v2243, 0
        %2258 = vmatprep.subr.mxu0 0.0
        %2259 = vmatpush1.msra.mxu0 %v2244
        %2260 = vmatprep.subr.mxu0 0.0
        %2261 = vmatpush1.msra.mxu0 %v2245
        %2262 = vmatprep.subr.mxu0 0.0
        %2263 = vmatpush1.msra.mxu0 %v2246
        %2264 = vmatprep.subr.mxu0 0.0
        %2265 = vmatpush1.msra.mxu0 %v2247
        %2266 = vmatprep.subr.mxu0 0.0
        %2267 = vmatpush1.msra.mxu0 0.0
        %2268 = vmatprep.subr.mxu0 0.0
        %2269 = vmatpush1.msra.mxu0 0.0
        %2270 = vmatprep.subr.mxu0 0.0
        %2271 = vmatpush1.msra.mxu0 0.0
        %2272 = vmatprep.subr.mxu0 0.0
        %2273 = vmatpush1.msra.mxu0 0.0
        %2274 = vmatprep.subr.mxu0 0.0
        %2275 = vmatpush1.msra.mxu0 0.0
        %2276 = vmatprep.subr.mxu0 0.0
        %2277 = vmatpush1.msra.mxu0 0.0
        %2278 = vmatprep.subr.mxu0 0.0
        %2279 = vmatpush1.msra.mxu0 0.0
        %2280 = vmatprep.subr.mxu0 0.0
        %2281 = vmatpush1.msra.mxu0 0.0
        %2282 = vmatprep.subr.mxu0 0.0
        %2283 = vmatpush1.msra.mxu0 0.0
        %2284 = vmatprep.subr.mxu0 0.0
        %2285 = vmatpush1.msra.mxu0 0.0
        %2286 = vmatprep.subr.mxu0 0.0
        %2287 = vmatpush1.msra.mxu0 0.0
        %2288 = vmatprep.subr.mxu0 0.0
        %2289 = vmatpush1.msra.mxu0 0.0
        %2290 = vmatprep.subr.mxu0 0.0
        %2291 = vmatpush1.msra.mxu0 0.0
        %2292 = vmatprep.subr.mxu0 0.0
        %2293 = vmatpush1.msra.mxu0 0.0
        %2294 = vmatprep.subr.mxu0 0.0
        %2295 = vmatpush1.msra.mxu0 0.0
        %2296 = vmatprep.subr.mxu0 0.0
        %2297 = vmatpush1.msra.mxu0 0.0
        %2298 = vmatprep.subr.mxu0 0.0
        %2299 = vmatpush1.msra.mxu0 0.0
        %2300 = vmatprep.subr.mxu0 0.0
        %2301 = vmatpush1.msra.mxu0 0.0
        %2302 = vmatprep.subr.mxu0 0.0
        %2303 = vmatpush1.msra.mxu0 0.0
        %2304 = vmatprep.subr.mxu0 0.0
        %2305 = vmatpush1.msra.mxu0 0.0
        %2306 = vmatprep.subr.mxu0 0.0
        %2307 = vmatpush1.msra.mxu0 0.0
        %2308 = vmatprep.subr.mxu0 0.0
        %2309 = vmatpush1.msra.mxu0 0.0
        %2310 = vmatprep.subr.mxu0 0.0
        %2311 = vmatpush1.msra.mxu0 0.0
        %2312 = vmatprep.subr.mxu0 0.0
        %2313 = vmatpush1.msra.mxu0 0.0
        %2314 = vmatprep.subr.mxu0 0.0
        %2315 = vmatpush1.msra.mxu0 0.0
        %2316 = vmatprep.subr.mxu0 0.0
        %2317 = vmatpush1.msra.mxu0 0.0
        %2318 = vmatprep.subr.mxu0 0.0
        %2319 = vmatpush1.msra.mxu0 0.0
        %2320 = vmatprep.subr.mxu0 0.0
        %2321 = vmatpush1.msra.mxu0 0.0
        %2322 = vmatprep.mubr.f32.mxu0 0.0
        %2323 = vmatmul.mubr.f32.gmra.mrb[0].mxu0 %v2256
        %v2324 = vpop.f32.mrb[0].mxu0
        %v2325 = vadd.f32 %v2253, %v2324
        %v2326 = vpop.f32.mrb[0].mxu0
        %2327 = vdwg.mxu0
        %v2328 = vadd.f32 %v2325, %v1606
        %v2329 = vsel %vm855, %v2328, 0.0
        %2330 = vadd.xlane.f32.xlu0 %v2329
        %v2331 = vpop.xlane.xlu0 %2330
        %v2332 = vmul.f32 %v2331, %v1580
        %v2333 = vsub.f32 %v2328, %v2332
        %v2334 = vmul.f32 %v2333, %v2333
        %v2335 = vsel %vm855, %v2334, 0.0
        %2336 = vadd.xlane.f32.xlu0 %v2335
        %v2337 = vpop.xlane.xlu0 %2336
        %v2338 = vmul.f32 %v2337, %v1580
        %v2339 = vadd.f32 %v2338, 1e-05
        %v2340 = vrsqrt.pop %v2339
        %v2341 = vmul.f32 %v2333, %v2340
        %v2342 = vld [vmem:[%s16] sm:$0x1]
        %v2344 = vlaneseq
        %v2345 = vshrl.u32 %v2344, 7
        %v2346 = vsub.s32 0, %v2345
        %v2347 = vrot.slane %v2342, %v2346
        %v2349 = vmul.f32 %v2341, %v2347
        %v2350 = vld [vmem:[%s17] sm:$0x1]
        %v2352 = vlaneseq
        %v2353 = vshrl.u32 %v2352, 7
        %v2354 = vsub.s32 0, %v2353
        %v2355 = vrot.slane %v2350, %v2354
        %v2357 = vadd.f32 %v2349, %v2355
        %v2358 = vld [vmem:[%s18] sm:$0xff]
        %v2359 = vld [vmem:[%s18 + $0x8] sm:$0xff]
        %v2360 = vld [vmem:[%s18 + $0x10] sm:$0xff]
        %v2361 = vld [vmem:[%s18 + $0x18] sm:$0xff]
        %v2362 = vld [vmem:[%s19] sm:$0x1]
        %v2364 = vlaneseq
        %v2365 = vshrl.u32 %v2364, 7
        %v2366 = vsub.s32 0, %v2365
        %v2367 = vrot.slane %v2362, %v2366
        %v2370 = vsel %vm855, %v2357, 0
        %2372 = vmatprep.subr.mxu0 0.0
        %2373 = vmatpush1.msra.mxu0 %v2358
        %2374 = vmatprep.subr.mxu0 0.0
        %2375 = vmatpush1.msra.mxu0 %v2359
        %2376 = vmatprep.subr.mxu0 0.0
        %2377 = vmatpush1.msra.mxu0 %v2360
        %2378 = vmatprep.subr.mxu0 0.0
        %2379 = vmatpush1.msra.mxu0 %v2361
        %2380 = vmatprep.subr.mxu0 0.0
        %2381 = vmatpush1.msra.mxu0 0.0
        %2382 = vmatprep.subr.mxu0 0.0
        %2383 = vmatpush1.msra.mxu0 0.0
        %2384 = vmatprep.subr.mxu0 0.0
        %2385 = vmatpush1.msra.mxu0 0.0
        %2386 = vmatprep.subr.mxu0 0.0
        %2387 = vmatpush1.msra.mxu0 0.0
        %2388 = vmatprep.subr.mxu0 0.0
        %2389 = vmatpush1.msra.mxu0 0.0
        %2390 = vmatprep.subr.mxu0 0.0
        %2391 = vmatpush1.msra.mxu0 0.0
        %2392 = vmatprep.subr.mxu0 0.0
        %2393 = vmatpush1.msra.mxu0 0.0
        %2394 = vmatprep.subr.mxu0 0.0
        %2395 = vmatpush1.msra.mxu0 0.0
        %2396 = vmatprep.subr.mxu0 0.0
        %2397 = vmatpush1.msra.mxu0 0.0
        %2398 = vmatprep.subr.mxu0 0.0
        %2399 = vmatpush1.msra.mxu0 0.0
        %2400 = vmatprep.subr.mxu0 0.0
        %2401 = vmatpush1.msra.mxu0 0.0
        %2402 = vmatprep.subr.mxu0 0.0
        %2403 = vmatpush1.msra.mxu0 0.0
        %2404 = vmatprep.subr.mxu0 0.0
        %2405 = vmatpush1.msra.mxu0 0.0
        %2406 = vmatprep.subr.mxu0 0.0
        %2407 = vmatpush1.msra.mxu0 0.0
        %2408 = vmatprep.subr.mxu0 0.0
        %2409 = vmatpush1.msra.mxu0 0.0
        %2410 = vmatprep.subr.mxu0 0.0
        %2411 = vmatpush1.msra.mxu0 0.0
        %2412 = vmatprep.subr.mxu0 0.0
        %2413 = vmatpush1.msra.mxu0 0.0
        %2414 = vmatprep.subr.mxu0 0.0
        %2415 = vmatpush1.msra.mxu0 0.0
        %2416 = vmatprep.subr.mxu0 0.0
        %2417 = vmatpush1.msra.mxu0 0.0
        %2418 = vmatprep.subr.mxu0 0.0
        %2419 = vmatpush1.msra.mxu0 0.0
        %2420 = vmatprep.subr.mxu0 0.0
        %2421 = vmatpush1.msra.mxu0 0.0
        %2422 = vmatprep.subr.mxu0 0.0
        %2423 = vmatpush1.msra.mxu0 0.0
        %2424 = vmatprep.subr.mxu0 0.0
        %2425 = vmatpush1.msra.mxu0 0.0
        %2426 = vmatprep.subr.mxu0 0.0
        %2427 = vmatpush1.msra.mxu0 0.0
        %2428 = vmatprep.subr.mxu0 0.0
        %2429 = vmatpush1.msra.mxu0 0.0
        %2430 = vmatprep.subr.mxu0 0.0
        %2431 = vmatpush1.msra.mxu0 0.0
        %2432 = vmatprep.subr.mxu0 0.0
        %2433 = vmatpush1.msra.mxu0 0.0
        %2434 = vmatprep.subr.mxu0 0.0
        %2435 = vmatpush1.msra.mxu0 0.0
        %2436 = vmatprep.mubr.f32.mxu0 0.0
        %2437 = vmatmul.mubr.f32.gmra.mrb[0].mxu0 %v2370
        %v2438 = vpop.f32.mrb[0].mxu0
        %v2439 = vadd.f32 %v2367, %v2438
        %v2440 = vpop.f32.mrb[0].mxu0
        %2441 = vdwg.mxu0
        %v2442 = vmax.f32 %v2439, 0.0
        %v2443 = vld [vmem:[%s20] sm:$0xff]
        %v2444 = vld [vmem:[%s20 + $0x8] sm:$0xff]
        %v2445 = vld [vmem:[%s20 + $0x10] sm:$0xff]
        %v2446 = vld [vmem:[%s20 + $0x18] sm:$0xff]
        %v2447 = vld [vmem:[%s20 + $0x20] sm:$0xff]
        %v2448 = vld [vmem:[%s20 + $0x28] sm:$0xff]
        %v2449 = vld [vmem:[%s20 + $0x30] sm:$0xff]
        %v2450 = vld [vmem:[%s20 + $0x38] sm:$0xff]
        %v2451 = vld [vmem:[%s21] sm:$0x1]
        %v2453 = vlaneseq
        %v2454 = vshrl.u32 %v2453, 7
        %v2455 = vsub.s32 0, %v2454
        %v2456 = vrot.slane %v2451, %v2455
        %vm2458 = vcmask 523264
        %v2460 = vsel %vm2458, %v2442, 0
        %2462 = vmatprep.subr.mxu0 0.0
        %2463 = vmatpush1.msra.mxu0 %v2443
        %2464 = vmatprep.subr.mxu0 0.0
        %2465 = vmatpush1.msra.mxu0 %v2444
        %2466 = vmatprep.subr.mxu0 0.0
        %2467 = vmatpush1.msra.mxu0 %v2445
        %2468 = vmatprep.subr.mxu0 0.0
        %2469 = vmatpush1.msra.mxu0 %v2446
        %2470 = vmatprep.subr.mxu0 0.0
        %2471 = vmatpush1.msra.mxu0 %v2447
        %2472 = vmatprep.subr.mxu0 0.0
        %2473 = vmatpush1.msra.mxu0 %v2448
        %2474 = vmatprep.subr.mxu0 0.0
        %2475 = vmatpush1.msra.mxu0 %v2449
        %2476 = vmatprep.subr.mxu0 0.0
        %2477 = vmatpush1.msra.mxu0 %v2450
        %2478 = vmatprep.subr.mxu0 0.0
        %2479 = vmatpush1.msra.mxu0 0.0
        %2480 = vmatprep.subr.mxu0 0.0
        %2481 = vmatpush1.msra.mxu0 0.0
        %2482 = vmatprep.subr.mxu0 0.0
        %2483 = vmatpush1.msra.mxu0 0.0
        %2484 = vmatprep.subr.mxu0 0.0
        %2485 = vmatpush1.msra.mxu0 0.0
        %2486 = vmatprep.subr.mxu0 0.0
        %2487 = vmatpush1.msra.mxu0 0.0
        %2488 = vmatprep.subr.mxu0 0.0
        %2489 = vmatpush1.msra.mxu0 0.0
        %2490 = vmatprep.subr.mxu0 0.0
        %2491 = vmatpush1.msra.mxu0 0.0
        %2492 = vmatprep.subr.mxu0 0.0
        %2493 = vmatpush1.msra.mxu0 0.0
        %2494 = vmatprep.subr.mxu0 0.0
        %2495 = vmatpush1.msra.mxu0 0.0
        %2496 = vmatprep.subr.mxu0 0.0
        %2497 = vmatpush1.msra.mxu0 0.0
        %2498 = vmatprep.subr.mxu0 0.0
        %2499 = vmatpush1.msra.mxu0 0.0
        %2500 = vmatprep.subr.mxu0 0.0
        %2501 = vmatpush1.msra.mxu0 0.0
        %2502 = vmatprep.subr.mxu0 0.0
        %2503 = vmatpush1.msra.mxu0 0.0
        %2504 = vmatprep.subr.mxu0 0.0
        %2505 = vmatpush1.msra.mxu0 0.0
        %2506 = vmatprep.subr.mxu0 0.0
        %2507 = vmatpush1.msra.mxu0 0.0
        %2508 = vmatprep.subr.mxu0 0.0
        %2509 = vmatpush1.msra.mxu0 0.0
        %2510 = vmatprep.subr.mxu0 0.0
        %2511 = vmatpush1.msra.mxu0 0.0
        %2512 = vmatprep.subr.mxu0 0.0
        %2513 = vmatpush1.msra.mxu0 0.0
        %2514 = vmatprep.subr.mxu0 0.0
        %2515 = vmatpush1.msra.mxu0 0.0
        %2516 = vmatprep.subr.mxu0 0.0
        %2517 = vmatpush1.msra.mxu0 0.0
        %2518 = vmatprep.subr.mxu0 0.0
        %2519 = vmatpush1.msra.mxu0 0.0
        %2520 = vmatprep.subr.mxu0 0.0
        %2521 = vmatpush1.msra.mxu0 0.0
        %2522 = vmatprep.subr.mxu0 0.0
        %2523 = vmatpush1.msra.mxu0 0.0
        %2524 = vmatprep.subr.mxu0 0.0
        %2525 = vmatpush1.msra.mxu0 0.0
        %2526 = vmatprep.mubr.f32.mxu0 0.0
        %2527 = vmatmul.mubr.f32.gmra.mrb[0].mxu0 %v2460
        %v2528 = vpop.f32.mrb[0].mxu0
        %v2529 = vadd.f32 %v2456, %v2528
        %v2530 = vpop.f32.mrb[0].mxu0
        %2531 = vdwg.mxu0
        %v2532 = vadd.f32 %v2529, %v2357
        %v2533 = vsel %vm855, %v2532, 0.0
        %2534 = vadd.xlane.f32.xlu0 %v2533
        %v2535 = vpop.xlane.xlu0 %2534
        %v2536 = vmul.f32 %v2535, %v1580
        %v2537 = vsub.f32 %v2532, %v2536
        %v2538 = vmul.f32 %v2537, %v2537
        %v2539 = vsel %vm855, %v2538, 0.0
        %2540 = vadd.xlane.f32.xlu0 %v2539
        %v2541 = vpop.xlane.xlu0 %2540
        %v2542 = vmul.f32 %v2541, %v1580
        %v2543 = vadd.f32 %v2542, 1e-05
        %v2544 = vrsqrt.pop %v2543
        %v2545 = vmul.f32 %v2537, %v2544
        %v2546 = vld [vmem:[%s22] sm:$0x1]
        %v2548 = vlaneseq
        %v2549 = vshrl.u32 %v2548, 7
        %v2550 = vsub.s32 0, %v2549
        %v2551 = vrot.slane %v2546, %v2550
        %v2553 = vmul.f32 %v2545, %v2551
        %v2554 = vld [vmem:[%s23] sm:$0x1]
        %v2556 = vlaneseq
        %v2557 = vshrl.u32 %v2556, 7
        %v2558 = vsub.s32 0, %v2557
        %v2559 = vrot.slane %v2554, %v2558
        %v2561 = vadd.f32 %v2553, %v2559
        %2562 = vst.msk [vmem:[%s842] sm:$0xff] %vm855, %v2561
        %p2563 = scmp.lt.s32.totalorder %s38, 1
        %s2564 = scalar_select %p2563, %s38, 1
        %s2565 = smul.addr %s2564, 8
        %s2566 = scalar_lea.vmem %s24, %s2565
        // Predicated region
        $region133: #{decoder_forward.3} parent=115 // pred_check
          %p2567 = pneg %p580
        $region134: #{decoder_forward.3} parent=115 // pred_check_branch
          %2569 = sbr.rel (%p2567) target = $region136
        $region135: #{decoder_forward.3} parent=115 // pred_region
          _
        $region136: #{decoder_forward.3} parent=115 // pred_fallthru
          _
      $region116: #{decoder_forward.3} parent=5 // pred_fallthru
        _
      %p2570 = scmp.le.s32.totalorder 2, %s33
      // Predicated region
      $region137: #{decoder_forward.3} parent=5 // pred_check
        %p2571 = pneg %p2570
      $region138: #{decoder_forward.3} parent=5 // pred_check_branch
        %2573 = sbr.rel (%p2571) target = $region140
      $region139: #{decoder_forward.3} parent=5 // pred_region
        %s2574 = ssub.s32 %s33, 2
        // Predicated region
        $region141: #{decoder_forward.3} parent=139 // pred_check
          %p2575 = pneg %p586
        $region142: #{decoder_forward.3} parent=139 // pred_check_branch
          %2577 = sbr.rel (%p2575) target = $region144
        $region143: #{decoder_forward.3} parent=139 // pred_region
          %p2578 = scmp.lt.s32.totalorder %s39, 1
          %s2579 = scalar_select %p2578, %s39, 1
          %s2580 = smul.addr %s2579, 8
          %s2581 = scalar_lea.vmem %s24, %s2580
        $region144: #{decoder_forward.3} parent=139 // pred_fallthru
          _
      $region140: #{decoder_forward.3} parent=5 // pred_fallthru
        _
    $region6: #{decoder_forward.3} parent=1 // loop_footer
      %s37 = sadd.s32 1, %s33
    $region7: #{decoder_forward.3} parent=1 // loop_footer_branch
      %32 = sbr.rel target = $region3
    $region8: #{decoder_forward.3} parent=1 // loop_exit
      _
    %2582 = vsyncpa [#allocation3], 1
    %s2583 = scalar_lea.sflag [#allocation3], 1
    %2584 = vsyncpa %s2583, 1
    %2585 = vsyncpa [#allocation5], 1
    %2586 = vsyncpa [#allocation8], 1

</llo_original>
